<compile_context>
chip_gen: v5e
topology: v5e:2x2
jax: 0.10.0
libtpu: 0.0.40
codegen_flags: <defaults>
</compile_context>

<pallas_src>
import functools

import jax
import jax.numpy as jnp
from jax.experimental import pallas as pl
from jax.experimental.pallas import tpu as pltpu


# ------------------------------ fused kernel ------------------------------- #
# Internal 2-D (rows, channels) layouts, channels on the lane axis:
#   conv1 activation : row = n*256 + 16*ho + wo   (ho,wo in [0,14), junk rest)
#   conv2 input scr  : row = n*256 + 16*h  + w    (padded pool1, 15x15 of 16x16)
#   conv2/pool2 rows : t   = 32*ho + 2*wo          (per sample, junk in between)

def _net_tf_kernel(patches1_ref, w1_ref, b1_ref, w2_ref, b2_ref,
                   wfc1_ref, bfc1_ref, wfc2_ref, bfc2_ref, o_ref,
                   xp2_ref, *, batch):
    f32 = jnp.float32

    # Zero the conv2-input scratch: the zeros double as conv2's pad=1 border.
    xp2_ref[...] = jnp.zeros(xp2_ref.shape, xp2_ref.dtype)

    w1 = w1_ref[...]          # (64, 16)
    b1 = b1_ref[...]          # (1, 16)

    # ---- conv1 (im2col matmul) + ReLU + maxpool(2, stride=1), per sample ----
    for n in range(batch):
        p1 = patches1_ref[pl.ds(n * 256, 256), :]                  # (256, 64)
        y1 = jnp.dot(p1, w1, preferred_element_type=f32) + b1      # (256, 16)
        y1 = jnp.maximum(y1, 0.0)
        # pool1 at t = 16*h + w  ==  max of rows {t, t+1, t+16, t+17}
        a = jnp.maximum(y1[0:222, :], y1[1:223, :])                # (222, 16)
        b = jnp.maximum(a[0:205, :], a[16:221, :])                 # (205, 16)
        # Scatter the 13 valid columns of each pooled row into the padded
        # conv2-input scratch (offset +1 in h and w for padding=1).
        for h in range(13):
            dst = n * 256 + (h + 1) * 16 + 1
            xp2_ref[pl.ds(dst, 13), :] = b[16 * h:16 * h + 13, :]

    b2 = b2_ref[...]          # (1, 32)

    # ---- conv2 (16 shifted-slab matmuls) + ReLU + maxpool(2,1), per sample --
    pooled = []
    for n in range(batch):
        acc = jnp.zeros((171, 32), f32)
        for di in range(4):
            for dj in range(4):
                base = n * 256 + di * 16 + dj
                r = xp2_ref[pl.ds(base, 171), :]                   # (171, 16)
                wt = w2_ref[pl.ds((di * 4 + dj) * 16, 16), :]      # (16, 32)
                acc = acc + jnp.dot(r, wt, preferred_element_type=f32)
        y2 = jnp.maximum(acc + b2, 0.0)                            # (171, 32)
        # pool2 at t = 32*ho + 2*wo  ==  max of rows {t, t+2, t+32, t+34}
        a2 = jnp.maximum(y2[0:169, :], y2[2:171, :])               # (169, 32)
        p2 = jnp.maximum(a2[0:137, :], a2[32:169, :])              # (137, 32)
        pooled.append(p2)

    # ---- fc1 (+ReLU): 25 per-position (batch,32)x(32,32) MXU matmuls --------
    accf = jnp.zeros((batch, 32), f32)
    for po in range(5):
        for qo in range(5):
            s = po * 5 + qo
            t = 32 * po + 2 * qo
            xrow = jnp.concatenate([p[t:t + 1, :] for p in pooled], axis=0)
            wts = wfc1_ref[pl.ds(s * 32, 32), :]                   # (32, 32)
            accf = accf + jnp.dot(xrow, wts, preferred_element_type=f32)
    h1 = jnp.maximum(accf + bfc1_ref[...], 0.0)                    # (batch, 32)

    # ---- fc2 + log_softmax ---------------------------------------------------
    logits = jnp.dot(h1, wfc2_ref[...], preferred_element_type=f32) + bfc2_ref[...]
    m = jnp.max(logits, axis=-1, keepdims=True)
    z = logits - m
    lse = jnp.log(jnp.sum(jnp.exp(z), axis=-1, keepdims=True))
    o_ref[...] = (z - lse).astype(o_ref.dtype)


# ----------------------------- wrapper (XLA glue) --------------------------- #

def _conv1_patches(x_nchw):
    """(N,1,28,28) -> im2col patches with rows at n*256 + 16*ho + wo: (N*256,64)."""
    n = x_nchw.shape[0]
    x = x_nchw[:, 0, :, :]                                 # (N, 28, 28)
    xp = jnp.pad(x, ((0, 0), (3, 3), (3, 3)))              # (N, 34, 34)
    cols = []
    for di in range(8):
        for dj in range(8):
            cols.append(xp[:, di:di + 28:2, dj:dj + 28:2])  # (N, 14, 14)
    pat = jnp.stack(cols, axis=-1)                          # (N, 14, 14, 64)
    pat = jnp.pad(pat, ((0, 0), (0, 2), (0, 2), (0, 0)))    # (N, 16, 16, 64)
    return pat.reshape(n * 256, 64)


def net_tf_forward(params, x_nchw):
    """x_nchw: (N, 1, 28, 28) float32 -> (N, 10) log-probabilities."""
    n = x_nchw.shape[0]
    x = x_nchw.astype(jnp.float32)
    patches1 = _conv1_patches(x)                                         # (N*256, 64)

    # Weight re-layouts (tiny, wrapper-side XLA).  Feature order (kh, kw, C)
    # is kept in lockstep between patches and weight matrices.
    w1 = jnp.transpose(params['conv1_w'], (2, 3, 1, 0)).reshape(64, 16)
    b1 = params['conv1_b'].reshape(1, 16)
    w2 = jnp.transpose(params['conv2_w'], (2, 3, 1, 0)).reshape(256, 32)
    b2 = params['conv2_b'].reshape(1, 32)
    # fc1 weight rows are stored in PyTorch flatten order f = c*25 + ho*5 + wo;
    # permute to the kernel's (ho, wo, c) order.
    wfc1 = jnp.transpose(params['fc1_w'].reshape(32, 5, 5, 32),
                         (1, 2, 0, 3)).reshape(800, 32)
    bfc1 = params['fc1_b'].reshape(1, 32)
    wfc2 = params['fc2_w']                                               # (32, 10)
    bfc2 = params['fc2_b'].reshape(1, 10)

    vmem = pl.BlockSpec(memory_space=pltpu.MemorySpace.VMEM)
    return pl.pallas_call(
        functools.partial(_net_tf_kernel, batch=n),
        out_shape=jax.ShapeDtypeStruct((n, 10), jnp.float32),
        in_specs=[vmem] * 9,
        out_specs=vmem,
        scratch_shapes=[pltpu.VMEM((n * 256, 16), jnp.float32)],
    )(patches1, w1, b1, w2, b2, wfc1, bfc1, wfc2, bfc2)


# -------------------------- pure-JAX reference ------------------------------ #

def net_tf_reference(params, x):
    dn = ('NCHW', 'OIHW', 'NCHW')
    y = jax.lax.conv_general_dilated(x, params['conv1_w'], (2, 2),
                                     [(3, 3), (3, 3)], dimension_numbers=dn)
    y = jax.nn.relu(y + params['conv1_b'][None, :, None, None])
    y = jax.lax.reduce_window(y, -jnp.inf, jax.lax.max,
                              (1, 1, 2, 2), (1, 1, 1, 1), 'VALID')
    y = jax.lax.conv_general_dilated(y, params['conv2_w'], (2, 2),
                                     [(1, 1), (1, 1)], dimension_numbers=dn)
    y = jax.nn.relu(y + params['conv2_b'][None, :, None, None])
    y = jax.lax.reduce_window(y, -jnp.inf, jax.lax.max,
                              (1, 1, 2, 2), (1, 1, 1, 1), 'VALID')
    y = y.reshape(y.shape[0], -1)
    y = jax.nn.relu(y @ params['fc1_w'] + params['fc1_b'])
    y = y @ params['fc2_w'] + params['fc2_b']
    return jax.nn.log_softmax(y, axis=-1)


# ------------------------------- params ------------------------------------- #

def init_params(key):
    """Deterministic PyTorch-style uniform(-1/sqrt(fan_in), 1/sqrt(fan_in))."""
    ks = jax.random.split(key, 8)

    def u(k, shape, fan_in):
        bound = 1.0 / float(fan_in) ** 0.5
        return jax.random.uniform(k, shape, jnp.float32, -bound, bound)

    return {
        'conv1_w': u(ks[0], (16, 1, 8, 8), 1 * 8 * 8),    # PyTorch (O,C,kh,kw)
        'conv1_b': u(ks[1], (16,), 1 * 8 * 8),
        'conv2_w': u(ks[2], (32, 16, 4, 4), 16 * 4 * 4),
        'conv2_b': u(ks[3], (32,), 16 * 4 * 4),
        'fc1_w':   u(ks[4], (800, 32), 800),              # stored (in, out)
        'fc1_b':   u(ks[5], (32,), 800),
        'fc2_w':   u(ks[6], (32, 10), 32),                # stored (in, out)
        'fc2_b':   u(ks[7], (10,), 32),
    }


if __name__ == "__main__":
    key = jax.random.PRNGKey(0)
    pkey, xkey = jax.random.split(key)
    params = init_params(pkey)
    # Input shape implied by fc1 (32*5*5 = 800): (N, 1, 28, 28), NCHW like PyTorch.
    x = jax.random.normal(xkey, (2, 1, 28, 28), dtype=jnp.float32)

    fwd = jax.jit(net_tf_forward)
    out = jax.block_until_ready(fwd(params, x))

    assert out.shape == (2, 10)
    assert bool(jnp.all(jnp.isfinite(out)))
    # log_softmax rows must exponentiate-sum to ~1.
    assert bool(jnp.allclose(jnp.exp(out).sum(axis=1), 1.0, atol=1e-5))
    # Numerics must match the pure-JAX (= PyTorch-semantics) reference.
    ref = jax.block_until_ready(net_tf_reference(params, x))
    assert bool(jnp.allclose(out, ref, atol=2e-4, rtol=2e-4)), \
        float(jnp.max(jnp.abs(out - ref)))
    print("KERNEL_OK")
</pallas_src>

<mosaic_0001>
module attributes {stable_mosaic.version = 11 : i64} {
  func.func @_net_tf_kernel(%arg0: memref<512x64xf32, #tpu.memory_space<vmem>>, %arg1: memref<64x16xf32, #tpu.memory_space<vmem>>, %arg2: memref<1x16xf32, #tpu.memory_space<vmem>>, %arg3: memref<256x32xf32, #tpu.memory_space<vmem>>, %arg4: memref<1x32xf32, #tpu.memory_space<vmem>>, %arg5: memref<800x32xf32, #tpu.memory_space<vmem>>, %arg6: memref<1x32xf32, #tpu.memory_space<vmem>>, %arg7: memref<32x10xf32, #tpu.memory_space<vmem>>, %arg8: memref<1x10xf32, #tpu.memory_space<vmem>>, %arg9: memref<2x10xf32, #tpu.memory_space<vmem>>, %arg10: memref<512x16xf32, #tpu.memory_space<vmem>>) attributes {dimension_semantics = [], scalar_prefetch = 0 : i64, scratch_operands = 1 : i64, tpu.core_type = #tpu.core_type<tc>} {
    %cst = arith.constant 0.000000e+00 : f32
    %0 = vector.broadcast %cst : f32 to vector<512x16xf32>
    %c0 = arith.constant 0 : index
    %c0_0 = arith.constant 0 : index
    %1 = vector.load %arg10[%c0, %c0_0] : memref<512x16xf32, #tpu.memory_space<vmem>>, vector<512x16xf32>
    tpu.vector_store %arg10[%c0, %c0_0], %0 {strides = array<i32>} : memref<512x16xf32, #tpu.memory_space<vmem>>, vector<512x16xf32>,
    %c0_1 = arith.constant 0 : index
    %c0_2 = arith.constant 0 : index
    %2 = vector.load %arg1[%c0_1, %c0_2] : memref<64x16xf32, #tpu.memory_space<vmem>>, vector<64x16xf32>
    %c0_3 = arith.constant 0 : index
    %c0_4 = arith.constant 0 : index
    %3 = vector.load %arg2[%c0_3, %c0_4] : memref<1x16xf32, #tpu.memory_space<vmem>>, vector<1x16xf32>
    %c0_5 = arith.constant 0 : index
    %c0_6 = arith.constant 0 : index
    %4 = vector.load %arg0[%c0_5, %c0_6] : memref<512x64xf32, #tpu.memory_space<vmem>>, vector<256x64xf32>
    %cst_7 = arith.constant dense<0.000000e+00> : vector<256x16xf32>
    %5 = tpu.matmul %4, %2, %cst_7 {dimension_numbers = #tpu.dot_dimension_numbers<[1], [0], [0], [1], [0, 0, 1, 1], [], []>} : vector<256x64xf32>, vector<64x16xf32>, vector<256x16xf32> -> vector<256x16xf32>
    %6 = vector.broadcast %3 : vector<1x16xf32> to vector<256x16xf32>
    %7 = arith.addf %5, %6 : vector<256x16xf32>
    %cst_8 = arith.constant 0.000000e+00 : f32
    %8 = vector.broadcast %cst_8 : f32 to vector<256x16xf32>
    %9 = arith.maximumf %7, %8 : vector<256x16xf32>
    %10 = vector.extract_strided_slice %9 {offsets = [0, 0], sizes = [222, 16], strides = [1, 1]} : vector<256x16xf32> to vector<222x16xf32>
    %11 = vector.extract_strided_slice %9 {offsets = [1, 0], sizes = [222, 16], strides = [1, 1]} : vector<256x16xf32> to vector<222x16xf32>
    %12 = arith.maximumf %10, %11 : vector<222x16xf32>
    %13 = vector.extract_strided_slice %12 {offsets = [0, 0], sizes = [205, 16], strides = [1, 1]} : vector<222x16xf32> to vector<205x16xf32>
    %14 = vector.extract_strided_slice %12 {offsets = [16, 0], sizes = [205, 16], strides = [1, 1]} : vector<222x16xf32> to vector<205x16xf32>
    %15 = arith.maximumf %13, %14 : vector<205x16xf32>
    %16 = vector.extract_strided_slice %15 {offsets = [0, 0], sizes = [13, 16], strides = [1, 1]} : vector<205x16xf32> to vector<13x16xf32>
    %c17 = arith.constant 17 : index
    %c0_9 = arith.constant 0 : index
    %17 = vector.load %arg10[%c17, %c0_9] : memref<512x16xf32, #tpu.memory_space<vmem>>, vector<13x16xf32>
    tpu.vector_store %arg10[%c17, %c0_9], %16 {strides = array<i32>} : memref<512x16xf32, #tpu.memory_space<vmem>>, vector<13x16xf32>,
    %18 = vector.extract_strided_slice %15 {offsets = [16, 0], sizes = [13, 16], strides = [1, 1]} : vector<205x16xf32> to vector<13x16xf32>
    %c33 = arith.constant 33 : index
    %c0_10 = arith.constant 0 : index
    %19 = vector.load %arg10[%c33, %c0_10] : memref<512x16xf32, #tpu.memory_space<vmem>>, vector<13x16xf32>
    tpu.vector_store %arg10[%c33, %c0_10], %18 {strides = array<i32>} : memref<512x16xf32, #tpu.memory_space<vmem>>, vector<13x16xf32>,
    %20 = vector.extract_strided_slice %15 {offsets = [32, 0], sizes = [13, 16], strides = [1, 1]} : vector<205x16xf32> to vector<13x16xf32>
    %c49 = arith.constant 49 : index
    %c0_11 = arith.constant 0 : index
    %21 = vector.load %arg10[%c49, %c0_11] : memref<512x16xf32, #tpu.memory_space<vmem>>, vector<13x16xf32>
    tpu.vector_store %arg10[%c49, %c0_11], %20 {strides = array<i32>} : memref<512x16xf32, #tpu.memory_space<vmem>>, vector<13x16xf32>,
    %22 = vector.extract_strided_slice %15 {offsets = [48, 0], sizes = [13, 16], strides = [1, 1]} : vector<205x16xf32> to vector<13x16xf32>
    %c65 = arith.constant 65 : index
    %c0_12 = arith.constant 0 : index
    %23 = vector.load %arg10[%c65, %c0_12] : memref<512x16xf32, #tpu.memory_space<vmem>>, vector<13x16xf32>
    tpu.vector_store %arg10[%c65, %c0_12], %22 {strides = array<i32>} : memref<512x16xf32, #tpu.memory_space<vmem>>, vector<13x16xf32>,
    %24 = vector.extract_strided_slice %15 {offsets = [64, 0], sizes = [13, 16], strides = [1, 1]} : vector<205x16xf32> to vector<13x16xf32>
    %c81 = arith.constant 81 : index
    %c0_13 = arith.constant 0 : index
    %25 = vector.load %arg10[%c81, %c0_13] : memref<512x16xf32, #tpu.memory_space<vmem>>, vector<13x16xf32>
    tpu.vector_store %arg10[%c81, %c0_13], %24 {strides = array<i32>} : memref<512x16xf32, #tpu.memory_space<vmem>>, vector<13x16xf32>,
    %26 = vector.extract_strided_slice %15 {offsets = [80, 0], sizes = [13, 16], strides = [1, 1]} : vector<205x16xf32> to vector<13x16xf32>
    %c97 = arith.constant 97 : index
    %c0_14 = arith.constant 0 : index
    %27 = vector.load %arg10[%c97, %c0_14] : memref<512x16xf32, #tpu.memory_space<vmem>>, vector<13x16xf32>
    tpu.vector_store %arg10[%c97, %c0_14], %26 {strides = array<i32>} : memref<512x16xf32, #tpu.memory_space<vmem>>, vector<13x16xf32>,
    %28 = vector.extract_strided_slice %15 {offsets = [96, 0], sizes = [13, 16], strides = [1, 1]} : vector<205x16xf32> to vector<13x16xf32>
    %c113 = arith.constant 113 : index
    %c0_15 = arith.constant 0 : index
    %29 = vector.load %arg10[%c113, %c0_15] : memref<512x16xf32, #tpu.memory_space<vmem>>, vector<13x16xf32>
    tpu.vector_store %arg10[%c113, %c0_15], %28 {strides = array<i32>} : memref<512x16xf32, #tpu.memory_space<vmem>>, vector<13x16xf32>,
    %30 = vector.extract_strided_slice %15 {offsets = [112, 0], sizes = [13, 16], strides = [1, 1]} : vector<205x16xf32> to vector<13x16xf32>
    %c129 = arith.constant 129 : index
    %c0_16 = arith.constant 0 : index
    %31 = vector.load %arg10[%c129, %c0_16] : memref<512x16xf32, #tpu.memory_space<vmem>>, vector<13x16xf32>
    tpu.vector_store %arg10[%c129, %c0_16], %30 {strides = array<i32>} : memref<512x16xf32, #tpu.memory_space<vmem>>, vector<13x16xf32>,
    %32 = vector.extract_strided_slice %15 {offsets = [128, 0], sizes = [13, 16], strides = [1, 1]} : vector<205x16xf32> to vector<13x16xf32>
    %c145 = arith.constant 145 : index
    %c0_17 = arith.constant 0 : index
    %33 = vector.load %arg10[%c145, %c0_17] : memref<512x16xf32, #tpu.memory_space<vmem>>, vector<13x16xf32>
    tpu.vector_store %arg10[%c145, %c0_17], %32 {strides = array<i32>} : memref<512x16xf32, #tpu.memory_space<vmem>>, vector<13x16xf32>,
    %34 = vector.extract_strided_slice %15 {offsets = [144, 0], sizes = [13, 16], strides = [1, 1]} : vector<205x16xf32> to vector<13x16xf32>
    %c161 = arith.constant 161 : index
    %c0_18 = arith.constant 0 : index
    %35 = vector.load %arg10[%c161, %c0_18] : memref<512x16xf32, #tpu.memory_space<vmem>>, vector<13x16xf32>
    tpu.vector_store %arg10[%c161, %c0_18], %34 {strides = array<i32>} : memref<512x16xf32, #tpu.memory_space<vmem>>, vector<13x16xf32>,
    %36 = vector.extract_strided_slice %15 {offsets = [160, 0], sizes = [13, 16], strides = [1, 1]} : vector<205x16xf32> to vector<13x16xf32>
    %c177 = arith.constant 177 : index
    %c0_19 = arith.constant 0 : index
    %37 = vector.load %arg10[%c177, %c0_19] : memref<512x16xf32, #tpu.memory_space<vmem>>, vector<13x16xf32>
    tpu.vector_store %arg10[%c177, %c0_19], %36 {strides = array<i32>} : memref<512x16xf32, #tpu.memory_space<vmem>>, vector<13x16xf32>,
    %38 = vector.extract_strided_slice %15 {offsets = [176, 0], sizes = [13, 16], strides = [1, 1]} : vector<205x16xf32> to vector<13x16xf32>
    %c193 = arith.constant 193 : index
    %c0_20 = arith.constant 0 : index
    %39 = vector.load %arg10[%c193, %c0_20] : memref<512x16xf32, #tpu.memory_space<vmem>>, vector<13x16xf32>
    tpu.vector_store %arg10[%c193, %c0_20], %38 {strides = array<i32>} : memref<512x16xf32, #tpu.memory_space<vmem>>, vector<13x16xf32>,
    %40 = vector.extract_strided_slice %15 {offsets = [192, 0], sizes = [13, 16], strides = [1, 1]} : vector<205x16xf32> to vector<13x16xf32>
    %c209 = arith.constant 209 : index
    %c0_21 = arith.constant 0 : index
    %41 = vector.load %arg10[%c209, %c0_21] : memref<512x16xf32, #tpu.memory_space<vmem>>, vector<13x16xf32>
    tpu.vector_store %arg10[%c209, %c0_21], %40 {strides = array<i32>} : memref<512x16xf32, #tpu.memory_space<vmem>>, vector<13x16xf32>,
    %c256 = arith.constant 256 : index
    %c0_22 = arith.constant 0 : index
    %42 = vector.load %arg0[%c256, %c0_22] : memref<512x64xf32, #tpu.memory_space<vmem>>, vector<256x64xf32>
    %cst_23 = arith.constant dense<0.000000e+00> : vector<256x16xf32>
    %43 = tpu.matmul %42, %2, %cst_23 {dimension_numbers = #tpu.dot_dimension_numbers<[1], [0], [0], [1], [0, 0, 1, 1], [], []>} : vector<256x64xf32>, vector<64x16xf32>, vector<256x16xf32> -> vector<256x16xf32>
    %44 = vector.broadcast %3 : vector<1x16xf32> to vector<256x16xf32>
    %45 = arith.addf %43, %44 : vector<256x16xf32>
    %cst_24 = arith.constant 0.000000e+00 : f32
    %46 = vector.broadcast %cst_24 : f32 to vector<256x16xf32>
    %47 = arith.maximumf %45, %46 : vector<256x16xf32>
    %48 = vector.extract_strided_slice %47 {offsets = [0, 0], sizes = [222, 16], strides = [1, 1]} : vector<256x16xf32> to vector<222x16xf32>
    %49 = vector.extract_strided_slice %47 {offsets = [1, 0], sizes = [222, 16], strides = [1, 1]} : vector<256x16xf32> to vector<222x16xf32>
    %50 = arith.maximumf %48, %49 : vector<222x16xf32>
    %51 = vector.extract_strided_slice %50 {offsets = [0, 0], sizes = [205, 16], strides = [1, 1]} : vector<222x16xf32> to vector<205x16xf32>
    %52 = vector.extract_strided_slice %50 {offsets = [16, 0], sizes = [205, 16], strides = [1, 1]} : vector<222x16xf32> to vector<205x16xf32>
    %53 = arith.maximumf %51, %52 : vector<205x16xf32>
    %54 = vector.extract_strided_slice %53 {offsets = [0, 0], sizes = [13, 16], strides = [1, 1]} : vector<205x16xf32> to vector<13x16xf32>
    %c273 = arith.constant 273 : index
    %c0_25 = arith.constant 0 : index
    %55 = vector.load %arg10[%c273, %c0_25] : memref<512x16xf32, #tpu.memory_space<vmem>>, vector<13x16xf32>
    tpu.vector_store %arg10[%c273, %c0_25], %54 {strides = array<i32>} : memref<512x16xf32, #tpu.memory_space<vmem>>, vector<13x16xf32>,
    %56 = vector.extract_strided_slice %53 {offsets = [16, 0], sizes = [13, 16], strides = [1, 1]} : vector<205x16xf32> to vector<13x16xf32>
    %c289 = arith.constant 289 : index
    %c0_26 = arith.constant 0 : index
    %57 = vector.load %arg10[%c289, %c0_26] : memref<512x16xf32, #tpu.memory_space<vmem>>, vector<13x16xf32>
    tpu.vector_store %arg10[%c289, %c0_26], %56 {strides = array<i32>} : memref<512x16xf32, #tpu.memory_space<vmem>>, vector<13x16xf32>,
    %58 = vector.extract_strided_slice %53 {offsets = [32, 0], sizes = [13, 16], strides = [1, 1]} : vector<205x16xf32> to vector<13x16xf32>
    %c305 = arith.constant 305 : index
    %c0_27 = arith.constant 0 : index
    %59 = vector.load %arg10[%c305, %c0_27] : memref<512x16xf32, #tpu.memory_space<vmem>>, vector<13x16xf32>
    tpu.vector_store %arg10[%c305, %c0_27], %58 {strides = array<i32>} : memref<512x16xf32, #tpu.memory_space<vmem>>, vector<13x16xf32>,
    %60 = vector.extract_strided_slice %53 {offsets = [48, 0], sizes = [13, 16], strides = [1, 1]} : vector<205x16xf32> to vector<13x16xf32>
    %c321 = arith.constant 321 : index
    %c0_28 = arith.constant 0 : index
    %61 = vector.load %arg10[%c321, %c0_28] : memref<512x16xf32, #tpu.memory_space<vmem>>, vector<13x16xf32>
    tpu.vector_store %arg10[%c321, %c0_28], %60 {strides = array<i32>} : memref<512x16xf32, #tpu.memory_space<vmem>>, vector<13x16xf32>,
    %62 = vector.extract_strided_slice %53 {offsets = [64, 0], sizes = [13, 16], strides = [1, 1]} : vector<205x16xf32> to vector<13x16xf32>
    %c337 = arith.constant 337 : index
    %c0_29 = arith.constant 0 : index
    %63 = vector.load %arg10[%c337, %c0_29] : memref<512x16xf32, #tpu.memory_space<vmem>>, vector<13x16xf32>
    tpu.vector_store %arg10[%c337, %c0_29], %62 {strides = array<i32>} : memref<512x16xf32, #tpu.memory_space<vmem>>, vector<13x16xf32>,
    %64 = vector.extract_strided_slice %53 {offsets = [80, 0], sizes = [13, 16], strides = [1, 1]} : vector<205x16xf32> to vector<13x16xf32>
    %c353 = arith.constant 353 : index
    %c0_30 = arith.constant 0 : index
    %65 = vector.load %arg10[%c353, %c0_30] : memref<512x16xf32, #tpu.memory_space<vmem>>, vector<13x16xf32>
    tpu.vector_store %arg10[%c353, %c0_30], %64 {strides = array<i32>} : memref<512x16xf32, #tpu.memory_space<vmem>>, vector<13x16xf32>,
    %66 = vector.extract_strided_slice %53 {offsets = [96, 0], sizes = [13, 16], strides = [1, 1]} : vector<205x16xf32> to vector<13x16xf32>
    %c369 = arith.constant 369 : index
    %c0_31 = arith.constant 0 : index
    %67 = vector.load %arg10[%c369, %c0_31] : memref<512x16xf32, #tpu.memory_space<vmem>>, vector<13x16xf32>
    tpu.vector_store %arg10[%c369, %c0_31], %66 {strides = array<i32>} : memref<512x16xf32, #tpu.memory_space<vmem>>, vector<13x16xf32>,
    %68 = vector.extract_strided_slice %53 {offsets = [112, 0], sizes = [13, 16], strides = [1, 1]} : vector<205x16xf32> to vector<13x16xf32>
    %c385 = arith.constant 385 : index
    %c0_32 = arith.constant 0 : index
    %69 = vector.load %arg10[%c385, %c0_32] : memref<512x16xf32, #tpu.memory_space<vmem>>, vector<13x16xf32>
    tpu.vector_store %arg10[%c385, %c0_32], %68 {strides = array<i32>} : memref<512x16xf32, #tpu.memory_space<vmem>>, vector<13x16xf32>,
    %70 = vector.extract_strided_slice %53 {offsets = [128, 0], sizes = [13, 16], strides = [1, 1]} : vector<205x16xf32> to vector<13x16xf32>
    %c401 = arith.constant 401 : index
    %c0_33 = arith.constant 0 : index
    %71 = vector.load %arg10[%c401, %c0_33] : memref<512x16xf32, #tpu.memory_space<vmem>>, vector<13x16xf32>
    tpu.vector_store %arg10[%c401, %c0_33], %70 {strides = array<i32>} : memref<512x16xf32, #tpu.memory_space<vmem>>, vector<13x16xf32>,
    %72 = vector.extract_strided_slice %53 {offsets = [144, 0], sizes = [13, 16], strides = [1, 1]} : vector<205x16xf32> to vector<13x16xf32>
    %c417 = arith.constant 417 : index
    %c0_34 = arith.constant 0 : index
    %73 = vector.load %arg10[%c417, %c0_34] : memref<512x16xf32, #tpu.memory_space<vmem>>, vector<13x16xf32>
    tpu.vector_store %arg10[%c417, %c0_34], %72 {strides = array<i32>} : memref<512x16xf32, #tpu.memory_space<vmem>>, vector<13x16xf32>,
    %74 = vector.extract_strided_slice %53 {offsets = [160, 0], sizes = [13, 16], strides = [1, 1]} : vector<205x16xf32> to vector<13x16xf32>
    %c433 = arith.constant 433 : index
    %c0_35 = arith.constant 0 : index
    %75 = vector.load %arg10[%c433, %c0_35] : memref<512x16xf32, #tpu.memory_space<vmem>>, vector<13x16xf32>
    tpu.vector_store %arg10[%c433, %c0_35], %74 {strides = array<i32>} : memref<512x16xf32, #tpu.memory_space<vmem>>, vector<13x16xf32>,
    %76 = vector.extract_strided_slice %53 {offsets = [176, 0], sizes = [13, 16], strides = [1, 1]} : vector<205x16xf32> to vector<13x16xf32>
    %c449 = arith.constant 449 : index
    %c0_36 = arith.constant 0 : index
    %77 = vector.load %arg10[%c449, %c0_36] : memref<512x16xf32, #tpu.memory_space<vmem>>, vector<13x16xf32>
    tpu.vector_store %arg10[%c449, %c0_36], %76 {strides = array<i32>} : memref<512x16xf32, #tpu.memory_space<vmem>>, vector<13x16xf32>,
    %78 = vector.extract_strided_slice %53 {offsets = [192, 0], sizes = [13, 16], strides = [1, 1]} : vector<205x16xf32> to vector<13x16xf32>
    %c465 = arith.constant 465 : index
    %c0_37 = arith.constant 0 : index
    %79 = vector.load %arg10[%c465, %c0_37] : memref<512x16xf32, #tpu.memory_space<vmem>>, vector<13x16xf32>
    tpu.vector_store %arg10[%c465, %c0_37], %78 {strides = array<i32>} : memref<512x16xf32, #tpu.memory_space<vmem>>, vector<13x16xf32>,
    %c0_38 = arith.constant 0 : index
    %c0_39 = arith.constant 0 : index
    %80 = vector.load %arg4[%c0_38, %c0_39] : memref<1x32xf32, #tpu.memory_space<vmem>>, vector<1x32xf32>
    %cst_40 = arith.constant 0.000000e+00 : f32
    %81 = vector.broadcast %cst_40 : f32 to vector<171x32xf32>
    %c0_41 = arith.constant 0 : index
    %c0_42 = arith.constant 0 : index
    %82 = vector.load %arg10[%c0_41, %c0_42] : memref<512x16xf32, #tpu.memory_space<vmem>>, vector<171x16xf32>
    %c0_43 = arith.constant 0 : index
    %c0_44 = arith.constant 0 : index
    %83 = vector.load %arg3[%c0_43, %c0_44] : memref<256x32xf32, #tpu.memory_space<vmem>>, vector<16x32xf32>
    %cst_45 = arith.constant dense<0.000000e+00> : vector<171x32xf32>
    %84 = tpu.matmul %82, %83, %cst_45 {dimension_numbers = #tpu.dot_dimension_numbers<[1], [0], [0], [1], [0, 0, 1, 1], [], []>} : vector<171x16xf32>, vector<16x32xf32>, vector<171x32xf32> -> vector<171x32xf32>
    %85 = arith.addf %81, %84 : vector<171x32xf32>
    %c1 = arith.constant 1 : index
    %c0_46 = arith.constant 0 : index
    %86 = vector.load %arg10[%c1, %c0_46] : memref<512x16xf32, #tpu.memory_space<vmem>>, vector<171x16xf32>
    %c16 = arith.constant 16 : index
    %c0_47 = arith.constant 0 : index
    %87 = vector.load %arg3[%c16, %c0_47] : memref<256x32xf32, #tpu.memory_space<vmem>>, vector<16x32xf32>
    %cst_48 = arith.constant dense<0.000000e+00> : vector<171x32xf32>
    %88 = tpu.matmul %86, %87, %cst_48 {dimension_numbers = #tpu.dot_dimension_numbers<[1], [0], [0], [1], [0, 0, 1, 1], [], []>} : vector<171x16xf32>, vector<16x32xf32>, vector<171x32xf32> -> vector<171x32xf32>
    %89 = arith.addf %85, %88 : vector<171x32xf32>
    %c2 = arith.constant 2 : index
    %c0_49 = arith.constant 0 : index
    %90 = vector.load %arg10[%c2, %c0_49] : memref<512x16xf32, #tpu.memory_space<vmem>>, vector<171x16xf32>
    %c32 = arith.constant 32 : index
    %c0_50 = arith.constant 0 : index
    %91 = vector.load %arg3[%c32, %c0_50] : memref<256x32xf32, #tpu.memory_space<vmem>>, vector<16x32xf32>
    %cst_51 = arith.constant dense<0.000000e+00> : vector<171x32xf32>
    %92 = tpu.matmul %90, %91, %cst_51 {dimension_numbers = #tpu.dot_dimension_numbers<[1], [0], [0], [1], [0, 0, 1, 1], [], []>} : vector<171x16xf32>, vector<16x32xf32>, vector<171x32xf32> -> vector<171x32xf32>
    %93 = arith.addf %89, %92 : vector<171x32xf32>
    %c3 = arith.constant 3 : index
    %c0_52 = arith.constant 0 : index
    %94 = vector.load %arg10[%c3, %c0_52] : memref<512x16xf32, #tpu.memory_space<vmem>>, vector<171x16xf32>
    %c48 = arith.constant 48 : index
    %c0_53 = arith.constant 0 : index
    %95 = vector.load %arg3[%c48, %c0_53] : memref<256x32xf32, #tpu.memory_space<vmem>>, vector<16x32xf32>
    %cst_54 = arith.constant dense<0.000000e+00> : vector<171x32xf32>
    %96 = tpu.matmul %94, %95, %cst_54 {dimension_numbers = #tpu.dot_dimension_numbers<[1], [0], [0], [1], [0, 0, 1, 1], [], []>} : vector<171x16xf32>, vector<16x32xf32>, vector<171x32xf32> -> vector<171x32xf32>
    %97 = arith.addf %93, %96 : vector<171x32xf32>
    %c16_55 = arith.constant 16 : index
    %c0_56 = arith.constant 0 : index
    %98 = vector.load %arg10[%c16_55, %c0_56] : memref<512x16xf32, #tpu.memory_space<vmem>>, vector<171x16xf32>
    %c64 = arith.constant 64 : index
    %c0_57 = arith.constant 0 : index
    %99 = vector.load %arg3[%c64, %c0_57] : memref<256x32xf32, #tpu.memory_space<vmem>>, vector<16x32xf32>
    %cst_58 = arith.constant dense<0.000000e+00> : vector<171x32xf32>
    %100 = tpu.matmul %98, %99, %cst_58 {dimension_numbers = #tpu.dot_dimension_numbers<[1], [0], [0], [1], [0, 0, 1, 1], [], []>} : vector<171x16xf32>, vector<16x32xf32>, vector<171x32xf32> -> vector<171x32xf32>
    %101 = arith.addf %97, %100 : vector<171x32xf32>
    %c17_59 = arith.constant 17 : index
    %c0_60 = arith.constant 0 : index
    %102 = vector.load %arg10[%c17_59, %c0_60] : memref<512x16xf32, #tpu.memory_space<vmem>>, vector<171x16xf32>
    %c80 = arith.constant 80 : index
    %c0_61 = arith.constant 0 : index
    %103 = vector.load %arg3[%c80, %c0_61] : memref<256x32xf32, #tpu.memory_space<vmem>>, vector<16x32xf32>
    %cst_62 = arith.constant dense<0.000000e+00> : vector<171x32xf32>
    %104 = tpu.matmul %102, %103, %cst_62 {dimension_numbers = #tpu.dot_dimension_numbers<[1], [0], [0], [1], [0, 0, 1, 1], [], []>} : vector<171x16xf32>, vector<16x32xf32>, vector<171x32xf32> -> vector<171x32xf32>
    %105 = arith.addf %101, %104 : vector<171x32xf32>
    %c18 = arith.constant 18 : index
    %c0_63 = arith.constant 0 : index
    %106 = vector.load %arg10[%c18, %c0_63] : memref<512x16xf32, #tpu.memory_space<vmem>>, vector<171x16xf32>
    %c96 = arith.constant 96 : index
    %c0_64 = arith.constant 0 : index
    %107 = vector.load %arg3[%c96, %c0_64] : memref<256x32xf32, #tpu.memory_space<vmem>>, vector<16x32xf32>
    %cst_65 = arith.constant dense<0.000000e+00> : vector<171x32xf32>
    %108 = tpu.matmul %106, %107, %cst_65 {dimension_numbers = #tpu.dot_dimension_numbers<[1], [0], [0], [1], [0, 0, 1, 1], [], []>} : vector<171x16xf32>, vector<16x32xf32>, vector<171x32xf32> -> vector<171x32xf32>
    %109 = arith.addf %105, %108 : vector<171x32xf32>
    %c19 = arith.constant 19 : index
    %c0_66 = arith.constant 0 : index
    %110 = vector.load %arg10[%c19, %c0_66] : memref<512x16xf32, #tpu.memory_space<vmem>>, vector<171x16xf32>
    %c112 = arith.constant 112 : index
    %c0_67 = arith.constant 0 : index
    %111 = vector.load %arg3[%c112, %c0_67] : memref<256x32xf32, #tpu.memory_space<vmem>>, vector<16x32xf32>
    %cst_68 = arith.constant dense<0.000000e+00> : vector<171x32xf32>
    %112 = tpu.matmul %110, %111, %cst_68 {dimension_numbers = #tpu.dot_dimension_numbers<[1], [0], [0], [1], [0, 0, 1, 1], [], []>} : vector<171x16xf32>, vector<16x32xf32>, vector<171x32xf32> -> vector<171x32xf32>
    %113 = arith.addf %109, %112 : vector<171x32xf32>
    %c32_69 = arith.constant 32 : index
    %c0_70 = arith.constant 0 : index
    %114 = vector.load %arg10[%c32_69, %c0_70] : memref<512x16xf32, #tpu.memory_space<vmem>>, vector<171x16xf32>
    %c128 = arith.constant 128 : index
    %c0_71 = arith.constant 0 : index
    %115 = vector.load %arg3[%c128, %c0_71] : memref<256x32xf32, #tpu.memory_space<vmem>>, vector<16x32xf32>
    %cst_72 = arith.constant dense<0.000000e+00> : vector<171x32xf32>
    %116 = tpu.matmul %114, %115, %cst_72 {dimension_numbers = #tpu.dot_dimension_numbers<[1], [0], [0], [1], [0, 0, 1, 1], [], []>} : vector<171x16xf32>, vector<16x32xf32>, vector<171x32xf32> -> vector<171x32xf32>
    %117 = arith.addf %113, %116 : vector<171x32xf32>
    %c33_73 = arith.constant 33 : index
    %c0_74 = arith.constant 0 : index
    %118 = vector.load %arg10[%c33_73, %c0_74] : memref<512x16xf32, #tpu.memory_space<vmem>>, vector<171x16xf32>
    %c144 = arith.constant 144 : index
    %c0_75 = arith.constant 0 : index
    %119 = vector.load %arg3[%c144, %c0_75] : memref<256x32xf32, #tpu.memory_space<vmem>>, vector<16x32xf32>
    %cst_76 = arith.constant dense<0.000000e+00> : vector<171x32xf32>
    %120 = tpu.matmul %118, %119, %cst_76 {dimension_numbers = #tpu.dot_dimension_numbers<[1], [0], [0], [1], [0, 0, 1, 1], [], []>} : vector<171x16xf32>, vector<16x32xf32>, vector<171x32xf32> -> vector<171x32xf32>
    %121 = arith.addf %117, %120 : vector<171x32xf32>
    %c34 = arith.constant 34 : index
    %c0_77 = arith.constant 0 : index
    %122 = vector.load %arg10[%c34, %c0_77] : memref<512x16xf32, #tpu.memory_space<vmem>>, vector<171x16xf32>
    %c160 = arith.constant 160 : index
    %c0_78 = arith.constant 0 : index
    %123 = vector.load %arg3[%c160, %c0_78] : memref<256x32xf32, #tpu.memory_space<vmem>>, vector<16x32xf32>
    %cst_79 = arith.constant dense<0.000000e+00> : vector<171x32xf32>
    %124 = tpu.matmul %122, %123, %cst_79 {dimension_numbers = #tpu.dot_dimension_numbers<[1], [0], [0], [1], [0, 0, 1, 1], [], []>} : vector<171x16xf32>, vector<16x32xf32>, vector<171x32xf32> -> vector<171x32xf32>
    %125 = arith.addf %121, %124 : vector<171x32xf32>
    %c35 = arith.constant 35 : index
    %c0_80 = arith.constant 0 : index
    %126 = vector.load %arg10[%c35, %c0_80] : memref<512x16xf32, #tpu.memory_space<vmem>>, vector<171x16xf32>
    %c176 = arith.constant 176 : index
    %c0_81 = arith.constant 0 : index
    %127 = vector.load %arg3[%c176, %c0_81] : memref<256x32xf32, #tpu.memory_space<vmem>>, vector<16x32xf32>
    %cst_82 = arith.constant dense<0.000000e+00> : vector<171x32xf32>
    %128 = tpu.matmul %126, %127, %cst_82 {dimension_numbers = #tpu.dot_dimension_numbers<[1], [0], [0], [1], [0, 0, 1, 1], [], []>} : vector<171x16xf32>, vector<16x32xf32>, vector<171x32xf32> -> vector<171x32xf32>
    %129 = arith.addf %125, %128 : vector<171x32xf32>
    %c48_83 = arith.constant 48 : index
    %c0_84 = arith.constant 0 : index
    %130 = vector.load %arg10[%c48_83, %c0_84] : memref<512x16xf32, #tpu.memory_space<vmem>>, vector<171x16xf32>
    %c192 = arith.constant 192 : index
    %c0_85 = arith.constant 0 : index
    %131 = vector.load %arg3[%c192, %c0_85] : memref<256x32xf32, #tpu.memory_space<vmem>>, vector<16x32xf32>
    %cst_86 = arith.constant dense<0.000000e+00> : vector<171x32xf32>
    %132 = tpu.matmul %130, %131, %cst_86 {dimension_numbers = #tpu.dot_dimension_numbers<[1], [0], [0], [1], [0, 0, 1, 1], [], []>} : vector<171x16xf32>, vector<16x32xf32>, vector<171x32xf32> -> vector<171x32xf32>
    %133 = arith.addf %129, %132 : vector<171x32xf32>
    %c49_87 = arith.constant 49 : index
    %c0_88 = arith.constant 0 : index
    %134 = vector.load %arg10[%c49_87, %c0_88] : memref<512x16xf32, #tpu.memory_space<vmem>>, vector<171x16xf32>
    %c208 = arith.constant 208 : index
    %c0_89 = arith.constant 0 : index
    %135 = vector.load %arg3[%c208, %c0_89] : memref<256x32xf32, #tpu.memory_space<vmem>>, vector<16x32xf32>
    %cst_90 = arith.constant dense<0.000000e+00> : vector<171x32xf32>
    %136 = tpu.matmul %134, %135, %cst_90 {dimension_numbers = #tpu.dot_dimension_numbers<[1], [0], [0], [1], [0, 0, 1, 1], [], []>} : vector<171x16xf32>, vector<16x32xf32>, vector<171x32xf32> -> vector<171x32xf32>
    %137 = arith.addf %133, %136 : vector<171x32xf32>
    %c50 = arith.constant 50 : index
    %c0_91 = arith.constant 0 : index
    %138 = vector.load %arg10[%c50, %c0_91] : memref<512x16xf32, #tpu.memory_space<vmem>>, vector<171x16xf32>
    %c224 = arith.constant 224 : index
    %c0_92 = arith.constant 0 : index
    %139 = vector.load %arg3[%c224, %c0_92] : memref<256x32xf32, #tpu.memory_space<vmem>>, vector<16x32xf32>
    %cst_93 = arith.constant dense<0.000000e+00> : vector<171x32xf32>
    %140 = tpu.matmul %138, %139, %cst_93 {dimension_numbers = #tpu.dot_dimension_numbers<[1], [0], [0], [1], [0, 0, 1, 1], [], []>} : vector<171x16xf32>, vector<16x32xf32>, vector<171x32xf32> -> vector<171x32xf32>
    %141 = arith.addf %137, %140 : vector<171x32xf32>
    %c51 = arith.constant 51 : index
    %c0_94 = arith.constant 0 : index
    %142 = vector.load %arg10[%c51, %c0_94] : memref<512x16xf32, #tpu.memory_space<vmem>>, vector<171x16xf32>
    %c240 = arith.constant 240 : index
    %c0_95 = arith.constant 0 : index
    %143 = vector.load %arg3[%c240, %c0_95] : memref<256x32xf32, #tpu.memory_space<vmem>>, vector<16x32xf32>
    %cst_96 = arith.constant dense<0.000000e+00> : vector<171x32xf32>
    %144 = tpu.matmul %142, %143, %cst_96 {dimension_numbers = #tpu.dot_dimension_numbers<[1], [0], [0], [1], [0, 0, 1, 1], [], []>} : vector<171x16xf32>, vector<16x32xf32>, vector<171x32xf32> -> vector<171x32xf32>
    %145 = arith.addf %141, %144 : vector<171x32xf32>
    %146 = vector.broadcast %80 : vector<1x32xf32> to vector<171x32xf32>
    %147 = arith.addf %145, %146 : vector<171x32xf32>
    %cst_97 = arith.constant 0.000000e+00 : f32
    %148 = vector.broadcast %cst_97 : f32 to vector<171x32xf32>
    %149 = arith.maximumf %147, %148 : vector<171x32xf32>
    %150 = vector.extract_strided_slice %149 {offsets = [0, 0], sizes = [169, 32], strides = [1, 1]} : vector<171x32xf32> to vector<169x32xf32>
    %151 = vector.extract_strided_slice %149 {offsets = [2, 0], sizes = [169, 32], strides = [1, 1]} : vector<171x32xf32> to vector<169x32xf32>
    %152 = arith.maximumf %150, %151 : vector<169x32xf32>
    %153 = vector.extract_strided_slice %152 {offsets = [0, 0], sizes = [137, 32], strides = [1, 1]} : vector<169x32xf32> to vector<137x32xf32>
    %154 = vector.extract_strided_slice %152 {offsets = [32, 0], sizes = [137, 32], strides = [1, 1]} : vector<169x32xf32> to vector<137x32xf32>
    %155 = arith.maximumf %153, %154 : vector<137x32xf32>
    %cst_98 = arith.constant 0.000000e+00 : f32
    %156 = vector.broadcast %cst_98 : f32 to vector<171x32xf32>
    %c256_99 = arith.constant 256 : index
    %c0_100 = arith.constant 0 : index
    %157 = vector.load %arg10[%c256_99, %c0_100] : memref<512x16xf32, #tpu.memory_space<vmem>>, vector<171x16xf32>
    %c0_101 = arith.constant 0 : index
    %c0_102 = arith.constant 0 : index
    %158 = vector.load %arg3[%c0_101, %c0_102] : memref<256x32xf32, #tpu.memory_space<vmem>>, vector<16x32xf32>
    %cst_103 = arith.constant dense<0.000000e+00> : vector<171x32xf32>
    %159 = tpu.matmul %157, %158, %cst_103 {dimension_numbers = #tpu.dot_dimension_numbers<[1], [0], [0], [1], [0, 0, 1, 1], [], []>} : vector<171x16xf32>, vector<16x32xf32>, vector<171x32xf32> -> vector<171x32xf32>
    %160 = arith.addf %156, %159 : vector<171x32xf32>
    %c257 = arith.constant 257 : index
    %c0_104 = arith.constant 0 : index
    %161 = vector.load %arg10[%c257, %c0_104] : memref<512x16xf32, #tpu.memory_space<vmem>>, vector<171x16xf32>
    %c16_105 = arith.constant 16 : index
    %c0_106 = arith.constant 0 : index
    %162 = vector.load %arg3[%c16_105, %c0_106] : memref<256x32xf32, #tpu.memory_space<vmem>>, vector<16x32xf32>
    %cst_107 = arith.constant dense<0.000000e+00> : vector<171x32xf32>
    %163 = tpu.matmul %161, %162, %cst_107 {dimension_numbers = #tpu.dot_dimension_numbers<[1], [0], [0], [1], [0, 0, 1, 1], [], []>} : vector<171x16xf32>, vector<16x32xf32>, vector<171x32xf32> -> vector<171x32xf32>
    %164 = arith.addf %160, %163 : vector<171x32xf32>
    %c258 = arith.constant 258 : index
    %c0_108 = arith.constant 0 : index
    %165 = vector.load %arg10[%c258, %c0_108] : memref<512x16xf32, #tpu.memory_space<vmem>>, vector<171x16xf32>
    %c32_109 = arith.constant 32 : index
    %c0_110 = arith.constant 0 : index
    %166 = vector.load %arg3[%c32_109, %c0_110] : memref<256x32xf32, #tpu.memory_space<vmem>>, vector<16x32xf32>
    %cst_111 = arith.constant dense<0.000000e+00> : vector<171x32xf32>
    %167 = tpu.matmul %165, %166, %cst_111 {dimension_numbers = #tpu.dot_dimension_numbers<[1], [0], [0], [1], [0, 0, 1, 1], [], []>} : vector<171x16xf32>, vector<16x32xf32>, vector<171x32xf32> -> vector<171x32xf32>
    %168 = arith.addf %164, %167 : vector<171x32xf32>
    %c259 = arith.constant 259 : index
    %c0_112 = arith.constant 0 : index
    %169 = vector.load %arg10[%c259, %c0_112] : memref<512x16xf32, #tpu.memory_space<vmem>>, vector<171x16xf32>
    %c48_113 = arith.constant 48 : index
    %c0_114 = arith.constant 0 : index
    %170 = vector.load %arg3[%c48_113, %c0_114] : memref<256x32xf32, #tpu.memory_space<vmem>>, vector<16x32xf32>
    %cst_115 = arith.constant dense<0.000000e+00> : vector<171x32xf32>
    %171 = tpu.matmul %169, %170, %cst_115 {dimension_numbers = #tpu.dot_dimension_numbers<[1], [0], [0], [1], [0, 0, 1, 1], [], []>} : vector<171x16xf32>, vector<16x32xf32>, vector<171x32xf32> -> vector<171x32xf32>
    %172 = arith.addf %168, %171 : vector<171x32xf32>
    %c272 = arith.constant 272 : index
    %c0_116 = arith.constant 0 : index
    %173 = vector.load %arg10[%c272, %c0_116] : memref<512x16xf32, #tpu.memory_space<vmem>>, vector<171x16xf32>
    %c64_117 = arith.constant 64 : index
    %c0_118 = arith.constant 0 : index
    %174 = vector.load %arg3[%c64_117, %c0_118] : memref<256x32xf32, #tpu.memory_space<vmem>>, vector<16x32xf32>
    %cst_119 = arith.constant dense<0.000000e+00> : vector<171x32xf32>
    %175 = tpu.matmul %173, %174, %cst_119 {dimension_numbers = #tpu.dot_dimension_numbers<[1], [0], [0], [1], [0, 0, 1, 1], [], []>} : vector<171x16xf32>, vector<16x32xf32>, vector<171x32xf32> -> vector<171x32xf32>
    %176 = arith.addf %172, %175 : vector<171x32xf32>
    %c273_120 = arith.constant 273 : index
    %c0_121 = arith.constant 0 : index
    %177 = vector.load %arg10[%c273_120, %c0_121] : memref<512x16xf32, #tpu.memory_space<vmem>>, vector<171x16xf32>
    %c80_122 = arith.constant 80 : index
    %c0_123 = arith.constant 0 : index
    %178 = vector.load %arg3[%c80_122, %c0_123] : memref<256x32xf32, #tpu.memory_space<vmem>>, vector<16x32xf32>
    %cst_124 = arith.constant dense<0.000000e+00> : vector<171x32xf32>
    %179 = tpu.matmul %177, %178, %cst_124 {dimension_numbers = #tpu.dot_dimension_numbers<[1], [0], [0], [1], [0, 0, 1, 1], [], []>} : vector<171x16xf32>, vector<16x32xf32>, vector<171x32xf32> -> vector<171x32xf32>
    %180 = arith.addf %176, %179 : vector<171x32xf32>
    %c274 = arith.constant 274 : index
    %c0_125 = arith.constant 0 : index
    %181 = vector.load %arg10[%c274, %c0_125] : memref<512x16xf32, #tpu.memory_space<vmem>>, vector<171x16xf32>
    %c96_126 = arith.constant 96 : index
    %c0_127 = arith.constant 0 : index
    %182 = vector.load %arg3[%c96_126, %c0_127] : memref<256x32xf32, #tpu.memory_space<vmem>>, vector<16x32xf32>
    %cst_128 = arith.constant dense<0.000000e+00> : vector<171x32xf32>
    %183 = tpu.matmul %181, %182, %cst_128 {dimension_numbers = #tpu.dot_dimension_numbers<[1], [0], [0], [1], [0, 0, 1, 1], [], []>} : vector<171x16xf32>, vector<16x32xf32>, vector<171x32xf32> -> vector<171x32xf32>
    %184 = arith.addf %180, %183 : vector<171x32xf32>
    %c275 = arith.constant 275 : index
    %c0_129 = arith.constant 0 : index
    %185 = vector.load %arg10[%c275, %c0_129] : memref<512x16xf32, #tpu.memory_space<vmem>>, vector<171x16xf32>
    %c112_130 = arith.constant 112 : index
    %c0_131 = arith.constant 0 : index
    %186 = vector.load %arg3[%c112_130, %c0_131] : memref<256x32xf32, #tpu.memory_space<vmem>>, vector<16x32xf32>
    %cst_132 = arith.constant dense<0.000000e+00> : vector<171x32xf32>
    %187 = tpu.matmul %185, %186, %cst_132 {dimension_numbers = #tpu.dot_dimension_numbers<[1], [0], [0], [1], [0, 0, 1, 1], [], []>} : vector<171x16xf32>, vector<16x32xf32>, vector<171x32xf32> -> vector<171x32xf32>
    %188 = arith.addf %184, %187 : vector<171x32xf32>
    %c288 = arith.constant 288 : index
    %c0_133 = arith.constant 0 : index
    %189 = vector.load %arg10[%c288, %c0_133] : memref<512x16xf32, #tpu.memory_space<vmem>>, vector<171x16xf32>
    %c128_134 = arith.constant 128 : index
    %c0_135 = arith.constant 0 : index
    %190 = vector.load %arg3[%c128_134, %c0_135] : memref<256x32xf32, #tpu.memory_space<vmem>>, vector<16x32xf32>
    %cst_136 = arith.constant dense<0.000000e+00> : vector<171x32xf32>
    %191 = tpu.matmul %189, %190, %cst_136 {dimension_numbers = #tpu.dot_dimension_numbers<[1], [0], [0], [1], [0, 0, 1, 1], [], []>} : vector<171x16xf32>, vector<16x32xf32>, vector<171x32xf32> -> vector<171x32xf32>
    %192 = arith.addf %188, %191 : vector<171x32xf32>
    %c289_137 = arith.constant 289 : index
    %c0_138 = arith.constant 0 : index
    %193 = vector.load %arg10[%c289_137, %c0_138] : memref<512x16xf32, #tpu.memory_space<vmem>>, vector<171x16xf32>
    %c144_139 = arith.constant 144 : index
    %c0_140 = arith.constant 0 : index
    %194 = vector.load %arg3[%c144_139, %c0_140] : memref<256x32xf32, #tpu.memory_space<vmem>>, vector<16x32xf32>
    %cst_141 = arith.constant dense<0.000000e+00> : vector<171x32xf32>
    %195 = tpu.matmul %193, %194, %cst_141 {dimension_numbers = #tpu.dot_dimension_numbers<[1], [0], [0], [1], [0, 0, 1, 1], [], []>} : vector<171x16xf32>, vector<16x32xf32>, vector<171x32xf32> -> vector<171x32xf32>
    %196 = arith.addf %192, %195 : vector<171x32xf32>
    %c290 = arith.constant 290 : index
    %c0_142 = arith.constant 0 : index
    %197 = vector.load %arg10[%c290, %c0_142] : memref<512x16xf32, #tpu.memory_space<vmem>>, vector<171x16xf32>
    %c160_143 = arith.constant 160 : index
    %c0_144 = arith.constant 0 : index
    %198 = vector.load %arg3[%c160_143, %c0_144] : memref<256x32xf32, #tpu.memory_space<vmem>>, vector<16x32xf32>
    %cst_145 = arith.constant dense<0.000000e+00> : vector<171x32xf32>
    %199 = tpu.matmul %197, %198, %cst_145 {dimension_numbers = #tpu.dot_dimension_numbers<[1], [0], [0], [1], [0, 0, 1, 1], [], []>} : vector<171x16xf32>, vector<16x32xf32>, vector<171x32xf32> -> vector<171x32xf32>
    %200 = arith.addf %196, %199 : vector<171x32xf32>
    %c291 = arith.constant 291 : index
    %c0_146 = arith.constant 0 : index
    %201 = vector.load %arg10[%c291, %c0_146] : memref<512x16xf32, #tpu.memory_space<vmem>>, vector<171x16xf32>
    %c176_147 = arith.constant 176 : index
    %c0_148 = arith.constant 0 : index
    %202 = vector.load %arg3[%c176_147, %c0_148] : memref<256x32xf32, #tpu.memory_space<vmem>>, vector<16x32xf32>
    %cst_149 = arith.constant dense<0.000000e+00> : vector<171x32xf32>
    %203 = tpu.matmul %201, %202, %cst_149 {dimension_numbers = #tpu.dot_dimension_numbers<[1], [0], [0], [1], [0, 0, 1, 1], [], []>} : vector<171x16xf32>, vector<16x32xf32>, vector<171x32xf32> -> vector<171x32xf32>
    %204 = arith.addf %200, %203 : vector<171x32xf32>
    %c304 = arith.constant 304 : index
    %c0_150 = arith.constant 0 : index
    %205 = vector.load %arg10[%c304, %c0_150] : memref<512x16xf32, #tpu.memory_space<vmem>>, vector<171x16xf32>
    %c192_151 = arith.constant 192 : index
    %c0_152 = arith.constant 0 : index
    %206 = vector.load %arg3[%c192_151, %c0_152] : memref<256x32xf32, #tpu.memory_space<vmem>>, vector<16x32xf32>
    %cst_153 = arith.constant dense<0.000000e+00> : vector<171x32xf32>
    %207 = tpu.matmul %205, %206, %cst_153 {dimension_numbers = #tpu.dot_dimension_numbers<[1], [0], [0], [1], [0, 0, 1, 1], [], []>} : vector<171x16xf32>, vector<16x32xf32>, vector<171x32xf32> -> vector<171x32xf32>
    %208 = arith.addf %204, %207 : vector<171x32xf32>
    %c305_154 = arith.constant 305 : index
    %c0_155 = arith.constant 0 : index
    %209 = vector.load %arg10[%c305_154, %c0_155] : memref<512x16xf32, #tpu.memory_space<vmem>>, vector<171x16xf32>
    %c208_156 = arith.constant 208 : index
    %c0_157 = arith.constant 0 : index
    %210 = vector.load %arg3[%c208_156, %c0_157] : memref<256x32xf32, #tpu.memory_space<vmem>>, vector<16x32xf32>
    %cst_158 = arith.constant dense<0.000000e+00> : vector<171x32xf32>
    %211 = tpu.matmul %209, %210, %cst_158 {dimension_numbers = #tpu.dot_dimension_numbers<[1], [0], [0], [1], [0, 0, 1, 1], [], []>} : vector<171x16xf32>, vector<16x32xf32>, vector<171x32xf32> -> vector<171x32xf32>
    %212 = arith.addf %208, %211 : vector<171x32xf32>
    %c306 = arith.constant 306 : index
    %c0_159 = arith.constant 0 : index
    %213 = vector.load %arg10[%c306, %c0_159] : memref<512x16xf32, #tpu.memory_space<vmem>>, vector<171x16xf32>
    %c224_160 = arith.constant 224 : index
    %c0_161 = arith.constant 0 : index
    %214 = vector.load %arg3[%c224_160, %c0_161] : memref<256x32xf32, #tpu.memory_space<vmem>>, vector<16x32xf32>
    %cst_162 = arith.constant dense<0.000000e+00> : vector<171x32xf32>
    %215 = tpu.matmul %213, %214, %cst_162 {dimension_numbers = #tpu.dot_dimension_numbers<[1], [0], [0], [1], [0, 0, 1, 1], [], []>} : vector<171x16xf32>, vector<16x32xf32>, vector<171x32xf32> -> vector<171x32xf32>
    %216 = arith.addf %212, %215 : vector<171x32xf32>
    %c307 = arith.constant 307 : index
    %c0_163 = arith.constant 0 : index
    %217 = vector.load %arg10[%c307, %c0_163] : memref<512x16xf32, #tpu.memory_space<vmem>>, vector<171x16xf32>
    %c240_164 = arith.constant 240 : index
    %c0_165 = arith.constant 0 : index
    %218 = vector.load %arg3[%c240_164, %c0_165] : memref<256x32xf32, #tpu.memory_space<vmem>>, vector<16x32xf32>
    %cst_166 = arith.constant dense<0.000000e+00> : vector<171x32xf32>
    %219 = tpu.matmul %217, %218, %cst_166 {dimension_numbers = #tpu.dot_dimension_numbers<[1], [0], [0], [1], [0, 0, 1, 1], [], []>} : vector<171x16xf32>, vector<16x32xf32>, vector<171x32xf32> -> vector<171x32xf32>
    %220 = arith.addf %216, %219 : vector<171x32xf32>
    %221 = vector.broadcast %80 : vector<1x32xf32> to vector<171x32xf32>
    %222 = arith.addf %220, %221 : vector<171x32xf32>
    %cst_167 = arith.constant 0.000000e+00 : f32
    %223 = vector.broadcast %cst_167 : f32 to vector<171x32xf32>
    %224 = arith.maximumf %222, %223 : vector<171x32xf32>
    %225 = vector.extract_strided_slice %224 {offsets = [0, 0], sizes = [169, 32], strides = [1, 1]} : vector<171x32xf32> to vector<169x32xf32>
    %226 = vector.extract_strided_slice %224 {offsets = [2, 0], sizes = [169, 32], strides = [1, 1]} : vector<171x32xf32> to vector<169x32xf32>
    %227 = arith.maximumf %225, %226 : vector<169x32xf32>
    %228 = vector.extract_strided_slice %227 {offsets = [0, 0], sizes = [137, 32], strides = [1, 1]} : vector<169x32xf32> to vector<137x32xf32>
    %229 = vector.extract_strided_slice %227 {offsets = [32, 0], sizes = [137, 32], strides = [1, 1]} : vector<169x32xf32> to vector<137x32xf32>
    %230 = arith.maximumf %228, %229 : vector<137x32xf32>
    %cst_168 = arith.constant 0.000000e+00 : f32
    %231 = vector.broadcast %cst_168 : f32 to vector<2x32xf32>
    %232 = vector.extract_strided_slice %155 {offsets = [0, 0], sizes = [1, 32], strides = [1, 1]} : vector<137x32xf32> to vector<1x32xf32>
    %233 = vector.extract_strided_slice %230 {offsets = [0, 0], sizes = [1, 32], strides = [1, 1]} : vector<137x32xf32> to vector<1x32xf32>
    %234 = tpu.concatenate %232, %233 in 0 : vector<1x32xf32>, vector<1x32xf32> -> vector<2x32xf32>
    %c0_169 = arith.constant 0 : index
    %c0_170 = arith.constant 0 : index
    %235 = vector.load %arg5[%c0_169, %c0_170] : memref<800x32xf32, #tpu.memory_space<vmem>>, vector<32x32xf32>
    %cst_171 = arith.constant dense<0.000000e+00> : vector<2x32xf32>
    %236 = tpu.matmul %234, %235, %cst_171 {dimension_numbers = #tpu.dot_dimension_numbers<[1], [0], [0], [1], [0, 0, 1, 1], [], []>} : vector<2x32xf32>, vector<32x32xf32>, vector<2x32xf32> -> vector<2x32xf32>
    %237 = arith.addf %231, %236 : vector<2x32xf32>
    %238 = vector.extract_strided_slice %155 {offsets = [2, 0], sizes = [1, 32], strides = [1, 1]} : vector<137x32xf32> to vector<1x32xf32>
    %239 = vector.extract_strided_slice %230 {offsets = [2, 0], sizes = [1, 32], strides = [1, 1]} : vector<137x32xf32> to vector<1x32xf32>
    %240 = tpu.concatenate %238, %239 in 0 : vector<1x32xf32>, vector<1x32xf32> -> vector<2x32xf32>
    %c32_172 = arith.constant 32 : index
    %c0_173 = arith.constant 0 : index
    %241 = vector.load %arg5[%c32_172, %c0_173] : memref<800x32xf32, #tpu.memory_space<vmem>>, vector<32x32xf32>
    %cst_174 = arith.constant dense<0.000000e+00> : vector<2x32xf32>
    %242 = tpu.matmul %240, %241, %cst_174 {dimension_numbers = #tpu.dot_dimension_numbers<[1], [0], [0], [1], [0, 0, 1, 1], [], []>} : vector<2x32xf32>, vector<32x32xf32>, vector<2x32xf32> -> vector<2x32xf32>
    %243 = arith.addf %237, %242 : vector<2x32xf32>
    %244 = vector.extract_strided_slice %155 {offsets = [4, 0], sizes = [1, 32], strides = [1, 1]} : vector<137x32xf32> to vector<1x32xf32>
    %245 = vector.extract_strided_slice %230 {offsets = [4, 0], sizes = [1, 32], strides = [1, 1]} : vector<137x32xf32> to vector<1x32xf32>
    %246 = tpu.concatenate %244, %245 in 0 : vector<1x32xf32>, vector<1x32xf32> -> vector<2x32xf32>
    %c64_175 = arith.constant 64 : index
    %c0_176 = arith.constant 0 : index
    %247 = vector.load %arg5[%c64_175, %c0_176] : memref<800x32xf32, #tpu.memory_space<vmem>>, vector<32x32xf32>
    %cst_177 = arith.constant dense<0.000000e+00> : vector<2x32xf32>
    %248 = tpu.matmul %246, %247, %cst_177 {dimension_numbers = #tpu.dot_dimension_numbers<[1], [0], [0], [1], [0, 0, 1, 1], [], []>} : vector<2x32xf32>, vector<32x32xf32>, vector<2x32xf32> -> vector<2x32xf32>
    %249 = arith.addf %243, %248 : vector<2x32xf32>
    %250 = vector.extract_strided_slice %155 {offsets = [6, 0], sizes = [1, 32], strides = [1, 1]} : vector<137x32xf32> to vector<1x32xf32>
    %251 = vector.extract_strided_slice %230 {offsets = [6, 0], sizes = [1, 32], strides = [1, 1]} : vector<137x32xf32> to vector<1x32xf32>
    %252 = tpu.concatenate %250, %251 in 0 : vector<1x32xf32>, vector<1x32xf32> -> vector<2x32xf32>
    %c96_178 = arith.constant 96 : index
    %c0_179 = arith.constant 0 : index
    %253 = vector.load %arg5[%c96_178, %c0_179] : memref<800x32xf32, #tpu.memory_space<vmem>>, vector<32x32xf32>
    %cst_180 = arith.constant dense<0.000000e+00> : vector<2x32xf32>
    %254 = tpu.matmul %252, %253, %cst_180 {dimension_numbers = #tpu.dot_dimension_numbers<[1], [0], [0], [1], [0, 0, 1, 1], [], []>} : vector<2x32xf32>, vector<32x32xf32>, vector<2x32xf32> -> vector<2x32xf32>
    %255 = arith.addf %249, %254 : vector<2x32xf32>
    %256 = vector.extract_strided_slice %155 {offsets = [8, 0], sizes = [1, 32], strides = [1, 1]} : vector<137x32xf32> to vector<1x32xf32>
    %257 = vector.extract_strided_slice %230 {offsets = [8, 0], sizes = [1, 32], strides = [1, 1]} : vector<137x32xf32> to vector<1x32xf32>
    %258 = tpu.concatenate %256, %257 in 0 : vector<1x32xf32>, vector<1x32xf32> -> vector<2x32xf32>
    %c128_181 = arith.constant 128 : index
    %c0_182 = arith.constant 0 : index
    %259 = vector.load %arg5[%c128_181, %c0_182] : memref<800x32xf32, #tpu.memory_space<vmem>>, vector<32x32xf32>
    %cst_183 = arith.constant dense<0.000000e+00> : vector<2x32xf32>
    %260 = tpu.matmul %258, %259, %cst_183 {dimension_numbers = #tpu.dot_dimension_numbers<[1], [0], [0], [1], [0, 0, 1, 1], [], []>} : vector<2x32xf32>, vector<32x32xf32>, vector<2x32xf32> -> vector<2x32xf32>
    %261 = arith.addf %255, %260 : vector<2x32xf32>
    %262 = vector.extract_strided_slice %155 {offsets = [32, 0], sizes = [1, 32], strides = [1, 1]} : vector<137x32xf32> to vector<1x32xf32>
    %263 = vector.extract_strided_slice %230 {offsets = [32, 0], sizes = [1, 32], strides = [1, 1]} : vector<137x32xf32> to vector<1x32xf32>
    %264 = tpu.concatenate %262, %263 in 0 : vector<1x32xf32>, vector<1x32xf32> -> vector<2x32xf32>
    %c160_184 = arith.constant 160 : index
    %c0_185 = arith.constant 0 : index
    %265 = vector.load %arg5[%c160_184, %c0_185] : memref<800x32xf32, #tpu.memory_space<vmem>>, vector<32x32xf32>
    %cst_186 = arith.constant dense<0.000000e+00> : vector<2x32xf32>
    %266 = tpu.matmul %264, %265, %cst_186 {dimension_numbers = #tpu.dot_dimension_numbers<[1], [0], [0], [1], [0, 0, 1, 1], [], []>} : vector<2x32xf32>, vector<32x32xf32>, vector<2x32xf32> -> vector<2x32xf32>
    %267 = arith.addf %261, %266 : vector<2x32xf32>
    %268 = vector.extract_strided_slice %155 {offsets = [34, 0], sizes = [1, 32], strides = [1, 1]} : vector<137x32xf32> to vector<1x32xf32>
    %269 = vector.extract_strided_slice %230 {offsets = [34, 0], sizes = [1, 32], strides = [1, 1]} : vector<137x32xf32> to vector<1x32xf32>
    %270 = tpu.concatenate %268, %269 in 0 : vector<1x32xf32>, vector<1x32xf32> -> vector<2x32xf32>
    %c192_187 = arith.constant 192 : index
    %c0_188 = arith.constant 0 : index
    %271 = vector.load %arg5[%c192_187, %c0_188] : memref<800x32xf32, #tpu.memory_space<vmem>>, vector<32x32xf32>
    %cst_189 = arith.constant dense<0.000000e+00> : vector<2x32xf32>
    %272 = tpu.matmul %270, %271, %cst_189 {dimension_numbers = #tpu.dot_dimension_numbers<[1], [0], [0], [1], [0, 0, 1, 1], [], []>} : vector<2x32xf32>, vector<32x32xf32>, vector<2x32xf32> -> vector<2x32xf32>
    %273 = arith.addf %267, %272 : vector<2x32xf32>
    %274 = vector.extract_strided_slice %155 {offsets = [36, 0], sizes = [1, 32], strides = [1, 1]} : vector<137x32xf32> to vector<1x32xf32>
    %275 = vector.extract_strided_slice %230 {offsets = [36, 0], sizes = [1, 32], strides = [1, 1]} : vector<137x32xf32> to vector<1x32xf32>
    %276 = tpu.concatenate %274, %275 in 0 : vector<1x32xf32>, vector<1x32xf32> -> vector<2x32xf32>
    %c224_190 = arith.constant 224 : index
    %c0_191 = arith.constant 0 : index
    %277 = vector.load %arg5[%c224_190, %c0_191] : memref<800x32xf32, #tpu.memory_space<vmem>>, vector<32x32xf32>
    %cst_192 = arith.constant dense<0.000000e+00> : vector<2x32xf32>
    %278 = tpu.matmul %276, %277, %cst_192 {dimension_numbers = #tpu.dot_dimension_numbers<[1], [0], [0], [1], [0, 0, 1, 1], [], []>} : vector<2x32xf32>, vector<32x32xf32>, vector<2x32xf32> -> vector<2x32xf32>
    %279 = arith.addf %273, %278 : vector<2x32xf32>
    %280 = vector.extract_strided_slice %155 {offsets = [38, 0], sizes = [1, 32], strides = [1, 1]} : vector<137x32xf32> to vector<1x32xf32>
    %281 = vector.extract_strided_slice %230 {offsets = [38, 0], sizes = [1, 32], strides = [1, 1]} : vector<137x32xf32> to vector<1x32xf32>
    %282 = tpu.concatenate %280, %281 in 0 : vector<1x32xf32>, vector<1x32xf32> -> vector<2x32xf32>
    %c256_193 = arith.constant 256 : index
    %c0_194 = arith.constant 0 : index
    %283 = vector.load %arg5[%c256_193, %c0_194] : memref<800x32xf32, #tpu.memory_space<vmem>>, vector<32x32xf32>
    %cst_195 = arith.constant dense<0.000000e+00> : vector<2x32xf32>
    %284 = tpu.matmul %282, %283, %cst_195 {dimension_numbers = #tpu.dot_dimension_numbers<[1], [0], [0], [1], [0, 0, 1, 1], [], []>} : vector<2x32xf32>, vector<32x32xf32>, vector<2x32xf32> -> vector<2x32xf32>
    %285 = arith.addf %279, %284 : vector<2x32xf32>
    %286 = vector.extract_strided_slice %155 {offsets = [40, 0], sizes = [1, 32], strides = [1, 1]} : vector<137x32xf32> to vector<1x32xf32>
    %287 = vector.extract_strided_slice %230 {offsets = [40, 0], sizes = [1, 32], strides = [1, 1]} : vector<137x32xf32> to vector<1x32xf32>
    %288 = tpu.concatenate %286, %287 in 0 : vector<1x32xf32>, vector<1x32xf32> -> vector<2x32xf32>
    %c288_196 = arith.constant 288 : index
    %c0_197 = arith.constant 0 : index
    %289 = vector.load %arg5[%c288_196, %c0_197] : memref<800x32xf32, #tpu.memory_space<vmem>>, vector<32x32xf32>
    %cst_198 = arith.constant dense<0.000000e+00> : vector<2x32xf32>
    %290 = tpu.matmul %288, %289, %cst_198 {dimension_numbers = #tpu.dot_dimension_numbers<[1], [0], [0], [1], [0, 0, 1, 1], [], []>} : vector<2x32xf32>, vector<32x32xf32>, vector<2x32xf32> -> vector<2x32xf32>
    %291 = arith.addf %285, %290 : vector<2x32xf32>
    %292 = vector.extract_strided_slice %155 {offsets = [64, 0], sizes = [1, 32], strides = [1, 1]} : vector<137x32xf32> to vector<1x32xf32>
    %293 = vector.extract_strided_slice %230 {offsets = [64, 0], sizes = [1, 32], strides = [1, 1]} : vector<137x32xf32> to vector<1x32xf32>
    %294 = tpu.concatenate %292, %293 in 0 : vector<1x32xf32>, vector<1x32xf32> -> vector<2x32xf32>
    %c320 = arith.constant 320 : index
    %c0_199 = arith.constant 0 : index
    %295 = vector.load %arg5[%c320, %c0_199] : memref<800x32xf32, #tpu.memory_space<vmem>>, vector<32x32xf32>
    %cst_200 = arith.constant dense<0.000000e+00> : vector<2x32xf32>
    %296 = tpu.matmul %294, %295, %cst_200 {dimension_numbers = #tpu.dot_dimension_numbers<[1], [0], [0], [1], [0, 0, 1, 1], [], []>} : vector<2x32xf32>, vector<32x32xf32>, vector<2x32xf32> -> vector<2x32xf32>
    %297 = arith.addf %291, %296 : vector<2x32xf32>
    %298 = vector.extract_strided_slice %155 {offsets = [66, 0], sizes = [1, 32], strides = [1, 1]} : vector<137x32xf32> to vector<1x32xf32>
    %299 = vector.extract_strided_slice %230 {offsets = [66, 0], sizes = [1, 32], strides = [1, 1]} : vector<137x32xf32> to vector<1x32xf32>
    %300 = tpu.concatenate %298, %299 in 0 : vector<1x32xf32>, vector<1x32xf32> -> vector<2x32xf32>
    %c352 = arith.constant 352 : index
    %c0_201 = arith.constant 0 : index
    %301 = vector.load %arg5[%c352, %c0_201] : memref<800x32xf32, #tpu.memory_space<vmem>>, vector<32x32xf32>
    %cst_202 = arith.constant dense<0.000000e+00> : vector<2x32xf32>
    %302 = tpu.matmul %300, %301, %cst_202 {dimension_numbers = #tpu.dot_dimension_numbers<[1], [0], [0], [1], [0, 0, 1, 1], [], []>} : vector<2x32xf32>, vector<32x32xf32>, vector<2x32xf32> -> vector<2x32xf32>
    %303 = arith.addf %297, %302 : vector<2x32xf32>
    %304 = vector.extract_strided_slice %155 {offsets = [68, 0], sizes = [1, 32], strides = [1, 1]} : vector<137x32xf32> to vector<1x32xf32>
    %305 = vector.extract_strided_slice %230 {offsets = [68, 0], sizes = [1, 32], strides = [1, 1]} : vector<137x32xf32> to vector<1x32xf32>
    %306 = tpu.concatenate %304, %305 in 0 : vector<1x32xf32>, vector<1x32xf32> -> vector<2x32xf32>
    %c384 = arith.constant 384 : index
    %c0_203 = arith.constant 0 : index
    %307 = vector.load %arg5[%c384, %c0_203] : memref<800x32xf32, #tpu.memory_space<vmem>>, vector<32x32xf32>
    %cst_204 = arith.constant dense<0.000000e+00> : vector<2x32xf32>
    %308 = tpu.matmul %306, %307, %cst_204 {dimension_numbers = #tpu.dot_dimension_numbers<[1], [0], [0], [1], [0, 0, 1, 1], [], []>} : vector<2x32xf32>, vector<32x32xf32>, vector<2x32xf32> -> vector<2x32xf32>
    %309 = arith.addf %303, %308 : vector<2x32xf32>
    %310 = vector.extract_strided_slice %155 {offsets = [70, 0], sizes = [1, 32], strides = [1, 1]} : vector<137x32xf32> to vector<1x32xf32>
    %311 = vector.extract_strided_slice %230 {offsets = [70, 0], sizes = [1, 32], strides = [1, 1]} : vector<137x32xf32> to vector<1x32xf32>
    %312 = tpu.concatenate %310, %311 in 0 : vector<1x32xf32>, vector<1x32xf32> -> vector<2x32xf32>
    %c416 = arith.constant 416 : index
    %c0_205 = arith.constant 0 : index
    %313 = vector.load %arg5[%c416, %c0_205] : memref<800x32xf32, #tpu.memory_space<vmem>>, vector<32x32xf32>
    %cst_206 = arith.constant dense<0.000000e+00> : vector<2x32xf32>
    %314 = tpu.matmul %312, %313, %cst_206 {dimension_numbers = #tpu.dot_dimension_numbers<[1], [0], [0], [1], [0, 0, 1, 1], [], []>} : vector<2x32xf32>, vector<32x32xf32>, vector<2x32xf32> -> vector<2x32xf32>
    %315 = arith.addf %309, %314 : vector<2x32xf32>
    %316 = vector.extract_strided_slice %155 {offsets = [72, 0], sizes = [1, 32], strides = [1, 1]} : vector<137x32xf32> to vector<1x32xf32>
    %317 = vector.extract_strided_slice %230 {offsets = [72, 0], sizes = [1, 32], strides = [1, 1]} : vector<137x32xf32> to vector<1x32xf32>
    %318 = tpu.concatenate %316, %317 in 0 : vector<1x32xf32>, vector<1x32xf32> -> vector<2x32xf32>
    %c448 = arith.constant 448 : index
    %c0_207 = arith.constant 0 : index
    %319 = vector.load %arg5[%c448, %c0_207] : memref<800x32xf32, #tpu.memory_space<vmem>>, vector<32x32xf32>
    %cst_208 = arith.constant dense<0.000000e+00> : vector<2x32xf32>
    %320 = tpu.matmul %318, %319, %cst_208 {dimension_numbers = #tpu.dot_dimension_numbers<[1], [0], [0], [1], [0, 0, 1, 1], [], []>} : vector<2x32xf32>, vector<32x32xf32>, vector<2x32xf32> -> vector<2x32xf32>
    %321 = arith.addf %315, %320 : vector<2x32xf32>
    %322 = vector.extract_strided_slice %155 {offsets = [96, 0], sizes = [1, 32], strides = [1, 1]} : vector<137x32xf32> to vector<1x32xf32>
    %323 = vector.extract_strided_slice %230 {offsets = [96, 0], sizes = [1, 32], strides = [1, 1]} : vector<137x32xf32> to vector<1x32xf32>
    %324 = tpu.concatenate %322, %323 in 0 : vector<1x32xf32>, vector<1x32xf32> -> vector<2x32xf32>
    %c480 = arith.constant 480 : index
    %c0_209 = arith.constant 0 : index
    %325 = vector.load %arg5[%c480, %c0_209] : memref<800x32xf32, #tpu.memory_space<vmem>>, vector<32x32xf32>
    %cst_210 = arith.constant dense<0.000000e+00> : vector<2x32xf32>
    %326 = tpu.matmul %324, %325, %cst_210 {dimension_numbers = #tpu.dot_dimension_numbers<[1], [0], [0], [1], [0, 0, 1, 1], [], []>} : vector<2x32xf32>, vector<32x32xf32>, vector<2x32xf32> -> vector<2x32xf32>
    %327 = arith.addf %321, %326 : vector<2x32xf32>
    %328 = vector.extract_strided_slice %155 {offsets = [98, 0], sizes = [1, 32], strides = [1, 1]} : vector<137x32xf32> to vector<1x32xf32>
    %329 = vector.extract_strided_slice %230 {offsets = [98, 0], sizes = [1, 32], strides = [1, 1]} : vector<137x32xf32> to vector<1x32xf32>
    %330 = tpu.concatenate %328, %329 in 0 : vector<1x32xf32>, vector<1x32xf32> -> vector<2x32xf32>
    %c512 = arith.constant 512 : index
    %c0_211 = arith.constant 0 : index
    %331 = vector.load %arg5[%c512, %c0_211] : memref<800x32xf32, #tpu.memory_space<vmem>>, vector<32x32xf32>
    %cst_212 = arith.constant dense<0.000000e+00> : vector<2x32xf32>
    %332 = tpu.matmul %330, %331, %cst_212 {dimension_numbers = #tpu.dot_dimension_numbers<[1], [0], [0], [1], [0, 0, 1, 1], [], []>} : vector<2x32xf32>, vector<32x32xf32>, vector<2x32xf32> -> vector<2x32xf32>
    %333 = arith.addf %327, %332 : vector<2x32xf32>
    %334 = vector.extract_strided_slice %155 {offsets = [100, 0], sizes = [1, 32], strides = [1, 1]} : vector<137x32xf32> to vector<1x32xf32>
    %335 = vector.extract_strided_slice %230 {offsets = [100, 0], sizes = [1, 32], strides = [1, 1]} : vector<137x32xf32> to vector<1x32xf32>
    %336 = tpu.concatenate %334, %335 in 0 : vector<1x32xf32>, vector<1x32xf32> -> vector<2x32xf32>
    %c544 = arith.constant 544 : index
    %c0_213 = arith.constant 0 : index
    %337 = vector.load %arg5[%c544, %c0_213] : memref<800x32xf32, #tpu.memory_space<vmem>>, vector<32x32xf32>
    %cst_214 = arith.constant dense<0.000000e+00> : vector<2x32xf32>
    %338 = tpu.matmul %336, %337, %cst_214 {dimension_numbers = #tpu.dot_dimension_numbers<[1], [0], [0], [1], [0, 0, 1, 1], [], []>} : vector<2x32xf32>, vector<32x32xf32>, vector<2x32xf32> -> vector<2x32xf32>
    %339 = arith.addf %333, %338 : vector<2x32xf32>
    %340 = vector.extract_strided_slice %155 {offsets = [102, 0], sizes = [1, 32], strides = [1, 1]} : vector<137x32xf32> to vector<1x32xf32>
    %341 = vector.extract_strided_slice %230 {offsets = [102, 0], sizes = [1, 32], strides = [1, 1]} : vector<137x32xf32> to vector<1x32xf32>
    %342 = tpu.concatenate %340, %341 in 0 : vector<1x32xf32>, vector<1x32xf32> -> vector<2x32xf32>
    %c576 = arith.constant 576 : index
    %c0_215 = arith.constant 0 : index
    %343 = vector.load %arg5[%c576, %c0_215] : memref<800x32xf32, #tpu.memory_space<vmem>>, vector<32x32xf32>
    %cst_216 = arith.constant dense<0.000000e+00> : vector<2x32xf32>
    %344 = tpu.matmul %342, %343, %cst_216 {dimension_numbers = #tpu.dot_dimension_numbers<[1], [0], [0], [1], [0, 0, 1, 1], [], []>} : vector<2x32xf32>, vector<32x32xf32>, vector<2x32xf32> -> vector<2x32xf32>
    %345 = arith.addf %339, %344 : vector<2x32xf32>
    %346 = vector.extract_strided_slice %155 {offsets = [104, 0], sizes = [1, 32], strides = [1, 1]} : vector<137x32xf32> to vector<1x32xf32>
    %347 = vector.extract_strided_slice %230 {offsets = [104, 0], sizes = [1, 32], strides = [1, 1]} : vector<137x32xf32> to vector<1x32xf32>
    %348 = tpu.concatenate %346, %347 in 0 : vector<1x32xf32>, vector<1x32xf32> -> vector<2x32xf32>
    %c608 = arith.constant 608 : index
    %c0_217 = arith.constant 0 : index
    %349 = vector.load %arg5[%c608, %c0_217] : memref<800x32xf32, #tpu.memory_space<vmem>>, vector<32x32xf32>
    %cst_218 = arith.constant dense<0.000000e+00> : vector<2x32xf32>
    %350 = tpu.matmul %348, %349, %cst_218 {dimension_numbers = #tpu.dot_dimension_numbers<[1], [0], [0], [1], [0, 0, 1, 1], [], []>} : vector<2x32xf32>, vector<32x32xf32>, vector<2x32xf32> -> vector<2x32xf32>
    %351 = arith.addf %345, %350 : vector<2x32xf32>
    %352 = vector.extract_strided_slice %155 {offsets = [128, 0], sizes = [1, 32], strides = [1, 1]} : vector<137x32xf32> to vector<1x32xf32>
    %353 = vector.extract_strided_slice %230 {offsets = [128, 0], sizes = [1, 32], strides = [1, 1]} : vector<137x32xf32> to vector<1x32xf32>
    %354 = tpu.concatenate %352, %353 in 0 : vector<1x32xf32>, vector<1x32xf32> -> vector<2x32xf32>
    %c640 = arith.constant 640 : index
    %c0_219 = arith.constant 0 : index
    %355 = vector.load %arg5[%c640, %c0_219] : memref<800x32xf32, #tpu.memory_space<vmem>>, vector<32x32xf32>
    %cst_220 = arith.constant dense<0.000000e+00> : vector<2x32xf32>
    %356 = tpu.matmul %354, %355, %cst_220 {dimension_numbers = #tpu.dot_dimension_numbers<[1], [0], [0], [1], [0, 0, 1, 1], [], []>} : vector<2x32xf32>, vector<32x32xf32>, vector<2x32xf32> -> vector<2x32xf32>
    %357 = arith.addf %351, %356 : vector<2x32xf32>
    %358 = vector.extract_strided_slice %155 {offsets = [130, 0], sizes = [1, 32], strides = [1, 1]} : vector<137x32xf32> to vector<1x32xf32>
    %359 = vector.extract_strided_slice %230 {offsets = [130, 0], sizes = [1, 32], strides = [1, 1]} : vector<137x32xf32> to vector<1x32xf32>
    %360 = tpu.concatenate %358, %359 in 0 : vector<1x32xf32>, vector<1x32xf32> -> vector<2x32xf32>
    %c672 = arith.constant 672 : index
    %c0_221 = arith.constant 0 : index
    %361 = vector.load %arg5[%c672, %c0_221] : memref<800x32xf32, #tpu.memory_space<vmem>>, vector<32x32xf32>
    %cst_222 = arith.constant dense<0.000000e+00> : vector<2x32xf32>
    %362 = tpu.matmul %360, %361, %cst_222 {dimension_numbers = #tpu.dot_dimension_numbers<[1], [0], [0], [1], [0, 0, 1, 1], [], []>} : vector<2x32xf32>, vector<32x32xf32>, vector<2x32xf32> -> vector<2x32xf32>
    %363 = arith.addf %357, %362 : vector<2x32xf32>
    %364 = vector.extract_strided_slice %155 {offsets = [132, 0], sizes = [1, 32], strides = [1, 1]} : vector<137x32xf32> to vector<1x32xf32>
    %365 = vector.extract_strided_slice %230 {offsets = [132, 0], sizes = [1, 32], strides = [1, 1]} : vector<137x32xf32> to vector<1x32xf32>
    %366 = tpu.concatenate %364, %365 in 0 : vector<1x32xf32>, vector<1x32xf32> -> vector<2x32xf32>
    %c704 = arith.constant 704 : index
    %c0_223 = arith.constant 0 : index
    %367 = vector.load %arg5[%c704, %c0_223] : memref<800x32xf32, #tpu.memory_space<vmem>>, vector<32x32xf32>
    %cst_224 = arith.constant dense<0.000000e+00> : vector<2x32xf32>
    %368 = tpu.matmul %366, %367, %cst_224 {dimension_numbers = #tpu.dot_dimension_numbers<[1], [0], [0], [1], [0, 0, 1, 1], [], []>} : vector<2x32xf32>, vector<32x32xf32>, vector<2x32xf32> -> vector<2x32xf32>
    %369 = arith.addf %363, %368 : vector<2x32xf32>
    %370 = vector.extract_strided_slice %155 {offsets = [134, 0], sizes = [1, 32], strides = [1, 1]} : vector<137x32xf32> to vector<1x32xf32>
    %371 = vector.extract_strided_slice %230 {offsets = [134, 0], sizes = [1, 32], strides = [1, 1]} : vector<137x32xf32> to vector<1x32xf32>
    %372 = tpu.concatenate %370, %371 in 0 : vector<1x32xf32>, vector<1x32xf32> -> vector<2x32xf32>
    %c736 = arith.constant 736 : index
    %c0_225 = arith.constant 0 : index
    %373 = vector.load %arg5[%c736, %c0_225] : memref<800x32xf32, #tpu.memory_space<vmem>>, vector<32x32xf32>
    %cst_226 = arith.constant dense<0.000000e+00> : vector<2x32xf32>
    %374 = tpu.matmul %372, %373, %cst_226 {dimension_numbers = #tpu.dot_dimension_numbers<[1], [0], [0], [1], [0, 0, 1, 1], [], []>} : vector<2x32xf32>, vector<32x32xf32>, vector<2x32xf32> -> vector<2x32xf32>
    %375 = arith.addf %369, %374 : vector<2x32xf32>
    %376 = vector.extract_strided_slice %155 {offsets = [136, 0], sizes = [1, 32], strides = [1, 1]} : vector<137x32xf32> to vector<1x32xf32>
    %377 = vector.extract_strided_slice %230 {offsets = [136, 0], sizes = [1, 32], strides = [1, 1]} : vector<137x32xf32> to vector<1x32xf32>
    %378 = tpu.concatenate %376, %377 in 0 : vector<1x32xf32>, vector<1x32xf32> -> vector<2x32xf32>
    %c768 = arith.constant 768 : index
    %c0_227 = arith.constant 0 : index
    %379 = vector.load %arg5[%c768, %c0_227] : memref<800x32xf32, #tpu.memory_space<vmem>>, vector<32x32xf32>
    %cst_228 = arith.constant dense<0.000000e+00> : vector<2x32xf32>
    %380 = tpu.matmul %378, %379, %cst_228 {dimension_numbers = #tpu.dot_dimension_numbers<[1], [0], [0], [1], [0, 0, 1, 1], [], []>} : vector<2x32xf32>, vector<32x32xf32>, vector<2x32xf32> -> vector<2x32xf32>
    %381 = arith.addf %375, %380 : vector<2x32xf32>
    %c0_229 = arith.constant 0 : index
    %c0_230 = arith.constant 0 : index
    %382 = vector.load %arg6[%c0_229, %c0_230] : memref<1x32xf32, #tpu.memory_space<vmem>>, vector<1x32xf32>
    %383 = vector.broadcast %382 : vector<1x32xf32> to vector<2x32xf32>
    %384 = arith.addf %381, %383 : vector<2x32xf32>
    %cst_231 = arith.constant 0.000000e+00 : f32
    %385 = vector.broadcast %cst_231 : f32 to vector<2x32xf32>
    %386 = arith.maximumf %384, %385 : vector<2x32xf32>
    %c0_232 = arith.constant 0 : index
    %c0_233 = arith.constant 0 : index
    %387 = vector.load %arg7[%c0_232, %c0_233] : memref<32x10xf32, #tpu.memory_space<vmem>>, vector<32x10xf32>
    %cst_234 = arith.constant dense<0.000000e+00> : vector<2x10xf32>
    %388 = tpu.matmul %386, %387, %cst_234 {dimension_numbers = #tpu.dot_dimension_numbers<[1], [0], [0], [1], [0, 0, 1, 1], [], []>} : vector<2x32xf32>, vector<32x10xf32>, vector<2x10xf32> -> vector<2x10xf32>
    %c0_235 = arith.constant 0 : index
    %c0_236 = arith.constant 0 : index
    %389 = vector.load %arg8[%c0_235, %c0_236] : memref<1x10xf32, #tpu.memory_space<vmem>>, vector<1x10xf32>
    %390 = vector.broadcast %389 : vector<1x10xf32> to vector<2x10xf32>
    %391 = arith.addf %388, %390 : vector<2x10xf32>
    %cst_237 = arith.constant dense<0xFF800000> : vector<2xf32>
    %392 = vector.multi_reduction <maximumf>, %391, %cst_237 [1] : vector<2x10xf32> to vector<2xf32>
    %393 = vector.shape_cast %392 : vector<2xf32> to vector<2x1xf32>
    %394 = vector.broadcast %393 : vector<2x1xf32> to vector<2x10xf32>
    %395 = arith.subf %391, %394 : vector<2x10xf32>
    %396 = math.exp %395 : vector<2x10xf32>
    %cst_238 = arith.constant dense<0.000000e+00> : vector<2xf32>
    %397 = vector.multi_reduction <add>, %396, %cst_238 [1] : vector<2x10xf32> to vector<2xf32>
    %398 = vector.shape_cast %397 : vector<2xf32> to vector<2x1xf32>
    %399 = math.log %398 : vector<2x1xf32>
    %400 = vector.broadcast %399 : vector<2x1xf32> to vector<2x10xf32>
    %401 = arith.subf %395, %400 : vector<2x10xf32>
    %c0_239 = arith.constant 0 : index
    %c0_240 = arith.constant 0 : index
    %402 = vector.load %arg9[%c0_239, %c0_240] : memref<2x10xf32, #tpu.memory_space<vmem>>, vector<2x10xf32>
    tpu.vector_store %arg9[%c0_239, %c0_240], %401 {strides = array<i32>} : memref<2x10xf32, #tpu.memory_space<vmem>>, vector<2x10xf32>,
    return
  }
}

</mosaic_0001>

<llo_original>
// kernel: net_tf_forward.1
$region0: #{net_tf_forward.1}
  #allocation0 [shape = 'u32[]', space=smem, size = 0x4, offset = 0x4, fixed_abs, tag = 'smem constant byte address 0x4 - core index']
  #allocation1 [shape = 'u32[72,128]{1,0:T(1,128)}', space=vmem, size = 0x9000, scoped, tag = 'internal scratch']
  #allocation2 [shape = 'f32[512,16]{1,0:T(8,128)}', space=vmem, size = 0x40000, scoped, tag = 'scratch operand']
  %s0 = inlined_call_operand.vmem [shape: f32[512,64], index: 0, kind: input, shape index: {}]
  %s1 = inlined_call_operand.vmem [shape: f32[64,16], index: 1, kind: input, shape index: {}]
  %s2 = inlined_call_operand.vmem [shape: f32[1,16], index: 2, kind: input, shape index: {}]
  %s3 = inlined_call_operand.vmem [shape: f32[256,32], index: 3, kind: input, shape index: {}]
  %s4 = inlined_call_operand.vmem [shape: f32[1,32], index: 4, kind: input, shape index: {}]
  %s5 = inlined_call_operand.vmem [shape: f32[800,32], index: 5, kind: input, shape index: {}]
  %s6 = inlined_call_operand.vmem [shape: f32[1,32], index: 6, kind: input, shape index: {}]
  %s7 = inlined_call_operand.vmem [shape: f32[32,10], index: 7, kind: input, shape index: {}]
  %s8 = inlined_call_operand.vmem [shape: f32[1,10], index: 8, kind: input, shape index: {}]
  %s9 = inlined_call_operand.hbm [shape: f32[2,10], index: 9, kind: output, shape index: {}]
  %s10 = sld [smem:[#allocation0]]
  $region46: #{net_tf_forward.1} parent=0
    _
  %s12 = ssub.s32 1, %s10
  %s13 = scalar_select 0, %s12, %s10
  $region1: #{net_tf_forward.1} parent=0
    #allocation3 [shape = 'u8[1024]{0}', space=vmem, size = 0x400, scoped, tag = 'output window, operand 0, single buffered']
    #allocation4 [shape = 's32[1]{0}', space=sflag, size = 0x4, scoped, tag = 'scoped memory for net_tf_forward.1']
    %14 = vsyncpa [#allocation4], 0
    // Predicated region
    $region2: #{net_tf_forward.1} parent=1 // pred_check
      _
    $region3: #{net_tf_forward.1} parent=1 // pred_check_branch
      %16 = sbr.rel (0) target = $region5
    $region4: #{net_tf_forward.1} parent=1 // pred_region
      _
    $region5: #{net_tf_forward.1} parent=1 // pred_fallthru
      _
    // Predicated region
    $region6: #{net_tf_forward.1} parent=1 // pred_check
      _
    $region7: #{net_tf_forward.1} parent=1 // pred_check_branch
      %18 = sbr.rel (0) target = $region9
    $region8: #{net_tf_forward.1} parent=1 // pred_region
      _
    $region9: #{net_tf_forward.1} parent=1 // pred_fallthru
      _
    // Predicated region
    $region10: #{net_tf_forward.1} parent=1 // pred_check
      _
    $region11: #{net_tf_forward.1} parent=1 // pred_check_branch
      %20 = sbr.rel (0) target = $region13
    $region12: #{net_tf_forward.1} parent=1 // pred_region
      _
    $region13: #{net_tf_forward.1} parent=1 // pred_fallthru
      _
    // Predicated region
    $region14: #{net_tf_forward.1} parent=1 // pred_check
      _
    $region15: #{net_tf_forward.1} parent=1 // pred_check_branch
      %22 = sbr.rel (0) target = $region17
    $region16: #{net_tf_forward.1} parent=1 // pred_region
      _
    $region17: #{net_tf_forward.1} parent=1 // pred_fallthru
      _
    // Predicated region
    $region18: #{net_tf_forward.1} parent=1 // pred_check
      _
    $region19: #{net_tf_forward.1} parent=1 // pred_check_branch
      %24 = sbr.rel (0) target = $region21
    $region20: #{net_tf_forward.1} parent=1 // pred_region
      _
    $region21: #{net_tf_forward.1} parent=1 // pred_fallthru
      _
    // Predicated region
    $region22: #{net_tf_forward.1} parent=1 // pred_check
      _
    $region23: #{net_tf_forward.1} parent=1 // pred_check_branch
      %26 = sbr.rel (0) target = $region25
    $region24: #{net_tf_forward.1} parent=1 // pred_region
      _
    $region25: #{net_tf_forward.1} parent=1 // pred_fallthru
      _
    // Predicated region
    $region26: #{net_tf_forward.1} parent=1 // pred_check
      _
    $region27: #{net_tf_forward.1} parent=1 // pred_check_branch
      %28 = sbr.rel (0) target = $region29
    $region28: #{net_tf_forward.1} parent=1 // pred_region
      _
    $region29: #{net_tf_forward.1} parent=1 // pred_fallthru
      _
    // Predicated region
    $region30: #{net_tf_forward.1} parent=1 // pred_check
      _
    $region31: #{net_tf_forward.1} parent=1 // pred_check_branch
      %30 = sbr.rel (0) target = $region33
    $region32: #{net_tf_forward.1} parent=1 // pred_region
      _
    $region33: #{net_tf_forward.1} parent=1 // pred_fallthru
      _
    // Predicated region
    $region34: #{net_tf_forward.1} parent=1 // pred_check
      _
    $region35: #{net_tf_forward.1} parent=1 // pred_check_branch
      %32 = sbr.rel (0) target = $region37
    $region36: #{net_tf_forward.1} parent=1 // pred_region
      _
    $region37: #{net_tf_forward.1} parent=1 // pred_fallthru
      _
    %vm33 = vcmask 130048
    %34 = vst.msk [vmem:[#allocation2] sm:$0xff] %vm33, 0.0
    %35 = vst.msk [vmem:[#allocation2 + $0x8] sm:$0xff] %vm33, 0.0
    %36 = vst.msk [vmem:[#allocation2 + $0x10] sm:$0xff] %vm33, 0.0
    %37 = vst.msk [vmem:[#allocation2 + $0x18] sm:$0xff] %vm33, 0.0
    %38 = vst.msk [vmem:[#allocation2 + $0x20] sm:$0xff] %vm33, 0.0
    %39 = vst.msk [vmem:[#allocation2 + $0x28] sm:$0xff] %vm33, 0.0
    %40 = vst.msk [vmem:[#allocation2 + $0x30] sm:$0xff] %vm33, 0.0
    %41 = vst.msk [vmem:[#allocation2 + $0x38] sm:$0xff] %vm33, 0.0
    %42 = vst.msk [vmem:[#allocation2 + $0x40] sm:$0xff] %vm33, 0.0
    %43 = vst.msk [vmem:[#allocation2 + $0x48] sm:$0xff] %vm33, 0.0
    %44 = vst.msk [vmem:[#allocation2 + $0x50] sm:$0xff] %vm33, 0.0
    %45 = vst.msk [vmem:[#allocation2 + $0x58] sm:$0xff] %vm33, 0.0
    %46 = vst.msk [vmem:[#allocation2 + $0x60] sm:$0xff] %vm33, 0.0
    %47 = vst.msk [vmem:[#allocation2 + $0x68] sm:$0xff] %vm33, 0.0
    %48 = vst.msk [vmem:[#allocation2 + $0x70] sm:$0xff] %vm33, 0.0
    %49 = vst.msk [vmem:[#allocation2 + $0x78] sm:$0xff] %vm33, 0.0
    %50 = vst.msk [vmem:[#allocation2 + $0x80] sm:$0xff] %vm33, 0.0
    %51 = vst.msk [vmem:[#allocation2 + $0x88] sm:$0xff] %vm33, 0.0
    %52 = vst.msk [vmem:[#allocation2 + $0x90] sm:$0xff] %vm33, 0.0
    %53 = vst.msk [vmem:[#allocation2 + $0x98] sm:$0xff] %vm33, 0.0
    %54 = vst.msk [vmem:[#allocation2 + $0xa0] sm:$0xff] %vm33, 0.0
    %55 = vst.msk [vmem:[#allocation2 + $0xa8] sm:$0xff] %vm33, 0.0
    %56 = vst.msk [vmem:[#allocation2 + $0xb0] sm:$0xff] %vm33, 0.0
    %57 = vst.msk [vmem:[#allocation2 + $0xb8] sm:$0xff] %vm33, 0.0
    %58 = vst.msk [vmem:[#allocation2 + $0xc0] sm:$0xff] %vm33, 0.0
    %59 = vst.msk [vmem:[#allocation2 + $0xc8] sm:$0xff] %vm33, 0.0
    %60 = vst.msk [vmem:[#allocation2 + $0xd0] sm:$0xff] %vm33, 0.0
    %61 = vst.msk [vmem:[#allocation2 + $0xd8] sm:$0xff] %vm33, 0.0
    %62 = vst.msk [vmem:[#allocation2 + $0xe0] sm:$0xff] %vm33, 0.0
    %63 = vst.msk [vmem:[#allocation2 + $0xe8] sm:$0xff] %vm33, 0.0
    %64 = vst.msk [vmem:[#allocation2 + $0xf0] sm:$0xff] %vm33, 0.0
    %65 = vst.msk [vmem:[#allocation2 + $0xf8] sm:$0xff] %vm33, 0.0
    %66 = vst.msk [vmem:[#allocation2 + $0x100] sm:$0xff] %vm33, 0.0
    %67 = vst.msk [vmem:[#allocation2 + $0x108] sm:$0xff] %vm33, 0.0
    %68 = vst.msk [vmem:[#allocation2 + $0x110] sm:$0xff] %vm33, 0.0
    %69 = vst.msk [vmem:[#allocation2 + $0x118] sm:$0xff] %vm33, 0.0
    %70 = vst.msk [vmem:[#allocation2 + $0x120] sm:$0xff] %vm33, 0.0
    %71 = vst.msk [vmem:[#allocation2 + $0x128] sm:$0xff] %vm33, 0.0
    %72 = vst.msk [vmem:[#allocation2 + $0x130] sm:$0xff] %vm33, 0.0
    %73 = vst.msk [vmem:[#allocation2 + $0x138] sm:$0xff] %vm33, 0.0
    %74 = vst.msk [vmem:[#allocation2 + $0x140] sm:$0xff] %vm33, 0.0
    %75 = vst.msk [vmem:[#allocation2 + $0x148] sm:$0xff] %vm33, 0.0
    %76 = vst.msk [vmem:[#allocation2 + $0x150] sm:$0xff] %vm33, 0.0
    %77 = vst.msk [vmem:[#allocation2 + $0x158] sm:$0xff] %vm33, 0.0
    %78 = vst.msk [vmem:[#allocation2 + $0x160] sm:$0xff] %vm33, 0.0
    %79 = vst.msk [vmem:[#allocation2 + $0x168] sm:$0xff] %vm33, 0.0
    %80 = vst.msk [vmem:[#allocation2 + $0x170] sm:$0xff] %vm33, 0.0
    %81 = vst.msk [vmem:[#allocation2 + $0x178] sm:$0xff] %vm33, 0.0
    %82 = vst.msk [vmem:[#allocation2 + $0x180] sm:$0xff] %vm33, 0.0
    %83 = vst.msk [vmem:[#allocation2 + $0x188] sm:$0xff] %vm33, 0.0
    %84 = vst.msk [vmem:[#allocation2 + $0x190] sm:$0xff] %vm33, 0.0
    %85 = vst.msk [vmem:[#allocation2 + $0x198] sm:$0xff] %vm33, 0.0
    %86 = vst.msk [vmem:[#allocation2 + $0x1a0] sm:$0xff] %vm33, 0.0
    %87 = vst.msk [vmem:[#allocation2 + $0x1a8] sm:$0xff] %vm33, 0.0
    %88 = vst.msk [vmem:[#allocation2 + $0x1b0] sm:$0xff] %vm33, 0.0
    %89 = vst.msk [vmem:[#allocation2 + $0x1b8] sm:$0xff] %vm33, 0.0
    %90 = vst.msk [vmem:[#allocation2 + $0x1c0] sm:$0xff] %vm33, 0.0
    %91 = vst.msk [vmem:[#allocation2 + $0x1c8] sm:$0xff] %vm33, 0.0
    %92 = vst.msk [vmem:[#allocation2 + $0x1d0] sm:$0xff] %vm33, 0.0
    %93 = vst.msk [vmem:[#allocation2 + $0x1d8] sm:$0xff] %vm33, 0.0
    %94 = vst.msk [vmem:[#allocation2 + $0x1e0] sm:$0xff] %vm33, 0.0
    %95 = vst.msk [vmem:[#allocation2 + $0x1e8] sm:$0xff] %vm33, 0.0
    %96 = vst.msk [vmem:[#allocation2 + $0x1f0] sm:$0xff] %vm33, 0.0
    %97 = vst.msk [vmem:[#allocation2 + $0x1f8] sm:$0xff] %vm33, 0.0
    %v98 = vld [vmem:[%s1] sm:$0xff]
    %v99 = vld [vmem:[%s1 + $0x8] sm:$0xff]
    %v100 = vld [vmem:[%s1 + $0x10] sm:$0xff]
    %v101 = vld [vmem:[%s1 + $0x18] sm:$0xff]
    %v102 = vld [vmem:[%s1 + $0x20] sm:$0xff]
    %v103 = vld [vmem:[%s1 + $0x28] sm:$0xff]
    %v104 = vld [vmem:[%s1 + $0x30] sm:$0xff]
    %v105 = vld [vmem:[%s1 + $0x38] sm:$0xff]
    %v106 = vld [vmem:[%s2] sm:$0x1]
    %v107 = vld [vmem:[%s0] sm:$0xff]
    %v108 = vld [vmem:[%s0 + $0x8] sm:$0xff]
    %v109 = vld [vmem:[%s0 + $0x10] sm:$0xff]
    %v110 = vld [vmem:[%s0 + $0x18] sm:$0xff]
    %v111 = vld [vmem:[%s0 + $0x20] sm:$0xff]
    %v112 = vld [vmem:[%s0 + $0x28] sm:$0xff]
    %v113 = vld [vmem:[%s0 + $0x30] sm:$0xff]
    %v114 = vld [vmem:[%s0 + $0x38] sm:$0xff]
    %v115 = vld [vmem:[%s0 + $0x40] sm:$0xff]
    %v116 = vld [vmem:[%s0 + $0x48] sm:$0xff]
    %v117 = vld [vmem:[%s0 + $0x50] sm:$0xff]
    %v118 = vld [vmem:[%s0 + $0x58] sm:$0xff]
    %v119 = vld [vmem:[%s0 + $0x60] sm:$0xff]
    %v120 = vld [vmem:[%s0 + $0x68] sm:$0xff]
    %v121 = vld [vmem:[%s0 + $0x70] sm:$0xff]
    %v122 = vld [vmem:[%s0 + $0x78] sm:$0xff]
    %v123 = vld [vmem:[%s0 + $0x80] sm:$0xff]
    %v124 = vld [vmem:[%s0 + $0x88] sm:$0xff]
    %v125 = vld [vmem:[%s0 + $0x90] sm:$0xff]
    %v126 = vld [vmem:[%s0 + $0x98] sm:$0xff]
    %v127 = vld [vmem:[%s0 + $0xa0] sm:$0xff]
    %v128 = vld [vmem:[%s0 + $0xa8] sm:$0xff]
    %v129 = vld [vmem:[%s0 + $0xb0] sm:$0xff]
    %v130 = vld [vmem:[%s0 + $0xb8] sm:$0xff]
    %v131 = vld [vmem:[%s0 + $0xc0] sm:$0xff]
    %v132 = vld [vmem:[%s0 + $0xc8] sm:$0xff]
    %v133 = vld [vmem:[%s0 + $0xd0] sm:$0xff]
    %v134 = vld [vmem:[%s0 + $0xd8] sm:$0xff]
    %v135 = vld [vmem:[%s0 + $0xe0] sm:$0xff]
    %v136 = vld [vmem:[%s0 + $0xe8] sm:$0xff]
    %v137 = vld [vmem:[%s0 + $0xf0] sm:$0xff]
    %v138 = vld [vmem:[%s0 + $0xf8] sm:$0xff]
    %v140 = vperm.slane %v106, 0
    %vm142 = vcmask 523264
    %v144 = vsel %vm142, %v107, 0
    %v147 = vsel %vm142, %v108, 0
    %v150 = vsel %vm142, %v109, 0
    %v153 = vsel %vm142, %v110, 0
    %v156 = vsel %vm142, %v111, 0
    %v159 = vsel %vm142, %v112, 0
    %v162 = vsel %vm142, %v113, 0
    %v165 = vsel %vm142, %v114, 0
    %v168 = vsel %vm142, %v115, 0
    %v171 = vsel %vm142, %v116, 0
    %v174 = vsel %vm142, %v117, 0
    %v177 = vsel %vm142, %v118, 0
    %v180 = vsel %vm142, %v119, 0
    %v183 = vsel %vm142, %v120, 0
    %v186 = vsel %vm142, %v121, 0
    %v189 = vsel %vm142, %v122, 0
    %v192 = vsel %vm142, %v123, 0
    %v195 = vsel %vm142, %v124, 0
    %v198 = vsel %vm142, %v125, 0
    %v201 = vsel %vm142, %v126, 0
    %v204 = vsel %vm142, %v127, 0
    %v207 = vsel %vm142, %v128, 0
    %v210 = vsel %vm142, %v129, 0
    %v213 = vsel %vm142, %v130, 0
    %v216 = vsel %vm142, %v131, 0
    %v219 = vsel %vm142, %v132, 0
    %v222 = vsel %vm142, %v133, 0
    %v225 = vsel %vm142, %v134, 0
    %v228 = vsel %vm142, %v135, 0
    %v231 = vsel %vm142, %v136, 0
    %v234 = vsel %vm142, %v137, 0
    %v237 = vsel %vm142, %v138, 0
    %239 = vmatpush.msra.mxu0 0.0
    %240 = vmatpush.msra.mxu0 0.0
    %241 = vmatpush.msra.mxu0 0.0
    %242 = vmatpush.msra.mxu0 0.0
    %243 = vmatpush.msra.mxu0 0.0
    %244 = vmatpush.msra.mxu0 0.0
    %245 = vmatpush.msra.mxu0 0.0
    %246 = vmatpush.msra.mxu0 0.0
    %247 = vmatpush.msra.mxu0 %v105
    %248 = vmatpush.msra.mxu0 %v104
    %249 = vmatpush.msra.mxu0 %v103
    %250 = vmatpush.msra.mxu0 %v102
    %251 = vmatpush.msra.mxu0 %v101
    %252 = vmatpush.msra.mxu0 %v100
    %253 = vmatpush.msra.mxu0 %v99
    %254 = vmatpush.msra.mxu0 %v98
    %255 = vmatmul.f32.gmra.mxu0 %v144
    %v256 = vpop.f32.mrf.mxu0
    %v257 = vadd.f32 %v140, %v256
    %258 = vmatmul.f32.gmra.mxu0 %v147
    %v259 = vpop.f32.mrf.mxu0
    %v260 = vadd.f32 %v140, %v259
    %261 = vmatmul.f32.gmra.mxu0 %v150
    %v262 = vpop.f32.mrf.mxu0
    %v263 = vadd.f32 %v140, %v262
    %264 = vmatmul.f32.gmra.mxu0 %v153
    %v265 = vpop.f32.mrf.mxu0
    %v266 = vadd.f32 %v140, %v265
    %267 = vmatmul.f32.gmra.mxu0 %v156
    %v268 = vpop.f32.mrf.mxu0
    %v269 = vadd.f32 %v140, %v268
    %270 = vmatmul.f32.gmra.mxu0 %v159
    %v271 = vpop.f32.mrf.mxu0
    %v272 = vadd.f32 %v140, %v271
    %273 = vmatmul.f32.gmra.mxu0 %v162
    %v274 = vpop.f32.mrf.mxu0
    %v275 = vadd.f32 %v140, %v274
    %276 = vmatmul.f32.gmra.mxu0 %v165
    %v277 = vpop.f32.mrf.mxu0
    %v278 = vadd.f32 %v140, %v277
    %279 = vmatmul.f32.gmra.mxu0 %v168
    %v280 = vpop.f32.mrf.mxu0
    %v281 = vadd.f32 %v140, %v280
    %282 = vmatmul.f32.gmra.mxu0 %v171
    %v283 = vpop.f32.mrf.mxu0
    %v284 = vadd.f32 %v140, %v283
    %285 = vmatmul.f32.gmra.mxu0 %v174
    %v286 = vpop.f32.mrf.mxu0
    %v287 = vadd.f32 %v140, %v286
    %288 = vmatmul.f32.gmra.mxu0 %v177
    %v289 = vpop.f32.mrf.mxu0
    %v290 = vadd.f32 %v140, %v289
    %291 = vmatmul.f32.gmra.mxu0 %v180
    %v292 = vpop.f32.mrf.mxu0
    %v293 = vadd.f32 %v140, %v292
    %294 = vmatmul.f32.gmra.mxu0 %v183
    %v295 = vpop.f32.mrf.mxu0
    %v296 = vadd.f32 %v140, %v295
    %297 = vmatmul.f32.gmra.mxu0 %v186
    %v298 = vpop.f32.mrf.mxu0
    %v299 = vadd.f32 %v140, %v298
    %300 = vmatmul.f32.gmra.mxu0 %v189
    %v301 = vpop.f32.mrf.mxu0
    %v302 = vadd.f32 %v140, %v301
    %303 = vmatmul.f32.gmra.mxu0 %v192
    %v304 = vpop.f32.mrf.mxu0
    %v305 = vadd.f32 %v140, %v304
    %306 = vmatmul.f32.gmra.mxu0 %v195
    %v307 = vpop.f32.mrf.mxu0
    %v308 = vadd.f32 %v140, %v307
    %309 = vmatmul.f32.gmra.mxu0 %v198
    %v310 = vpop.f32.mrf.mxu0
    %v311 = vadd.f32 %v140, %v310
    %312 = vmatmul.f32.gmra.mxu0 %v201
    %v313 = vpop.f32.mrf.mxu0
    %v314 = vadd.f32 %v140, %v313
    %315 = vmatmul.f32.gmra.mxu0 %v204
    %v316 = vpop.f32.mrf.mxu0
    %v317 = vadd.f32 %v140, %v316
    %318 = vmatmul.f32.gmra.mxu0 %v207
    %v319 = vpop.f32.mrf.mxu0
    %v320 = vadd.f32 %v140, %v319
    %321 = vmatmul.f32.gmra.mxu0 %v210
    %v322 = vpop.f32.mrf.mxu0
    %v323 = vadd.f32 %v140, %v322
    %324 = vmatmul.f32.gmra.mxu0 %v213
    %v325 = vpop.f32.mrf.mxu0
    %v326 = vadd.f32 %v140, %v325
    %327 = vmatmul.f32.gmra.mxu0 %v216
    %v328 = vpop.f32.mrf.mxu0
    %v329 = vadd.f32 %v140, %v328
    %330 = vmatmul.f32.gmra.mxu0 %v219
    %v331 = vpop.f32.mrf.mxu0
    %v332 = vadd.f32 %v140, %v331
    %333 = vmatmul.f32.gmra.mxu0 %v222
    %v334 = vpop.f32.mrf.mxu0
    %v335 = vadd.f32 %v140, %v334
    %336 = vmatmul.f32.gmra.mxu0 %v225
    %v337 = vpop.f32.mrf.mxu0
    %v338 = vadd.f32 %v140, %v337
    %339 = vmatmul.f32.gmra.mxu0 %v228
    %v340 = vpop.f32.mrf.mxu0
    %341 = vmatmul.f32.gmra.mxu0 %v231
    %v342 = vpop.f32.mrf.mxu0
    %343 = vmatmul.f32.gmra.mxu0 %v234
    %v344 = vpop.f32.mrf.mxu0
    %345 = vmatmul.f32.gmra.mxu0 %v237
    %v346 = vpop.f32.mrf.mxu0
    %347 = vdwg.mxu0
    %v348 = vmax.f32 %v257, 0.0
    %v349 = vmax.f32 %v260, 0.0
    %v350 = vmax.f32 %v263, 0.0
    %v351 = vmax.f32 %v266, 0.0
    %v352 = vmax.f32 %v269, 0.0
    %v353 = vmax.f32 %v272, 0.0
    %v354 = vmax.f32 %v275, 0.0
    %v355 = vmax.f32 %v278, 0.0
    %v356 = vmax.f32 %v281, 0.0
    %v357 = vmax.f32 %v284, 0.0
    %v358 = vmax.f32 %v287, 0.0
    %v359 = vmax.f32 %v290, 0.0
    %v360 = vmax.f32 %v293, 0.0
    %v361 = vmax.f32 %v296, 0.0
    %v362 = vmax.f32 %v299, 0.0
    %v363 = vmax.f32 %v302, 0.0
    %v364 = vmax.f32 %v305, 0.0
    %v365 = vmax.f32 %v308, 0.0
    %v366 = vmax.f32 %v311, 0.0
    %v367 = vmax.f32 %v314, 0.0
    %v368 = vmax.f32 %v317, 0.0
    %v369 = vmax.f32 %v320, 0.0
    %v370 = vmax.f32 %v323, 0.0
    %v371 = vmax.f32 %v326, 0.0
    %v372 = vmax.f32 %v329, 0.0
    %v373 = vmax.f32 %v332, 0.0
    %v374 = vmax.f32 %v335, 0.0
    %v375 = vmax.f32 %v338, 0.0
    %vm404 = vcmask 1046528
    %v405 = vrot.slane %v348, 1
    %v406 = vrot.slane %v349, 1
    %v407 = vsel %vm404, %v405, %v406
    %v408 = vrot.slane %v350, 1
    %v409 = vsel %vm404, %v406, %v408
    %v410 = vrot.slane %v351, 1
    %v411 = vsel %vm404, %v408, %v410
    %v412 = vrot.slane %v352, 1
    %v413 = vsel %vm404, %v410, %v412
    %v414 = vrot.slane %v353, 1
    %v415 = vsel %vm404, %v412, %v414
    %v416 = vrot.slane %v354, 1
    %v417 = vsel %vm404, %v414, %v416
    %v418 = vrot.slane %v355, 1
    %v419 = vsel %vm404, %v416, %v418
    %v420 = vrot.slane %v356, 1
    %v421 = vsel %vm404, %v418, %v420
    %v422 = vrot.slane %v357, 1
    %v423 = vsel %vm404, %v420, %v422
    %v424 = vrot.slane %v358, 1
    %v425 = vsel %vm404, %v422, %v424
    %v426 = vrot.slane %v359, 1
    %v427 = vsel %vm404, %v424, %v426
    %v428 = vrot.slane %v360, 1
    %v429 = vsel %vm404, %v426, %v428
    %v430 = vrot.slane %v361, 1
    %v431 = vsel %vm404, %v428, %v430
    %v432 = vrot.slane %v362, 1
    %v433 = vsel %vm404, %v430, %v432
    %v434 = vrot.slane %v363, 1
    %v435 = vsel %vm404, %v432, %v434
    %v436 = vrot.slane %v364, 1
    %v437 = vsel %vm404, %v434, %v436
    %v438 = vrot.slane %v365, 1
    %v439 = vsel %vm404, %v436, %v438
    %v440 = vrot.slane %v366, 1
    %v441 = vsel %vm404, %v438, %v440
    %v442 = vrot.slane %v367, 1
    %v443 = vsel %vm404, %v440, %v442
    %v444 = vrot.slane %v368, 1
    %v445 = vsel %vm404, %v442, %v444
    %v446 = vrot.slane %v369, 1
    %v447 = vsel %vm404, %v444, %v446
    %v448 = vrot.slane %v370, 1
    %v449 = vsel %vm404, %v446, %v448
    %v450 = vrot.slane %v371, 1
    %v451 = vsel %vm404, %v448, %v450
    %v452 = vrot.slane %v372, 1
    %v453 = vsel %vm404, %v450, %v452
    %v454 = vrot.slane %v373, 1
    %v455 = vsel %vm404, %v452, %v454
    %v456 = vrot.slane %v374, 1
    %v457 = vsel %vm404, %v454, %v456
    %v458 = vrot.slane %v375, 1
    %v459 = vsel %vm404, %v456, %v458
    %v488 = vmax.f32 %v348, %v407
    %v489 = vmax.f32 %v349, %v409
    %v490 = vmax.f32 %v350, %v411
    %v491 = vmax.f32 %v351, %v413
    %v492 = vmax.f32 %v352, %v415
    %v493 = vmax.f32 %v353, %v417
    %v494 = vmax.f32 %v354, %v419
    %v495 = vmax.f32 %v355, %v421
    %v496 = vmax.f32 %v356, %v423
    %v497 = vmax.f32 %v357, %v425
    %v498 = vmax.f32 %v358, %v427
    %v499 = vmax.f32 %v359, %v429
    %v500 = vmax.f32 %v360, %v431
    %v501 = vmax.f32 %v361, %v433
    %v502 = vmax.f32 %v362, %v435
    %v503 = vmax.f32 %v363, %v437
    %v504 = vmax.f32 %v364, %v439
    %v505 = vmax.f32 %v365, %v441
    %v506 = vmax.f32 %v366, %v443
    %v507 = vmax.f32 %v367, %v445
    %v508 = vmax.f32 %v368, %v447
    %v509 = vmax.f32 %v369, %v449
    %v510 = vmax.f32 %v370, %v451
    %v511 = vmax.f32 %v371, %v453
    %v512 = vmax.f32 %v372, %v455
    %v513 = vmax.f32 %v373, %v457
    %v514 = vmax.f32 %v374, %v459
    %v515 = vmax.f32 %v375, %v458
    %v516 = vmax.f32 %v488, %v490
    %v517 = vmax.f32 %v489, %v491
    %v518 = vmax.f32 %v490, %v492
    %v519 = vmax.f32 %v491, %v493
    %v520 = vmax.f32 %v492, %v494
    %v521 = vmax.f32 %v493, %v495
    %v522 = vmax.f32 %v494, %v496
    %v523 = vmax.f32 %v495, %v497
    %v524 = vmax.f32 %v496, %v498
    %v525 = vmax.f32 %v497, %v499
    %v526 = vmax.f32 %v498, %v500
    %v527 = vmax.f32 %v499, %v501
    %v528 = vmax.f32 %v500, %v502
    %v529 = vmax.f32 %v501, %v503
    %v530 = vmax.f32 %v502, %v504
    %v531 = vmax.f32 %v503, %v505
    %v532 = vmax.f32 %v504, %v506
    %v533 = vmax.f32 %v505, %v507
    %v534 = vmax.f32 %v506, %v508
    %v535 = vmax.f32 %v507, %v509
    %v536 = vmax.f32 %v508, %v510
    %v537 = vmax.f32 %v509, %v511
    %v538 = vmax.f32 %v510, %v512
    %v539 = vmax.f32 %v511, %v513
    %v540 = vmax.f32 %v512, %v514
    %v541 = vmax.f32 %v513, %v515
    %542 = vst.msk [vmem:[#allocation2 + $0x11] sm:$0xff] %vm33, %v516
    %vm543 = vcmask 126976
    %544 = vst.msk [vmem:[#allocation2 + $0x19] sm:$0x1f] %vm543, %v517
    %545 = vst.msk [vmem:[#allocation2 + $0x21] sm:$0xff] %vm33, %v518
    %546 = vst.msk [vmem:[#allocation2 + $0x29] sm:$0x1f] %vm543, %v519
    %547 = vst.msk [vmem:[#allocation2 + $0x31] sm:$0xff] %vm33, %v520
    %548 = vst.msk [vmem:[#allocation2 + $0x39] sm:$0x1f] %vm543, %v521
    %549 = vst.msk [vmem:[#allocation2 + $0x41] sm:$0xff] %vm33, %v522
    %550 = vst.msk [vmem:[#allocation2 + $0x49] sm:$0x1f] %vm543, %v523
    %551 = vst.msk [vmem:[#allocation2 + $0x51] sm:$0xff] %vm33, %v524
    %552 = vst.msk [vmem:[#allocation2 + $0x59] sm:$0x1f] %vm543, %v525
    %553 = vst.msk [vmem:[#allocation2 + $0x61] sm:$0xff] %vm33, %v526
    %554 = vst.msk [vmem:[#allocation2 + $0x69] sm:$0x1f] %vm543, %v527
    %555 = vst.msk [vmem:[#allocation2 + $0x71] sm:$0xff] %vm33, %v528
    %556 = vst.msk [vmem:[#allocation2 + $0x79] sm:$0x1f] %vm543, %v529
    %557 = vst.msk [vmem:[#allocation2 + $0x81] sm:$0xff] %vm33, %v530
    %558 = vst.msk [vmem:[#allocation2 + $0x89] sm:$0x1f] %vm543, %v531
    %559 = vst.msk [vmem:[#allocation2 + $0x91] sm:$0xff] %vm33, %v532
    %560 = vst.msk [vmem:[#allocation2 + $0x99] sm:$0x1f] %vm543, %v533
    %561 = vst.msk [vmem:[#allocation2 + $0xa1] sm:$0xff] %vm33, %v534
    %562 = vst.msk [vmem:[#allocation2 + $0xa9] sm:$0x1f] %vm543, %v535
    %563 = vst.msk [vmem:[#allocation2 + $0xb1] sm:$0xff] %vm33, %v536
    %564 = vst.msk [vmem:[#allocation2 + $0xb9] sm:$0x1f] %vm543, %v537
    %565 = vst.msk [vmem:[#allocation2 + $0xc1] sm:$0xff] %vm33, %v538
    %566 = vst.msk [vmem:[#allocation2 + $0xc9] sm:$0x1f] %vm543, %v539
    %567 = vst.msk [vmem:[#allocation2 + $0xd1] sm:$0xff] %vm33, %v540
    %568 = vst.msk [vmem:[#allocation2 + $0xd9] sm:$0x1f] %vm543, %v541
    %v569 = vld [vmem:[%s0 + $0x100] sm:$0xff]
    %v570 = vld [vmem:[%s0 + $0x108] sm:$0xff]
    %v571 = vld [vmem:[%s0 + $0x110] sm:$0xff]
    %v572 = vld [vmem:[%s0 + $0x118] sm:$0xff]
    %v573 = vld [vmem:[%s0 + $0x120] sm:$0xff]
    %v574 = vld [vmem:[%s0 + $0x128] sm:$0xff]
    %v575 = vld [vmem:[%s0 + $0x130] sm:$0xff]
    %v576 = vld [vmem:[%s0 + $0x138] sm:$0xff]
    %v577 = vld [vmem:[%s0 + $0x140] sm:$0xff]
    %v578 = vld [vmem:[%s0 + $0x148] sm:$0xff]
    %v579 = vld [vmem:[%s0 + $0x150] sm:$0xff]
    %v580 = vld [vmem:[%s0 + $0x158] sm:$0xff]
    %v581 = vld [vmem:[%s0 + $0x160] sm:$0xff]
    %v582 = vld [vmem:[%s0 + $0x168] sm:$0xff]
    %v583 = vld [vmem:[%s0 + $0x170] sm:$0xff]
    %v584 = vld [vmem:[%s0 + $0x178] sm:$0xff]
    %v585 = vld [vmem:[%s0 + $0x180] sm:$0xff]
    %v586 = vld [vmem:[%s0 + $0x188] sm:$0xff]
    %v587 = vld [vmem:[%s0 + $0x190] sm:$0xff]
    %v588 = vld [vmem:[%s0 + $0x198] sm:$0xff]
    %v589 = vld [vmem:[%s0 + $0x1a0] sm:$0xff]
    %v590 = vld [vmem:[%s0 + $0x1a8] sm:$0xff]
    %v591 = vld [vmem:[%s0 + $0x1b0] sm:$0xff]
    %v592 = vld [vmem:[%s0 + $0x1b8] sm:$0xff]
    %v593 = vld [vmem:[%s0 + $0x1c0] sm:$0xff]
    %v594 = vld [vmem:[%s0 + $0x1c8] sm:$0xff]
    %v595 = vld [vmem:[%s0 + $0x1d0] sm:$0xff]
    %v596 = vld [vmem:[%s0 + $0x1d8] sm:$0xff]
    %v597 = vld [vmem:[%s0 + $0x1e0] sm:$0xff]
    %v598 = vld [vmem:[%s0 + $0x1e8] sm:$0xff]
    %v599 = vld [vmem:[%s0 + $0x1f0] sm:$0xff]
    %v600 = vld [vmem:[%s0 + $0x1f8] sm:$0xff]
    %v602 = vsel %vm142, %v569, 0
    %v605 = vsel %vm142, %v570, 0
    %v608 = vsel %vm142, %v571, 0
    %v611 = vsel %vm142, %v572, 0
    %v614 = vsel %vm142, %v573, 0
    %v617 = vsel %vm142, %v574, 0
    %v620 = vsel %vm142, %v575, 0
    %v623 = vsel %vm142, %v576, 0
    %v626 = vsel %vm142, %v577, 0
    %v629 = vsel %vm142, %v578, 0
    %v632 = vsel %vm142, %v579, 0
    %v635 = vsel %vm142, %v580, 0
    %v638 = vsel %vm142, %v581, 0
    %v641 = vsel %vm142, %v582, 0
    %v644 = vsel %vm142, %v583, 0
    %v647 = vsel %vm142, %v584, 0
    %v650 = vsel %vm142, %v585, 0
    %v653 = vsel %vm142, %v586, 0
    %v656 = vsel %vm142, %v587, 0
    %v659 = vsel %vm142, %v588, 0
    %v662 = vsel %vm142, %v589, 0
    %v665 = vsel %vm142, %v590, 0
    %v668 = vsel %vm142, %v591, 0
    %v671 = vsel %vm142, %v592, 0
    %v674 = vsel %vm142, %v593, 0
    %v677 = vsel %vm142, %v594, 0
    %v680 = vsel %vm142, %v595, 0
    %v683 = vsel %vm142, %v596, 0
    %v686 = vsel %vm142, %v597, 0
    %v689 = vsel %vm142, %v598, 0
    %v692 = vsel %vm142, %v599, 0
    %v695 = vsel %vm142, %v600, 0
    %697 = vmatpush.msra.mxu0 0.0
    %698 = vmatpush.msra.mxu0 0.0
    %699 = vmatpush.msra.mxu0 0.0
    %700 = vmatpush.msra.mxu0 0.0
    %701 = vmatpush.msra.mxu0 0.0
    %702 = vmatpush.msra.mxu0 0.0
    %703 = vmatpush.msra.mxu0 0.0
    %704 = vmatpush.msra.mxu0 0.0
    %705 = vmatpush.msra.mxu0 %v105
    %706 = vmatpush.msra.mxu0 %v104
    %707 = vmatpush.msra.mxu0 %v103
    %708 = vmatpush.msra.mxu0 %v102
    %709 = vmatpush.msra.mxu0 %v101
    %710 = vmatpush.msra.mxu0 %v100
    %711 = vmatpush.msra.mxu0 %v99
    %712 = vmatpush.msra.mxu0 %v98
    %713 = vmatmul.f32.gmra.mxu0 %v602
    %v714 = vpop.f32.mrf.mxu0
    %v715 = vadd.f32 %v140, %v714
    %716 = vmatmul.f32.gmra.mxu0 %v605
    %v717 = vpop.f32.mrf.mxu0
    %v718 = vadd.f32 %v140, %v717
    %719 = vmatmul.f32.gmra.mxu0 %v608
    %v720 = vpop.f32.mrf.mxu0
    %v721 = vadd.f32 %v140, %v720
    %722 = vmatmul.f32.gmra.mxu0 %v611
    %v723 = vpop.f32.mrf.mxu0
    %v724 = vadd.f32 %v140, %v723
    %725 = vmatmul.f32.gmra.mxu0 %v614
    %v726 = vpop.f32.mrf.mxu0
    %v727 = vadd.f32 %v140, %v726
    %728 = vmatmul.f32.gmra.mxu0 %v617
    %v729 = vpop.f32.mrf.mxu0
    %v730 = vadd.f32 %v140, %v729
    %731 = vmatmul.f32.gmra.mxu0 %v620
    %v732 = vpop.f32.mrf.mxu0
    %v733 = vadd.f32 %v140, %v732
    %734 = vmatmul.f32.gmra.mxu0 %v623
    %v735 = vpop.f32.mrf.mxu0
    %v736 = vadd.f32 %v140, %v735
    %737 = vmatmul.f32.gmra.mxu0 %v626
    %v738 = vpop.f32.mrf.mxu0
    %v739 = vadd.f32 %v140, %v738
    %740 = vmatmul.f32.gmra.mxu0 %v629
    %v741 = vpop.f32.mrf.mxu0
    %v742 = vadd.f32 %v140, %v741
    %743 = vmatmul.f32.gmra.mxu0 %v632
    %v744 = vpop.f32.mrf.mxu0
    %v745 = vadd.f32 %v140, %v744
    %746 = vmatmul.f32.gmra.mxu0 %v635
    %v747 = vpop.f32.mrf.mxu0
    %v748 = vadd.f32 %v140, %v747
    %749 = vmatmul.f32.gmra.mxu0 %v638
    %v750 = vpop.f32.mrf.mxu0
    %v751 = vadd.f32 %v140, %v750
    %752 = vmatmul.f32.gmra.mxu0 %v641
    %v753 = vpop.f32.mrf.mxu0
    %v754 = vadd.f32 %v140, %v753
    %755 = vmatmul.f32.gmra.mxu0 %v644
    %v756 = vpop.f32.mrf.mxu0
    %v757 = vadd.f32 %v140, %v756
    %758 = vmatmul.f32.gmra.mxu0 %v647
    %v759 = vpop.f32.mrf.mxu0
    %v760 = vadd.f32 %v140, %v759
    %761 = vmatmul.f32.gmra.mxu0 %v650
    %v762 = vpop.f32.mrf.mxu0
    %v763 = vadd.f32 %v140, %v762
    %764 = vmatmul.f32.gmra.mxu0 %v653
    %v765 = vpop.f32.mrf.mxu0
    %v766 = vadd.f32 %v140, %v765
    %767 = vmatmul.f32.gmra.mxu0 %v656
    %v768 = vpop.f32.mrf.mxu0
    %v769 = vadd.f32 %v140, %v768
    %770 = vmatmul.f32.gmra.mxu0 %v659
    %v771 = vpop.f32.mrf.mxu0
    %v772 = vadd.f32 %v140, %v771
    %773 = vmatmul.f32.gmra.mxu0 %v662
    %v774 = vpop.f32.mrf.mxu0
    %v775 = vadd.f32 %v140, %v774
    %776 = vmatmul.f32.gmra.mxu0 %v665
    %v777 = vpop.f32.mrf.mxu0
    %v778 = vadd.f32 %v140, %v777
    %779 = vmatmul.f32.gmra.mxu0 %v668
    %v780 = vpop.f32.mrf.mxu0
    %v781 = vadd.f32 %v140, %v780
    %782 = vmatmul.f32.gmra.mxu0 %v671
    %v783 = vpop.f32.mrf.mxu0
    %v784 = vadd.f32 %v140, %v783
    %785 = vmatmul.f32.gmra.mxu0 %v674
    %v786 = vpop.f32.mrf.mxu0
    %v787 = vadd.f32 %v140, %v786
    %788 = vmatmul.f32.gmra.mxu0 %v677
    %v789 = vpop.f32.mrf.mxu0
    %v790 = vadd.f32 %v140, %v789
    %791 = vmatmul.f32.gmra.mxu0 %v680
    %v792 = vpop.f32.mrf.mxu0
    %v793 = vadd.f32 %v140, %v792
    %794 = vmatmul.f32.gmra.mxu0 %v683
    %v795 = vpop.f32.mrf.mxu0
    %v796 = vadd.f32 %v140, %v795
    %797 = vmatmul.f32.gmra.mxu0 %v686
    %v798 = vpop.f32.mrf.mxu0
    %799 = vmatmul.f32.gmra.mxu0 %v689
    %v800 = vpop.f32.mrf.mxu0
    %801 = vmatmul.f32.gmra.mxu0 %v692
    %v802 = vpop.f32.mrf.mxu0
    %803 = vmatmul.f32.gmra.mxu0 %v695
    %v804 = vpop.f32.mrf.mxu0
    %805 = vdwg.mxu0
    %v806 = vmax.f32 %v715, 0.0
    %v807 = vmax.f32 %v718, 0.0
    %v808 = vmax.f32 %v721, 0.0
    %v809 = vmax.f32 %v724, 0.0
    %v810 = vmax.f32 %v727, 0.0
    %v811 = vmax.f32 %v730, 0.0
    %v812 = vmax.f32 %v733, 0.0
    %v813 = vmax.f32 %v736, 0.0
    %v814 = vmax.f32 %v739, 0.0
    %v815 = vmax.f32 %v742, 0.0
    %v816 = vmax.f32 %v745, 0.0
    %v817 = vmax.f32 %v748, 0.0
    %v818 = vmax.f32 %v751, 0.0
    %v819 = vmax.f32 %v754, 0.0
    %v820 = vmax.f32 %v757, 0.0
    %v821 = vmax.f32 %v760, 0.0
    %v822 = vmax.f32 %v763, 0.0
    %v823 = vmax.f32 %v766, 0.0
    %v824 = vmax.f32 %v769, 0.0
    %v825 = vmax.f32 %v772, 0.0
    %v826 = vmax.f32 %v775, 0.0
    %v827 = vmax.f32 %v778, 0.0
    %v828 = vmax.f32 %v781, 0.0
    %v829 = vmax.f32 %v784, 0.0
    %v830 = vmax.f32 %v787, 0.0
    %v831 = vmax.f32 %v790, 0.0
    %v832 = vmax.f32 %v793, 0.0
    %v833 = vmax.f32 %v796, 0.0
    %v862 = vrot.slane %v806, 1
    %v863 = vrot.slane %v807, 1
    %v864 = vsel %vm404, %v862, %v863
    %v865 = vrot.slane %v808, 1
    %v866 = vsel %vm404, %v863, %v865
    %v867 = vrot.slane %v809, 1
    %v868 = vsel %vm404, %v865, %v867
    %v869 = vrot.slane %v810, 1
    %v870 = vsel %vm404, %v867, %v869
    %v871 = vrot.slane %v811, 1
    %v872 = vsel %vm404, %v869, %v871
    %v873 = vrot.slane %v812, 1
    %v874 = vsel %vm404, %v871, %v873
    %v875 = vrot.slane %v813, 1
    %v876 = vsel %vm404, %v873, %v875
    %v877 = vrot.slane %v814, 1
    %v878 = vsel %vm404, %v875, %v877
    %v879 = vrot.slane %v815, 1
    %v880 = vsel %vm404, %v877, %v879
    %v881 = vrot.slane %v816, 1
    %v882 = vsel %vm404, %v879, %v881
    %v883 = vrot.slane %v817, 1
    %v884 = vsel %vm404, %v881, %v883
    %v885 = vrot.slane %v818, 1
    %v886 = vsel %vm404, %v883, %v885
    %v887 = vrot.slane %v819, 1
    %v888 = vsel %vm404, %v885, %v887
    %v889 = vrot.slane %v820, 1
    %v890 = vsel %vm404, %v887, %v889
    %v891 = vrot.slane %v821, 1
    %v892 = vsel %vm404, %v889, %v891
    %v893 = vrot.slane %v822, 1
    %v894 = vsel %vm404, %v891, %v893
    %v895 = vrot.slane %v823, 1
    %v896 = vsel %vm404, %v893, %v895
    %v897 = vrot.slane %v824, 1
    %v898 = vsel %vm404, %v895, %v897
    %v899 = vrot.slane %v825, 1
    %v900 = vsel %vm404, %v897, %v899
    %v901 = vrot.slane %v826, 1
    %v902 = vsel %vm404, %v899, %v901
    %v903 = vrot.slane %v827, 1
    %v904 = vsel %vm404, %v901, %v903
    %v905 = vrot.slane %v828, 1
    %v906 = vsel %vm404, %v903, %v905
    %v907 = vrot.slane %v829, 1
    %v908 = vsel %vm404, %v905, %v907
    %v909 = vrot.slane %v830, 1
    %v910 = vsel %vm404, %v907, %v909
    %v911 = vrot.slane %v831, 1
    %v912 = vsel %vm404, %v909, %v911
    %v913 = vrot.slane %v832, 1
    %v914 = vsel %vm404, %v911, %v913
    %v915 = vrot.slane %v833, 1
    %v916 = vsel %vm404, %v913, %v915
    %v945 = vmax.f32 %v806, %v864
    %v946 = vmax.f32 %v807, %v866
    %v947 = vmax.f32 %v808, %v868
    %v948 = vmax.f32 %v809, %v870
    %v949 = vmax.f32 %v810, %v872
    %v950 = vmax.f32 %v811, %v874
    %v951 = vmax.f32 %v812, %v876
    %v952 = vmax.f32 %v813, %v878
    %v953 = vmax.f32 %v814, %v880
    %v954 = vmax.f32 %v815, %v882
    %v955 = vmax.f32 %v816, %v884
    %v956 = vmax.f32 %v817, %v886
    %v957 = vmax.f32 %v818, %v888
    %v958 = vmax.f32 %v819, %v890
    %v959 = vmax.f32 %v820, %v892
    %v960 = vmax.f32 %v821, %v894
    %v961 = vmax.f32 %v822, %v896
    %v962 = vmax.f32 %v823, %v898
    %v963 = vmax.f32 %v824, %v900
    %v964 = vmax.f32 %v825, %v902
    %v965 = vmax.f32 %v826, %v904
    %v966 = vmax.f32 %v827, %v906
    %v967 = vmax.f32 %v828, %v908
    %v968 = vmax.f32 %v829, %v910
    %v969 = vmax.f32 %v830, %v912
    %v970 = vmax.f32 %v831, %v914
    %v971 = vmax.f32 %v832, %v916
    %v972 = vmax.f32 %v833, %v915
    %v973 = vmax.f32 %v945, %v947
    %v974 = vmax.f32 %v946, %v948
    %v975 = vmax.f32 %v947, %v949
    %v976 = vmax.f32 %v948, %v950
    %v977 = vmax.f32 %v949, %v951
    %v978 = vmax.f32 %v950, %v952
    %v979 = vmax.f32 %v951, %v953
    %v980 = vmax.f32 %v952, %v954
    %v981 = vmax.f32 %v953, %v955
    %v982 = vmax.f32 %v954, %v956
    %v983 = vmax.f32 %v955, %v957
    %v984 = vmax.f32 %v956, %v958
    %v985 = vmax.f32 %v957, %v959
    %v986 = vmax.f32 %v958, %v960
    %v987 = vmax.f32 %v959, %v961
    %v988 = vmax.f32 %v960, %v962
    %v989 = vmax.f32 %v961, %v963
    %v990 = vmax.f32 %v962, %v964
    %v991 = vmax.f32 %v963, %v965
    %v992 = vmax.f32 %v964, %v966
    %v993 = vmax.f32 %v965, %v967
    %v994 = vmax.f32 %v966, %v968
    %v995 = vmax.f32 %v967, %v969
    %v996 = vmax.f32 %v968, %v970
    %v997 = vmax.f32 %v969, %v971
    %v998 = vmax.f32 %v970, %v972
    %999 = vst.msk [vmem:[#allocation2 + $0x111] sm:$0xff] %vm33, %v973
    %1000 = vst.msk [vmem:[#allocation2 + $0x119] sm:$0x1f] %vm543, %v974
    %1001 = vst.msk [vmem:[#allocation2 + $0x121] sm:$0xff] %vm33, %v975
    %1002 = vst.msk [vmem:[#allocation2 + $0x129] sm:$0x1f] %vm543, %v976
    %1003 = vst.msk [vmem:[#allocation2 + $0x131] sm:$0xff] %vm33, %v977
    %1004 = vst.msk [vmem:[#allocation2 + $0x139] sm:$0x1f] %vm543, %v978
    %1005 = vst.msk [vmem:[#allocation2 + $0x141] sm:$0xff] %vm33, %v979
    %1006 = vst.msk [vmem:[#allocation2 + $0x149] sm:$0x1f] %vm543, %v980
    %1007 = vst.msk [vmem:[#allocation2 + $0x151] sm:$0xff] %vm33, %v981
    %1008 = vst.msk [vmem:[#allocation2 + $0x159] sm:$0x1f] %vm543, %v982
    %1009 = vst.msk [vmem:[#allocation2 + $0x161] sm:$0xff] %vm33, %v983
    %1010 = vst.msk [vmem:[#allocation2 + $0x169] sm:$0x1f] %vm543, %v984
    %1011 = vst.msk [vmem:[#allocation2 + $0x171] sm:$0xff] %vm33, %v985
    %1012 = vst.msk [vmem:[#allocation2 + $0x179] sm:$0x1f] %vm543, %v986
    %1013 = vst.msk [vmem:[#allocation2 + $0x181] sm:$0xff] %vm33, %v987
    %1014 = vst.msk [vmem:[#allocation2 + $0x189] sm:$0x1f] %vm543, %v988
    %1015 = vst.msk [vmem:[#allocation2 + $0x191] sm:$0xff] %vm33, %v989
    %1016 = vst.msk [vmem:[#allocation2 + $0x199] sm:$0x1f] %vm543, %v990
    %1017 = vst.msk [vmem:[#allocation2 + $0x1a1] sm:$0xff] %vm33, %v991
    %1018 = vst.msk [vmem:[#allocation2 + $0x1a9] sm:$0x1f] %vm543, %v992
    %1019 = vst.msk [vmem:[#allocation2 + $0x1b1] sm:$0xff] %vm33, %v993
    %1020 = vst.msk [vmem:[#allocation2 + $0x1b9] sm:$0x1f] %vm543, %v994
    %1021 = vst.msk [vmem:[#allocation2 + $0x1c1] sm:$0xff] %vm33, %v995
    %1022 = vst.msk [vmem:[#allocation2 + $0x1c9] sm:$0x1f] %vm543, %v996
    %1023 = vst.msk [vmem:[#allocation2 + $0x1d1] sm:$0xff] %vm33, %v997
    %1024 = vst.msk [vmem:[#allocation2 + $0x1d9] sm:$0x1f] %vm543, %v998
    %v1025 = vld [vmem:[%s4] sm:$0x1]
    %v1026 = vld [vmem:[#allocation2] sm:$0xff]
    %v1027 = vld [vmem:[#allocation2 + $0x8] sm:$0xff]
    %v1028 = vld [vmem:[#allocation2 + $0x10] sm:$0xff]
    %v1029 = vld [vmem:[#allocation2 + $0x18] sm:$0xff]
    %v1030 = vld [vmem:[#allocation2 + $0x20] sm:$0xff]
    %v1031 = vld [vmem:[#allocation2 + $0x28] sm:$0xff]
    %v1032 = vld [vmem:[#allocation2 + $0x30] sm:$0xff]
    %v1033 = vld [vmem:[#allocation2 + $0x38] sm:$0xff]
    %v1034 = vld [vmem:[#allocation2 + $0x40] sm:$0xff]
    %v1035 = vld [vmem:[#allocation2 + $0x48] sm:$0xff]
    %v1036 = vld [vmem:[#allocation2 + $0x50] sm:$0xff]
    %v1037 = vld [vmem:[#allocation2 + $0x58] sm:$0xff]
    %v1038 = vld [vmem:[#allocation2 + $0x60] sm:$0xff]
    %v1039 = vld [vmem:[#allocation2 + $0x68] sm:$0xff]
    %v1040 = vld [vmem:[#allocation2 + $0x70] sm:$0xff]
    %v1041 = vld [vmem:[#allocation2 + $0x78] sm:$0xff]
    %v1042 = vld [vmem:[#allocation2 + $0x80] sm:$0xff]
    %v1043 = vld [vmem:[#allocation2 + $0x88] sm:$0xff]
    %v1044 = vld [vmem:[#allocation2 + $0x90] sm:$0xff]
    %v1045 = vld [vmem:[#allocation2 + $0x98] sm:$0xff]
    %v1046 = vld [vmem:[#allocation2 + $0xa0] sm:$0xff]
    %v1047 = vld [vmem:[#allocation2 + $0xa8] sm:$0x7]
    %v1048 = vld [vmem:[%s3] sm:$0xff]
    %v1049 = vld [vmem:[%s3 + $0x8] sm:$0xff]
    %v1050 = vld [vmem:[#allocation2 + $0x1] sm:$0xff]
    %v1051 = vld [vmem:[#allocation2 + $0x9] sm:$0xff]
    %v1052 = vld [vmem:[#allocation2 + $0x11] sm:$0xff]
    %v1053 = vld [vmem:[#allocation2 + $0x19] sm:$0xff]
    %v1054 = vld [vmem:[#allocation2 + $0x21] sm:$0xff]
    %v1055 = vld [vmem:[#allocation2 + $0x29] sm:$0xff]
    %v1056 = vld [vmem:[#allocation2 + $0x31] sm:$0xff]
    %v1057 = vld [vmem:[#allocation2 + $0x39] sm:$0xff]
    %v1058 = vld [vmem:[#allocation2 + $0x41] sm:$0xff]
    %v1059 = vld [vmem:[#allocation2 + $0x49] sm:$0xff]
    %v1060 = vld [vmem:[#allocation2 + $0x51] sm:$0xff]
    %v1061 = vld [vmem:[#allocation2 + $0x59] sm:$0xff]
    %v1062 = vld [vmem:[#allocation2 + $0x61] sm:$0xff]
    %v1063 = vld [vmem:[#allocation2 + $0x69] sm:$0xff]
    %v1064 = vld [vmem:[#allocation2 + $0x71] sm:$0xff]
    %v1065 = vld [vmem:[#allocation2 + $0x79] sm:$0xff]
    %v1066 = vld [vmem:[#allocation2 + $0x81] sm:$0xff]
    %v1067 = vld [vmem:[#allocation2 + $0x89] sm:$0xff]
    %v1068 = vld [vmem:[#allocation2 + $0x91] sm:$0xff]
    %v1069 = vld [vmem:[#allocation2 + $0x99] sm:$0xff]
    %v1070 = vld [vmem:[#allocation2 + $0xa1] sm:$0xff]
    %v1071 = vld [vmem:[#allocation2 + $0xa9] sm:$0x7]
    %v1072 = vld [vmem:[%s3 + $0x10] sm:$0xff]
    %v1073 = vld [vmem:[%s3 + $0x18] sm:$0xff]
    %v1075 = vsel %vm33, %v1050, 0
    %v1078 = vsel %vm33, %v1051, 0
    %v1081 = vsel %vm33, %v1052, 0
    %v1084 = vsel %vm33, %v1053, 0
    %v1087 = vsel %vm33, %v1054, 0
    %v1090 = vsel %vm33, %v1055, 0
    %v1093 = vsel %vm33, %v1056, 0
    %v1096 = vsel %vm33, %v1057, 0
    %v1099 = vsel %vm33, %v1058, 0
    %v1102 = vsel %vm33, %v1059, 0
    %v1105 = vsel %vm33, %v1060, 0
    %v1108 = vsel %vm33, %v1061, 0
    %v1111 = vsel %vm33, %v1062, 0
    %v1114 = vsel %vm33, %v1063, 0
    %v1117 = vsel %vm33, %v1064, 0
    %v1120 = vsel %vm33, %v1065, 0
    %v1123 = vsel %vm33, %v1066, 0
    %v1126 = vsel %vm33, %v1067, 0
    %v1129 = vsel %vm33, %v1068, 0
    %v1132 = vsel %vm33, %v1069, 0
    %v1135 = vsel %vm33, %v1070, 0
    %v1138 = vsel %vm33, %v1071, 0
    %1140 = vmatpush.msra.mxu0 0.0
    %1141 = vmatpush.msra.mxu0 0.0
    %1142 = vmatpush.msra.mxu0 0.0
    %1143 = vmatpush.msra.mxu0 0.0
    %1144 = vmatpush.msra.mxu0 0.0
    %1145 = vmatpush.msra.mxu0 0.0
    %1146 = vmatpush.msra.mxu0 0.0
    %1147 = vmatpush.msra.mxu0 0.0
    %1148 = vmatpush.msra.mxu0 0.0
    %1149 = vmatpush.msra.mxu0 0.0
    %1150 = vmatpush.msra.mxu0 0.0
    %1151 = vmatpush.msra.mxu0 0.0
    %1152 = vmatpush.msra.mxu0 0.0
    %1153 = vmatpush.msra.mxu0 0.0
    %1154 = vmatpush.msra.mxu0 %v1073
    %1155 = vmatpush.msra.mxu0 %v1072
    %1156 = vmatmul.f32.gmra.mxu0 %v1075
    %v1157 = vpop.f32.mrf.mxu0
    %v1158 = vadd.f32 0.0, %v1157
    %1159 = vmatmul.f32.gmra.mxu0 %v1078
    %v1160 = vpop.f32.mrf.mxu0
    %v1161 = vadd.f32 0.0, %v1160
    %1162 = vmatmul.f32.gmra.mxu0 %v1081
    %v1163 = vpop.f32.mrf.mxu0
    %v1164 = vadd.f32 0.0, %v1163
    %1165 = vmatmul.f32.gmra.mxu0 %v1084
    %v1166 = vpop.f32.mrf.mxu0
    %1167 = vmatmul.f32.gmra.mxu0 %v1087
    %v1168 = vpop.f32.mrf.mxu0
    %v1169 = vadd.f32 0.0, %v1168
    %1170 = vmatmul.f32.gmra.mxu0 %v1090
    %v1171 = vpop.f32.mrf.mxu0
    %v1172 = vadd.f32 0.0, %v1171
    %1173 = vmatmul.f32.gmra.mxu0 %v1093
    %v1174 = vpop.f32.mrf.mxu0
    %v1175 = vadd.f32 0.0, %v1174
    %1176 = vmatmul.f32.gmra.mxu0 %v1096
    %v1177 = vpop.f32.mrf.mxu0
    %1178 = vmatmul.f32.gmra.mxu0 %v1099
    %v1179 = vpop.f32.mrf.mxu0
    %v1180 = vadd.f32 0.0, %v1179
    %1181 = vmatmul.f32.gmra.mxu0 %v1102
    %v1182 = vpop.f32.mrf.mxu0
    %v1183 = vadd.f32 0.0, %v1182
    %1184 = vmatmul.f32.gmra.mxu0 %v1105
    %v1185 = vpop.f32.mrf.mxu0
    %v1186 = vadd.f32 0.0, %v1185
    %1187 = vmatmul.f32.gmra.mxu0 %v1108
    %v1188 = vpop.f32.mrf.mxu0
    %1189 = vmatmul.f32.gmra.mxu0 %v1111
    %v1190 = vpop.f32.mrf.mxu0
    %v1191 = vadd.f32 0.0, %v1190
    %1192 = vmatmul.f32.gmra.mxu0 %v1114
    %v1193 = vpop.f32.mrf.mxu0
    %v1194 = vadd.f32 0.0, %v1193
    %1195 = vmatmul.f32.gmra.mxu0 %v1117
    %v1196 = vpop.f32.mrf.mxu0
    %v1197 = vadd.f32 0.0, %v1196
    %1198 = vmatmul.f32.gmra.mxu0 %v1120
    %v1199 = vpop.f32.mrf.mxu0
    %1200 = vmatmul.f32.gmra.mxu0 %v1123
    %v1201 = vpop.f32.mrf.mxu0
    %v1202 = vadd.f32 0.0, %v1201
    %1203 = vmatmul.f32.gmra.mxu0 %v1126
    %v1204 = vpop.f32.mrf.mxu0
    %v1205 = vadd.f32 0.0, %v1204
    %1206 = vmatmul.f32.gmra.mxu0 %v1129
    %v1207 = vpop.f32.mrf.mxu0
    %v1208 = vadd.f32 0.0, %v1207
    %1209 = vmatmul.f32.gmra.mxu0 %v1132
    %v1210 = vpop.f32.mrf.mxu0
    %1211 = vmatmul.f32.gmra.mxu0 %v1135
    %v1212 = vpop.f32.mrf.mxu0
    %v1213 = vadd.f32 0.0, %v1212
    %1214 = vmatmul.f32.gmra.mxu0 %v1138
    %v1215 = vpop.f32.mrf.mxu0
    %v1216 = vadd.f32 0.0, %v1215
    %1217 = vdwg.mxu0
    %v1219 = vsel %vm33, %v1026, 0
    %v1222 = vsel %vm33, %v1027, 0
    %v1225 = vsel %vm33, %v1028, 0
    %v1228 = vsel %vm33, %v1029, 0
    %v1231 = vsel %vm33, %v1030, 0
    %v1234 = vsel %vm33, %v1031, 0
    %v1237 = vsel %vm33, %v1032, 0
    %v1240 = vsel %vm33, %v1033, 0
    %v1243 = vsel %vm33, %v1034, 0
    %v1246 = vsel %vm33, %v1035, 0
    %v1249 = vsel %vm33, %v1036, 0
    %v1252 = vsel %vm33, %v1037, 0
    %v1255 = vsel %vm33, %v1038, 0
    %v1258 = vsel %vm33, %v1039, 0
    %v1261 = vsel %vm33, %v1040, 0
    %v1264 = vsel %vm33, %v1041, 0
    %v1267 = vsel %vm33, %v1042, 0
    %v1270 = vsel %vm33, %v1043, 0
    %v1273 = vsel %vm33, %v1044, 0
    %v1276 = vsel %vm33, %v1045, 0
    %v1279 = vsel %vm33, %v1046, 0
    %v1282 = vsel %vm33, %v1047, 0
    %1284 = vmatpush.msra.mxu0 0.0
    %1285 = vmatpush.msra.mxu0 0.0
    %1286 = vmatpush.msra.mxu0 0.0
    %1287 = vmatpush.msra.mxu0 0.0
    %1288 = vmatpush.msra.mxu0 0.0
    %1289 = vmatpush.msra.mxu0 0.0
    %1290 = vmatpush.msra.mxu0 0.0
    %1291 = vmatpush.msra.mxu0 0.0
    %1292 = vmatpush.msra.mxu0 0.0
    %1293 = vmatpush.msra.mxu0 0.0
    %1294 = vmatpush.msra.mxu0 0.0
    %1295 = vmatpush.msra.mxu0 0.0
    %1296 = vmatpush.msra.mxu0 0.0
    %1297 = vmatpush.msra.mxu0 0.0
    %1298 = vmatpush.msra.mxu0 %v1049
    %1299 = vmatpush.msra.mxu0 %v1048
    %1300 = vmatmul.f32.gmra.mxu0 %v1219
    %v1301 = vpop.f32.mrf.mxu0
    %v1302 = vadd.f32 %v1158, %v1301
    %1303 = vmatmul.f32.gmra.mxu0 %v1222
    %v1304 = vpop.f32.mrf.mxu0
    %v1305 = vadd.f32 %v1161, %v1304
    %1306 = vmatmul.f32.gmra.mxu0 %v1225
    %v1307 = vpop.f32.mrf.mxu0
    %v1308 = vadd.f32 %v1164, %v1307
    %1309 = vmatmul.f32.gmra.mxu0 %v1228
    %v1310 = vpop.f32.mrf.mxu0
    %1311 = vmatmul.f32.gmra.mxu0 %v1231
    %v1312 = vpop.f32.mrf.mxu0
    %v1313 = vadd.f32 %v1169, %v1312
    %1314 = vmatmul.f32.gmra.mxu0 %v1234
    %v1315 = vpop.f32.mrf.mxu0
    %v1316 = vadd.f32 %v1172, %v1315
    %1317 = vmatmul.f32.gmra.mxu0 %v1237
    %v1318 = vpop.f32.mrf.mxu0
    %v1319 = vadd.f32 %v1175, %v1318
    %1320 = vmatmul.f32.gmra.mxu0 %v1240
    %v1321 = vpop.f32.mrf.mxu0
    %1322 = vmatmul.f32.gmra.mxu0 %v1243
    %v1323 = vpop.f32.mrf.mxu0
    %v1324 = vadd.f32 %v1180, %v1323
    %1325 = vmatmul.f32.gmra.mxu0 %v1246
    %v1326 = vpop.f32.mrf.mxu0
    %v1327 = vadd.f32 %v1183, %v1326
    %1328 = vmatmul.f32.gmra.mxu0 %v1249
    %v1329 = vpop.f32.mrf.mxu0
    %v1330 = vadd.f32 %v1186, %v1329
    %1331 = vmatmul.f32.gmra.mxu0 %v1252
    %v1332 = vpop.f32.mrf.mxu0
    %1333 = vmatmul.f32.gmra.mxu0 %v1255
    %v1334 = vpop.f32.mrf.mxu0
    %v1335 = vadd.f32 %v1191, %v1334
    %1336 = vmatmul.f32.gmra.mxu0 %v1258
    %v1337 = vpop.f32.mrf.mxu0
    %v1338 = vadd.f32 %v1194, %v1337
    %1339 = vmatmul.f32.gmra.mxu0 %v1261
    %v1340 = vpop.f32.mrf.mxu0
    %v1341 = vadd.f32 %v1197, %v1340
    %1342 = vmatmul.f32.gmra.mxu0 %v1264
    %v1343 = vpop.f32.mrf.mxu0
    %1344 = vmatmul.f32.gmra.mxu0 %v1267
    %v1345 = vpop.f32.mrf.mxu0
    %v1346 = vadd.f32 %v1202, %v1345
    %1347 = vmatmul.f32.gmra.mxu0 %v1270
    %v1348 = vpop.f32.mrf.mxu0
    %v1349 = vadd.f32 %v1205, %v1348
    %1350 = vmatmul.f32.gmra.mxu0 %v1273
    %v1351 = vpop.f32.mrf.mxu0
    %v1352 = vadd.f32 %v1208, %v1351
    %1353 = vmatmul.f32.gmra.mxu0 %v1276
    %v1354 = vpop.f32.mrf.mxu0
    %1355 = vmatmul.f32.gmra.mxu0 %v1279
    %v1356 = vpop.f32.mrf.mxu0
    %v1357 = vadd.f32 %v1213, %v1356
    %1358 = vmatmul.f32.gmra.mxu0 %v1282
    %v1359 = vpop.f32.mrf.mxu0
    %v1360 = vadd.f32 %v1216, %v1359
    %1361 = vdwg.mxu0
    %v1362 = vld [vmem:[#allocation2 + $0x2] sm:$0xff]
    %v1363 = vld [vmem:[#allocation2 + $0xa] sm:$0xff]
    %v1364 = vld [vmem:[#allocation2 + $0x12] sm:$0xff]
    %v1365 = vld [vmem:[#allocation2 + $0x1a] sm:$0xff]
    %v1366 = vld [vmem:[#allocation2 + $0x22] sm:$0xff]
    %v1367 = vld [vmem:[#allocation2 + $0x2a] sm:$0xff]
    %v1368 = vld [vmem:[#allocation2 + $0x32] sm:$0xff]
    %v1369 = vld [vmem:[#allocation2 + $0x3a] sm:$0xff]
    %v1370 = vld [vmem:[#allocation2 + $0x42] sm:$0xff]
    %v1371 = vld [vmem:[#allocation2 + $0x4a] sm:$0xff]
    %v1372 = vld [vmem:[#allocation2 + $0x52] sm:$0xff]
    %v1373 = vld [vmem:[#allocation2 + $0x5a] sm:$0xff]
    %v1374 = vld [vmem:[#allocation2 + $0x62] sm:$0xff]
    %v1375 = vld [vmem:[#allocation2 + $0x6a] sm:$0xff]
    %v1376 = vld [vmem:[#allocation2 + $0x72] sm:$0xff]
    %v1377 = vld [vmem:[#allocation2 + $0x7a] sm:$0xff]
    %v1378 = vld [vmem:[#allocation2 + $0x82] sm:$0xff]
    %v1379 = vld [vmem:[#allocation2 + $0x8a] sm:$0xff]
    %v1380 = vld [vmem:[#allocation2 + $0x92] sm:$0xff]
    %v1381 = vld [vmem:[#allocation2 + $0x9a] sm:$0xff]
    %v1382 = vld [vmem:[#allocation2 + $0xa2] sm:$0xff]
    %v1383 = vld [vmem:[#allocation2 + $0xaa] sm:$0x7]
    %v1384 = vld [vmem:[%s3 + $0x20] sm:$0xff]
    %v1385 = vld [vmem:[%s3 + $0x28] sm:$0xff]
    %v1387 = vsel %vm33, %v1362, 0
    %v1390 = vsel %vm33, %v1363, 0
    %v1393 = vsel %vm33, %v1364, 0
    %v1396 = vsel %vm33, %v1365, 0
    %v1399 = vsel %vm33, %v1366, 0
    %v1402 = vsel %vm33, %v1367, 0
    %v1405 = vsel %vm33, %v1368, 0
    %v1408 = vsel %vm33, %v1369, 0
    %v1411 = vsel %vm33, %v1370, 0
    %v1414 = vsel %vm33, %v1371, 0
    %v1417 = vsel %vm33, %v1372, 0
    %v1420 = vsel %vm33, %v1373, 0
    %v1423 = vsel %vm33, %v1374, 0
    %v1426 = vsel %vm33, %v1375, 0
    %v1429 = vsel %vm33, %v1376, 0
    %v1432 = vsel %vm33, %v1377, 0
    %v1435 = vsel %vm33, %v1378, 0
    %v1438 = vsel %vm33, %v1379, 0
    %v1441 = vsel %vm33, %v1380, 0
    %v1444 = vsel %vm33, %v1381, 0
    %v1447 = vsel %vm33, %v1382, 0
    %v1450 = vsel %vm33, %v1383, 0
    %1452 = vmatpush.msra.mxu0 0.0
    %1453 = vmatpush.msra.mxu0 0.0
    %1454 = vmatpush.msra.mxu0 0.0
    %1455 = vmatpush.msra.mxu0 0.0
    %1456 = vmatpush.msra.mxu0 0.0
    %1457 = vmatpush.msra.mxu0 0.0
    %1458 = vmatpush.msra.mxu0 0.0
    %1459 = vmatpush.msra.mxu0 0.0
    %1460 = vmatpush.msra.mxu0 0.0
    %1461 = vmatpush.msra.mxu0 0.0
    %1462 = vmatpush.msra.mxu0 0.0
    %1463 = vmatpush.msra.mxu0 0.0
    %1464 = vmatpush.msra.mxu0 0.0
    %1465 = vmatpush.msra.mxu0 0.0
    %1466 = vmatpush.msra.mxu0 %v1385
    %1467 = vmatpush.msra.mxu0 %v1384
    %1468 = vmatmul.f32.gmra.mxu0 %v1387
    %v1469 = vpop.f32.mrf.mxu0
    %v1470 = vadd.f32 0.0, %v1469
    %1471 = vmatmul.f32.gmra.mxu0 %v1390
    %v1472 = vpop.f32.mrf.mxu0
    %v1473 = vadd.f32 0.0, %v1472
    %1474 = vmatmul.f32.gmra.mxu0 %v1393
    %v1475 = vpop.f32.mrf.mxu0
    %v1476 = vadd.f32 0.0, %v1475
    %1477 = vmatmul.f32.gmra.mxu0 %v1396
    %v1478 = vpop.f32.mrf.mxu0
    %1479 = vmatmul.f32.gmra.mxu0 %v1399
    %v1480 = vpop.f32.mrf.mxu0
    %v1481 = vadd.f32 0.0, %v1480
    %1482 = vmatmul.f32.gmra.mxu0 %v1402
    %v1483 = vpop.f32.mrf.mxu0
    %v1484 = vadd.f32 0.0, %v1483
    %1485 = vmatmul.f32.gmra.mxu0 %v1405
    %v1486 = vpop.f32.mrf.mxu0
    %v1487 = vadd.f32 0.0, %v1486
    %1488 = vmatmul.f32.gmra.mxu0 %v1408
    %v1489 = vpop.f32.mrf.mxu0
    %1490 = vmatmul.f32.gmra.mxu0 %v1411
    %v1491 = vpop.f32.mrf.mxu0
    %v1492 = vadd.f32 0.0, %v1491
    %1493 = vmatmul.f32.gmra.mxu0 %v1414
    %v1494 = vpop.f32.mrf.mxu0
    %v1495 = vadd.f32 0.0, %v1494
    %1496 = vmatmul.f32.gmra.mxu0 %v1417
    %v1497 = vpop.f32.mrf.mxu0
    %v1498 = vadd.f32 0.0, %v1497
    %1499 = vmatmul.f32.gmra.mxu0 %v1420
    %v1500 = vpop.f32.mrf.mxu0
    %1501 = vmatmul.f32.gmra.mxu0 %v1423
    %v1502 = vpop.f32.mrf.mxu0
    %v1503 = vadd.f32 0.0, %v1502
    %1504 = vmatmul.f32.gmra.mxu0 %v1426
    %v1505 = vpop.f32.mrf.mxu0
    %v1506 = vadd.f32 0.0, %v1505
    %1507 = vmatmul.f32.gmra.mxu0 %v1429
    %v1508 = vpop.f32.mrf.mxu0
    %v1509 = vadd.f32 0.0, %v1508
    %1510 = vmatmul.f32.gmra.mxu0 %v1432
    %v1511 = vpop.f32.mrf.mxu0
    %1512 = vmatmul.f32.gmra.mxu0 %v1435
    %v1513 = vpop.f32.mrf.mxu0
    %v1514 = vadd.f32 0.0, %v1513
    %1515 = vmatmul.f32.gmra.mxu0 %v1438
    %v1516 = vpop.f32.mrf.mxu0
    %v1517 = vadd.f32 0.0, %v1516
    %1518 = vmatmul.f32.gmra.mxu0 %v1441
    %v1519 = vpop.f32.mrf.mxu0
    %v1520 = vadd.f32 0.0, %v1519
    %1521 = vmatmul.f32.gmra.mxu0 %v1444
    %v1522 = vpop.f32.mrf.mxu0
    %1523 = vmatmul.f32.gmra.mxu0 %v1447
    %v1524 = vpop.f32.mrf.mxu0
    %v1525 = vadd.f32 0.0, %v1524
    %1526 = vmatmul.f32.gmra.mxu0 %v1450
    %v1527 = vpop.f32.mrf.mxu0
    %v1528 = vadd.f32 0.0, %v1527
    %1529 = vdwg.mxu0
    %v1530 = vadd.f32 %v1302, %v1470
    %v1531 = vadd.f32 %v1305, %v1473
    %v1532 = vadd.f32 %v1308, %v1476
    %v1533 = vadd.f32 %v1313, %v1481
    %v1534 = vadd.f32 %v1316, %v1484
    %v1535 = vadd.f32 %v1319, %v1487
    %v1536 = vadd.f32 %v1324, %v1492
    %v1537 = vadd.f32 %v1327, %v1495
    %v1538 = vadd.f32 %v1330, %v1498
    %v1539 = vadd.f32 %v1335, %v1503
    %v1540 = vadd.f32 %v1338, %v1506
    %v1541 = vadd.f32 %v1341, %v1509
    %v1542 = vadd.f32 %v1346, %v1514
    %v1543 = vadd.f32 %v1349, %v1517
    %v1544 = vadd.f32 %v1352, %v1520
    %v1545 = vadd.f32 %v1357, %v1525
    %v1546 = vadd.f32 %v1360, %v1528
    %v1547 = vld [vmem:[#allocation2 + $0x3] sm:$0xff]
    %v1548 = vld [vmem:[#allocation2 + $0xb] sm:$0xff]
    %v1549 = vld [vmem:[#allocation2 + $0x13] sm:$0xff]
    %v1550 = vld [vmem:[#allocation2 + $0x1b] sm:$0xff]
    %v1551 = vld [vmem:[#allocation2 + $0x23] sm:$0xff]
    %v1552 = vld [vmem:[#allocation2 + $0x2b] sm:$0xff]
    %v1553 = vld [vmem:[#allocation2 + $0x33] sm:$0xff]
    %v1554 = vld [vmem:[#allocation2 + $0x3b] sm:$0xff]
    %v1555 = vld [vmem:[#allocation2 + $0x43] sm:$0xff]
    %v1556 = vld [vmem:[#allocation2 + $0x4b] sm:$0xff]
    %v1557 = vld [vmem:[#allocation2 + $0x53] sm:$0xff]
    %v1558 = vld [vmem:[#allocation2 + $0x5b] sm:$0xff]
    %v1559 = vld [vmem:[#allocation2 + $0x63] sm:$0xff]
    %v1560 = vld [vmem:[#allocation2 + $0x6b] sm:$0xff]
    %v1561 = vld [vmem:[#allocation2 + $0x73] sm:$0xff]
    %v1562 = vld [vmem:[#allocation2 + $0x7b] sm:$0xff]
    %v1563 = vld [vmem:[#allocation2 + $0x83] sm:$0xff]
    %v1564 = vld [vmem:[#allocation2 + $0x8b] sm:$0xff]
    %v1565 = vld [vmem:[#allocation2 + $0x93] sm:$0xff]
    %v1566 = vld [vmem:[#allocation2 + $0x9b] sm:$0xff]
    %v1567 = vld [vmem:[#allocation2 + $0xa3] sm:$0xff]
    %v1568 = vld [vmem:[#allocation2 + $0xab] sm:$0x7]
    %v1569 = vld [vmem:[%s3 + $0x30] sm:$0xff]
    %v1570 = vld [vmem:[%s3 + $0x38] sm:$0xff]
    %v1572 = vsel %vm33, %v1547, 0
    %v1575 = vsel %vm33, %v1548, 0
    %v1578 = vsel %vm33, %v1549, 0
    %v1581 = vsel %vm33, %v1550, 0
    %v1584 = vsel %vm33, %v1551, 0
    %v1587 = vsel %vm33, %v1552, 0
    %v1590 = vsel %vm33, %v1553, 0
    %v1593 = vsel %vm33, %v1554, 0
    %v1596 = vsel %vm33, %v1555, 0
    %v1599 = vsel %vm33, %v1556, 0
    %v1602 = vsel %vm33, %v1557, 0
    %v1605 = vsel %vm33, %v1558, 0
    %v1608 = vsel %vm33, %v1559, 0
    %v1611 = vsel %vm33, %v1560, 0
    %v1614 = vsel %vm33, %v1561, 0
    %v1617 = vsel %vm33, %v1562, 0
    %v1620 = vsel %vm33, %v1563, 0
    %v1623 = vsel %vm33, %v1564, 0
    %v1626 = vsel %vm33, %v1565, 0
    %v1629 = vsel %vm33, %v1566, 0
    %v1632 = vsel %vm33, %v1567, 0
    %v1635 = vsel %vm33, %v1568, 0
    %1637 = vmatpush.msra.mxu0 0.0
    %1638 = vmatpush.msra.mxu0 0.0
    %1639 = vmatpush.msra.mxu0 0.0
    %1640 = vmatpush.msra.mxu0 0.0
    %1641 = vmatpush.msra.mxu0 0.0
    %1642 = vmatpush.msra.mxu0 0.0
    %1643 = vmatpush.msra.mxu0 0.0
    %1644 = vmatpush.msra.mxu0 0.0
    %1645 = vmatpush.msra.mxu0 0.0
    %1646 = vmatpush.msra.mxu0 0.0
    %1647 = vmatpush.msra.mxu0 0.0
    %1648 = vmatpush.msra.mxu0 0.0
    %1649 = vmatpush.msra.mxu0 0.0
    %1650 = vmatpush.msra.mxu0 0.0
    %1651 = vmatpush.msra.mxu0 %v1570
    %1652 = vmatpush.msra.mxu0 %v1569
    %1653 = vmatmul.f32.gmra.mxu0 %v1572
    %v1654 = vpop.f32.mrf.mxu0
    %v1655 = vadd.f32 0.0, %v1654
    %1656 = vmatmul.f32.gmra.mxu0 %v1575
    %v1657 = vpop.f32.mrf.mxu0
    %v1658 = vadd.f32 0.0, %v1657
    %1659 = vmatmul.f32.gmra.mxu0 %v1578
    %v1660 = vpop.f32.mrf.mxu0
    %v1661 = vadd.f32 0.0, %v1660
    %1662 = vmatmul.f32.gmra.mxu0 %v1581
    %v1663 = vpop.f32.mrf.mxu0
    %1664 = vmatmul.f32.gmra.mxu0 %v1584
    %v1665 = vpop.f32.mrf.mxu0
    %v1666 = vadd.f32 0.0, %v1665
    %1667 = vmatmul.f32.gmra.mxu0 %v1587
    %v1668 = vpop.f32.mrf.mxu0
    %v1669 = vadd.f32 0.0, %v1668
    %1670 = vmatmul.f32.gmra.mxu0 %v1590
    %v1671 = vpop.f32.mrf.mxu0
    %v1672 = vadd.f32 0.0, %v1671
    %1673 = vmatmul.f32.gmra.mxu0 %v1593
    %v1674 = vpop.f32.mrf.mxu0
    %1675 = vmatmul.f32.gmra.mxu0 %v1596
    %v1676 = vpop.f32.mrf.mxu0
    %v1677 = vadd.f32 0.0, %v1676
    %1678 = vmatmul.f32.gmra.mxu0 %v1599
    %v1679 = vpop.f32.mrf.mxu0
    %v1680 = vadd.f32 0.0, %v1679
    %1681 = vmatmul.f32.gmra.mxu0 %v1602
    %v1682 = vpop.f32.mrf.mxu0
    %v1683 = vadd.f32 0.0, %v1682
    %1684 = vmatmul.f32.gmra.mxu0 %v1605
    %v1685 = vpop.f32.mrf.mxu0
    %1686 = vmatmul.f32.gmra.mxu0 %v1608
    %v1687 = vpop.f32.mrf.mxu0
    %v1688 = vadd.f32 0.0, %v1687
    %1689 = vmatmul.f32.gmra.mxu0 %v1611
    %v1690 = vpop.f32.mrf.mxu0
    %v1691 = vadd.f32 0.0, %v1690
    %1692 = vmatmul.f32.gmra.mxu0 %v1614
    %v1693 = vpop.f32.mrf.mxu0
    %v1694 = vadd.f32 0.0, %v1693
    %1695 = vmatmul.f32.gmra.mxu0 %v1617
    %v1696 = vpop.f32.mrf.mxu0
    %1697 = vmatmul.f32.gmra.mxu0 %v1620
    %v1698 = vpop.f32.mrf.mxu0
    %v1699 = vadd.f32 0.0, %v1698
    %1700 = vmatmul.f32.gmra.mxu0 %v1623
    %v1701 = vpop.f32.mrf.mxu0
    %v1702 = vadd.f32 0.0, %v1701
    %1703 = vmatmul.f32.gmra.mxu0 %v1626
    %v1704 = vpop.f32.mrf.mxu0
    %v1705 = vadd.f32 0.0, %v1704
    %1706 = vmatmul.f32.gmra.mxu0 %v1629
    %v1707 = vpop.f32.mrf.mxu0
    %1708 = vmatmul.f32.gmra.mxu0 %v1632
    %v1709 = vpop.f32.mrf.mxu0
    %v1710 = vadd.f32 0.0, %v1709
    %1711 = vmatmul.f32.gmra.mxu0 %v1635
    %v1712 = vpop.f32.mrf.mxu0
    %v1713 = vadd.f32 0.0, %v1712
    %1714 = vdwg.mxu0
    %v1715 = vadd.f32 %v1530, %v1655
    %v1716 = vadd.f32 %v1531, %v1658
    %v1717 = vadd.f32 %v1532, %v1661
    %v1718 = vadd.f32 %v1533, %v1666
    %v1719 = vadd.f32 %v1534, %v1669
    %v1720 = vadd.f32 %v1535, %v1672
    %v1721 = vadd.f32 %v1536, %v1677
    %v1722 = vadd.f32 %v1537, %v1680
    %v1723 = vadd.f32 %v1538, %v1683
    %v1724 = vadd.f32 %v1539, %v1688
    %v1725 = vadd.f32 %v1540, %v1691
    %v1726 = vadd.f32 %v1541, %v1694
    %v1727 = vadd.f32 %v1542, %v1699
    %v1728 = vadd.f32 %v1543, %v1702
    %v1729 = vadd.f32 %v1544, %v1705
    %v1730 = vadd.f32 %v1545, %v1710
    %v1731 = vadd.f32 %v1546, %v1713
    %v1732 = vld [vmem:[#allocation2 + $0x10] sm:$0xff]
    %v1733 = vld [vmem:[#allocation2 + $0x18] sm:$0xff]
    %v1734 = vld [vmem:[#allocation2 + $0x20] sm:$0xff]
    %v1735 = vld [vmem:[#allocation2 + $0x28] sm:$0xff]
    %v1736 = vld [vmem:[#allocation2 + $0x30] sm:$0xff]
    %v1737 = vld [vmem:[#allocation2 + $0x38] sm:$0xff]
    %v1738 = vld [vmem:[#allocation2 + $0x40] sm:$0xff]
    %v1739 = vld [vmem:[#allocation2 + $0x48] sm:$0xff]
    %v1740 = vld [vmem:[#allocation2 + $0x50] sm:$0xff]
    %v1741 = vld [vmem:[#allocation2 + $0x58] sm:$0xff]
    %v1742 = vld [vmem:[#allocation2 + $0x60] sm:$0xff]
    %v1743 = vld [vmem:[#allocation2 + $0x68] sm:$0xff]
    %v1744 = vld [vmem:[#allocation2 + $0x70] sm:$0xff]
    %v1745 = vld [vmem:[#allocation2 + $0x78] sm:$0xff]
    %v1746 = vld [vmem:[#allocation2 + $0x80] sm:$0xff]
    %v1747 = vld [vmem:[#allocation2 + $0x88] sm:$0xff]
    %v1748 = vld [vmem:[#allocation2 + $0x90] sm:$0xff]
    %v1749 = vld [vmem:[#allocation2 + $0x98] sm:$0xff]
    %v1750 = vld [vmem:[#allocation2 + $0xa0] sm:$0xff]
    %v1751 = vld [vmem:[#allocation2 + $0xa8] sm:$0xff]
    %v1752 = vld [vmem:[#allocation2 + $0xb0] sm:$0xff]
    %v1753 = vld [vmem:[#allocation2 + $0xb8] sm:$0x7]
    %v1754 = vld [vmem:[%s3 + $0x40] sm:$0xff]
    %v1755 = vld [vmem:[%s3 + $0x48] sm:$0xff]
    %v1757 = vsel %vm33, %v1732, 0
    %v1760 = vsel %vm33, %v1733, 0
    %v1763 = vsel %vm33, %v1734, 0
    %v1766 = vsel %vm33, %v1735, 0
    %v1769 = vsel %vm33, %v1736, 0
    %v1772 = vsel %vm33, %v1737, 0
    %v1775 = vsel %vm33, %v1738, 0
    %v1778 = vsel %vm33, %v1739, 0
    %v1781 = vsel %vm33, %v1740, 0
    %v1784 = vsel %vm33, %v1741, 0
    %v1787 = vsel %vm33, %v1742, 0
    %v1790 = vsel %vm33, %v1743, 0
    %v1793 = vsel %vm33, %v1744, 0
    %v1796 = vsel %vm33, %v1745, 0
    %v1799 = vsel %vm33, %v1746, 0
    %v1802 = vsel %vm33, %v1747, 0
    %v1805 = vsel %vm33, %v1748, 0
    %v1808 = vsel %vm33, %v1749, 0
    %v1811 = vsel %vm33, %v1750, 0
    %v1814 = vsel %vm33, %v1751, 0
    %v1817 = vsel %vm33, %v1752, 0
    %v1820 = vsel %vm33, %v1753, 0
    %1822 = vmatpush.msra.mxu0 0.0
    %1823 = vmatpush.msra.mxu0 0.0
    %1824 = vmatpush.msra.mxu0 0.0
    %1825 = vmatpush.msra.mxu0 0.0
    %1826 = vmatpush.msra.mxu0 0.0
    %1827 = vmatpush.msra.mxu0 0.0
    %1828 = vmatpush.msra.mxu0 0.0
    %1829 = vmatpush.msra.mxu0 0.0
    %1830 = vmatpush.msra.mxu0 0.0
    %1831 = vmatpush.msra.mxu0 0.0
    %1832 = vmatpush.msra.mxu0 0.0
    %1833 = vmatpush.msra.mxu0 0.0
    %1834 = vmatpush.msra.mxu0 0.0
    %1835 = vmatpush.msra.mxu0 0.0
    %1836 = vmatpush.msra.mxu0 %v1755
    %1837 = vmatpush.msra.mxu0 %v1754
    %1838 = vmatmul.f32.gmra.mxu0 %v1757
    %v1839 = vpop.f32.mrf.mxu0
    %v1840 = vadd.f32 0.0, %v1839
    %1841 = vmatmul.f32.gmra.mxu0 %v1760
    %v1842 = vpop.f32.mrf.mxu0
    %v1843 = vadd.f32 0.0, %v1842
    %1844 = vmatmul.f32.gmra.mxu0 %v1763
    %v1845 = vpop.f32.mrf.mxu0
    %v1846 = vadd.f32 0.0, %v1845
    %1847 = vmatmul.f32.gmra.mxu0 %v1766
    %v1848 = vpop.f32.mrf.mxu0
    %1849 = vmatmul.f32.gmra.mxu0 %v1769
    %v1850 = vpop.f32.mrf.mxu0
    %v1851 = vadd.f32 0.0, %v1850
    %1852 = vmatmul.f32.gmra.mxu0 %v1772
    %v1853 = vpop.f32.mrf.mxu0
    %v1854 = vadd.f32 0.0, %v1853
    %1855 = vmatmul.f32.gmra.mxu0 %v1775
    %v1856 = vpop.f32.mrf.mxu0
    %v1857 = vadd.f32 0.0, %v1856
    %1858 = vmatmul.f32.gmra.mxu0 %v1778
    %v1859 = vpop.f32.mrf.mxu0
    %1860 = vmatmul.f32.gmra.mxu0 %v1781
    %v1861 = vpop.f32.mrf.mxu0
    %v1862 = vadd.f32 0.0, %v1861
    %1863 = vmatmul.f32.gmra.mxu0 %v1784
    %v1864 = vpop.f32.mrf.mxu0
    %v1865 = vadd.f32 0.0, %v1864
    %1866 = vmatmul.f32.gmra.mxu0 %v1787
    %v1867 = vpop.f32.mrf.mxu0
    %v1868 = vadd.f32 0.0, %v1867
    %1869 = vmatmul.f32.gmra.mxu0 %v1790
    %v1870 = vpop.f32.mrf.mxu0
    %1871 = vmatmul.f32.gmra.mxu0 %v1793
    %v1872 = vpop.f32.mrf.mxu0
    %v1873 = vadd.f32 0.0, %v1872
    %1874 = vmatmul.f32.gmra.mxu0 %v1796
    %v1875 = vpop.f32.mrf.mxu0
    %v1876 = vadd.f32 0.0, %v1875
    %1877 = vmatmul.f32.gmra.mxu0 %v1799
    %v1878 = vpop.f32.mrf.mxu0
    %v1879 = vadd.f32 0.0, %v1878
    %1880 = vmatmul.f32.gmra.mxu0 %v1802
    %v1881 = vpop.f32.mrf.mxu0
    %1882 = vmatmul.f32.gmra.mxu0 %v1805
    %v1883 = vpop.f32.mrf.mxu0
    %v1884 = vadd.f32 0.0, %v1883
    %1885 = vmatmul.f32.gmra.mxu0 %v1808
    %v1886 = vpop.f32.mrf.mxu0
    %v1887 = vadd.f32 0.0, %v1886
    %1888 = vmatmul.f32.gmra.mxu0 %v1811
    %v1889 = vpop.f32.mrf.mxu0
    %v1890 = vadd.f32 0.0, %v1889
    %1891 = vmatmul.f32.gmra.mxu0 %v1814
    %v1892 = vpop.f32.mrf.mxu0
    %1893 = vmatmul.f32.gmra.mxu0 %v1817
    %v1894 = vpop.f32.mrf.mxu0
    %v1895 = vadd.f32 0.0, %v1894
    %1896 = vmatmul.f32.gmra.mxu0 %v1820
    %v1897 = vpop.f32.mrf.mxu0
    %v1898 = vadd.f32 0.0, %v1897
    %1899 = vdwg.mxu0
    %v1900 = vadd.f32 %v1715, %v1840
    %v1901 = vadd.f32 %v1716, %v1843
    %v1902 = vadd.f32 %v1717, %v1846
    %v1903 = vadd.f32 %v1718, %v1851
    %v1904 = vadd.f32 %v1719, %v1854
    %v1905 = vadd.f32 %v1720, %v1857
    %v1906 = vadd.f32 %v1721, %v1862
    %v1907 = vadd.f32 %v1722, %v1865
    %v1908 = vadd.f32 %v1723, %v1868
    %v1909 = vadd.f32 %v1724, %v1873
    %v1910 = vadd.f32 %v1725, %v1876
    %v1911 = vadd.f32 %v1726, %v1879
    %v1912 = vadd.f32 %v1727, %v1884
    %v1913 = vadd.f32 %v1728, %v1887
    %v1914 = vadd.f32 %v1729, %v1890
    %v1915 = vadd.f32 %v1730, %v1895
    %v1916 = vadd.f32 %v1731, %v1898
    %v1917 = vld [vmem:[#allocation2 + $0x11] sm:$0xff]
    %v1918 = vld [vmem:[#allocation2 + $0x19] sm:$0xff]
    %v1919 = vld [vmem:[#allocation2 + $0x21] sm:$0xff]
    %v1920 = vld [vmem:[#allocation2 + $0x29] sm:$0xff]
    %v1921 = vld [vmem:[#allocation2 + $0x31] sm:$0xff]
    %v1922 = vld [vmem:[#allocation2 + $0x39] sm:$0xff]
    %v1923 = vld [vmem:[#allocation2 + $0x41] sm:$0xff]
    %v1924 = vld [vmem:[#allocation2 + $0x49] sm:$0xff]
    %v1925 = vld [vmem:[#allocation2 + $0x51] sm:$0xff]
    %v1926 = vld [vmem:[#allocation2 + $0x59] sm:$0xff]
    %v1927 = vld [vmem:[#allocation2 + $0x61] sm:$0xff]
    %v1928 = vld [vmem:[#allocation2 + $0x69] sm:$0xff]
    %v1929 = vld [vmem:[#allocation2 + $0x71] sm:$0xff]
    %v1930 = vld [vmem:[#allocation2 + $0x79] sm:$0xff]
    %v1931 = vld [vmem:[#allocation2 + $0x81] sm:$0xff]
    %v1932 = vld [vmem:[#allocation2 + $0x89] sm:$0xff]
    %v1933 = vld [vmem:[#allocation2 + $0x91] sm:$0xff]
    %v1934 = vld [vmem:[#allocation2 + $0x99] sm:$0xff]
    %v1935 = vld [vmem:[#allocation2 + $0xa1] sm:$0xff]
    %v1936 = vld [vmem:[#allocation2 + $0xa9] sm:$0xff]
    %v1937 = vld [vmem:[#allocation2 + $0xb1] sm:$0xff]
    %v1938 = vld [vmem:[#allocation2 + $0xb9] sm:$0x7]
    %v1939 = vld [vmem:[%s3 + $0x50] sm:$0xff]
    %v1940 = vld [vmem:[%s3 + $0x58] sm:$0xff]
    %v1942 = vsel %vm33, %v1917, 0
    %v1945 = vsel %vm33, %v1918, 0
    %v1948 = vsel %vm33, %v1919, 0
    %v1951 = vsel %vm33, %v1920, 0
    %v1954 = vsel %vm33, %v1921, 0
    %v1957 = vsel %vm33, %v1922, 0
    %v1960 = vsel %vm33, %v1923, 0
    %v1963 = vsel %vm33, %v1924, 0
    %v1966 = vsel %vm33, %v1925, 0
    %v1969 = vsel %vm33, %v1926, 0
    %v1972 = vsel %vm33, %v1927, 0
    %v1975 = vsel %vm33, %v1928, 0
    %v1978 = vsel %vm33, %v1929, 0
    %v1981 = vsel %vm33, %v1930, 0
    %v1984 = vsel %vm33, %v1931, 0
    %v1987 = vsel %vm33, %v1932, 0
    %v1990 = vsel %vm33, %v1933, 0
    %v1993 = vsel %vm33, %v1934, 0
    %v1996 = vsel %vm33, %v1935, 0
    %v1999 = vsel %vm33, %v1936, 0
    %v2002 = vsel %vm33, %v1937, 0
    %v2005 = vsel %vm33, %v1938, 0
    %2007 = vmatpush.msra.mxu0 0.0
    %2008 = vmatpush.msra.mxu0 0.0
    %2009 = vmatpush.msra.mxu0 0.0
    %2010 = vmatpush.msra.mxu0 0.0
    %2011 = vmatpush.msra.mxu0 0.0
    %2012 = vmatpush.msra.mxu0 0.0
    %2013 = vmatpush.msra.mxu0 0.0
    %2014 = vmatpush.msra.mxu0 0.0
    %2015 = vmatpush.msra.mxu0 0.0
    %2016 = vmatpush.msra.mxu0 0.0
    %2017 = vmatpush.msra.mxu0 0.0
    %2018 = vmatpush.msra.mxu0 0.0
    %2019 = vmatpush.msra.mxu0 0.0
    %2020 = vmatpush.msra.mxu0 0.0
    %2021 = vmatpush.msra.mxu0 %v1940
    %2022 = vmatpush.msra.mxu0 %v1939
    %2023 = vmatmul.f32.gmra.mxu0 %v1942
    %v2024 = vpop.f32.mrf.mxu0
    %v2025 = vadd.f32 0.0, %v2024
    %2026 = vmatmul.f32.gmra.mxu0 %v1945
    %v2027 = vpop.f32.mrf.mxu0
    %v2028 = vadd.f32 0.0, %v2027
    %2029 = vmatmul.f32.gmra.mxu0 %v1948
    %v2030 = vpop.f32.mrf.mxu0
    %v2031 = vadd.f32 0.0, %v2030
    %2032 = vmatmul.f32.gmra.mxu0 %v1951
    %v2033 = vpop.f32.mrf.mxu0
    %2034 = vmatmul.f32.gmra.mxu0 %v1954
    %v2035 = vpop.f32.mrf.mxu0
    %v2036 = vadd.f32 0.0, %v2035
    %2037 = vmatmul.f32.gmra.mxu0 %v1957
    %v2038 = vpop.f32.mrf.mxu0
    %v2039 = vadd.f32 0.0, %v2038
    %2040 = vmatmul.f32.gmra.mxu0 %v1960
    %v2041 = vpop.f32.mrf.mxu0
    %v2042 = vadd.f32 0.0, %v2041
    %2043 = vmatmul.f32.gmra.mxu0 %v1963
    %v2044 = vpop.f32.mrf.mxu0
    %2045 = vmatmul.f32.gmra.mxu0 %v1966
    %v2046 = vpop.f32.mrf.mxu0
    %v2047 = vadd.f32 0.0, %v2046
    %2048 = vmatmul.f32.gmra.mxu0 %v1969
    %v2049 = vpop.f32.mrf.mxu0
    %v2050 = vadd.f32 0.0, %v2049
    %2051 = vmatmul.f32.gmra.mxu0 %v1972
    %v2052 = vpop.f32.mrf.mxu0
    %v2053 = vadd.f32 0.0, %v2052
    %2054 = vmatmul.f32.gmra.mxu0 %v1975
    %v2055 = vpop.f32.mrf.mxu0
    %2056 = vmatmul.f32.gmra.mxu0 %v1978
    %v2057 = vpop.f32.mrf.mxu0
    %v2058 = vadd.f32 0.0, %v2057
    %2059 = vmatmul.f32.gmra.mxu0 %v1981
    %v2060 = vpop.f32.mrf.mxu0
    %v2061 = vadd.f32 0.0, %v2060
    %2062 = vmatmul.f32.gmra.mxu0 %v1984
    %v2063 = vpop.f32.mrf.mxu0
    %v2064 = vadd.f32 0.0, %v2063
    %2065 = vmatmul.f32.gmra.mxu0 %v1987
    %v2066 = vpop.f32.mrf.mxu0
    %2067 = vmatmul.f32.gmra.mxu0 %v1990
    %v2068 = vpop.f32.mrf.mxu0
    %v2069 = vadd.f32 0.0, %v2068
    %2070 = vmatmul.f32.gmra.mxu0 %v1993
    %v2071 = vpop.f32.mrf.mxu0
    %v2072 = vadd.f32 0.0, %v2071
    %2073 = vmatmul.f32.gmra.mxu0 %v1996
    %v2074 = vpop.f32.mrf.mxu0
    %v2075 = vadd.f32 0.0, %v2074
    %2076 = vmatmul.f32.gmra.mxu0 %v1999
    %v2077 = vpop.f32.mrf.mxu0
    %2078 = vmatmul.f32.gmra.mxu0 %v2002
    %v2079 = vpop.f32.mrf.mxu0
    %v2080 = vadd.f32 0.0, %v2079
    %2081 = vmatmul.f32.gmra.mxu0 %v2005
    %v2082 = vpop.f32.mrf.mxu0
    %v2083 = vadd.f32 0.0, %v2082
    %2084 = vdwg.mxu0
    %v2085 = vadd.f32 %v1900, %v2025
    %v2086 = vadd.f32 %v1901, %v2028
    %v2087 = vadd.f32 %v1902, %v2031
    %v2088 = vadd.f32 %v1903, %v2036
    %v2089 = vadd.f32 %v1904, %v2039
    %v2090 = vadd.f32 %v1905, %v2042
    %v2091 = vadd.f32 %v1906, %v2047
    %v2092 = vadd.f32 %v1907, %v2050
    %v2093 = vadd.f32 %v1908, %v2053
    %v2094 = vadd.f32 %v1909, %v2058
    %v2095 = vadd.f32 %v1910, %v2061
    %v2096 = vadd.f32 %v1911, %v2064
    %v2097 = vadd.f32 %v1912, %v2069
    %v2098 = vadd.f32 %v1913, %v2072
    %v2099 = vadd.f32 %v1914, %v2075
    %v2100 = vadd.f32 %v1915, %v2080
    %v2101 = vadd.f32 %v1916, %v2083
    %v2102 = vld [vmem:[#allocation2 + $0x12] sm:$0xff]
    %v2103 = vld [vmem:[#allocation2 + $0x1a] sm:$0xff]
    %v2104 = vld [vmem:[#allocation2 + $0x22] sm:$0xff]
    %v2105 = vld [vmem:[#allocation2 + $0x2a] sm:$0xff]
    %v2106 = vld [vmem:[#allocation2 + $0x32] sm:$0xff]
    %v2107 = vld [vmem:[#allocation2 + $0x3a] sm:$0xff]
    %v2108 = vld [vmem:[#allocation2 + $0x42] sm:$0xff]
    %v2109 = vld [vmem:[#allocation2 + $0x4a] sm:$0xff]
    %v2110 = vld [vmem:[#allocation2 + $0x52] sm:$0xff]
    %v2111 = vld [vmem:[#allocation2 + $0x5a] sm:$0xff]
    %v2112 = vld [vmem:[#allocation2 + $0x62] sm:$0xff]
    %v2113 = vld [vmem:[#allocation2 + $0x6a] sm:$0xff]
    %v2114 = vld [vmem:[#allocation2 + $0x72] sm:$0xff]
    %v2115 = vld [vmem:[#allocation2 + $0x7a] sm:$0xff]
    %v2116 = vld [vmem:[#allocation2 + $0x82] sm:$0xff]
    %v2117 = vld [vmem:[#allocation2 + $0x8a] sm:$0xff]
    %v2118 = vld [vmem:[#allocation2 + $0x92] sm:$0xff]
    %v2119 = vld [vmem:[#allocation2 + $0x9a] sm:$0xff]
    %v2120 = vld [vmem:[#allocation2 + $0xa2] sm:$0xff]
    %v2121 = vld [vmem:[#allocation2 + $0xaa] sm:$0xff]
    %v2122 = vld [vmem:[#allocation2 + $0xb2] sm:$0xff]
    %v2123 = vld [vmem:[#allocation2 + $0xba] sm:$0x7]
    %v2124 = vld [vmem:[%s3 + $0x60] sm:$0xff]
    %v2125 = vld [vmem:[%s3 + $0x68] sm:$0xff]
    %v2127 = vsel %vm33, %v2102, 0
    %v2130 = vsel %vm33, %v2103, 0
    %v2133 = vsel %vm33, %v2104, 0
    %v2136 = vsel %vm33, %v2105, 0
    %v2139 = vsel %vm33, %v2106, 0
    %v2142 = vsel %vm33, %v2107, 0
    %v2145 = vsel %vm33, %v2108, 0
    %v2148 = vsel %vm33, %v2109, 0
    %v2151 = vsel %vm33, %v2110, 0
    %v2154 = vsel %vm33, %v2111, 0
    %v2157 = vsel %vm33, %v2112, 0
    %v2160 = vsel %vm33, %v2113, 0
    %v2163 = vsel %vm33, %v2114, 0
    %v2166 = vsel %vm33, %v2115, 0
    %v2169 = vsel %vm33, %v2116, 0
    %v2172 = vsel %vm33, %v2117, 0
    %v2175 = vsel %vm33, %v2118, 0
    %v2178 = vsel %vm33, %v2119, 0
    %v2181 = vsel %vm33, %v2120, 0
    %v2184 = vsel %vm33, %v2121, 0
    %v2187 = vsel %vm33, %v2122, 0
    %v2190 = vsel %vm33, %v2123, 0
    %2192 = vmatpush.msra.mxu0 0.0
    %2193 = vmatpush.msra.mxu0 0.0
    %2194 = vmatpush.msra.mxu0 0.0
    %2195 = vmatpush.msra.mxu0 0.0
    %2196 = vmatpush.msra.mxu0 0.0
    %2197 = vmatpush.msra.mxu0 0.0
    %2198 = vmatpush.msra.mxu0 0.0
    %2199 = vmatpush.msra.mxu0 0.0
    %2200 = vmatpush.msra.mxu0 0.0
    %2201 = vmatpush.msra.mxu0 0.0
    %2202 = vmatpush.msra.mxu0 0.0
    %2203 = vmatpush.msra.mxu0 0.0
    %2204 = vmatpush.msra.mxu0 0.0
    %2205 = vmatpush.msra.mxu0 0.0
    %2206 = vmatpush.msra.mxu0 %v2125
    %2207 = vmatpush.msra.mxu0 %v2124
    %2208 = vmatmul.f32.gmra.mxu0 %v2127
    %v2209 = vpop.f32.mrf.mxu0
    %v2210 = vadd.f32 0.0, %v2209
    %2211 = vmatmul.f32.gmra.mxu0 %v2130
    %v2212 = vpop.f32.mrf.mxu0
    %v2213 = vadd.f32 0.0, %v2212
    %2214 = vmatmul.f32.gmra.mxu0 %v2133
    %v2215 = vpop.f32.mrf.mxu0
    %v2216 = vadd.f32 0.0, %v2215
    %2217 = vmatmul.f32.gmra.mxu0 %v2136
    %v2218 = vpop.f32.mrf.mxu0
    %2219 = vmatmul.f32.gmra.mxu0 %v2139
    %v2220 = vpop.f32.mrf.mxu0
    %v2221 = vadd.f32 0.0, %v2220
    %2222 = vmatmul.f32.gmra.mxu0 %v2142
    %v2223 = vpop.f32.mrf.mxu0
    %v2224 = vadd.f32 0.0, %v2223
    %2225 = vmatmul.f32.gmra.mxu0 %v2145
    %v2226 = vpop.f32.mrf.mxu0
    %v2227 = vadd.f32 0.0, %v2226
    %2228 = vmatmul.f32.gmra.mxu0 %v2148
    %v2229 = vpop.f32.mrf.mxu0
    %2230 = vmatmul.f32.gmra.mxu0 %v2151
    %v2231 = vpop.f32.mrf.mxu0
    %v2232 = vadd.f32 0.0, %v2231
    %2233 = vmatmul.f32.gmra.mxu0 %v2154
    %v2234 = vpop.f32.mrf.mxu0
    %v2235 = vadd.f32 0.0, %v2234
    %2236 = vmatmul.f32.gmra.mxu0 %v2157
    %v2237 = vpop.f32.mrf.mxu0
    %v2238 = vadd.f32 0.0, %v2237
    %2239 = vmatmul.f32.gmra.mxu0 %v2160
    %v2240 = vpop.f32.mrf.mxu0
    %2241 = vmatmul.f32.gmra.mxu0 %v2163
    %v2242 = vpop.f32.mrf.mxu0
    %v2243 = vadd.f32 0.0, %v2242
    %2244 = vmatmul.f32.gmra.mxu0 %v2166
    %v2245 = vpop.f32.mrf.mxu0
    %v2246 = vadd.f32 0.0, %v2245
    %2247 = vmatmul.f32.gmra.mxu0 %v2169
    %v2248 = vpop.f32.mrf.mxu0
    %v2249 = vadd.f32 0.0, %v2248
    %2250 = vmatmul.f32.gmra.mxu0 %v2172
    %v2251 = vpop.f32.mrf.mxu0
    %2252 = vmatmul.f32.gmra.mxu0 %v2175
    %v2253 = vpop.f32.mrf.mxu0
    %v2254 = vadd.f32 0.0, %v2253
    %2255 = vmatmul.f32.gmra.mxu0 %v2178
    %v2256 = vpop.f32.mrf.mxu0
    %v2257 = vadd.f32 0.0, %v2256
    %2258 = vmatmul.f32.gmra.mxu0 %v2181
    %v2259 = vpop.f32.mrf.mxu0
    %v2260 = vadd.f32 0.0, %v2259
    %2261 = vmatmul.f32.gmra.mxu0 %v2184
    %v2262 = vpop.f32.mrf.mxu0
    %2263 = vmatmul.f32.gmra.mxu0 %v2187
    %v2264 = vpop.f32.mrf.mxu0
    %v2265 = vadd.f32 0.0, %v2264
    %2266 = vmatmul.f32.gmra.mxu0 %v2190
    %v2267 = vpop.f32.mrf.mxu0
    %v2268 = vadd.f32 0.0, %v2267
    %2269 = vdwg.mxu0
    %v2270 = vadd.f32 %v2085, %v2210
    %v2271 = vadd.f32 %v2086, %v2213
    %v2272 = vadd.f32 %v2087, %v2216
    %v2273 = vadd.f32 %v2088, %v2221
    %v2274 = vadd.f32 %v2089, %v2224
    %v2275 = vadd.f32 %v2090, %v2227
    %v2276 = vadd.f32 %v2091, %v2232
    %v2277 = vadd.f32 %v2092, %v2235
    %v2278 = vadd.f32 %v2093, %v2238
    %v2279 = vadd.f32 %v2094, %v2243
    %v2280 = vadd.f32 %v2095, %v2246
    %v2281 = vadd.f32 %v2096, %v2249
    %v2282 = vadd.f32 %v2097, %v2254
    %v2283 = vadd.f32 %v2098, %v2257
    %v2284 = vadd.f32 %v2099, %v2260
    %v2285 = vadd.f32 %v2100, %v2265
    %v2286 = vadd.f32 %v2101, %v2268
    %v2287 = vld [vmem:[#allocation2 + $0x13] sm:$0xff]
    %v2288 = vld [vmem:[#allocation2 + $0x1b] sm:$0xff]
    %v2289 = vld [vmem:[#allocation2 + $0x23] sm:$0xff]
    %v2290 = vld [vmem:[#allocation2 + $0x2b] sm:$0xff]
    %v2291 = vld [vmem:[#allocation2 + $0x33] sm:$0xff]
    %v2292 = vld [vmem:[#allocation2 + $0x3b] sm:$0xff]
    %v2293 = vld [vmem:[#allocation2 + $0x43] sm:$0xff]
    %v2294 = vld [vmem:[#allocation2 + $0x4b] sm:$0xff]
    %v2295 = vld [vmem:[#allocation2 + $0x53] sm:$0xff]
    %v2296 = vld [vmem:[#allocation2 + $0x5b] sm:$0xff]
    %v2297 = vld [vmem:[#allocation2 + $0x63] sm:$0xff]
    %v2298 = vld [vmem:[#allocation2 + $0x6b] sm:$0xff]
    %v2299 = vld [vmem:[#allocation2 + $0x73] sm:$0xff]
    %v2300 = vld [vmem:[#allocation2 + $0x7b] sm:$0xff]
    %v2301 = vld [vmem:[#allocation2 + $0x83] sm:$0xff]
    %v2302 = vld [vmem:[#allocation2 + $0x8b] sm:$0xff]
    %v2303 = vld [vmem:[#allocation2 + $0x93] sm:$0xff]
    %v2304 = vld [vmem:[#allocation2 + $0x9b] sm:$0xff]
    %v2305 = vld [vmem:[#allocation2 + $0xa3] sm:$0xff]
    %v2306 = vld [vmem:[#allocation2 + $0xab] sm:$0xff]
    %v2307 = vld [vmem:[#allocation2 + $0xb3] sm:$0xff]
    %v2308 = vld [vmem:[#allocation2 + $0xbb] sm:$0x7]
    %v2309 = vld [vmem:[%s3 + $0x70] sm:$0xff]
    %v2310 = vld [vmem:[%s3 + $0x78] sm:$0xff]
    %v2312 = vsel %vm33, %v2287, 0
    %v2315 = vsel %vm33, %v2288, 0
    %v2318 = vsel %vm33, %v2289, 0
    %v2321 = vsel %vm33, %v2290, 0
    %v2324 = vsel %vm33, %v2291, 0
    %v2327 = vsel %vm33, %v2292, 0
    %v2330 = vsel %vm33, %v2293, 0
    %v2333 = vsel %vm33, %v2294, 0
    %v2336 = vsel %vm33, %v2295, 0
    %v2339 = vsel %vm33, %v2296, 0
    %v2342 = vsel %vm33, %v2297, 0
    %v2345 = vsel %vm33, %v2298, 0
    %v2348 = vsel %vm33, %v2299, 0
    %v2351 = vsel %vm33, %v2300, 0
    %v2354 = vsel %vm33, %v2301, 0
    %v2357 = vsel %vm33, %v2302, 0
    %v2360 = vsel %vm33, %v2303, 0
    %v2363 = vsel %vm33, %v2304, 0
    %v2366 = vsel %vm33, %v2305, 0
    %v2369 = vsel %vm33, %v2306, 0
    %v2372 = vsel %vm33, %v2307, 0
    %v2375 = vsel %vm33, %v2308, 0
    %2377 = vmatpush.msra.mxu0 0.0
    %2378 = vmatpush.msra.mxu0 0.0
    %2379 = vmatpush.msra.mxu0 0.0
    %2380 = vmatpush.msra.mxu0 0.0
    %2381 = vmatpush.msra.mxu0 0.0
    %2382 = vmatpush.msra.mxu0 0.0
    %2383 = vmatpush.msra.mxu0 0.0
    %2384 = vmatpush.msra.mxu0 0.0
    %2385 = vmatpush.msra.mxu0 0.0
    %2386 = vmatpush.msra.mxu0 0.0
    %2387 = vmatpush.msra.mxu0 0.0
    %2388 = vmatpush.msra.mxu0 0.0
    %2389 = vmatpush.msra.mxu0 0.0
    %2390 = vmatpush.msra.mxu0 0.0
    %2391 = vmatpush.msra.mxu0 %v2310
    %2392 = vmatpush.msra.mxu0 %v2309
    %2393 = vmatmul.f32.gmra.mxu0 %v2312
    %v2394 = vpop.f32.mrf.mxu0
    %v2395 = vadd.f32 0.0, %v2394
    %2396 = vmatmul.f32.gmra.mxu0 %v2315
    %v2397 = vpop.f32.mrf.mxu0
    %v2398 = vadd.f32 0.0, %v2397
    %2399 = vmatmul.f32.gmra.mxu0 %v2318
    %v2400 = vpop.f32.mrf.mxu0
    %v2401 = vadd.f32 0.0, %v2400
    %2402 = vmatmul.f32.gmra.mxu0 %v2321
    %v2403 = vpop.f32.mrf.mxu0
    %2404 = vmatmul.f32.gmra.mxu0 %v2324
    %v2405 = vpop.f32.mrf.mxu0
    %v2406 = vadd.f32 0.0, %v2405
    %2407 = vmatmul.f32.gmra.mxu0 %v2327
    %v2408 = vpop.f32.mrf.mxu0
    %v2409 = vadd.f32 0.0, %v2408
    %2410 = vmatmul.f32.gmra.mxu0 %v2330
    %v2411 = vpop.f32.mrf.mxu0
    %v2412 = vadd.f32 0.0, %v2411
    %2413 = vmatmul.f32.gmra.mxu0 %v2333
    %v2414 = vpop.f32.mrf.mxu0
    %2415 = vmatmul.f32.gmra.mxu0 %v2336
    %v2416 = vpop.f32.mrf.mxu0
    %v2417 = vadd.f32 0.0, %v2416
    %2418 = vmatmul.f32.gmra.mxu0 %v2339
    %v2419 = vpop.f32.mrf.mxu0
    %v2420 = vadd.f32 0.0, %v2419
    %2421 = vmatmul.f32.gmra.mxu0 %v2342
    %v2422 = vpop.f32.mrf.mxu0
    %v2423 = vadd.f32 0.0, %v2422
    %2424 = vmatmul.f32.gmra.mxu0 %v2345
    %v2425 = vpop.f32.mrf.mxu0
    %2426 = vmatmul.f32.gmra.mxu0 %v2348
    %v2427 = vpop.f32.mrf.mxu0
    %v2428 = vadd.f32 0.0, %v2427
    %2429 = vmatmul.f32.gmra.mxu0 %v2351
    %v2430 = vpop.f32.mrf.mxu0
    %v2431 = vadd.f32 0.0, %v2430
    %2432 = vmatmul.f32.gmra.mxu0 %v2354
    %v2433 = vpop.f32.mrf.mxu0
    %v2434 = vadd.f32 0.0, %v2433
    %2435 = vmatmul.f32.gmra.mxu0 %v2357
    %v2436 = vpop.f32.mrf.mxu0
    %2437 = vmatmul.f32.gmra.mxu0 %v2360
    %v2438 = vpop.f32.mrf.mxu0
    %v2439 = vadd.f32 0.0, %v2438
    %2440 = vmatmul.f32.gmra.mxu0 %v2363
    %v2441 = vpop.f32.mrf.mxu0
    %v2442 = vadd.f32 0.0, %v2441
    %2443 = vmatmul.f32.gmra.mxu0 %v2366
    %v2444 = vpop.f32.mrf.mxu0
    %v2445 = vadd.f32 0.0, %v2444
    %2446 = vmatmul.f32.gmra.mxu0 %v2369
    %v2447 = vpop.f32.mrf.mxu0
    %2448 = vmatmul.f32.gmra.mxu0 %v2372
    %v2449 = vpop.f32.mrf.mxu0
    %v2450 = vadd.f32 0.0, %v2449
    %2451 = vmatmul.f32.gmra.mxu0 %v2375
    %v2452 = vpop.f32.mrf.mxu0
    %v2453 = vadd.f32 0.0, %v2452
    %2454 = vdwg.mxu0
    %v2455 = vadd.f32 %v2270, %v2395
    %v2456 = vadd.f32 %v2271, %v2398
    %v2457 = vadd.f32 %v2272, %v2401
    %v2458 = vadd.f32 %v2273, %v2406
    %v2459 = vadd.f32 %v2274, %v2409
    %v2460 = vadd.f32 %v2275, %v2412
    %v2461 = vadd.f32 %v2276, %v2417
    %v2462 = vadd.f32 %v2277, %v2420
    %v2463 = vadd.f32 %v2278, %v2423
    %v2464 = vadd.f32 %v2279, %v2428
    %v2465 = vadd.f32 %v2280, %v2431
    %v2466 = vadd.f32 %v2281, %v2434
    %v2467 = vadd.f32 %v2282, %v2439
    %v2468 = vadd.f32 %v2283, %v2442
    %v2469 = vadd.f32 %v2284, %v2445
    %v2470 = vadd.f32 %v2285, %v2450
    %v2471 = vadd.f32 %v2286, %v2453
    %v2472 = vld [vmem:[#allocation2 + $0x20] sm:$0xff]
    %v2473 = vld [vmem:[#allocation2 + $0x28] sm:$0xff]
    %v2474 = vld [vmem:[#allocation2 + $0x30] sm:$0xff]
    %v2475 = vld [vmem:[#allocation2 + $0x38] sm:$0xff]
    %v2476 = vld [vmem:[#allocation2 + $0x40] sm:$0xff]
    %v2477 = vld [vmem:[#allocation2 + $0x48] sm:$0xff]
    %v2478 = vld [vmem:[#allocation2 + $0x50] sm:$0xff]
    %v2479 = vld [vmem:[#allocation2 + $0x58] sm:$0xff]
    %v2480 = vld [vmem:[#allocation2 + $0x60] sm:$0xff]
    %v2481 = vld [vmem:[#allocation2 + $0x68] sm:$0xff]
    %v2482 = vld [vmem:[#allocation2 + $0x70] sm:$0xff]
    %v2483 = vld [vmem:[#allocation2 + $0x78] sm:$0xff]
    %v2484 = vld [vmem:[#allocation2 + $0x80] sm:$0xff]
    %v2485 = vld [vmem:[#allocation2 + $0x88] sm:$0xff]
    %v2486 = vld [vmem:[#allocation2 + $0x90] sm:$0xff]
    %v2487 = vld [vmem:[#allocation2 + $0x98] sm:$0xff]
    %v2488 = vld [vmem:[#allocation2 + $0xa0] sm:$0xff]
    %v2489 = vld [vmem:[#allocation2 + $0xa8] sm:$0xff]
    %v2490 = vld [vmem:[#allocation2 + $0xb0] sm:$0xff]
    %v2491 = vld [vmem:[#allocation2 + $0xb8] sm:$0xff]
    %v2492 = vld [vmem:[#allocation2 + $0xc0] sm:$0xff]
    %v2493 = vld [vmem:[#allocation2 + $0xc8] sm:$0x7]
    %v2494 = vld [vmem:[%s3 + $0x80] sm:$0xff]
    %v2495 = vld [vmem:[%s3 + $0x88] sm:$0xff]
    %v2497 = vsel %vm33, %v2472, 0
    %v2500 = vsel %vm33, %v2473, 0
    %v2503 = vsel %vm33, %v2474, 0
    %v2506 = vsel %vm33, %v2475, 0
    %v2509 = vsel %vm33, %v2476, 0
    %v2512 = vsel %vm33, %v2477, 0
    %v2515 = vsel %vm33, %v2478, 0
    %v2518 = vsel %vm33, %v2479, 0
    %v2521 = vsel %vm33, %v2480, 0
    %v2524 = vsel %vm33, %v2481, 0
    %v2527 = vsel %vm33, %v2482, 0
    %v2530 = vsel %vm33, %v2483, 0
    %v2533 = vsel %vm33, %v2484, 0
    %v2536 = vsel %vm33, %v2485, 0
    %v2539 = vsel %vm33, %v2486, 0
    %v2542 = vsel %vm33, %v2487, 0
    %v2545 = vsel %vm33, %v2488, 0
    %v2548 = vsel %vm33, %v2489, 0
    %v2551 = vsel %vm33, %v2490, 0
    %v2554 = vsel %vm33, %v2491, 0
    %v2557 = vsel %vm33, %v2492, 0
    %v2560 = vsel %vm33, %v2493, 0
    %2562 = vmatpush.msra.mxu0 0.0
    %2563 = vmatpush.msra.mxu0 0.0
    %2564 = vmatpush.msra.mxu0 0.0
    %2565 = vmatpush.msra.mxu0 0.0
    %2566 = vmatpush.msra.mxu0 0.0
    %2567 = vmatpush.msra.mxu0 0.0
    %2568 = vmatpush.msra.mxu0 0.0
    %2569 = vmatpush.msra.mxu0 0.0
    %2570 = vmatpush.msra.mxu0 0.0
    %2571 = vmatpush.msra.mxu0 0.0
    %2572 = vmatpush.msra.mxu0 0.0
    %2573 = vmatpush.msra.mxu0 0.0
    %2574 = vmatpush.msra.mxu0 0.0
    %2575 = vmatpush.msra.mxu0 0.0
    %2576 = vmatpush.msra.mxu0 %v2495
    %2577 = vmatpush.msra.mxu0 %v2494
    %2578 = vmatmul.f32.gmra.mxu0 %v2497
    %v2579 = vpop.f32.mrf.mxu0
    %v2580 = vadd.f32 0.0, %v2579
    %2581 = vmatmul.f32.gmra.mxu0 %v2500
    %v2582 = vpop.f32.mrf.mxu0
    %v2583 = vadd.f32 0.0, %v2582
    %2584 = vmatmul.f32.gmra.mxu0 %v2503
    %v2585 = vpop.f32.mrf.mxu0
    %v2586 = vadd.f32 0.0, %v2585
    %2587 = vmatmul.f32.gmra.mxu0 %v2506
    %v2588 = vpop.f32.mrf.mxu0
    %2589 = vmatmul.f32.gmra.mxu0 %v2509
    %v2590 = vpop.f32.mrf.mxu0
    %v2591 = vadd.f32 0.0, %v2590
    %2592 = vmatmul.f32.gmra.mxu0 %v2512
    %v2593 = vpop.f32.mrf.mxu0
    %v2594 = vadd.f32 0.0, %v2593
    %2595 = vmatmul.f32.gmra.mxu0 %v2515
    %v2596 = vpop.f32.mrf.mxu0
    %v2597 = vadd.f32 0.0, %v2596
    %2598 = vmatmul.f32.gmra.mxu0 %v2518
    %v2599 = vpop.f32.mrf.mxu0
    %2600 = vmatmul.f32.gmra.mxu0 %v2521
    %v2601 = vpop.f32.mrf.mxu0
    %v2602 = vadd.f32 0.0, %v2601
    %2603 = vmatmul.f32.gmra.mxu0 %v2524
    %v2604 = vpop.f32.mrf.mxu0
    %v2605 = vadd.f32 0.0, %v2604
    %2606 = vmatmul.f32.gmra.mxu0 %v2527
    %v2607 = vpop.f32.mrf.mxu0
    %v2608 = vadd.f32 0.0, %v2607
    %2609 = vmatmul.f32.gmra.mxu0 %v2530
    %v2610 = vpop.f32.mrf.mxu0
    %2611 = vmatmul.f32.gmra.mxu0 %v2533
    %v2612 = vpop.f32.mrf.mxu0
    %v2613 = vadd.f32 0.0, %v2612
    %2614 = vmatmul.f32.gmra.mxu0 %v2536
    %v2615 = vpop.f32.mrf.mxu0
    %v2616 = vadd.f32 0.0, %v2615
    %2617 = vmatmul.f32.gmra.mxu0 %v2539
    %v2618 = vpop.f32.mrf.mxu0
    %v2619 = vadd.f32 0.0, %v2618
    %2620 = vmatmul.f32.gmra.mxu0 %v2542
    %v2621 = vpop.f32.mrf.mxu0
    %2622 = vmatmul.f32.gmra.mxu0 %v2545
    %v2623 = vpop.f32.mrf.mxu0
    %v2624 = vadd.f32 0.0, %v2623
    %2625 = vmatmul.f32.gmra.mxu0 %v2548
    %v2626 = vpop.f32.mrf.mxu0
    %v2627 = vadd.f32 0.0, %v2626
    %2628 = vmatmul.f32.gmra.mxu0 %v2551
    %v2629 = vpop.f32.mrf.mxu0
    %v2630 = vadd.f32 0.0, %v2629
    %2631 = vmatmul.f32.gmra.mxu0 %v2554
    %v2632 = vpop.f32.mrf.mxu0
    %2633 = vmatmul.f32.gmra.mxu0 %v2557
    %v2634 = vpop.f32.mrf.mxu0
    %v2635 = vadd.f32 0.0, %v2634
    %2636 = vmatmul.f32.gmra.mxu0 %v2560
    %v2637 = vpop.f32.mrf.mxu0
    %v2638 = vadd.f32 0.0, %v2637
    %2639 = vdwg.mxu0
    %v2640 = vadd.f32 %v2455, %v2580
    %v2641 = vadd.f32 %v2456, %v2583
    %v2642 = vadd.f32 %v2457, %v2586
    %v2643 = vadd.f32 %v2458, %v2591
    %v2644 = vadd.f32 %v2459, %v2594
    %v2645 = vadd.f32 %v2460, %v2597
    %v2646 = vadd.f32 %v2461, %v2602
    %v2647 = vadd.f32 %v2462, %v2605
    %v2648 = vadd.f32 %v2463, %v2608
    %v2649 = vadd.f32 %v2464, %v2613
    %v2650 = vadd.f32 %v2465, %v2616
    %v2651 = vadd.f32 %v2466, %v2619
    %v2652 = vadd.f32 %v2467, %v2624
    %v2653 = vadd.f32 %v2468, %v2627
    %v2654 = vadd.f32 %v2469, %v2630
    %v2655 = vadd.f32 %v2470, %v2635
    %v2656 = vadd.f32 %v2471, %v2638
    %v2657 = vld [vmem:[#allocation2 + $0x21] sm:$0xff]
    %v2658 = vld [vmem:[#allocation2 + $0x29] sm:$0xff]
    %v2659 = vld [vmem:[#allocation2 + $0x31] sm:$0xff]
    %v2660 = vld [vmem:[#allocation2 + $0x39] sm:$0xff]
    %v2661 = vld [vmem:[#allocation2 + $0x41] sm:$0xff]
    %v2662 = vld [vmem:[#allocation2 + $0x49] sm:$0xff]
    %v2663 = vld [vmem:[#allocation2 + $0x51] sm:$0xff]
    %v2664 = vld [vmem:[#allocation2 + $0x59] sm:$0xff]
    %v2665 = vld [vmem:[#allocation2 + $0x61] sm:$0xff]
    %v2666 = vld [vmem:[#allocation2 + $0x69] sm:$0xff]
    %v2667 = vld [vmem:[#allocation2 + $0x71] sm:$0xff]
    %v2668 = vld [vmem:[#allocation2 + $0x79] sm:$0xff]
    %v2669 = vld [vmem:[#allocation2 + $0x81] sm:$0xff]
    %v2670 = vld [vmem:[#allocation2 + $0x89] sm:$0xff]
    %v2671 = vld [vmem:[#allocation2 + $0x91] sm:$0xff]
    %v2672 = vld [vmem:[#allocation2 + $0x99] sm:$0xff]
    %v2673 = vld [vmem:[#allocation2 + $0xa1] sm:$0xff]
    %v2674 = vld [vmem:[#allocation2 + $0xa9] sm:$0xff]
    %v2675 = vld [vmem:[#allocation2 + $0xb1] sm:$0xff]
    %v2676 = vld [vmem:[#allocation2 + $0xb9] sm:$0xff]
    %v2677 = vld [vmem:[#allocation2 + $0xc1] sm:$0xff]
    %v2678 = vld [vmem:[#allocation2 + $0xc9] sm:$0x7]
    %v2679 = vld [vmem:[%s3 + $0x90] sm:$0xff]
    %v2680 = vld [vmem:[%s3 + $0x98] sm:$0xff]
    %v2682 = vsel %vm33, %v2657, 0
    %v2685 = vsel %vm33, %v2658, 0
    %v2688 = vsel %vm33, %v2659, 0
    %v2691 = vsel %vm33, %v2660, 0
    %v2694 = vsel %vm33, %v2661, 0
    %v2697 = vsel %vm33, %v2662, 0
    %v2700 = vsel %vm33, %v2663, 0
    %v2703 = vsel %vm33, %v2664, 0
    %v2706 = vsel %vm33, %v2665, 0
    %v2709 = vsel %vm33, %v2666, 0
    %v2712 = vsel %vm33, %v2667, 0
    %v2715 = vsel %vm33, %v2668, 0
    %v2718 = vsel %vm33, %v2669, 0
    %v2721 = vsel %vm33, %v2670, 0
    %v2724 = vsel %vm33, %v2671, 0
    %v2727 = vsel %vm33, %v2672, 0
    %v2730 = vsel %vm33, %v2673, 0
    %v2733 = vsel %vm33, %v2674, 0
    %v2736 = vsel %vm33, %v2675, 0
    %v2739 = vsel %vm33, %v2676, 0
    %v2742 = vsel %vm33, %v2677, 0
    %v2745 = vsel %vm33, %v2678, 0
    %2747 = vmatpush.msra.mxu0 0.0
    %2748 = vmatpush.msra.mxu0 0.0
    %2749 = vmatpush.msra.mxu0 0.0
    %2750 = vmatpush.msra.mxu0 0.0
    %2751 = vmatpush.msra.mxu0 0.0
    %2752 = vmatpush.msra.mxu0 0.0
    %2753 = vmatpush.msra.mxu0 0.0
    %2754 = vmatpush.msra.mxu0 0.0
    %2755 = vmatpush.msra.mxu0 0.0
    %2756 = vmatpush.msra.mxu0 0.0
    %2757 = vmatpush.msra.mxu0 0.0
    %2758 = vmatpush.msra.mxu0 0.0
    %2759 = vmatpush.msra.mxu0 0.0
    %2760 = vmatpush.msra.mxu0 0.0
    %2761 = vmatpush.msra.mxu0 %v2680
    %2762 = vmatpush.msra.mxu0 %v2679
    %2763 = vmatmul.f32.gmra.mxu0 %v2682
    %v2764 = vpop.f32.mrf.mxu0
    %v2765 = vadd.f32 0.0, %v2764
    %2766 = vmatmul.f32.gmra.mxu0 %v2685
    %v2767 = vpop.f32.mrf.mxu0
    %v2768 = vadd.f32 0.0, %v2767
    %2769 = vmatmul.f32.gmra.mxu0 %v2688
    %v2770 = vpop.f32.mrf.mxu0
    %v2771 = vadd.f32 0.0, %v2770
    %2772 = vmatmul.f32.gmra.mxu0 %v2691
    %v2773 = vpop.f32.mrf.mxu0
    %2774 = vmatmul.f32.gmra.mxu0 %v2694
    %v2775 = vpop.f32.mrf.mxu0
    %v2776 = vadd.f32 0.0, %v2775
    %2777 = vmatmul.f32.gmra.mxu0 %v2697
    %v2778 = vpop.f32.mrf.mxu0
    %v2779 = vadd.f32 0.0, %v2778
    %2780 = vmatmul.f32.gmra.mxu0 %v2700
    %v2781 = vpop.f32.mrf.mxu0
    %v2782 = vadd.f32 0.0, %v2781
    %2783 = vmatmul.f32.gmra.mxu0 %v2703
    %v2784 = vpop.f32.mrf.mxu0
    %2785 = vmatmul.f32.gmra.mxu0 %v2706
    %v2786 = vpop.f32.mrf.mxu0
    %v2787 = vadd.f32 0.0, %v2786
    %2788 = vmatmul.f32.gmra.mxu0 %v2709
    %v2789 = vpop.f32.mrf.mxu0
    %v2790 = vadd.f32 0.0, %v2789
    %2791 = vmatmul.f32.gmra.mxu0 %v2712
    %v2792 = vpop.f32.mrf.mxu0
    %v2793 = vadd.f32 0.0, %v2792
    %2794 = vmatmul.f32.gmra.mxu0 %v2715
    %v2795 = vpop.f32.mrf.mxu0
    %2796 = vmatmul.f32.gmra.mxu0 %v2718
    %v2797 = vpop.f32.mrf.mxu0
    %v2798 = vadd.f32 0.0, %v2797
    %2799 = vmatmul.f32.gmra.mxu0 %v2721
    %v2800 = vpop.f32.mrf.mxu0
    %v2801 = vadd.f32 0.0, %v2800
    %2802 = vmatmul.f32.gmra.mxu0 %v2724
    %v2803 = vpop.f32.mrf.mxu0
    %v2804 = vadd.f32 0.0, %v2803
    %2805 = vmatmul.f32.gmra.mxu0 %v2727
    %v2806 = vpop.f32.mrf.mxu0
    %2807 = vmatmul.f32.gmra.mxu0 %v2730
    %v2808 = vpop.f32.mrf.mxu0
    %v2809 = vadd.f32 0.0, %v2808
    %2810 = vmatmul.f32.gmra.mxu0 %v2733
    %v2811 = vpop.f32.mrf.mxu0
    %v2812 = vadd.f32 0.0, %v2811
    %2813 = vmatmul.f32.gmra.mxu0 %v2736
    %v2814 = vpop.f32.mrf.mxu0
    %v2815 = vadd.f32 0.0, %v2814
    %2816 = vmatmul.f32.gmra.mxu0 %v2739
    %v2817 = vpop.f32.mrf.mxu0
    %2818 = vmatmul.f32.gmra.mxu0 %v2742
    %v2819 = vpop.f32.mrf.mxu0
    %v2820 = vadd.f32 0.0, %v2819
    %2821 = vmatmul.f32.gmra.mxu0 %v2745
    %v2822 = vpop.f32.mrf.mxu0
    %v2823 = vadd.f32 0.0, %v2822
    %2824 = vdwg.mxu0
    %v2825 = vadd.f32 %v2640, %v2765
    %v2826 = vadd.f32 %v2641, %v2768
    %v2827 = vadd.f32 %v2642, %v2771
    %v2828 = vadd.f32 %v2643, %v2776
    %v2829 = vadd.f32 %v2644, %v2779
    %v2830 = vadd.f32 %v2645, %v2782
    %v2831 = vadd.f32 %v2646, %v2787
    %v2832 = vadd.f32 %v2647, %v2790
    %v2833 = vadd.f32 %v2648, %v2793
    %v2834 = vadd.f32 %v2649, %v2798
    %v2835 = vadd.f32 %v2650, %v2801
    %v2836 = vadd.f32 %v2651, %v2804
    %v2837 = vadd.f32 %v2652, %v2809
    %v2838 = vadd.f32 %v2653, %v2812
    %v2839 = vadd.f32 %v2654, %v2815
    %v2840 = vadd.f32 %v2655, %v2820
    %v2841 = vadd.f32 %v2656, %v2823
    %v2842 = vld [vmem:[#allocation2 + $0x22] sm:$0xff]
    %v2843 = vld [vmem:[#allocation2 + $0x2a] sm:$0xff]
    %v2844 = vld [vmem:[#allocation2 + $0x32] sm:$0xff]
    %v2845 = vld [vmem:[#allocation2 + $0x3a] sm:$0xff]
    %v2846 = vld [vmem:[#allocation2 + $0x42] sm:$0xff]
    %v2847 = vld [vmem:[#allocation2 + $0x4a] sm:$0xff]
    %v2848 = vld [vmem:[#allocation2 + $0x52] sm:$0xff]
    %v2849 = vld [vmem:[#allocation2 + $0x5a] sm:$0xff]
    %v2850 = vld [vmem:[#allocation2 + $0x62] sm:$0xff]
    %v2851 = vld [vmem:[#allocation2 + $0x6a] sm:$0xff]
    %v2852 = vld [vmem:[#allocation2 + $0x72] sm:$0xff]
    %v2853 = vld [vmem:[#allocation2 + $0x7a] sm:$0xff]
    %v2854 = vld [vmem:[#allocation2 + $0x82] sm:$0xff]
    %v2855 = vld [vmem:[#allocation2 + $0x8a] sm:$0xff]
    %v2856 = vld [vmem:[#allocation2 + $0x92] sm:$0xff]
    %v2857 = vld [vmem:[#allocation2 + $0x9a] sm:$0xff]
    %v2858 = vld [vmem:[#allocation2 + $0xa2] sm:$0xff]
    %v2859 = vld [vmem:[#allocation2 + $0xaa] sm:$0xff]
    %v2860 = vld [vmem:[#allocation2 + $0xb2] sm:$0xff]
    %v2861 = vld [vmem:[#allocation2 + $0xba] sm:$0xff]
    %v2862 = vld [vmem:[#allocation2 + $0xc2] sm:$0xff]
    %v2863 = vld [vmem:[#allocation2 + $0xca] sm:$0x7]
    %v2864 = vld [vmem:[%s3 + $0xa0] sm:$0xff]
    %v2865 = vld [vmem:[%s3 + $0xa8] sm:$0xff]
    %v2867 = vsel %vm33, %v2842, 0
    %v2870 = vsel %vm33, %v2843, 0
    %v2873 = vsel %vm33, %v2844, 0
    %v2876 = vsel %vm33, %v2845, 0
    %v2879 = vsel %vm33, %v2846, 0
    %v2882 = vsel %vm33, %v2847, 0
    %v2885 = vsel %vm33, %v2848, 0
    %v2888 = vsel %vm33, %v2849, 0
    %v2891 = vsel %vm33, %v2850, 0
    %v2894 = vsel %vm33, %v2851, 0
    %v2897 = vsel %vm33, %v2852, 0
    %v2900 = vsel %vm33, %v2853, 0
    %v2903 = vsel %vm33, %v2854, 0
    %v2906 = vsel %vm33, %v2855, 0
    %v2909 = vsel %vm33, %v2856, 0
    %v2912 = vsel %vm33, %v2857, 0
    %v2915 = vsel %vm33, %v2858, 0
    %v2918 = vsel %vm33, %v2859, 0
    %v2921 = vsel %vm33, %v2860, 0
    %v2924 = vsel %vm33, %v2861, 0
    %v2927 = vsel %vm33, %v2862, 0
    %v2930 = vsel %vm33, %v2863, 0
    %2932 = vmatpush.msra.mxu0 0.0
    %2933 = vmatpush.msra.mxu0 0.0
    %2934 = vmatpush.msra.mxu0 0.0
    %2935 = vmatpush.msra.mxu0 0.0
    %2936 = vmatpush.msra.mxu0 0.0
    %2937 = vmatpush.msra.mxu0 0.0
    %2938 = vmatpush.msra.mxu0 0.0
    %2939 = vmatpush.msra.mxu0 0.0
    %2940 = vmatpush.msra.mxu0 0.0
    %2941 = vmatpush.msra.mxu0 0.0
    %2942 = vmatpush.msra.mxu0 0.0
    %2943 = vmatpush.msra.mxu0 0.0
    %2944 = vmatpush.msra.mxu0 0.0
    %2945 = vmatpush.msra.mxu0 0.0
    %2946 = vmatpush.msra.mxu0 %v2865
    %2947 = vmatpush.msra.mxu0 %v2864
    %2948 = vmatmul.f32.gmra.mxu0 %v2867
    %v2949 = vpop.f32.mrf.mxu0
    %v2950 = vadd.f32 0.0, %v2949
    %2951 = vmatmul.f32.gmra.mxu0 %v2870
    %v2952 = vpop.f32.mrf.mxu0
    %v2953 = vadd.f32 0.0, %v2952
    %2954 = vmatmul.f32.gmra.mxu0 %v2873
    %v2955 = vpop.f32.mrf.mxu0
    %v2956 = vadd.f32 0.0, %v2955
    %2957 = vmatmul.f32.gmra.mxu0 %v2876
    %v2958 = vpop.f32.mrf.mxu0
    %2959 = vmatmul.f32.gmra.mxu0 %v2879
    %v2960 = vpop.f32.mrf.mxu0
    %v2961 = vadd.f32 0.0, %v2960
    %2962 = vmatmul.f32.gmra.mxu0 %v2882
    %v2963 = vpop.f32.mrf.mxu0
    %v2964 = vadd.f32 0.0, %v2963
    %2965 = vmatmul.f32.gmra.mxu0 %v2885
    %v2966 = vpop.f32.mrf.mxu0
    %v2967 = vadd.f32 0.0, %v2966
    %2968 = vmatmul.f32.gmra.mxu0 %v2888
    %v2969 = vpop.f32.mrf.mxu0
    %2970 = vmatmul.f32.gmra.mxu0 %v2891
    %v2971 = vpop.f32.mrf.mxu0
    %v2972 = vadd.f32 0.0, %v2971
    %2973 = vmatmul.f32.gmra.mxu0 %v2894
    %v2974 = vpop.f32.mrf.mxu0
    %v2975 = vadd.f32 0.0, %v2974
    %2976 = vmatmul.f32.gmra.mxu0 %v2897
    %v2977 = vpop.f32.mrf.mxu0
    %v2978 = vadd.f32 0.0, %v2977
    %2979 = vmatmul.f32.gmra.mxu0 %v2900
    %v2980 = vpop.f32.mrf.mxu0
    %2981 = vmatmul.f32.gmra.mxu0 %v2903
    %v2982 = vpop.f32.mrf.mxu0
    %v2983 = vadd.f32 0.0, %v2982
    %2984 = vmatmul.f32.gmra.mxu0 %v2906
    %v2985 = vpop.f32.mrf.mxu0
    %v2986 = vadd.f32 0.0, %v2985
    %2987 = vmatmul.f32.gmra.mxu0 %v2909
    %v2988 = vpop.f32.mrf.mxu0
    %v2989 = vadd.f32 0.0, %v2988
    %2990 = vmatmul.f32.gmra.mxu0 %v2912
    %v2991 = vpop.f32.mrf.mxu0
    %2992 = vmatmul.f32.gmra.mxu0 %v2915
    %v2993 = vpop.f32.mrf.mxu0
    %v2994 = vadd.f32 0.0, %v2993
    %2995 = vmatmul.f32.gmra.mxu0 %v2918
    %v2996 = vpop.f32.mrf.mxu0
    %v2997 = vadd.f32 0.0, %v2996
    %2998 = vmatmul.f32.gmra.mxu0 %v2921
    %v2999 = vpop.f32.mrf.mxu0
    %v3000 = vadd.f32 0.0, %v2999
    %3001 = vmatmul.f32.gmra.mxu0 %v2924
    %v3002 = vpop.f32.mrf.mxu0
    %3003 = vmatmul.f32.gmra.mxu0 %v2927
    %v3004 = vpop.f32.mrf.mxu0
    %v3005 = vadd.f32 0.0, %v3004
    %3006 = vmatmul.f32.gmra.mxu0 %v2930
    %v3007 = vpop.f32.mrf.mxu0
    %v3008 = vadd.f32 0.0, %v3007
    %3009 = vdwg.mxu0
    %v3010 = vadd.f32 %v2825, %v2950
    %v3011 = vadd.f32 %v2826, %v2953
    %v3012 = vadd.f32 %v2827, %v2956
    %v3013 = vadd.f32 %v2828, %v2961
    %v3014 = vadd.f32 %v2829, %v2964
    %v3015 = vadd.f32 %v2830, %v2967
    %v3016 = vadd.f32 %v2831, %v2972
    %v3017 = vadd.f32 %v2832, %v2975
    %v3018 = vadd.f32 %v2833, %v2978
    %v3019 = vadd.f32 %v2834, %v2983
    %v3020 = vadd.f32 %v2835, %v2986
    %v3021 = vadd.f32 %v2836, %v2989
    %v3022 = vadd.f32 %v2837, %v2994
    %v3023 = vadd.f32 %v2838, %v2997
    %v3024 = vadd.f32 %v2839, %v3000
    %v3025 = vadd.f32 %v2840, %v3005
    %v3026 = vadd.f32 %v2841, %v3008
    %v3027 = vld [vmem:[#allocation2 + $0x23] sm:$0xff]
    %v3028 = vld [vmem:[#allocation2 + $0x2b] sm:$0xff]
    %v3029 = vld [vmem:[#allocation2 + $0x33] sm:$0xff]
    %v3030 = vld [vmem:[#allocation2 + $0x3b] sm:$0xff]
    %v3031 = vld [vmem:[#allocation2 + $0x43] sm:$0xff]
    %v3032 = vld [vmem:[#allocation2 + $0x4b] sm:$0xff]
    %v3033 = vld [vmem:[#allocation2 + $0x53] sm:$0xff]
    %v3034 = vld [vmem:[#allocation2 + $0x5b] sm:$0xff]
    %v3035 = vld [vmem:[#allocation2 + $0x63] sm:$0xff]
    %v3036 = vld [vmem:[#allocation2 + $0x6b] sm:$0xff]
    %v3037 = vld [vmem:[#allocation2 + $0x73] sm:$0xff]
    %v3038 = vld [vmem:[#allocation2 + $0x7b] sm:$0xff]
    %v3039 = vld [vmem:[#allocation2 + $0x83] sm:$0xff]
    %v3040 = vld [vmem:[#allocation2 + $0x8b] sm:$0xff]
    %v3041 = vld [vmem:[#allocation2 + $0x93] sm:$0xff]
    %v3042 = vld [vmem:[#allocation2 + $0x9b] sm:$0xff]
    %v3043 = vld [vmem:[#allocation2 + $0xa3] sm:$0xff]
    %v3044 = vld [vmem:[#allocation2 + $0xab] sm:$0xff]
    %v3045 = vld [vmem:[#allocation2 + $0xb3] sm:$0xff]
    %v3046 = vld [vmem:[#allocation2 + $0xbb] sm:$0xff]
    %v3047 = vld [vmem:[#allocation2 + $0xc3] sm:$0xff]
    %v3048 = vld [vmem:[#allocation2 + $0xcb] sm:$0x7]
    %v3049 = vld [vmem:[%s3 + $0xb0] sm:$0xff]
    %v3050 = vld [vmem:[%s3 + $0xb8] sm:$0xff]
    %v3052 = vsel %vm33, %v3027, 0
    %v3055 = vsel %vm33, %v3028, 0
    %v3058 = vsel %vm33, %v3029, 0
    %v3061 = vsel %vm33, %v3030, 0
    %v3064 = vsel %vm33, %v3031, 0
    %v3067 = vsel %vm33, %v3032, 0
    %v3070 = vsel %vm33, %v3033, 0
    %v3073 = vsel %vm33, %v3034, 0
    %v3076 = vsel %vm33, %v3035, 0
    %v3079 = vsel %vm33, %v3036, 0
    %v3082 = vsel %vm33, %v3037, 0
    %v3085 = vsel %vm33, %v3038, 0
    %v3088 = vsel %vm33, %v3039, 0
    %v3091 = vsel %vm33, %v3040, 0
    %v3094 = vsel %vm33, %v3041, 0
    %v3097 = vsel %vm33, %v3042, 0
    %v3100 = vsel %vm33, %v3043, 0
    %v3103 = vsel %vm33, %v3044, 0
    %v3106 = vsel %vm33, %v3045, 0
    %v3109 = vsel %vm33, %v3046, 0
    %v3112 = vsel %vm33, %v3047, 0
    %v3115 = vsel %vm33, %v3048, 0
    %3117 = vmatpush.msra.mxu0 0.0
    %3118 = vmatpush.msra.mxu0 0.0
    %3119 = vmatpush.msra.mxu0 0.0
    %3120 = vmatpush.msra.mxu0 0.0
    %3121 = vmatpush.msra.mxu0 0.0
    %3122 = vmatpush.msra.mxu0 0.0
    %3123 = vmatpush.msra.mxu0 0.0
    %3124 = vmatpush.msra.mxu0 0.0
    %3125 = vmatpush.msra.mxu0 0.0
    %3126 = vmatpush.msra.mxu0 0.0
    %3127 = vmatpush.msra.mxu0 0.0
    %3128 = vmatpush.msra.mxu0 0.0
    %3129 = vmatpush.msra.mxu0 0.0
    %3130 = vmatpush.msra.mxu0 0.0
    %3131 = vmatpush.msra.mxu0 %v3050
    %3132 = vmatpush.msra.mxu0 %v3049
    %3133 = vmatmul.f32.gmra.mxu0 %v3052
    %v3134 = vpop.f32.mrf.mxu0
    %v3135 = vadd.f32 0.0, %v3134
    %3136 = vmatmul.f32.gmra.mxu0 %v3055
    %v3137 = vpop.f32.mrf.mxu0
    %v3138 = vadd.f32 0.0, %v3137
    %3139 = vmatmul.f32.gmra.mxu0 %v3058
    %v3140 = vpop.f32.mrf.mxu0
    %v3141 = vadd.f32 0.0, %v3140
    %3142 = vmatmul.f32.gmra.mxu0 %v3061
    %v3143 = vpop.f32.mrf.mxu0
    %3144 = vmatmul.f32.gmra.mxu0 %v3064
    %v3145 = vpop.f32.mrf.mxu0
    %v3146 = vadd.f32 0.0, %v3145
    %3147 = vmatmul.f32.gmra.mxu0 %v3067
    %v3148 = vpop.f32.mrf.mxu0
    %v3149 = vadd.f32 0.0, %v3148
    %3150 = vmatmul.f32.gmra.mxu0 %v3070
    %v3151 = vpop.f32.mrf.mxu0
    %v3152 = vadd.f32 0.0, %v3151
    %3153 = vmatmul.f32.gmra.mxu0 %v3073
    %v3154 = vpop.f32.mrf.mxu0
    %3155 = vmatmul.f32.gmra.mxu0 %v3076
    %v3156 = vpop.f32.mrf.mxu0
    %v3157 = vadd.f32 0.0, %v3156
    %3158 = vmatmul.f32.gmra.mxu0 %v3079
    %v3159 = vpop.f32.mrf.mxu0
    %v3160 = vadd.f32 0.0, %v3159
    %3161 = vmatmul.f32.gmra.mxu0 %v3082
    %v3162 = vpop.f32.mrf.mxu0
    %v3163 = vadd.f32 0.0, %v3162
    %3164 = vmatmul.f32.gmra.mxu0 %v3085
    %v3165 = vpop.f32.mrf.mxu0
    %3166 = vmatmul.f32.gmra.mxu0 %v3088
    %v3167 = vpop.f32.mrf.mxu0
    %v3168 = vadd.f32 0.0, %v3167
    %3169 = vmatmul.f32.gmra.mxu0 %v3091
    %v3170 = vpop.f32.mrf.mxu0
    %v3171 = vadd.f32 0.0, %v3170
    %3172 = vmatmul.f32.gmra.mxu0 %v3094
    %v3173 = vpop.f32.mrf.mxu0
    %v3174 = vadd.f32 0.0, %v3173
    %3175 = vmatmul.f32.gmra.mxu0 %v3097
    %v3176 = vpop.f32.mrf.mxu0
    %3177 = vmatmul.f32.gmra.mxu0 %v3100
    %v3178 = vpop.f32.mrf.mxu0
    %v3179 = vadd.f32 0.0, %v3178
    %3180 = vmatmul.f32.gmra.mxu0 %v3103
    %v3181 = vpop.f32.mrf.mxu0
    %v3182 = vadd.f32 0.0, %v3181
    %3183 = vmatmul.f32.gmra.mxu0 %v3106
    %v3184 = vpop.f32.mrf.mxu0
    %v3185 = vadd.f32 0.0, %v3184
    %3186 = vmatmul.f32.gmra.mxu0 %v3109
    %v3187 = vpop.f32.mrf.mxu0
    %3188 = vmatmul.f32.gmra.mxu0 %v3112
    %v3189 = vpop.f32.mrf.mxu0
    %v3190 = vadd.f32 0.0, %v3189
    %3191 = vmatmul.f32.gmra.mxu0 %v3115
    %v3192 = vpop.f32.mrf.mxu0
    %v3193 = vadd.f32 0.0, %v3192
    %3194 = vdwg.mxu0
    %v3195 = vadd.f32 %v3010, %v3135
    %v3196 = vadd.f32 %v3011, %v3138
    %v3197 = vadd.f32 %v3012, %v3141
    %v3198 = vadd.f32 %v3013, %v3146
    %v3199 = vadd.f32 %v3014, %v3149
    %v3200 = vadd.f32 %v3015, %v3152
    %v3201 = vadd.f32 %v3016, %v3157
    %v3202 = vadd.f32 %v3017, %v3160
    %v3203 = vadd.f32 %v3018, %v3163
    %v3204 = vadd.f32 %v3019, %v3168
    %v3205 = vadd.f32 %v3020, %v3171
    %v3206 = vadd.f32 %v3021, %v3174
    %v3207 = vadd.f32 %v3022, %v3179
    %v3208 = vadd.f32 %v3023, %v3182
    %v3209 = vadd.f32 %v3024, %v3185
    %v3210 = vadd.f32 %v3025, %v3190
    %v3211 = vadd.f32 %v3026, %v3193
    %v3212 = vld [vmem:[#allocation2 + $0x30] sm:$0xff]
    %v3213 = vld [vmem:[#allocation2 + $0x38] sm:$0xff]
    %v3214 = vld [vmem:[#allocation2 + $0x40] sm:$0xff]
    %v3215 = vld [vmem:[#allocation2 + $0x48] sm:$0xff]
    %v3216 = vld [vmem:[#allocation2 + $0x50] sm:$0xff]
    %v3217 = vld [vmem:[#allocation2 + $0x58] sm:$0xff]
    %v3218 = vld [vmem:[#allocation2 + $0x60] sm:$0xff]
    %v3219 = vld [vmem:[#allocation2 + $0x68] sm:$0xff]
    %v3220 = vld [vmem:[#allocation2 + $0x70] sm:$0xff]
    %v3221 = vld [vmem:[#allocation2 + $0x78] sm:$0xff]
    %v3222 = vld [vmem:[#allocation2 + $0x80] sm:$0xff]
    %v3223 = vld [vmem:[#allocation2 + $0x88] sm:$0xff]
    %v3224 = vld [vmem:[#allocation2 + $0x90] sm:$0xff]
    %v3225 = vld [vmem:[#allocation2 + $0x98] sm:$0xff]
    %v3226 = vld [vmem:[#allocation2 + $0xa0] sm:$0xff]
    %v3227 = vld [vmem:[#allocation2 + $0xa8] sm:$0xff]
    %v3228 = vld [vmem:[#allocation2 + $0xb0] sm:$0xff]
    %v3229 = vld [vmem:[#allocation2 + $0xb8] sm:$0xff]
    %v3230 = vld [vmem:[#allocation2 + $0xc0] sm:$0xff]
    %v3231 = vld [vmem:[#allocation2 + $0xc8] sm:$0xff]
    %v3232 = vld [vmem:[#allocation2 + $0xd0] sm:$0xff]
    %v3233 = vld [vmem:[#allocation2 + $0xd8] sm:$0x7]
    %v3234 = vld [vmem:[%s3 + $0xc0] sm:$0xff]
    %v3235 = vld [vmem:[%s3 + $0xc8] sm:$0xff]
    %v3237 = vsel %vm33, %v3212, 0
    %v3240 = vsel %vm33, %v3213, 0
    %v3243 = vsel %vm33, %v3214, 0
    %v3246 = vsel %vm33, %v3215, 0
    %v3249 = vsel %vm33, %v3216, 0
    %v3252 = vsel %vm33, %v3217, 0
    %v3255 = vsel %vm33, %v3218, 0
    %v3258 = vsel %vm33, %v3219, 0
    %v3261 = vsel %vm33, %v3220, 0
    %v3264 = vsel %vm33, %v3221, 0
    %v3267 = vsel %vm33, %v3222, 0
    %v3270 = vsel %vm33, %v3223, 0
    %v3273 = vsel %vm33, %v3224, 0
    %v3276 = vsel %vm33, %v3225, 0
    %v3279 = vsel %vm33, %v3226, 0
    %v3282 = vsel %vm33, %v3227, 0
    %v3285 = vsel %vm33, %v3228, 0
    %v3288 = vsel %vm33, %v3229, 0
    %v3291 = vsel %vm33, %v3230, 0
    %v3294 = vsel %vm33, %v3231, 0
    %v3297 = vsel %vm33, %v3232, 0
    %v3300 = vsel %vm33, %v3233, 0
    %3302 = vmatpush.msra.mxu0 0.0
    %3303 = vmatpush.msra.mxu0 0.0
    %3304 = vmatpush.msra.mxu0 0.0
    %3305 = vmatpush.msra.mxu0 0.0
    %3306 = vmatpush.msra.mxu0 0.0
    %3307 = vmatpush.msra.mxu0 0.0
    %3308 = vmatpush.msra.mxu0 0.0
    %3309 = vmatpush.msra.mxu0 0.0
    %3310 = vmatpush.msra.mxu0 0.0
    %3311 = vmatpush.msra.mxu0 0.0
    %3312 = vmatpush.msra.mxu0 0.0
    %3313 = vmatpush.msra.mxu0 0.0
    %3314 = vmatpush.msra.mxu0 0.0
    %3315 = vmatpush.msra.mxu0 0.0
    %3316 = vmatpush.msra.mxu0 %v3235
    %3317 = vmatpush.msra.mxu0 %v3234
    %3318 = vmatmul.f32.gmra.mxu0 %v3237
    %v3319 = vpop.f32.mrf.mxu0
    %v3320 = vadd.f32 0.0, %v3319
    %3321 = vmatmul.f32.gmra.mxu0 %v3240
    %v3322 = vpop.f32.mrf.mxu0
    %v3323 = vadd.f32 0.0, %v3322
    %3324 = vmatmul.f32.gmra.mxu0 %v3243
    %v3325 = vpop.f32.mrf.mxu0
    %v3326 = vadd.f32 0.0, %v3325
    %3327 = vmatmul.f32.gmra.mxu0 %v3246
    %v3328 = vpop.f32.mrf.mxu0
    %3329 = vmatmul.f32.gmra.mxu0 %v3249
    %v3330 = vpop.f32.mrf.mxu0
    %v3331 = vadd.f32 0.0, %v3330
    %3332 = vmatmul.f32.gmra.mxu0 %v3252
    %v3333 = vpop.f32.mrf.mxu0
    %v3334 = vadd.f32 0.0, %v3333
    %3335 = vmatmul.f32.gmra.mxu0 %v3255
    %v3336 = vpop.f32.mrf.mxu0
    %v3337 = vadd.f32 0.0, %v3336
    %3338 = vmatmul.f32.gmra.mxu0 %v3258
    %v3339 = vpop.f32.mrf.mxu0
    %3340 = vmatmul.f32.gmra.mxu0 %v3261
    %v3341 = vpop.f32.mrf.mxu0
    %v3342 = vadd.f32 0.0, %v3341
    %3343 = vmatmul.f32.gmra.mxu0 %v3264
    %v3344 = vpop.f32.mrf.mxu0
    %v3345 = vadd.f32 0.0, %v3344
    %3346 = vmatmul.f32.gmra.mxu0 %v3267
    %v3347 = vpop.f32.mrf.mxu0
    %v3348 = vadd.f32 0.0, %v3347
    %3349 = vmatmul.f32.gmra.mxu0 %v3270
    %v3350 = vpop.f32.mrf.mxu0
    %3351 = vmatmul.f32.gmra.mxu0 %v3273
    %v3352 = vpop.f32.mrf.mxu0
    %v3353 = vadd.f32 0.0, %v3352
    %3354 = vmatmul.f32.gmra.mxu0 %v3276
    %v3355 = vpop.f32.mrf.mxu0
    %v3356 = vadd.f32 0.0, %v3355
    %3357 = vmatmul.f32.gmra.mxu0 %v3279
    %v3358 = vpop.f32.mrf.mxu0
    %v3359 = vadd.f32 0.0, %v3358
    %3360 = vmatmul.f32.gmra.mxu0 %v3282
    %v3361 = vpop.f32.mrf.mxu0
    %3362 = vmatmul.f32.gmra.mxu0 %v3285
    %v3363 = vpop.f32.mrf.mxu0
    %v3364 = vadd.f32 0.0, %v3363
    %3365 = vmatmul.f32.gmra.mxu0 %v3288
    %v3366 = vpop.f32.mrf.mxu0
    %v3367 = vadd.f32 0.0, %v3366
    %3368 = vmatmul.f32.gmra.mxu0 %v3291
    %v3369 = vpop.f32.mrf.mxu0
    %v3370 = vadd.f32 0.0, %v3369
    %3371 = vmatmul.f32.gmra.mxu0 %v3294
    %v3372 = vpop.f32.mrf.mxu0
    %3373 = vmatmul.f32.gmra.mxu0 %v3297
    %v3374 = vpop.f32.mrf.mxu0
    %v3375 = vadd.f32 0.0, %v3374
    %3376 = vmatmul.f32.gmra.mxu0 %v3300
    %v3377 = vpop.f32.mrf.mxu0
    %v3378 = vadd.f32 0.0, %v3377
    %3379 = vdwg.mxu0
    %v3380 = vadd.f32 %v3195, %v3320
    %v3381 = vadd.f32 %v3196, %v3323
    %v3382 = vadd.f32 %v3197, %v3326
    %v3383 = vadd.f32 %v3198, %v3331
    %v3384 = vadd.f32 %v3199, %v3334
    %v3385 = vadd.f32 %v3200, %v3337
    %v3386 = vadd.f32 %v3201, %v3342
    %v3387 = vadd.f32 %v3202, %v3345
    %v3388 = vadd.f32 %v3203, %v3348
    %v3389 = vadd.f32 %v3204, %v3353
    %v3390 = vadd.f32 %v3205, %v3356
    %v3391 = vadd.f32 %v3206, %v3359
    %v3392 = vadd.f32 %v3207, %v3364
    %v3393 = vadd.f32 %v3208, %v3367
    %v3394 = vadd.f32 %v3209, %v3370
    %v3395 = vadd.f32 %v3210, %v3375
    %v3396 = vadd.f32 %v3211, %v3378
    %v3397 = vld [vmem:[#allocation2 + $0x31] sm:$0xff]
    %v3398 = vld [vmem:[#allocation2 + $0x39] sm:$0xff]
    %v3399 = vld [vmem:[#allocation2 + $0x41] sm:$0xff]
    %v3400 = vld [vmem:[#allocation2 + $0x49] sm:$0xff]
    %v3401 = vld [vmem:[#allocation2 + $0x51] sm:$0xff]
    %v3402 = vld [vmem:[#allocation2 + $0x59] sm:$0xff]
    %v3403 = vld [vmem:[#allocation2 + $0x61] sm:$0xff]
    %v3404 = vld [vmem:[#allocation2 + $0x69] sm:$0xff]
    %v3405 = vld [vmem:[#allocation2 + $0x71] sm:$0xff]
    %v3406 = vld [vmem:[#allocation2 + $0x79] sm:$0xff]
    %v3407 = vld [vmem:[#allocation2 + $0x81] sm:$0xff]
    %v3408 = vld [vmem:[#allocation2 + $0x89] sm:$0xff]
    %v3409 = vld [vmem:[#allocation2 + $0x91] sm:$0xff]
    %v3410 = vld [vmem:[#allocation2 + $0x99] sm:$0xff]
    %v3411 = vld [vmem:[#allocation2 + $0xa1] sm:$0xff]
    %v3412 = vld [vmem:[#allocation2 + $0xa9] sm:$0xff]
    %v3413 = vld [vmem:[#allocation2 + $0xb1] sm:$0xff]
    %v3414 = vld [vmem:[#allocation2 + $0xb9] sm:$0xff]
    %v3415 = vld [vmem:[#allocation2 + $0xc1] sm:$0xff]
    %v3416 = vld [vmem:[#allocation2 + $0xc9] sm:$0xff]
    %v3417 = vld [vmem:[#allocation2 + $0xd1] sm:$0xff]
    %v3418 = vld [vmem:[#allocation2 + $0xd9] sm:$0x7]
    %v3419 = vld [vmem:[%s3 + $0xd0] sm:$0xff]
    %v3420 = vld [vmem:[%s3 + $0xd8] sm:$0xff]
    %v3422 = vsel %vm33, %v3397, 0
    %v3425 = vsel %vm33, %v3398, 0
    %v3428 = vsel %vm33, %v3399, 0
    %v3431 = vsel %vm33, %v3400, 0
    %v3434 = vsel %vm33, %v3401, 0
    %v3437 = vsel %vm33, %v3402, 0
    %v3440 = vsel %vm33, %v3403, 0
    %v3443 = vsel %vm33, %v3404, 0
    %v3446 = vsel %vm33, %v3405, 0
    %v3449 = vsel %vm33, %v3406, 0
    %v3452 = vsel %vm33, %v3407, 0
    %v3455 = vsel %vm33, %v3408, 0
    %v3458 = vsel %vm33, %v3409, 0
    %v3461 = vsel %vm33, %v3410, 0
    %v3464 = vsel %vm33, %v3411, 0
    %v3467 = vsel %vm33, %v3412, 0
    %v3470 = vsel %vm33, %v3413, 0
    %v3473 = vsel %vm33, %v3414, 0
    %v3476 = vsel %vm33, %v3415, 0
    %v3479 = vsel %vm33, %v3416, 0
    %v3482 = vsel %vm33, %v3417, 0
    %v3485 = vsel %vm33, %v3418, 0
    %3487 = vmatpush.msra.mxu0 0.0
    %3488 = vmatpush.msra.mxu0 0.0
    %3489 = vmatpush.msra.mxu0 0.0
    %3490 = vmatpush.msra.mxu0 0.0
    %3491 = vmatpush.msra.mxu0 0.0
    %3492 = vmatpush.msra.mxu0 0.0
    %3493 = vmatpush.msra.mxu0 0.0
    %3494 = vmatpush.msra.mxu0 0.0
    %3495 = vmatpush.msra.mxu0 0.0
    %3496 = vmatpush.msra.mxu0 0.0
    %3497 = vmatpush.msra.mxu0 0.0
    %3498 = vmatpush.msra.mxu0 0.0
    %3499 = vmatpush.msra.mxu0 0.0
    %3500 = vmatpush.msra.mxu0 0.0
    %3501 = vmatpush.msra.mxu0 %v3420
    %3502 = vmatpush.msra.mxu0 %v3419
    %3503 = vmatmul.f32.gmra.mxu0 %v3422
    %v3504 = vpop.f32.mrf.mxu0
    %v3505 = vadd.f32 0.0, %v3504
    %3506 = vmatmul.f32.gmra.mxu0 %v3425
    %v3507 = vpop.f32.mrf.mxu0
    %v3508 = vadd.f32 0.0, %v3507
    %3509 = vmatmul.f32.gmra.mxu0 %v3428
    %v3510 = vpop.f32.mrf.mxu0
    %v3511 = vadd.f32 0.0, %v3510
    %3512 = vmatmul.f32.gmra.mxu0 %v3431
    %v3513 = vpop.f32.mrf.mxu0
    %3514 = vmatmul.f32.gmra.mxu0 %v3434
    %v3515 = vpop.f32.mrf.mxu0
    %v3516 = vadd.f32 0.0, %v3515
    %3517 = vmatmul.f32.gmra.mxu0 %v3437
    %v3518 = vpop.f32.mrf.mxu0
    %v3519 = vadd.f32 0.0, %v3518
    %3520 = vmatmul.f32.gmra.mxu0 %v3440
    %v3521 = vpop.f32.mrf.mxu0
    %v3522 = vadd.f32 0.0, %v3521
    %3523 = vmatmul.f32.gmra.mxu0 %v3443
    %v3524 = vpop.f32.mrf.mxu0
    %3525 = vmatmul.f32.gmra.mxu0 %v3446
    %v3526 = vpop.f32.mrf.mxu0
    %v3527 = vadd.f32 0.0, %v3526
    %3528 = vmatmul.f32.gmra.mxu0 %v3449
    %v3529 = vpop.f32.mrf.mxu0
    %v3530 = vadd.f32 0.0, %v3529
    %3531 = vmatmul.f32.gmra.mxu0 %v3452
    %v3532 = vpop.f32.mrf.mxu0
    %v3533 = vadd.f32 0.0, %v3532
    %3534 = vmatmul.f32.gmra.mxu0 %v3455
    %v3535 = vpop.f32.mrf.mxu0
    %3536 = vmatmul.f32.gmra.mxu0 %v3458
    %v3537 = vpop.f32.mrf.mxu0
    %v3538 = vadd.f32 0.0, %v3537
    %3539 = vmatmul.f32.gmra.mxu0 %v3461
    %v3540 = vpop.f32.mrf.mxu0
    %v3541 = vadd.f32 0.0, %v3540
    %3542 = vmatmul.f32.gmra.mxu0 %v3464
    %v3543 = vpop.f32.mrf.mxu0
    %v3544 = vadd.f32 0.0, %v3543
    %3545 = vmatmul.f32.gmra.mxu0 %v3467
    %v3546 = vpop.f32.mrf.mxu0
    %3547 = vmatmul.f32.gmra.mxu0 %v3470
    %v3548 = vpop.f32.mrf.mxu0
    %v3549 = vadd.f32 0.0, %v3548
    %3550 = vmatmul.f32.gmra.mxu0 %v3473
    %v3551 = vpop.f32.mrf.mxu0
    %v3552 = vadd.f32 0.0, %v3551
    %3553 = vmatmul.f32.gmra.mxu0 %v3476
    %v3554 = vpop.f32.mrf.mxu0
    %v3555 = vadd.f32 0.0, %v3554
    %3556 = vmatmul.f32.gmra.mxu0 %v3479
    %v3557 = vpop.f32.mrf.mxu0
    %3558 = vmatmul.f32.gmra.mxu0 %v3482
    %v3559 = vpop.f32.mrf.mxu0
    %v3560 = vadd.f32 0.0, %v3559
    %3561 = vmatmul.f32.gmra.mxu0 %v3485
    %v3562 = vpop.f32.mrf.mxu0
    %v3563 = vadd.f32 0.0, %v3562
    %3564 = vdwg.mxu0
    %v3565 = vadd.f32 %v3380, %v3505
    %v3566 = vadd.f32 %v3381, %v3508
    %v3567 = vadd.f32 %v3382, %v3511
    %v3568 = vadd.f32 %v3383, %v3516
    %v3569 = vadd.f32 %v3384, %v3519
    %v3570 = vadd.f32 %v3385, %v3522
    %v3571 = vadd.f32 %v3386, %v3527
    %v3572 = vadd.f32 %v3387, %v3530
    %v3573 = vadd.f32 %v3388, %v3533
    %v3574 = vadd.f32 %v3389, %v3538
    %v3575 = vadd.f32 %v3390, %v3541
    %v3576 = vadd.f32 %v3391, %v3544
    %v3577 = vadd.f32 %v3392, %v3549
    %v3578 = vadd.f32 %v3393, %v3552
    %v3579 = vadd.f32 %v3394, %v3555
    %v3580 = vadd.f32 %v3395, %v3560
    %v3581 = vadd.f32 %v3396, %v3563
    %v3582 = vld [vmem:[#allocation2 + $0x32] sm:$0xff]
    %v3583 = vld [vmem:[#allocation2 + $0x3a] sm:$0xff]
    %v3584 = vld [vmem:[#allocation2 + $0x42] sm:$0xff]
    %v3585 = vld [vmem:[#allocation2 + $0x4a] sm:$0xff]
    %v3586 = vld [vmem:[#allocation2 + $0x52] sm:$0xff]
    %v3587 = vld [vmem:[#allocation2 + $0x5a] sm:$0xff]
    %v3588 = vld [vmem:[#allocation2 + $0x62] sm:$0xff]
    %v3589 = vld [vmem:[#allocation2 + $0x6a] sm:$0xff]
    %v3590 = vld [vmem:[#allocation2 + $0x72] sm:$0xff]
    %v3591 = vld [vmem:[#allocation2 + $0x7a] sm:$0xff]
    %v3592 = vld [vmem:[#allocation2 + $0x82] sm:$0xff]
    %v3593 = vld [vmem:[#allocation2 + $0x8a] sm:$0xff]
    %v3594 = vld [vmem:[#allocation2 + $0x92] sm:$0xff]
    %v3595 = vld [vmem:[#allocation2 + $0x9a] sm:$0xff]
    %v3596 = vld [vmem:[#allocation2 + $0xa2] sm:$0xff]
    %v3597 = vld [vmem:[#allocation2 + $0xaa] sm:$0xff]
    %v3598 = vld [vmem:[#allocation2 + $0xb2] sm:$0xff]
    %v3599 = vld [vmem:[#allocation2 + $0xba] sm:$0xff]
    %v3600 = vld [vmem:[#allocation2 + $0xc2] sm:$0xff]
    %v3601 = vld [vmem:[#allocation2 + $0xca] sm:$0xff]
    %v3602 = vld [vmem:[#allocation2 + $0xd2] sm:$0xff]
    %v3603 = vld [vmem:[#allocation2 + $0xda] sm:$0x7]
    %v3604 = vld [vmem:[%s3 + $0xe0] sm:$0xff]
    %v3605 = vld [vmem:[%s3 + $0xe8] sm:$0xff]
    %v3607 = vsel %vm33, %v3582, 0
    %v3610 = vsel %vm33, %v3583, 0
    %v3613 = vsel %vm33, %v3584, 0
    %v3616 = vsel %vm33, %v3585, 0
    %v3619 = vsel %vm33, %v3586, 0
    %v3622 = vsel %vm33, %v3587, 0
    %v3625 = vsel %vm33, %v3588, 0
    %v3628 = vsel %vm33, %v3589, 0
    %v3631 = vsel %vm33, %v3590, 0
    %v3634 = vsel %vm33, %v3591, 0
    %v3637 = vsel %vm33, %v3592, 0
    %v3640 = vsel %vm33, %v3593, 0
    %v3643 = vsel %vm33, %v3594, 0
    %v3646 = vsel %vm33, %v3595, 0
    %v3649 = vsel %vm33, %v3596, 0
    %v3652 = vsel %vm33, %v3597, 0
    %v3655 = vsel %vm33, %v3598, 0
    %v3658 = vsel %vm33, %v3599, 0
    %v3661 = vsel %vm33, %v3600, 0
    %v3664 = vsel %vm33, %v3601, 0
    %v3667 = vsel %vm33, %v3602, 0
    %v3670 = vsel %vm33, %v3603, 0
    %3672 = vmatpush.msra.mxu0 0.0
    %3673 = vmatpush.msra.mxu0 0.0
    %3674 = vmatpush.msra.mxu0 0.0
    %3675 = vmatpush.msra.mxu0 0.0
    %3676 = vmatpush.msra.mxu0 0.0
    %3677 = vmatpush.msra.mxu0 0.0
    %3678 = vmatpush.msra.mxu0 0.0
    %3679 = vmatpush.msra.mxu0 0.0
    %3680 = vmatpush.msra.mxu0 0.0
    %3681 = vmatpush.msra.mxu0 0.0
    %3682 = vmatpush.msra.mxu0 0.0
    %3683 = vmatpush.msra.mxu0 0.0
    %3684 = vmatpush.msra.mxu0 0.0
    %3685 = vmatpush.msra.mxu0 0.0
    %3686 = vmatpush.msra.mxu0 %v3605
    %3687 = vmatpush.msra.mxu0 %v3604
    %3688 = vmatmul.f32.gmra.mxu0 %v3607
    %v3689 = vpop.f32.mrf.mxu0
    %v3690 = vadd.f32 0.0, %v3689
    %3691 = vmatmul.f32.gmra.mxu0 %v3610
    %v3692 = vpop.f32.mrf.mxu0
    %v3693 = vadd.f32 0.0, %v3692
    %3694 = vmatmul.f32.gmra.mxu0 %v3613
    %v3695 = vpop.f32.mrf.mxu0
    %v3696 = vadd.f32 0.0, %v3695
    %3697 = vmatmul.f32.gmra.mxu0 %v3616
    %v3698 = vpop.f32.mrf.mxu0
    %3699 = vmatmul.f32.gmra.mxu0 %v3619
    %v3700 = vpop.f32.mrf.mxu0
    %v3701 = vadd.f32 0.0, %v3700
    %3702 = vmatmul.f32.gmra.mxu0 %v3622
    %v3703 = vpop.f32.mrf.mxu0
    %v3704 = vadd.f32 0.0, %v3703
    %3705 = vmatmul.f32.gmra.mxu0 %v3625
    %v3706 = vpop.f32.mrf.mxu0
    %v3707 = vadd.f32 0.0, %v3706
    %3708 = vmatmul.f32.gmra.mxu0 %v3628
    %v3709 = vpop.f32.mrf.mxu0
    %3710 = vmatmul.f32.gmra.mxu0 %v3631
    %v3711 = vpop.f32.mrf.mxu0
    %v3712 = vadd.f32 0.0, %v3711
    %3713 = vmatmul.f32.gmra.mxu0 %v3634
    %v3714 = vpop.f32.mrf.mxu0
    %v3715 = vadd.f32 0.0, %v3714
    %3716 = vmatmul.f32.gmra.mxu0 %v3637
    %v3717 = vpop.f32.mrf.mxu0
    %v3718 = vadd.f32 0.0, %v3717
    %3719 = vmatmul.f32.gmra.mxu0 %v3640
    %v3720 = vpop.f32.mrf.mxu0
    %3721 = vmatmul.f32.gmra.mxu0 %v3643
    %v3722 = vpop.f32.mrf.mxu0
    %v3723 = vadd.f32 0.0, %v3722
    %3724 = vmatmul.f32.gmra.mxu0 %v3646
    %v3725 = vpop.f32.mrf.mxu0
    %v3726 = vadd.f32 0.0, %v3725
    %3727 = vmatmul.f32.gmra.mxu0 %v3649
    %v3728 = vpop.f32.mrf.mxu0
    %v3729 = vadd.f32 0.0, %v3728
    %3730 = vmatmul.f32.gmra.mxu0 %v3652
    %v3731 = vpop.f32.mrf.mxu0
    %3732 = vmatmul.f32.gmra.mxu0 %v3655
    %v3733 = vpop.f32.mrf.mxu0
    %v3734 = vadd.f32 0.0, %v3733
    %3735 = vmatmul.f32.gmra.mxu0 %v3658
    %v3736 = vpop.f32.mrf.mxu0
    %v3737 = vadd.f32 0.0, %v3736
    %3738 = vmatmul.f32.gmra.mxu0 %v3661
    %v3739 = vpop.f32.mrf.mxu0
    %v3740 = vadd.f32 0.0, %v3739
    %3741 = vmatmul.f32.gmra.mxu0 %v3664
    %v3742 = vpop.f32.mrf.mxu0
    %3743 = vmatmul.f32.gmra.mxu0 %v3667
    %v3744 = vpop.f32.mrf.mxu0
    %v3745 = vadd.f32 0.0, %v3744
    %3746 = vmatmul.f32.gmra.mxu0 %v3670
    %v3747 = vpop.f32.mrf.mxu0
    %v3748 = vadd.f32 0.0, %v3747
    %3749 = vdwg.mxu0
    %v3750 = vadd.f32 %v3565, %v3690
    %v3751 = vadd.f32 %v3566, %v3693
    %v3752 = vadd.f32 %v3567, %v3696
    %v3753 = vadd.f32 %v3568, %v3701
    %v3754 = vadd.f32 %v3569, %v3704
    %v3755 = vadd.f32 %v3570, %v3707
    %v3756 = vadd.f32 %v3571, %v3712
    %v3757 = vadd.f32 %v3572, %v3715
    %v3758 = vadd.f32 %v3573, %v3718
    %v3759 = vadd.f32 %v3574, %v3723
    %v3760 = vadd.f32 %v3575, %v3726
    %v3761 = vadd.f32 %v3576, %v3729
    %v3762 = vadd.f32 %v3577, %v3734
    %v3763 = vadd.f32 %v3578, %v3737
    %v3764 = vadd.f32 %v3579, %v3740
    %v3765 = vadd.f32 %v3580, %v3745
    %v3766 = vadd.f32 %v3581, %v3748
    %v3767 = vld [vmem:[#allocation2 + $0x33] sm:$0xff]
    %v3768 = vld [vmem:[#allocation2 + $0x3b] sm:$0xff]
    %v3769 = vld [vmem:[#allocation2 + $0x43] sm:$0xff]
    %v3770 = vld [vmem:[#allocation2 + $0x4b] sm:$0xff]
    %v3771 = vld [vmem:[#allocation2 + $0x53] sm:$0xff]
    %v3772 = vld [vmem:[#allocation2 + $0x5b] sm:$0xff]
    %v3773 = vld [vmem:[#allocation2 + $0x63] sm:$0xff]
    %v3774 = vld [vmem:[#allocation2 + $0x6b] sm:$0xff]
    %v3775 = vld [vmem:[#allocation2 + $0x73] sm:$0xff]
    %v3776 = vld [vmem:[#allocation2 + $0x7b] sm:$0xff]
    %v3777 = vld [vmem:[#allocation2 + $0x83] sm:$0xff]
    %v3778 = vld [vmem:[#allocation2 + $0x8b] sm:$0xff]
    %v3779 = vld [vmem:[#allocation2 + $0x93] sm:$0xff]
    %v3780 = vld [vmem:[#allocation2 + $0x9b] sm:$0xff]
    %v3781 = vld [vmem:[#allocation2 + $0xa3] sm:$0xff]
    %v3782 = vld [vmem:[#allocation2 + $0xab] sm:$0xff]
    %v3783 = vld [vmem:[#allocation2 + $0xb3] sm:$0xff]
    %v3784 = vld [vmem:[#allocation2 + $0xbb] sm:$0xff]
    %v3785 = vld [vmem:[#allocation2 + $0xc3] sm:$0xff]
    %v3786 = vld [vmem:[#allocation2 + $0xcb] sm:$0xff]
    %v3787 = vld [vmem:[#allocation2 + $0xd3] sm:$0xff]
    %v3788 = vld [vmem:[#allocation2 + $0xdb] sm:$0x7]
    %v3789 = vld [vmem:[%s3 + $0xf0] sm:$0xff]
    %v3790 = vld [vmem:[%s3 + $0xf8] sm:$0xff]
    %v3792 = vsel %vm33, %v3767, 0
    %v3795 = vsel %vm33, %v3768, 0
    %v3798 = vsel %vm33, %v3769, 0
    %v3801 = vsel %vm33, %v3770, 0
    %v3804 = vsel %vm33, %v3771, 0
    %v3807 = vsel %vm33, %v3772, 0
    %v3810 = vsel %vm33, %v3773, 0
    %v3813 = vsel %vm33, %v3774, 0
    %v3816 = vsel %vm33, %v3775, 0
    %v3819 = vsel %vm33, %v3776, 0
    %v3822 = vsel %vm33, %v3777, 0
    %v3825 = vsel %vm33, %v3778, 0
    %v3828 = vsel %vm33, %v3779, 0
    %v3831 = vsel %vm33, %v3780, 0
    %v3834 = vsel %vm33, %v3781, 0
    %v3837 = vsel %vm33, %v3782, 0
    %v3840 = vsel %vm33, %v3783, 0
    %v3843 = vsel %vm33, %v3784, 0
    %v3846 = vsel %vm33, %v3785, 0
    %v3849 = vsel %vm33, %v3786, 0
    %v3852 = vsel %vm33, %v3787, 0
    %v3855 = vsel %vm33, %v3788, 0
    %3857 = vmatpush.msra.mxu0 0.0
    %3858 = vmatpush.msra.mxu0 0.0
    %3859 = vmatpush.msra.mxu0 0.0
    %3860 = vmatpush.msra.mxu0 0.0
    %3861 = vmatpush.msra.mxu0 0.0
    %3862 = vmatpush.msra.mxu0 0.0
    %3863 = vmatpush.msra.mxu0 0.0
    %3864 = vmatpush.msra.mxu0 0.0
    %3865 = vmatpush.msra.mxu0 0.0
    %3866 = vmatpush.msra.mxu0 0.0
    %3867 = vmatpush.msra.mxu0 0.0
    %3868 = vmatpush.msra.mxu0 0.0
    %3869 = vmatpush.msra.mxu0 0.0
    %3870 = vmatpush.msra.mxu0 0.0
    %3871 = vmatpush.msra.mxu0 %v3790
    %3872 = vmatpush.msra.mxu0 %v3789
    %3873 = vmatmul.f32.gmra.mxu0 %v3792
    %v3874 = vpop.f32.mrf.mxu0
    %v3875 = vadd.f32 0.0, %v3874
    %3876 = vmatmul.f32.gmra.mxu0 %v3795
    %v3877 = vpop.f32.mrf.mxu0
    %v3878 = vadd.f32 0.0, %v3877
    %3879 = vmatmul.f32.gmra.mxu0 %v3798
    %v3880 = vpop.f32.mrf.mxu0
    %v3881 = vadd.f32 0.0, %v3880
    %3882 = vmatmul.f32.gmra.mxu0 %v3801
    %v3883 = vpop.f32.mrf.mxu0
    %3884 = vmatmul.f32.gmra.mxu0 %v3804
    %v3885 = vpop.f32.mrf.mxu0
    %v3886 = vadd.f32 0.0, %v3885
    %3887 = vmatmul.f32.gmra.mxu0 %v3807
    %v3888 = vpop.f32.mrf.mxu0
    %v3889 = vadd.f32 0.0, %v3888
    %3890 = vmatmul.f32.gmra.mxu0 %v3810
    %v3891 = vpop.f32.mrf.mxu0
    %v3892 = vadd.f32 0.0, %v3891
    %3893 = vmatmul.f32.gmra.mxu0 %v3813
    %v3894 = vpop.f32.mrf.mxu0
    %3895 = vmatmul.f32.gmra.mxu0 %v3816
    %v3896 = vpop.f32.mrf.mxu0
    %v3897 = vadd.f32 0.0, %v3896
    %3898 = vmatmul.f32.gmra.mxu0 %v3819
    %v3899 = vpop.f32.mrf.mxu0
    %v3900 = vadd.f32 0.0, %v3899
    %3901 = vmatmul.f32.gmra.mxu0 %v3822
    %v3902 = vpop.f32.mrf.mxu0
    %v3903 = vadd.f32 0.0, %v3902
    %3904 = vmatmul.f32.gmra.mxu0 %v3825
    %v3905 = vpop.f32.mrf.mxu0
    %3906 = vmatmul.f32.gmra.mxu0 %v3828
    %v3907 = vpop.f32.mrf.mxu0
    %v3908 = vadd.f32 0.0, %v3907
    %3909 = vmatmul.f32.gmra.mxu0 %v3831
    %v3910 = vpop.f32.mrf.mxu0
    %v3911 = vadd.f32 0.0, %v3910
    %3912 = vmatmul.f32.gmra.mxu0 %v3834
    %v3913 = vpop.f32.mrf.mxu0
    %v3914 = vadd.f32 0.0, %v3913
    %3915 = vmatmul.f32.gmra.mxu0 %v3837
    %v3916 = vpop.f32.mrf.mxu0
    %3917 = vmatmul.f32.gmra.mxu0 %v3840
    %v3918 = vpop.f32.mrf.mxu0
    %v3919 = vadd.f32 0.0, %v3918
    %3920 = vmatmul.f32.gmra.mxu0 %v3843
    %v3921 = vpop.f32.mrf.mxu0
    %v3922 = vadd.f32 0.0, %v3921
    %3923 = vmatmul.f32.gmra.mxu0 %v3846
    %v3924 = vpop.f32.mrf.mxu0
    %v3925 = vadd.f32 0.0, %v3924
    %3926 = vmatmul.f32.gmra.mxu0 %v3849
    %v3927 = vpop.f32.mrf.mxu0
    %3928 = vmatmul.f32.gmra.mxu0 %v3852
    %v3929 = vpop.f32.mrf.mxu0
    %v3930 = vadd.f32 0.0, %v3929
    %3931 = vmatmul.f32.gmra.mxu0 %v3855
    %v3932 = vpop.f32.mrf.mxu0
    %v3933 = vadd.f32 0.0, %v3932
    %3934 = vdwg.mxu0
    %v3935 = vadd.f32 %v3750, %v3875
    %v3936 = vadd.f32 %v3751, %v3878
    %v3937 = vadd.f32 %v3752, %v3881
    %v3938 = vadd.f32 %v3753, %v3886
    %v3939 = vadd.f32 %v3754, %v3889
    %v3940 = vadd.f32 %v3755, %v3892
    %v3941 = vadd.f32 %v3756, %v3897
    %v3942 = vadd.f32 %v3757, %v3900
    %v3943 = vadd.f32 %v3758, %v3903
    %v3944 = vadd.f32 %v3759, %v3908
    %v3945 = vadd.f32 %v3760, %v3911
    %v3946 = vadd.f32 %v3761, %v3914
    %v3947 = vadd.f32 %v3762, %v3919
    %v3948 = vadd.f32 %v3763, %v3922
    %v3949 = vadd.f32 %v3764, %v3925
    %v3950 = vadd.f32 %v3765, %v3930
    %v3951 = vadd.f32 %v3766, %v3933
    %v3953 = vperm.slane %v1025, 0
    %v3955 = vadd.f32 %v3935, %v3953
    %v3956 = vadd.f32 %v3936, %v3953
    %v3957 = vadd.f32 %v3937, %v3953
    %v3958 = vadd.f32 %v3938, %v3953
    %v3959 = vadd.f32 %v3939, %v3953
    %v3960 = vadd.f32 %v3940, %v3953
    %v3961 = vadd.f32 %v3941, %v3953
    %v3962 = vadd.f32 %v3942, %v3953
    %v3963 = vadd.f32 %v3943, %v3953
    %v3964 = vadd.f32 %v3944, %v3953
    %v3965 = vadd.f32 %v3945, %v3953
    %v3966 = vadd.f32 %v3946, %v3953
    %v3967 = vadd.f32 %v3947, %v3953
    %v3968 = vadd.f32 %v3948, %v3953
    %v3969 = vadd.f32 %v3949, %v3953
    %v3970 = vadd.f32 %v3950, %v3953
    %v3971 = vadd.f32 %v3951, %v3953
    %v3972 = vmax.f32 %v3955, 0.0
    %v3973 = vmax.f32 %v3956, 0.0
    %v3974 = vmax.f32 %v3957, 0.0
    %v3975 = vmax.f32 %v3958, 0.0
    %v3976 = vmax.f32 %v3959, 0.0
    %v3977 = vmax.f32 %v3960, 0.0
    %v3978 = vmax.f32 %v3961, 0.0
    %v3979 = vmax.f32 %v3962, 0.0
    %v3980 = vmax.f32 %v3963, 0.0
    %v3981 = vmax.f32 %v3964, 0.0
    %v3982 = vmax.f32 %v3965, 0.0
    %v3983 = vmax.f32 %v3966, 0.0
    %v3984 = vmax.f32 %v3967, 0.0
    %v3985 = vmax.f32 %v3968, 0.0
    %v3986 = vmax.f32 %v3969, 0.0
    %v3987 = vmax.f32 %v3970, 0.0
    %v3988 = vmax.f32 %v3971, 0.0
    %vm4006 = vcmask 1045504
    %v4007 = vrot.slane %v3972, 2
    %v4008 = vrot.slane %v3973, 2
    %v4009 = vsel %vm4006, %v4007, %v4008
    %v4010 = vrot.slane %v3974, 2
    %v4011 = vsel %vm4006, %v4008, %v4010
    %v4012 = vrot.slane %v3975, 2
    %v4013 = vrot.slane %v3976, 2
    %v4014 = vsel %vm4006, %v4012, %v4013
    %v4015 = vrot.slane %v3977, 2
    %v4016 = vsel %vm4006, %v4013, %v4015
    %v4017 = vrot.slane %v3978, 2
    %v4018 = vrot.slane %v3979, 2
    %v4019 = vsel %vm4006, %v4017, %v4018
    %v4020 = vrot.slane %v3980, 2
    %v4021 = vsel %vm4006, %v4018, %v4020
    %v4022 = vrot.slane %v3981, 2
    %v4023 = vrot.slane %v3982, 2
    %v4024 = vsel %vm4006, %v4022, %v4023
    %v4025 = vrot.slane %v3983, 2
    %v4026 = vsel %vm4006, %v4023, %v4025
    %v4027 = vrot.slane %v3984, 2
    %v4028 = vrot.slane %v3985, 2
    %v4029 = vsel %vm4006, %v4027, %v4028
    %v4030 = vrot.slane %v3986, 2
    %v4031 = vsel %vm4006, %v4028, %v4030
    %v4032 = vrot.slane %v3987, 2
    %v4033 = vrot.slane %v3988, 2
    %v4034 = vsel %vm4006, %v4032, %v4033
    %v4047 = vmax.f32 %v3972, %v4009
    %v4048 = vmax.f32 %v3973, %v4011
    %v4049 = vmax.f32 %v3975, %v4014
    %v4050 = vmax.f32 %v3976, %v4016
    %v4051 = vmax.f32 %v3978, %v4019
    %v4052 = vmax.f32 %v3979, %v4021
    %v4053 = vmax.f32 %v3981, %v4024
    %v4054 = vmax.f32 %v3982, %v4026
    %v4055 = vmax.f32 %v3984, %v4029
    %v4056 = vmax.f32 %v3985, %v4031
    %v4057 = vmax.f32 %v3987, %v4034
    %v4058 = vmax.f32 %v3988, %v4033
    %v4059 = vmax.f32 %v4047, %v4049
    %v4060 = vmax.f32 %v4048, %v4050
    %v4061 = vmax.f32 %v4049, %v4051
    %v4062 = vmax.f32 %v4050, %v4052
    %v4063 = vmax.f32 %v4051, %v4053
    %v4064 = vmax.f32 %v4052, %v4054
    %v4065 = vmax.f32 %v4053, %v4055
    %v4066 = vmax.f32 %v4054, %v4056
    %v4067 = vmax.f32 %v4055, %v4057
    %v4068 = vmax.f32 %v4056, %v4058
    %v4069 = vld [vmem:[#allocation2 + $0x100] sm:$0xff]
    %v4070 = vld [vmem:[#allocation2 + $0x108] sm:$0xff]
    %v4071 = vld [vmem:[#allocation2 + $0x110] sm:$0xff]
    %v4072 = vld [vmem:[#allocation2 + $0x118] sm:$0xff]
    %v4073 = vld [vmem:[#allocation2 + $0x120] sm:$0xff]
    %v4074 = vld [vmem:[#allocation2 + $0x128] sm:$0xff]
    %v4075 = vld [vmem:[#allocation2 + $0x130] sm:$0xff]
    %v4076 = vld [vmem:[#allocation2 + $0x138] sm:$0xff]
    %v4077 = vld [vmem:[#allocation2 + $0x140] sm:$0xff]
    %v4078 = vld [vmem:[#allocation2 + $0x148] sm:$0xff]
    %v4079 = vld [vmem:[#allocation2 + $0x150] sm:$0xff]
    %v4080 = vld [vmem:[#allocation2 + $0x158] sm:$0xff]
    %v4081 = vld [vmem:[#allocation2 + $0x160] sm:$0xff]
    %v4082 = vld [vmem:[#allocation2 + $0x168] sm:$0xff]
    %v4083 = vld [vmem:[#allocation2 + $0x170] sm:$0xff]
    %v4084 = vld [vmem:[#allocation2 + $0x178] sm:$0xff]
    %v4085 = vld [vmem:[#allocation2 + $0x180] sm:$0xff]
    %v4086 = vld [vmem:[#allocation2 + $0x188] sm:$0xff]
    %v4087 = vld [vmem:[#allocation2 + $0x190] sm:$0xff]
    %v4088 = vld [vmem:[#allocation2 + $0x198] sm:$0xff]
    %v4089 = vld [vmem:[#allocation2 + $0x1a0] sm:$0xff]
    %v4090 = vld [vmem:[#allocation2 + $0x1a8] sm:$0x7]
    %v4091 = vld [vmem:[#allocation2 + $0x101] sm:$0xff]
    %v4092 = vld [vmem:[#allocation2 + $0x109] sm:$0xff]
    %v4093 = vld [vmem:[#allocation2 + $0x111] sm:$0xff]
    %v4094 = vld [vmem:[#allocation2 + $0x119] sm:$0xff]
    %v4095 = vld [vmem:[#allocation2 + $0x121] sm:$0xff]
    %v4096 = vld [vmem:[#allocation2 + $0x129] sm:$0xff]
    %v4097 = vld [vmem:[#allocation2 + $0x131] sm:$0xff]
    %v4098 = vld [vmem:[#allocation2 + $0x139] sm:$0xff]
    %v4099 = vld [vmem:[#allocation2 + $0x141] sm:$0xff]
    %v4100 = vld [vmem:[#allocation2 + $0x149] sm:$0xff]
    %v4101 = vld [vmem:[#allocation2 + $0x151] sm:$0xff]
    %v4102 = vld [vmem:[#allocation2 + $0x159] sm:$0xff]
    %v4103 = vld [vmem:[#allocation2 + $0x161] sm:$0xff]
    %v4104 = vld [vmem:[#allocation2 + $0x169] sm:$0xff]
    %v4105 = vld [vmem:[#allocation2 + $0x171] sm:$0xff]
    %v4106 = vld [vmem:[#allocation2 + $0x179] sm:$0xff]
    %v4107 = vld [vmem:[#allocation2 + $0x181] sm:$0xff]
    %v4108 = vld [vmem:[#allocation2 + $0x189] sm:$0xff]
    %v4109 = vld [vmem:[#allocation2 + $0x191] sm:$0xff]
    %v4110 = vld [vmem:[#allocation2 + $0x199] sm:$0xff]
    %v4111 = vld [vmem:[#allocation2 + $0x1a1] sm:$0xff]
    %v4112 = vld [vmem:[#allocation2 + $0x1a9] sm:$0x7]
    %v4114 = vsel %vm33, %v4091, 0
    %v4117 = vsel %vm33, %v4092, 0
    %v4120 = vsel %vm33, %v4093, 0
    %v4123 = vsel %vm33, %v4094, 0
    %v4126 = vsel %vm33, %v4095, 0
    %v4129 = vsel %vm33, %v4096, 0
    %v4132 = vsel %vm33, %v4097, 0
    %v4135 = vsel %vm33, %v4098, 0
    %v4138 = vsel %vm33, %v4099, 0
    %v4141 = vsel %vm33, %v4100, 0
    %v4144 = vsel %vm33, %v4101, 0
    %v4147 = vsel %vm33, %v4102, 0
    %v4150 = vsel %vm33, %v4103, 0
    %v4153 = vsel %vm33, %v4104, 0
    %v4156 = vsel %vm33, %v4105, 0
    %v4159 = vsel %vm33, %v4106, 0
    %v4162 = vsel %vm33, %v4107, 0
    %v4165 = vsel %vm33, %v4108, 0
    %v4168 = vsel %vm33, %v4109, 0
    %v4171 = vsel %vm33, %v4110, 0
    %v4174 = vsel %vm33, %v4111, 0
    %v4177 = vsel %vm33, %v4112, 0
    %4179 = vmatpush.msra.mxu0 0.0
    %4180 = vmatpush.msra.mxu0 0.0
    %4181 = vmatpush.msra.mxu0 0.0
    %4182 = vmatpush.msra.mxu0 0.0
    %4183 = vmatpush.msra.mxu0 0.0
    %4184 = vmatpush.msra.mxu0 0.0
    %4185 = vmatpush.msra.mxu0 0.0
    %4186 = vmatpush.msra.mxu0 0.0
    %4187 = vmatpush.msra.mxu0 0.0
    %4188 = vmatpush.msra.mxu0 0.0
    %4189 = vmatpush.msra.mxu0 0.0
    %4190 = vmatpush.msra.mxu0 0.0
    %4191 = vmatpush.msra.mxu0 0.0
    %4192 = vmatpush.msra.mxu0 0.0
    %4193 = vmatpush.msra.mxu0 %v1073
    %4194 = vmatpush.msra.mxu0 %v1072
    %4195 = vmatmul.f32.gmra.mxu0 %v4114
    %v4196 = vpop.f32.mrf.mxu0
    %v4197 = vadd.f32 0.0, %v4196
    %4198 = vmatmul.f32.gmra.mxu0 %v4117
    %v4199 = vpop.f32.mrf.mxu0
    %v4200 = vadd.f32 0.0, %v4199
    %4201 = vmatmul.f32.gmra.mxu0 %v4120
    %v4202 = vpop.f32.mrf.mxu0
    %v4203 = vadd.f32 0.0, %v4202
    %4204 = vmatmul.f32.gmra.mxu0 %v4123
    %v4205 = vpop.f32.mrf.mxu0
    %4206 = vmatmul.f32.gmra.mxu0 %v4126
    %v4207 = vpop.f32.mrf.mxu0
    %v4208 = vadd.f32 0.0, %v4207
    %4209 = vmatmul.f32.gmra.mxu0 %v4129
    %v4210 = vpop.f32.mrf.mxu0
    %v4211 = vadd.f32 0.0, %v4210
    %4212 = vmatmul.f32.gmra.mxu0 %v4132
    %v4213 = vpop.f32.mrf.mxu0
    %v4214 = vadd.f32 0.0, %v4213
    %4215 = vmatmul.f32.gmra.mxu0 %v4135
    %v4216 = vpop.f32.mrf.mxu0
    %4217 = vmatmul.f32.gmra.mxu0 %v4138
    %v4218 = vpop.f32.mrf.mxu0
    %v4219 = vadd.f32 0.0, %v4218
    %4220 = vmatmul.f32.gmra.mxu0 %v4141
    %v4221 = vpop.f32.mrf.mxu0
    %v4222 = vadd.f32 0.0, %v4221
    %4223 = vmatmul.f32.gmra.mxu0 %v4144
    %v4224 = vpop.f32.mrf.mxu0
    %v4225 = vadd.f32 0.0, %v4224
    %4226 = vmatmul.f32.gmra.mxu0 %v4147
    %v4227 = vpop.f32.mrf.mxu0
    %4228 = vmatmul.f32.gmra.mxu0 %v4150
    %v4229 = vpop.f32.mrf.mxu0
    %v4230 = vadd.f32 0.0, %v4229
    %4231 = vmatmul.f32.gmra.mxu0 %v4153
    %v4232 = vpop.f32.mrf.mxu0
    %v4233 = vadd.f32 0.0, %v4232
    %4234 = vmatmul.f32.gmra.mxu0 %v4156
    %v4235 = vpop.f32.mrf.mxu0
    %v4236 = vadd.f32 0.0, %v4235
    %4237 = vmatmul.f32.gmra.mxu0 %v4159
    %v4238 = vpop.f32.mrf.mxu0
    %4239 = vmatmul.f32.gmra.mxu0 %v4162
    %v4240 = vpop.f32.mrf.mxu0
    %v4241 = vadd.f32 0.0, %v4240
    %4242 = vmatmul.f32.gmra.mxu0 %v4165
    %v4243 = vpop.f32.mrf.mxu0
    %v4244 = vadd.f32 0.0, %v4243
    %4245 = vmatmul.f32.gmra.mxu0 %v4168
    %v4246 = vpop.f32.mrf.mxu0
    %v4247 = vadd.f32 0.0, %v4246
    %4248 = vmatmul.f32.gmra.mxu0 %v4171
    %v4249 = vpop.f32.mrf.mxu0
    %4250 = vmatmul.f32.gmra.mxu0 %v4174
    %v4251 = vpop.f32.mrf.mxu0
    %v4252 = vadd.f32 0.0, %v4251
    %4253 = vmatmul.f32.gmra.mxu0 %v4177
    %v4254 = vpop.f32.mrf.mxu0
    %v4255 = vadd.f32 0.0, %v4254
    %4256 = vdwg.mxu0
    %v4258 = vsel %vm33, %v4069, 0
    %v4261 = vsel %vm33, %v4070, 0
    %v4264 = vsel %vm33, %v4071, 0
    %v4267 = vsel %vm33, %v4072, 0
    %v4270 = vsel %vm33, %v4073, 0
    %v4273 = vsel %vm33, %v4074, 0
    %v4276 = vsel %vm33, %v4075, 0
    %v4279 = vsel %vm33, %v4076, 0
    %v4282 = vsel %vm33, %v4077, 0
    %v4285 = vsel %vm33, %v4078, 0
    %v4288 = vsel %vm33, %v4079, 0
    %v4291 = vsel %vm33, %v4080, 0
    %v4294 = vsel %vm33, %v4081, 0
    %v4297 = vsel %vm33, %v4082, 0
    %v4300 = vsel %vm33, %v4083, 0
    %v4303 = vsel %vm33, %v4084, 0
    %v4306 = vsel %vm33, %v4085, 0
    %v4309 = vsel %vm33, %v4086, 0
    %v4312 = vsel %vm33, %v4087, 0
    %v4315 = vsel %vm33, %v4088, 0
    %v4318 = vsel %vm33, %v4089, 0
    %v4321 = vsel %vm33, %v4090, 0
    %4323 = vmatpush.msra.mxu0 0.0
    %4324 = vmatpush.msra.mxu0 0.0
    %4325 = vmatpush.msra.mxu0 0.0
    %4326 = vmatpush.msra.mxu0 0.0
    %4327 = vmatpush.msra.mxu0 0.0
    %4328 = vmatpush.msra.mxu0 0.0
    %4329 = vmatpush.msra.mxu0 0.0
    %4330 = vmatpush.msra.mxu0 0.0
    %4331 = vmatpush.msra.mxu0 0.0
    %4332 = vmatpush.msra.mxu0 0.0
    %4333 = vmatpush.msra.mxu0 0.0
    %4334 = vmatpush.msra.mxu0 0.0
    %4335 = vmatpush.msra.mxu0 0.0
    %4336 = vmatpush.msra.mxu0 0.0
    %4337 = vmatpush.msra.mxu0 %v1049
    %4338 = vmatpush.msra.mxu0 %v1048
    %4339 = vmatmul.f32.gmra.mxu0 %v4258
    %v4340 = vpop.f32.mrf.mxu0
    %v4341 = vadd.f32 %v4197, %v4340
    %4342 = vmatmul.f32.gmra.mxu0 %v4261
    %v4343 = vpop.f32.mrf.mxu0
    %v4344 = vadd.f32 %v4200, %v4343
    %4345 = vmatmul.f32.gmra.mxu0 %v4264
    %v4346 = vpop.f32.mrf.mxu0
    %v4347 = vadd.f32 %v4203, %v4346
    %4348 = vmatmul.f32.gmra.mxu0 %v4267
    %v4349 = vpop.f32.mrf.mxu0
    %4350 = vmatmul.f32.gmra.mxu0 %v4270
    %v4351 = vpop.f32.mrf.mxu0
    %v4352 = vadd.f32 %v4208, %v4351
    %4353 = vmatmul.f32.gmra.mxu0 %v4273
    %v4354 = vpop.f32.mrf.mxu0
    %v4355 = vadd.f32 %v4211, %v4354
    %4356 = vmatmul.f32.gmra.mxu0 %v4276
    %v4357 = vpop.f32.mrf.mxu0
    %v4358 = vadd.f32 %v4214, %v4357
    %4359 = vmatmul.f32.gmra.mxu0 %v4279
    %v4360 = vpop.f32.mrf.mxu0
    %4361 = vmatmul.f32.gmra.mxu0 %v4282
    %v4362 = vpop.f32.mrf.mxu0
    %v4363 = vadd.f32 %v4219, %v4362
    %4364 = vmatmul.f32.gmra.mxu0 %v4285
    %v4365 = vpop.f32.mrf.mxu0
    %v4366 = vadd.f32 %v4222, %v4365
    %4367 = vmatmul.f32.gmra.mxu0 %v4288
    %v4368 = vpop.f32.mrf.mxu0
    %v4369 = vadd.f32 %v4225, %v4368
    %4370 = vmatmul.f32.gmra.mxu0 %v4291
    %v4371 = vpop.f32.mrf.mxu0
    %4372 = vmatmul.f32.gmra.mxu0 %v4294
    %v4373 = vpop.f32.mrf.mxu0
    %v4374 = vadd.f32 %v4230, %v4373
    %4375 = vmatmul.f32.gmra.mxu0 %v4297
    %v4376 = vpop.f32.mrf.mxu0
    %v4377 = vadd.f32 %v4233, %v4376
    %4378 = vmatmul.f32.gmra.mxu0 %v4300
    %v4379 = vpop.f32.mrf.mxu0
    %v4380 = vadd.f32 %v4236, %v4379
    %4381 = vmatmul.f32.gmra.mxu0 %v4303
    %v4382 = vpop.f32.mrf.mxu0
    %4383 = vmatmul.f32.gmra.mxu0 %v4306
    %v4384 = vpop.f32.mrf.mxu0
    %v4385 = vadd.f32 %v4241, %v4384
    %4386 = vmatmul.f32.gmra.mxu0 %v4309
    %v4387 = vpop.f32.mrf.mxu0
    %v4388 = vadd.f32 %v4244, %v4387
    %4389 = vmatmul.f32.gmra.mxu0 %v4312
    %v4390 = vpop.f32.mrf.mxu0
    %v4391 = vadd.f32 %v4247, %v4390
    %4392 = vmatmul.f32.gmra.mxu0 %v4315
    %v4393 = vpop.f32.mrf.mxu0
    %4394 = vmatmul.f32.gmra.mxu0 %v4318
    %v4395 = vpop.f32.mrf.mxu0
    %v4396 = vadd.f32 %v4252, %v4395
    %4397 = vmatmul.f32.gmra.mxu0 %v4321
    %v4398 = vpop.f32.mrf.mxu0
    %v4399 = vadd.f32 %v4255, %v4398
    %4400 = vdwg.mxu0
    %v4401 = vld [vmem:[#allocation2 + $0x102] sm:$0xff]
    %v4402 = vld [vmem:[#allocation2 + $0x10a] sm:$0xff]
    %v4403 = vld [vmem:[#allocation2 + $0x112] sm:$0xff]
    %v4404 = vld [vmem:[#allocation2 + $0x11a] sm:$0xff]
    %v4405 = vld [vmem:[#allocation2 + $0x122] sm:$0xff]
    %v4406 = vld [vmem:[#allocation2 + $0x12a] sm:$0xff]
    %v4407 = vld [vmem:[#allocation2 + $0x132] sm:$0xff]
    %v4408 = vld [vmem:[#allocation2 + $0x13a] sm:$0xff]
    %v4409 = vld [vmem:[#allocation2 + $0x142] sm:$0xff]
    %v4410 = vld [vmem:[#allocation2 + $0x14a] sm:$0xff]
    %v4411 = vld [vmem:[#allocation2 + $0x152] sm:$0xff]
    %v4412 = vld [vmem:[#allocation2 + $0x15a] sm:$0xff]
    %v4413 = vld [vmem:[#allocation2 + $0x162] sm:$0xff]
    %v4414 = vld [vmem:[#allocation2 + $0x16a] sm:$0xff]
    %v4415 = vld [vmem:[#allocation2 + $0x172] sm:$0xff]
    %v4416 = vld [vmem:[#allocation2 + $0x17a] sm:$0xff]
    %v4417 = vld [vmem:[#allocation2 + $0x182] sm:$0xff]
    %v4418 = vld [vmem:[#allocation2 + $0x18a] sm:$0xff]
    %v4419 = vld [vmem:[#allocation2 + $0x192] sm:$0xff]
    %v4420 = vld [vmem:[#allocation2 + $0x19a] sm:$0xff]
    %v4421 = vld [vmem:[#allocation2 + $0x1a2] sm:$0xff]
    %v4422 = vld [vmem:[#allocation2 + $0x1aa] sm:$0x7]
    %v4424 = vsel %vm33, %v4401, 0
    %v4427 = vsel %vm33, %v4402, 0
    %v4430 = vsel %vm33, %v4403, 0
    %v4433 = vsel %vm33, %v4404, 0
    %v4436 = vsel %vm33, %v4405, 0
    %v4439 = vsel %vm33, %v4406, 0
    %v4442 = vsel %vm33, %v4407, 0
    %v4445 = vsel %vm33, %v4408, 0
    %v4448 = vsel %vm33, %v4409, 0
    %v4451 = vsel %vm33, %v4410, 0
    %v4454 = vsel %vm33, %v4411, 0
    %v4457 = vsel %vm33, %v4412, 0
    %v4460 = vsel %vm33, %v4413, 0
    %v4463 = vsel %vm33, %v4414, 0
    %v4466 = vsel %vm33, %v4415, 0
    %v4469 = vsel %vm33, %v4416, 0
    %v4472 = vsel %vm33, %v4417, 0
    %v4475 = vsel %vm33, %v4418, 0
    %v4478 = vsel %vm33, %v4419, 0
    %v4481 = vsel %vm33, %v4420, 0
    %v4484 = vsel %vm33, %v4421, 0
    %v4487 = vsel %vm33, %v4422, 0
    %4489 = vmatpush.msra.mxu0 0.0
    %4490 = vmatpush.msra.mxu0 0.0
    %4491 = vmatpush.msra.mxu0 0.0
    %4492 = vmatpush.msra.mxu0 0.0
    %4493 = vmatpush.msra.mxu0 0.0
    %4494 = vmatpush.msra.mxu0 0.0
    %4495 = vmatpush.msra.mxu0 0.0
    %4496 = vmatpush.msra.mxu0 0.0
    %4497 = vmatpush.msra.mxu0 0.0
    %4498 = vmatpush.msra.mxu0 0.0
    %4499 = vmatpush.msra.mxu0 0.0
    %4500 = vmatpush.msra.mxu0 0.0
    %4501 = vmatpush.msra.mxu0 0.0
    %4502 = vmatpush.msra.mxu0 0.0
    %4503 = vmatpush.msra.mxu0 %v1385
    %4504 = vmatpush.msra.mxu0 %v1384
    %4505 = vmatmul.f32.gmra.mxu0 %v4424
    %v4506 = vpop.f32.mrf.mxu0
    %v4507 = vadd.f32 0.0, %v4506
    %4508 = vmatmul.f32.gmra.mxu0 %v4427
    %v4509 = vpop.f32.mrf.mxu0
    %v4510 = vadd.f32 0.0, %v4509
    %4511 = vmatmul.f32.gmra.mxu0 %v4430
    %v4512 = vpop.f32.mrf.mxu0
    %v4513 = vadd.f32 0.0, %v4512
    %4514 = vmatmul.f32.gmra.mxu0 %v4433
    %v4515 = vpop.f32.mrf.mxu0
    %4516 = vmatmul.f32.gmra.mxu0 %v4436
    %v4517 = vpop.f32.mrf.mxu0
    %v4518 = vadd.f32 0.0, %v4517
    %4519 = vmatmul.f32.gmra.mxu0 %v4439
    %v4520 = vpop.f32.mrf.mxu0
    %v4521 = vadd.f32 0.0, %v4520
    %4522 = vmatmul.f32.gmra.mxu0 %v4442
    %v4523 = vpop.f32.mrf.mxu0
    %v4524 = vadd.f32 0.0, %v4523
    %4525 = vmatmul.f32.gmra.mxu0 %v4445
    %v4526 = vpop.f32.mrf.mxu0
    %4527 = vmatmul.f32.gmra.mxu0 %v4448
    %v4528 = vpop.f32.mrf.mxu0
    %v4529 = vadd.f32 0.0, %v4528
    %4530 = vmatmul.f32.gmra.mxu0 %v4451
    %v4531 = vpop.f32.mrf.mxu0
    %v4532 = vadd.f32 0.0, %v4531
    %4533 = vmatmul.f32.gmra.mxu0 %v4454
    %v4534 = vpop.f32.mrf.mxu0
    %v4535 = vadd.f32 0.0, %v4534
    %4536 = vmatmul.f32.gmra.mxu0 %v4457
    %v4537 = vpop.f32.mrf.mxu0
    %4538 = vmatmul.f32.gmra.mxu0 %v4460
    %v4539 = vpop.f32.mrf.mxu0
    %v4540 = vadd.f32 0.0, %v4539
    %4541 = vmatmul.f32.gmra.mxu0 %v4463
    %v4542 = vpop.f32.mrf.mxu0
    %v4543 = vadd.f32 0.0, %v4542
    %4544 = vmatmul.f32.gmra.mxu0 %v4466
    %v4545 = vpop.f32.mrf.mxu0
    %v4546 = vadd.f32 0.0, %v4545
    %4547 = vmatmul.f32.gmra.mxu0 %v4469
    %v4548 = vpop.f32.mrf.mxu0
    %4549 = vmatmul.f32.gmra.mxu0 %v4472
    %v4550 = vpop.f32.mrf.mxu0
    %v4551 = vadd.f32 0.0, %v4550
    %4552 = vmatmul.f32.gmra.mxu0 %v4475
    %v4553 = vpop.f32.mrf.mxu0
    %v4554 = vadd.f32 0.0, %v4553
    %4555 = vmatmul.f32.gmra.mxu0 %v4478
    %v4556 = vpop.f32.mrf.mxu0
    %v4557 = vadd.f32 0.0, %v4556
    %4558 = vmatmul.f32.gmra.mxu0 %v4481
    %v4559 = vpop.f32.mrf.mxu0
    %4560 = vmatmul.f32.gmra.mxu0 %v4484
    %v4561 = vpop.f32.mrf.mxu0
    %v4562 = vadd.f32 0.0, %v4561
    %4563 = vmatmul.f32.gmra.mxu0 %v4487
    %v4564 = vpop.f32.mrf.mxu0
    %v4565 = vadd.f32 0.0, %v4564
    %4566 = vdwg.mxu0
    %v4567 = vadd.f32 %v4341, %v4507
    %v4568 = vadd.f32 %v4344, %v4510
    %v4569 = vadd.f32 %v4347, %v4513
    %v4570 = vadd.f32 %v4352, %v4518
    %v4571 = vadd.f32 %v4355, %v4521
    %v4572 = vadd.f32 %v4358, %v4524
    %v4573 = vadd.f32 %v4363, %v4529
    %v4574 = vadd.f32 %v4366, %v4532
    %v4575 = vadd.f32 %v4369, %v4535
    %v4576 = vadd.f32 %v4374, %v4540
    %v4577 = vadd.f32 %v4377, %v4543
    %v4578 = vadd.f32 %v4380, %v4546
    %v4579 = vadd.f32 %v4385, %v4551
    %v4580 = vadd.f32 %v4388, %v4554
    %v4581 = vadd.f32 %v4391, %v4557
    %v4582 = vadd.f32 %v4396, %v4562
    %v4583 = vadd.f32 %v4399, %v4565
    %v4584 = vld [vmem:[#allocation2 + $0x103] sm:$0xff]
    %v4585 = vld [vmem:[#allocation2 + $0x10b] sm:$0xff]
    %v4586 = vld [vmem:[#allocation2 + $0x113] sm:$0xff]
    %v4587 = vld [vmem:[#allocation2 + $0x11b] sm:$0xff]
    %v4588 = vld [vmem:[#allocation2 + $0x123] sm:$0xff]
    %v4589 = vld [vmem:[#allocation2 + $0x12b] sm:$0xff]
    %v4590 = vld [vmem:[#allocation2 + $0x133] sm:$0xff]
    %v4591 = vld [vmem:[#allocation2 + $0x13b] sm:$0xff]
    %v4592 = vld [vmem:[#allocation2 + $0x143] sm:$0xff]
    %v4593 = vld [vmem:[#allocation2 + $0x14b] sm:$0xff]
    %v4594 = vld [vmem:[#allocation2 + $0x153] sm:$0xff]
    %v4595 = vld [vmem:[#allocation2 + $0x15b] sm:$0xff]
    %v4596 = vld [vmem:[#allocation2 + $0x163] sm:$0xff]
    %v4597 = vld [vmem:[#allocation2 + $0x16b] sm:$0xff]
    %v4598 = vld [vmem:[#allocation2 + $0x173] sm:$0xff]
    %v4599 = vld [vmem:[#allocation2 + $0x17b] sm:$0xff]
    %v4600 = vld [vmem:[#allocation2 + $0x183] sm:$0xff]
    %v4601 = vld [vmem:[#allocation2 + $0x18b] sm:$0xff]
    %v4602 = vld [vmem:[#allocation2 + $0x193] sm:$0xff]
    %v4603 = vld [vmem:[#allocation2 + $0x19b] sm:$0xff]
    %v4604 = vld [vmem:[#allocation2 + $0x1a3] sm:$0xff]
    %v4605 = vld [vmem:[#allocation2 + $0x1ab] sm:$0x7]
    %v4607 = vsel %vm33, %v4584, 0
    %v4610 = vsel %vm33, %v4585, 0
    %v4613 = vsel %vm33, %v4586, 0
    %v4616 = vsel %vm33, %v4587, 0
    %v4619 = vsel %vm33, %v4588, 0
    %v4622 = vsel %vm33, %v4589, 0
    %v4625 = vsel %vm33, %v4590, 0
    %v4628 = vsel %vm33, %v4591, 0
    %v4631 = vsel %vm33, %v4592, 0
    %v4634 = vsel %vm33, %v4593, 0
    %v4637 = vsel %vm33, %v4594, 0
    %v4640 = vsel %vm33, %v4595, 0
    %v4643 = vsel %vm33, %v4596, 0
    %v4646 = vsel %vm33, %v4597, 0
    %v4649 = vsel %vm33, %v4598, 0
    %v4652 = vsel %vm33, %v4599, 0
    %v4655 = vsel %vm33, %v4600, 0
    %v4658 = vsel %vm33, %v4601, 0
    %v4661 = vsel %vm33, %v4602, 0
    %v4664 = vsel %vm33, %v4603, 0
    %v4667 = vsel %vm33, %v4604, 0
    %v4670 = vsel %vm33, %v4605, 0
    %4672 = vmatpush.msra.mxu0 0.0
    %4673 = vmatpush.msra.mxu0 0.0
    %4674 = vmatpush.msra.mxu0 0.0
    %4675 = vmatpush.msra.mxu0 0.0
    %4676 = vmatpush.msra.mxu0 0.0
    %4677 = vmatpush.msra.mxu0 0.0
    %4678 = vmatpush.msra.mxu0 0.0
    %4679 = vmatpush.msra.mxu0 0.0
    %4680 = vmatpush.msra.mxu0 0.0
    %4681 = vmatpush.msra.mxu0 0.0
    %4682 = vmatpush.msra.mxu0 0.0
    %4683 = vmatpush.msra.mxu0 0.0
    %4684 = vmatpush.msra.mxu0 0.0
    %4685 = vmatpush.msra.mxu0 0.0
    %4686 = vmatpush.msra.mxu0 %v1570
    %4687 = vmatpush.msra.mxu0 %v1569
    %4688 = vmatmul.f32.gmra.mxu0 %v4607
    %v4689 = vpop.f32.mrf.mxu0
    %v4690 = vadd.f32 0.0, %v4689
    %4691 = vmatmul.f32.gmra.mxu0 %v4610
    %v4692 = vpop.f32.mrf.mxu0
    %v4693 = vadd.f32 0.0, %v4692
    %4694 = vmatmul.f32.gmra.mxu0 %v4613
    %v4695 = vpop.f32.mrf.mxu0
    %v4696 = vadd.f32 0.0, %v4695
    %4697 = vmatmul.f32.gmra.mxu0 %v4616
    %v4698 = vpop.f32.mrf.mxu0
    %4699 = vmatmul.f32.gmra.mxu0 %v4619
    %v4700 = vpop.f32.mrf.mxu0
    %v4701 = vadd.f32 0.0, %v4700
    %4702 = vmatmul.f32.gmra.mxu0 %v4622
    %v4703 = vpop.f32.mrf.mxu0
    %v4704 = vadd.f32 0.0, %v4703
    %4705 = vmatmul.f32.gmra.mxu0 %v4625
    %v4706 = vpop.f32.mrf.mxu0
    %v4707 = vadd.f32 0.0, %v4706
    %4708 = vmatmul.f32.gmra.mxu0 %v4628
    %v4709 = vpop.f32.mrf.mxu0
    %4710 = vmatmul.f32.gmra.mxu0 %v4631
    %v4711 = vpop.f32.mrf.mxu0
    %v4712 = vadd.f32 0.0, %v4711
    %4713 = vmatmul.f32.gmra.mxu0 %v4634
    %v4714 = vpop.f32.mrf.mxu0
    %v4715 = vadd.f32 0.0, %v4714
    %4716 = vmatmul.f32.gmra.mxu0 %v4637
    %v4717 = vpop.f32.mrf.mxu0
    %v4718 = vadd.f32 0.0, %v4717
    %4719 = vmatmul.f32.gmra.mxu0 %v4640
    %v4720 = vpop.f32.mrf.mxu0
    %4721 = vmatmul.f32.gmra.mxu0 %v4643
    %v4722 = vpop.f32.mrf.mxu0
    %v4723 = vadd.f32 0.0, %v4722
    %4724 = vmatmul.f32.gmra.mxu0 %v4646
    %v4725 = vpop.f32.mrf.mxu0
    %v4726 = vadd.f32 0.0, %v4725
    %4727 = vmatmul.f32.gmra.mxu0 %v4649
    %v4728 = vpop.f32.mrf.mxu0
    %v4729 = vadd.f32 0.0, %v4728
    %4730 = vmatmul.f32.gmra.mxu0 %v4652
    %v4731 = vpop.f32.mrf.mxu0
    %4732 = vmatmul.f32.gmra.mxu0 %v4655
    %v4733 = vpop.f32.mrf.mxu0
    %v4734 = vadd.f32 0.0, %v4733
    %4735 = vmatmul.f32.gmra.mxu0 %v4658
    %v4736 = vpop.f32.mrf.mxu0
    %v4737 = vadd.f32 0.0, %v4736
    %4738 = vmatmul.f32.gmra.mxu0 %v4661
    %v4739 = vpop.f32.mrf.mxu0
    %v4740 = vadd.f32 0.0, %v4739
    %4741 = vmatmul.f32.gmra.mxu0 %v4664
    %v4742 = vpop.f32.mrf.mxu0
    %4743 = vmatmul.f32.gmra.mxu0 %v4667
    %v4744 = vpop.f32.mrf.mxu0
    %v4745 = vadd.f32 0.0, %v4744
    %4746 = vmatmul.f32.gmra.mxu0 %v4670
    %v4747 = vpop.f32.mrf.mxu0
    %v4748 = vadd.f32 0.0, %v4747
    %4749 = vdwg.mxu0
    %v4750 = vadd.f32 %v4567, %v4690
    %v4751 = vadd.f32 %v4568, %v4693
    %v4752 = vadd.f32 %v4569, %v4696
    %v4753 = vadd.f32 %v4570, %v4701
    %v4754 = vadd.f32 %v4571, %v4704
    %v4755 = vadd.f32 %v4572, %v4707
    %v4756 = vadd.f32 %v4573, %v4712
    %v4757 = vadd.f32 %v4574, %v4715
    %v4758 = vadd.f32 %v4575, %v4718
    %v4759 = vadd.f32 %v4576, %v4723
    %v4760 = vadd.f32 %v4577, %v4726
    %v4761 = vadd.f32 %v4578, %v4729
    %v4762 = vadd.f32 %v4579, %v4734
    %v4763 = vadd.f32 %v4580, %v4737
    %v4764 = vadd.f32 %v4581, %v4740
    %v4765 = vadd.f32 %v4582, %v4745
    %v4766 = vadd.f32 %v4583, %v4748
    %v4767 = vld [vmem:[#allocation2 + $0x110] sm:$0xff]
    %v4768 = vld [vmem:[#allocation2 + $0x118] sm:$0xff]
    %v4769 = vld [vmem:[#allocation2 + $0x120] sm:$0xff]
    %v4770 = vld [vmem:[#allocation2 + $0x128] sm:$0xff]
    %v4771 = vld [vmem:[#allocation2 + $0x130] sm:$0xff]
    %v4772 = vld [vmem:[#allocation2 + $0x138] sm:$0xff]
    %v4773 = vld [vmem:[#allocation2 + $0x140] sm:$0xff]
    %v4774 = vld [vmem:[#allocation2 + $0x148] sm:$0xff]
    %v4775 = vld [vmem:[#allocation2 + $0x150] sm:$0xff]
    %v4776 = vld [vmem:[#allocation2 + $0x158] sm:$0xff]
    %v4777 = vld [vmem:[#allocation2 + $0x160] sm:$0xff]
    %v4778 = vld [vmem:[#allocation2 + $0x168] sm:$0xff]
    %v4779 = vld [vmem:[#allocation2 + $0x170] sm:$0xff]
    %v4780 = vld [vmem:[#allocation2 + $0x178] sm:$0xff]
    %v4781 = vld [vmem:[#allocation2 + $0x180] sm:$0xff]
    %v4782 = vld [vmem:[#allocation2 + $0x188] sm:$0xff]
    %v4783 = vld [vmem:[#allocation2 + $0x190] sm:$0xff]
    %v4784 = vld [vmem:[#allocation2 + $0x198] sm:$0xff]
    %v4785 = vld [vmem:[#allocation2 + $0x1a0] sm:$0xff]
    %v4786 = vld [vmem:[#allocation2 + $0x1a8] sm:$0xff]
    %v4787 = vld [vmem:[#allocation2 + $0x1b0] sm:$0xff]
    %v4788 = vld [vmem:[#allocation2 + $0x1b8] sm:$0x7]
    %v4790 = vsel %vm33, %v4767, 0
    %v4793 = vsel %vm33, %v4768, 0
    %v4796 = vsel %vm33, %v4769, 0
    %v4799 = vsel %vm33, %v4770, 0
    %v4802 = vsel %vm33, %v4771, 0
    %v4805 = vsel %vm33, %v4772, 0
    %v4808 = vsel %vm33, %v4773, 0
    %v4811 = vsel %vm33, %v4774, 0
    %v4814 = vsel %vm33, %v4775, 0
    %v4817 = vsel %vm33, %v4776, 0
    %v4820 = vsel %vm33, %v4777, 0
    %v4823 = vsel %vm33, %v4778, 0
    %v4826 = vsel %vm33, %v4779, 0
    %v4829 = vsel %vm33, %v4780, 0
    %v4832 = vsel %vm33, %v4781, 0
    %v4835 = vsel %vm33, %v4782, 0
    %v4838 = vsel %vm33, %v4783, 0
    %v4841 = vsel %vm33, %v4784, 0
    %v4844 = vsel %vm33, %v4785, 0
    %v4847 = vsel %vm33, %v4786, 0
    %v4850 = vsel %vm33, %v4787, 0
    %v4853 = vsel %vm33, %v4788, 0
    %4855 = vmatpush.msra.mxu0 0.0
    %4856 = vmatpush.msra.mxu0 0.0
    %4857 = vmatpush.msra.mxu0 0.0
    %4858 = vmatpush.msra.mxu0 0.0
    %4859 = vmatpush.msra.mxu0 0.0
    %4860 = vmatpush.msra.mxu0 0.0
    %4861 = vmatpush.msra.mxu0 0.0
    %4862 = vmatpush.msra.mxu0 0.0
    %4863 = vmatpush.msra.mxu0 0.0
    %4864 = vmatpush.msra.mxu0 0.0
    %4865 = vmatpush.msra.mxu0 0.0
    %4866 = vmatpush.msra.mxu0 0.0
    %4867 = vmatpush.msra.mxu0 0.0
    %4868 = vmatpush.msra.mxu0 0.0
    %4869 = vmatpush.msra.mxu0 %v1755
    %4870 = vmatpush.msra.mxu0 %v1754
    %4871 = vmatmul.f32.gmra.mxu0 %v4790
    %v4872 = vpop.f32.mrf.mxu0
    %v4873 = vadd.f32 0.0, %v4872
    %4874 = vmatmul.f32.gmra.mxu0 %v4793
    %v4875 = vpop.f32.mrf.mxu0
    %v4876 = vadd.f32 0.0, %v4875
    %4877 = vmatmul.f32.gmra.mxu0 %v4796
    %v4878 = vpop.f32.mrf.mxu0
    %v4879 = vadd.f32 0.0, %v4878
    %4880 = vmatmul.f32.gmra.mxu0 %v4799
    %v4881 = vpop.f32.mrf.mxu0
    %4882 = vmatmul.f32.gmra.mxu0 %v4802
    %v4883 = vpop.f32.mrf.mxu0
    %v4884 = vadd.f32 0.0, %v4883
    %4885 = vmatmul.f32.gmra.mxu0 %v4805
    %v4886 = vpop.f32.mrf.mxu0
    %v4887 = vadd.f32 0.0, %v4886
    %4888 = vmatmul.f32.gmra.mxu0 %v4808
    %v4889 = vpop.f32.mrf.mxu0
    %v4890 = vadd.f32 0.0, %v4889
    %4891 = vmatmul.f32.gmra.mxu0 %v4811
    %v4892 = vpop.f32.mrf.mxu0
    %4893 = vmatmul.f32.gmra.mxu0 %v4814
    %v4894 = vpop.f32.mrf.mxu0
    %v4895 = vadd.f32 0.0, %v4894
    %4896 = vmatmul.f32.gmra.mxu0 %v4817
    %v4897 = vpop.f32.mrf.mxu0
    %v4898 = vadd.f32 0.0, %v4897
    %4899 = vmatmul.f32.gmra.mxu0 %v4820
    %v4900 = vpop.f32.mrf.mxu0
    %v4901 = vadd.f32 0.0, %v4900
    %4902 = vmatmul.f32.gmra.mxu0 %v4823
    %v4903 = vpop.f32.mrf.mxu0
    %4904 = vmatmul.f32.gmra.mxu0 %v4826
    %v4905 = vpop.f32.mrf.mxu0
    %v4906 = vadd.f32 0.0, %v4905
    %4907 = vmatmul.f32.gmra.mxu0 %v4829
    %v4908 = vpop.f32.mrf.mxu0
    %v4909 = vadd.f32 0.0, %v4908
    %4910 = vmatmul.f32.gmra.mxu0 %v4832
    %v4911 = vpop.f32.mrf.mxu0
    %v4912 = vadd.f32 0.0, %v4911
    %4913 = vmatmul.f32.gmra.mxu0 %v4835
    %v4914 = vpop.f32.mrf.mxu0
    %4915 = vmatmul.f32.gmra.mxu0 %v4838
    %v4916 = vpop.f32.mrf.mxu0
    %v4917 = vadd.f32 0.0, %v4916
    %4918 = vmatmul.f32.gmra.mxu0 %v4841
    %v4919 = vpop.f32.mrf.mxu0
    %v4920 = vadd.f32 0.0, %v4919
    %4921 = vmatmul.f32.gmra.mxu0 %v4844
    %v4922 = vpop.f32.mrf.mxu0
    %v4923 = vadd.f32 0.0, %v4922
    %4924 = vmatmul.f32.gmra.mxu0 %v4847
    %v4925 = vpop.f32.mrf.mxu0
    %4926 = vmatmul.f32.gmra.mxu0 %v4850
    %v4927 = vpop.f32.mrf.mxu0
    %v4928 = vadd.f32 0.0, %v4927
    %4929 = vmatmul.f32.gmra.mxu0 %v4853
    %v4930 = vpop.f32.mrf.mxu0
    %v4931 = vadd.f32 0.0, %v4930
    %4932 = vdwg.mxu0
    %v4933 = vadd.f32 %v4750, %v4873
    %v4934 = vadd.f32 %v4751, %v4876
    %v4935 = vadd.f32 %v4752, %v4879
    %v4936 = vadd.f32 %v4753, %v4884
    %v4937 = vadd.f32 %v4754, %v4887
    %v4938 = vadd.f32 %v4755, %v4890
    %v4939 = vadd.f32 %v4756, %v4895
    %v4940 = vadd.f32 %v4757, %v4898
    %v4941 = vadd.f32 %v4758, %v4901
    %v4942 = vadd.f32 %v4759, %v4906
    %v4943 = vadd.f32 %v4760, %v4909
    %v4944 = vadd.f32 %v4761, %v4912
    %v4945 = vadd.f32 %v4762, %v4917
    %v4946 = vadd.f32 %v4763, %v4920
    %v4947 = vadd.f32 %v4764, %v4923
    %v4948 = vadd.f32 %v4765, %v4928
    %v4949 = vadd.f32 %v4766, %v4931
    %v4950 = vld [vmem:[#allocation2 + $0x111] sm:$0xff]
    %v4951 = vld [vmem:[#allocation2 + $0x119] sm:$0xff]
    %v4952 = vld [vmem:[#allocation2 + $0x121] sm:$0xff]
    %v4953 = vld [vmem:[#allocation2 + $0x129] sm:$0xff]
    %v4954 = vld [vmem:[#allocation2 + $0x131] sm:$0xff]
    %v4955 = vld [vmem:[#allocation2 + $0x139] sm:$0xff]
    %v4956 = vld [vmem:[#allocation2 + $0x141] sm:$0xff]
    %v4957 = vld [vmem:[#allocation2 + $0x149] sm:$0xff]
    %v4958 = vld [vmem:[#allocation2 + $0x151] sm:$0xff]
    %v4959 = vld [vmem:[#allocation2 + $0x159] sm:$0xff]
    %v4960 = vld [vmem:[#allocation2 + $0x161] sm:$0xff]
    %v4961 = vld [vmem:[#allocation2 + $0x169] sm:$0xff]
    %v4962 = vld [vmem:[#allocation2 + $0x171] sm:$0xff]
    %v4963 = vld [vmem:[#allocation2 + $0x179] sm:$0xff]
    %v4964 = vld [vmem:[#allocation2 + $0x181] sm:$0xff]
    %v4965 = vld [vmem:[#allocation2 + $0x189] sm:$0xff]
    %v4966 = vld [vmem:[#allocation2 + $0x191] sm:$0xff]
    %v4967 = vld [vmem:[#allocation2 + $0x199] sm:$0xff]
    %v4968 = vld [vmem:[#allocation2 + $0x1a1] sm:$0xff]
    %v4969 = vld [vmem:[#allocation2 + $0x1a9] sm:$0xff]
    %v4970 = vld [vmem:[#allocation2 + $0x1b1] sm:$0xff]
    %v4971 = vld [vmem:[#allocation2 + $0x1b9] sm:$0x7]
    %v4973 = vsel %vm33, %v4950, 0
    %v4976 = vsel %vm33, %v4951, 0
    %v4979 = vsel %vm33, %v4952, 0
    %v4982 = vsel %vm33, %v4953, 0
    %v4985 = vsel %vm33, %v4954, 0
    %v4988 = vsel %vm33, %v4955, 0
    %v4991 = vsel %vm33, %v4956, 0
    %v4994 = vsel %vm33, %v4957, 0
    %v4997 = vsel %vm33, %v4958, 0
    %v5000 = vsel %vm33, %v4959, 0
    %v5003 = vsel %vm33, %v4960, 0
    %v5006 = vsel %vm33, %v4961, 0
    %v5009 = vsel %vm33, %v4962, 0
    %v5012 = vsel %vm33, %v4963, 0
    %v5015 = vsel %vm33, %v4964, 0
    %v5018 = vsel %vm33, %v4965, 0
    %v5021 = vsel %vm33, %v4966, 0
    %v5024 = vsel %vm33, %v4967, 0
    %v5027 = vsel %vm33, %v4968, 0
    %v5030 = vsel %vm33, %v4969, 0
    %v5033 = vsel %vm33, %v4970, 0
    %v5036 = vsel %vm33, %v4971, 0
    %5038 = vmatpush.msra.mxu0 0.0
    %5039 = vmatpush.msra.mxu0 0.0
    %5040 = vmatpush.msra.mxu0 0.0
    %5041 = vmatpush.msra.mxu0 0.0
    %5042 = vmatpush.msra.mxu0 0.0
    %5043 = vmatpush.msra.mxu0 0.0
    %5044 = vmatpush.msra.mxu0 0.0
    %5045 = vmatpush.msra.mxu0 0.0
    %5046 = vmatpush.msra.mxu0 0.0
    %5047 = vmatpush.msra.mxu0 0.0
    %5048 = vmatpush.msra.mxu0 0.0
    %5049 = vmatpush.msra.mxu0 0.0
    %5050 = vmatpush.msra.mxu0 0.0
    %5051 = vmatpush.msra.mxu0 0.0
    %5052 = vmatpush.msra.mxu0 %v1940
    %5053 = vmatpush.msra.mxu0 %v1939
    %5054 = vmatmul.f32.gmra.mxu0 %v4973
    %v5055 = vpop.f32.mrf.mxu0
    %v5056 = vadd.f32 0.0, %v5055
    %5057 = vmatmul.f32.gmra.mxu0 %v4976
    %v5058 = vpop.f32.mrf.mxu0
    %v5059 = vadd.f32 0.0, %v5058
    %5060 = vmatmul.f32.gmra.mxu0 %v4979
    %v5061 = vpop.f32.mrf.mxu0
    %v5062 = vadd.f32 0.0, %v5061
    %5063 = vmatmul.f32.gmra.mxu0 %v4982
    %v5064 = vpop.f32.mrf.mxu0
    %5065 = vmatmul.f32.gmra.mxu0 %v4985
    %v5066 = vpop.f32.mrf.mxu0
    %v5067 = vadd.f32 0.0, %v5066
    %5068 = vmatmul.f32.gmra.mxu0 %v4988
    %v5069 = vpop.f32.mrf.mxu0
    %v5070 = vadd.f32 0.0, %v5069
    %5071 = vmatmul.f32.gmra.mxu0 %v4991
    %v5072 = vpop.f32.mrf.mxu0
    %v5073 = vadd.f32 0.0, %v5072
    %5074 = vmatmul.f32.gmra.mxu0 %v4994
    %v5075 = vpop.f32.mrf.mxu0
    %5076 = vmatmul.f32.gmra.mxu0 %v4997
    %v5077 = vpop.f32.mrf.mxu0
    %v5078 = vadd.f32 0.0, %v5077
    %5079 = vmatmul.f32.gmra.mxu0 %v5000
    %v5080 = vpop.f32.mrf.mxu0
    %v5081 = vadd.f32 0.0, %v5080
    %5082 = vmatmul.f32.gmra.mxu0 %v5003
    %v5083 = vpop.f32.mrf.mxu0
    %v5084 = vadd.f32 0.0, %v5083
    %5085 = vmatmul.f32.gmra.mxu0 %v5006
    %v5086 = vpop.f32.mrf.mxu0
    %5087 = vmatmul.f32.gmra.mxu0 %v5009
    %v5088 = vpop.f32.mrf.mxu0
    %v5089 = vadd.f32 0.0, %v5088
    %5090 = vmatmul.f32.gmra.mxu0 %v5012
    %v5091 = vpop.f32.mrf.mxu0
    %v5092 = vadd.f32 0.0, %v5091
    %5093 = vmatmul.f32.gmra.mxu0 %v5015
    %v5094 = vpop.f32.mrf.mxu0
    %v5095 = vadd.f32 0.0, %v5094
    %5096 = vmatmul.f32.gmra.mxu0 %v5018
    %v5097 = vpop.f32.mrf.mxu0
    %5098 = vmatmul.f32.gmra.mxu0 %v5021
    %v5099 = vpop.f32.mrf.mxu0
    %v5100 = vadd.f32 0.0, %v5099
    %5101 = vmatmul.f32.gmra.mxu0 %v5024
    %v5102 = vpop.f32.mrf.mxu0
    %v5103 = vadd.f32 0.0, %v5102
    %5104 = vmatmul.f32.gmra.mxu0 %v5027
    %v5105 = vpop.f32.mrf.mxu0
    %v5106 = vadd.f32 0.0, %v5105
    %5107 = vmatmul.f32.gmra.mxu0 %v5030
    %v5108 = vpop.f32.mrf.mxu0
    %5109 = vmatmul.f32.gmra.mxu0 %v5033
    %v5110 = vpop.f32.mrf.mxu0
    %v5111 = vadd.f32 0.0, %v5110
    %5112 = vmatmul.f32.gmra.mxu0 %v5036
    %v5113 = vpop.f32.mrf.mxu0
    %v5114 = vadd.f32 0.0, %v5113
    %5115 = vdwg.mxu0
    %v5116 = vadd.f32 %v4933, %v5056
    %v5117 = vadd.f32 %v4934, %v5059
    %v5118 = vadd.f32 %v4935, %v5062
    %v5119 = vadd.f32 %v4936, %v5067
    %v5120 = vadd.f32 %v4937, %v5070
    %v5121 = vadd.f32 %v4938, %v5073
    %v5122 = vadd.f32 %v4939, %v5078
    %v5123 = vadd.f32 %v4940, %v5081
    %v5124 = vadd.f32 %v4941, %v5084
    %v5125 = vadd.f32 %v4942, %v5089
    %v5126 = vadd.f32 %v4943, %v5092
    %v5127 = vadd.f32 %v4944, %v5095
    %v5128 = vadd.f32 %v4945, %v5100
    %v5129 = vadd.f32 %v4946, %v5103
    %v5130 = vadd.f32 %v4947, %v5106
    %v5131 = vadd.f32 %v4948, %v5111
    %v5132 = vadd.f32 %v4949, %v5114
    %v5133 = vld [vmem:[#allocation2 + $0x112] sm:$0xff]
    %v5134 = vld [vmem:[#allocation2 + $0x11a] sm:$0xff]
    %v5135 = vld [vmem:[#allocation2 + $0x122] sm:$0xff]
    %v5136 = vld [vmem:[#allocation2 + $0x12a] sm:$0xff]
    %v5137 = vld [vmem:[#allocation2 + $0x132] sm:$0xff]
    %v5138 = vld [vmem:[#allocation2 + $0x13a] sm:$0xff]
    %v5139 = vld [vmem:[#allocation2 + $0x142] sm:$0xff]
    %v5140 = vld [vmem:[#allocation2 + $0x14a] sm:$0xff]
    %v5141 = vld [vmem:[#allocation2 + $0x152] sm:$0xff]
    %v5142 = vld [vmem:[#allocation2 + $0x15a] sm:$0xff]
    %v5143 = vld [vmem:[#allocation2 + $0x162] sm:$0xff]
    %v5144 = vld [vmem:[#allocation2 + $0x16a] sm:$0xff]
    %v5145 = vld [vmem:[#allocation2 + $0x172] sm:$0xff]
    %v5146 = vld [vmem:[#allocation2 + $0x17a] sm:$0xff]
    %v5147 = vld [vmem:[#allocation2 + $0x182] sm:$0xff]
    %v5148 = vld [vmem:[#allocation2 + $0x18a] sm:$0xff]
    %v5149 = vld [vmem:[#allocation2 + $0x192] sm:$0xff]
    %v5150 = vld [vmem:[#allocation2 + $0x19a] sm:$0xff]
    %v5151 = vld [vmem:[#allocation2 + $0x1a2] sm:$0xff]
    %v5152 = vld [vmem:[#allocation2 + $0x1aa] sm:$0xff]
    %v5153 = vld [vmem:[#allocation2 + $0x1b2] sm:$0xff]
    %v5154 = vld [vmem:[#allocation2 + $0x1ba] sm:$0x7]
    %v5156 = vsel %vm33, %v5133, 0
    %v5159 = vsel %vm33, %v5134, 0
    %v5162 = vsel %vm33, %v5135, 0
    %v5165 = vsel %vm33, %v5136, 0
    %v5168 = vsel %vm33, %v5137, 0
    %v5171 = vsel %vm33, %v5138, 0
    %v5174 = vsel %vm33, %v5139, 0
    %v5177 = vsel %vm33, %v5140, 0
    %v5180 = vsel %vm33, %v5141, 0
    %v5183 = vsel %vm33, %v5142, 0
    %v5186 = vsel %vm33, %v5143, 0
    %v5189 = vsel %vm33, %v5144, 0
    %v5192 = vsel %vm33, %v5145, 0
    %v5195 = vsel %vm33, %v5146, 0
    %v5198 = vsel %vm33, %v5147, 0
    %v5201 = vsel %vm33, %v5148, 0
    %v5204 = vsel %vm33, %v5149, 0
    %v5207 = vsel %vm33, %v5150, 0
    %v5210 = vsel %vm33, %v5151, 0
    %v5213 = vsel %vm33, %v5152, 0
    %v5216 = vsel %vm33, %v5153, 0
    %v5219 = vsel %vm33, %v5154, 0
    %5221 = vmatpush.msra.mxu0 0.0
    %5222 = vmatpush.msra.mxu0 0.0
    %5223 = vmatpush.msra.mxu0 0.0
    %5224 = vmatpush.msra.mxu0 0.0
    %5225 = vmatpush.msra.mxu0 0.0
    %5226 = vmatpush.msra.mxu0 0.0
    %5227 = vmatpush.msra.mxu0 0.0
    %5228 = vmatpush.msra.mxu0 0.0
    %5229 = vmatpush.msra.mxu0 0.0
    %5230 = vmatpush.msra.mxu0 0.0
    %5231 = vmatpush.msra.mxu0 0.0
    %5232 = vmatpush.msra.mxu0 0.0
    %5233 = vmatpush.msra.mxu0 0.0
    %5234 = vmatpush.msra.mxu0 0.0
    %5235 = vmatpush.msra.mxu0 %v2125
    %5236 = vmatpush.msra.mxu0 %v2124
    %5237 = vmatmul.f32.gmra.mxu0 %v5156
    %v5238 = vpop.f32.mrf.mxu0
    %v5239 = vadd.f32 0.0, %v5238
    %5240 = vmatmul.f32.gmra.mxu0 %v5159
    %v5241 = vpop.f32.mrf.mxu0
    %v5242 = vadd.f32 0.0, %v5241
    %5243 = vmatmul.f32.gmra.mxu0 %v5162
    %v5244 = vpop.f32.mrf.mxu0
    %v5245 = vadd.f32 0.0, %v5244
    %5246 = vmatmul.f32.gmra.mxu0 %v5165
    %v5247 = vpop.f32.mrf.mxu0
    %5248 = vmatmul.f32.gmra.mxu0 %v5168
    %v5249 = vpop.f32.mrf.mxu0
    %v5250 = vadd.f32 0.0, %v5249
    %5251 = vmatmul.f32.gmra.mxu0 %v5171
    %v5252 = vpop.f32.mrf.mxu0
    %v5253 = vadd.f32 0.0, %v5252
    %5254 = vmatmul.f32.gmra.mxu0 %v5174
    %v5255 = vpop.f32.mrf.mxu0
    %v5256 = vadd.f32 0.0, %v5255
    %5257 = vmatmul.f32.gmra.mxu0 %v5177
    %v5258 = vpop.f32.mrf.mxu0
    %5259 = vmatmul.f32.gmra.mxu0 %v5180
    %v5260 = vpop.f32.mrf.mxu0
    %v5261 = vadd.f32 0.0, %v5260
    %5262 = vmatmul.f32.gmra.mxu0 %v5183
    %v5263 = vpop.f32.mrf.mxu0
    %v5264 = vadd.f32 0.0, %v5263
    %5265 = vmatmul.f32.gmra.mxu0 %v5186
    %v5266 = vpop.f32.mrf.mxu0
    %v5267 = vadd.f32 0.0, %v5266
    %5268 = vmatmul.f32.gmra.mxu0 %v5189
    %v5269 = vpop.f32.mrf.mxu0
    %5270 = vmatmul.f32.gmra.mxu0 %v5192
    %v5271 = vpop.f32.mrf.mxu0
    %v5272 = vadd.f32 0.0, %v5271
    %5273 = vmatmul.f32.gmra.mxu0 %v5195
    %v5274 = vpop.f32.mrf.mxu0
    %v5275 = vadd.f32 0.0, %v5274
    %5276 = vmatmul.f32.gmra.mxu0 %v5198
    %v5277 = vpop.f32.mrf.mxu0
    %v5278 = vadd.f32 0.0, %v5277
    %5279 = vmatmul.f32.gmra.mxu0 %v5201
    %v5280 = vpop.f32.mrf.mxu0
    %5281 = vmatmul.f32.gmra.mxu0 %v5204
    %v5282 = vpop.f32.mrf.mxu0
    %v5283 = vadd.f32 0.0, %v5282
    %5284 = vmatmul.f32.gmra.mxu0 %v5207
    %v5285 = vpop.f32.mrf.mxu0
    %v5286 = vadd.f32 0.0, %v5285
    %5287 = vmatmul.f32.gmra.mxu0 %v5210
    %v5288 = vpop.f32.mrf.mxu0
    %v5289 = vadd.f32 0.0, %v5288
    %5290 = vmatmul.f32.gmra.mxu0 %v5213
    %v5291 = vpop.f32.mrf.mxu0
    %5292 = vmatmul.f32.gmra.mxu0 %v5216
    %v5293 = vpop.f32.mrf.mxu0
    %v5294 = vadd.f32 0.0, %v5293
    %5295 = vmatmul.f32.gmra.mxu0 %v5219
    %v5296 = vpop.f32.mrf.mxu0
    %v5297 = vadd.f32 0.0, %v5296
    %5298 = vdwg.mxu0
    %v5299 = vadd.f32 %v5116, %v5239
    %v5300 = vadd.f32 %v5117, %v5242
    %v5301 = vadd.f32 %v5118, %v5245
    %v5302 = vadd.f32 %v5119, %v5250
    %v5303 = vadd.f32 %v5120, %v5253
    %v5304 = vadd.f32 %v5121, %v5256
    %v5305 = vadd.f32 %v5122, %v5261
    %v5306 = vadd.f32 %v5123, %v5264
    %v5307 = vadd.f32 %v5124, %v5267
    %v5308 = vadd.f32 %v5125, %v5272
    %v5309 = vadd.f32 %v5126, %v5275
    %v5310 = vadd.f32 %v5127, %v5278
    %v5311 = vadd.f32 %v5128, %v5283
    %v5312 = vadd.f32 %v5129, %v5286
    %v5313 = vadd.f32 %v5130, %v5289
    %v5314 = vadd.f32 %v5131, %v5294
    %v5315 = vadd.f32 %v5132, %v5297
    %v5316 = vld [vmem:[#allocation2 + $0x113] sm:$0xff]
    %v5317 = vld [vmem:[#allocation2 + $0x11b] sm:$0xff]
    %v5318 = vld [vmem:[#allocation2 + $0x123] sm:$0xff]
    %v5319 = vld [vmem:[#allocation2 + $0x12b] sm:$0xff]
    %v5320 = vld [vmem:[#allocation2 + $0x133] sm:$0xff]
    %v5321 = vld [vmem:[#allocation2 + $0x13b] sm:$0xff]
    %v5322 = vld [vmem:[#allocation2 + $0x143] sm:$0xff]
    %v5323 = vld [vmem:[#allocation2 + $0x14b] sm:$0xff]
    %v5324 = vld [vmem:[#allocation2 + $0x153] sm:$0xff]
    %v5325 = vld [vmem:[#allocation2 + $0x15b] sm:$0xff]
    %v5326 = vld [vmem:[#allocation2 + $0x163] sm:$0xff]
    %v5327 = vld [vmem:[#allocation2 + $0x16b] sm:$0xff]
    %v5328 = vld [vmem:[#allocation2 + $0x173] sm:$0xff]
    %v5329 = vld [vmem:[#allocation2 + $0x17b] sm:$0xff]
    %v5330 = vld [vmem:[#allocation2 + $0x183] sm:$0xff]
    %v5331 = vld [vmem:[#allocation2 + $0x18b] sm:$0xff]
    %v5332 = vld [vmem:[#allocation2 + $0x193] sm:$0xff]
    %v5333 = vld [vmem:[#allocation2 + $0x19b] sm:$0xff]
    %v5334 = vld [vmem:[#allocation2 + $0x1a3] sm:$0xff]
    %v5335 = vld [vmem:[#allocation2 + $0x1ab] sm:$0xff]
    %v5336 = vld [vmem:[#allocation2 + $0x1b3] sm:$0xff]
    %v5337 = vld [vmem:[#allocation2 + $0x1bb] sm:$0x7]
    %v5339 = vsel %vm33, %v5316, 0
    %v5342 = vsel %vm33, %v5317, 0
    %v5345 = vsel %vm33, %v5318, 0
    %v5348 = vsel %vm33, %v5319, 0
    %v5351 = vsel %vm33, %v5320, 0
    %v5354 = vsel %vm33, %v5321, 0
    %v5357 = vsel %vm33, %v5322, 0
    %v5360 = vsel %vm33, %v5323, 0
    %v5363 = vsel %vm33, %v5324, 0
    %v5366 = vsel %vm33, %v5325, 0
    %v5369 = vsel %vm33, %v5326, 0
    %v5372 = vsel %vm33, %v5327, 0
    %v5375 = vsel %vm33, %v5328, 0
    %v5378 = vsel %vm33, %v5329, 0
    %v5381 = vsel %vm33, %v5330, 0
    %v5384 = vsel %vm33, %v5331, 0
    %v5387 = vsel %vm33, %v5332, 0
    %v5390 = vsel %vm33, %v5333, 0
    %v5393 = vsel %vm33, %v5334, 0
    %v5396 = vsel %vm33, %v5335, 0
    %v5399 = vsel %vm33, %v5336, 0
    %v5402 = vsel %vm33, %v5337, 0
    %5404 = vmatpush.msra.mxu0 0.0
    %5405 = vmatpush.msra.mxu0 0.0
    %5406 = vmatpush.msra.mxu0 0.0
    %5407 = vmatpush.msra.mxu0 0.0
    %5408 = vmatpush.msra.mxu0 0.0
    %5409 = vmatpush.msra.mxu0 0.0
    %5410 = vmatpush.msra.mxu0 0.0
    %5411 = vmatpush.msra.mxu0 0.0
    %5412 = vmatpush.msra.mxu0 0.0
    %5413 = vmatpush.msra.mxu0 0.0
    %5414 = vmatpush.msra.mxu0 0.0
    %5415 = vmatpush.msra.mxu0 0.0
    %5416 = vmatpush.msra.mxu0 0.0
    %5417 = vmatpush.msra.mxu0 0.0
    %5418 = vmatpush.msra.mxu0 %v2310
    %5419 = vmatpush.msra.mxu0 %v2309
    %5420 = vmatmul.f32.gmra.mxu0 %v5339
    %v5421 = vpop.f32.mrf.mxu0
    %v5422 = vadd.f32 0.0, %v5421
    %5423 = vmatmul.f32.gmra.mxu0 %v5342
    %v5424 = vpop.f32.mrf.mxu0
    %v5425 = vadd.f32 0.0, %v5424
    %5426 = vmatmul.f32.gmra.mxu0 %v5345
    %v5427 = vpop.f32.mrf.mxu0
    %v5428 = vadd.f32 0.0, %v5427
    %5429 = vmatmul.f32.gmra.mxu0 %v5348
    %v5430 = vpop.f32.mrf.mxu0
    %5431 = vmatmul.f32.gmra.mxu0 %v5351
    %v5432 = vpop.f32.mrf.mxu0
    %v5433 = vadd.f32 0.0, %v5432
    %5434 = vmatmul.f32.gmra.mxu0 %v5354
    %v5435 = vpop.f32.mrf.mxu0
    %v5436 = vadd.f32 0.0, %v5435
    %5437 = vmatmul.f32.gmra.mxu0 %v5357
    %v5438 = vpop.f32.mrf.mxu0
    %v5439 = vadd.f32 0.0, %v5438
    %5440 = vmatmul.f32.gmra.mxu0 %v5360
    %v5441 = vpop.f32.mrf.mxu0
    %5442 = vmatmul.f32.gmra.mxu0 %v5363
    %v5443 = vpop.f32.mrf.mxu0
    %v5444 = vadd.f32 0.0, %v5443
    %5445 = vmatmul.f32.gmra.mxu0 %v5366
    %v5446 = vpop.f32.mrf.mxu0
    %v5447 = vadd.f32 0.0, %v5446
    %5448 = vmatmul.f32.gmra.mxu0 %v5369
    %v5449 = vpop.f32.mrf.mxu0
    %v5450 = vadd.f32 0.0, %v5449
    %5451 = vmatmul.f32.gmra.mxu0 %v5372
    %v5452 = vpop.f32.mrf.mxu0
    %5453 = vmatmul.f32.gmra.mxu0 %v5375
    %v5454 = vpop.f32.mrf.mxu0
    %v5455 = vadd.f32 0.0, %v5454
    %5456 = vmatmul.f32.gmra.mxu0 %v5378
    %v5457 = vpop.f32.mrf.mxu0
    %v5458 = vadd.f32 0.0, %v5457
    %5459 = vmatmul.f32.gmra.mxu0 %v5381
    %v5460 = vpop.f32.mrf.mxu0
    %v5461 = vadd.f32 0.0, %v5460
    %5462 = vmatmul.f32.gmra.mxu0 %v5384
    %v5463 = vpop.f32.mrf.mxu0
    %5464 = vmatmul.f32.gmra.mxu0 %v5387
    %v5465 = vpop.f32.mrf.mxu0
    %v5466 = vadd.f32 0.0, %v5465
    %5467 = vmatmul.f32.gmra.mxu0 %v5390
    %v5468 = vpop.f32.mrf.mxu0
    %v5469 = vadd.f32 0.0, %v5468
    %5470 = vmatmul.f32.gmra.mxu0 %v5393
    %v5471 = vpop.f32.mrf.mxu0
    %v5472 = vadd.f32 0.0, %v5471
    %5473 = vmatmul.f32.gmra.mxu0 %v5396
    %v5474 = vpop.f32.mrf.mxu0
    %5475 = vmatmul.f32.gmra.mxu0 %v5399
    %v5476 = vpop.f32.mrf.mxu0
    %v5477 = vadd.f32 0.0, %v5476
    %5478 = vmatmul.f32.gmra.mxu0 %v5402
    %v5479 = vpop.f32.mrf.mxu0
    %v5480 = vadd.f32 0.0, %v5479
    %5481 = vdwg.mxu0
    %v5482 = vadd.f32 %v5299, %v5422
    %v5483 = vadd.f32 %v5300, %v5425
    %v5484 = vadd.f32 %v5301, %v5428
    %v5485 = vadd.f32 %v5302, %v5433
    %v5486 = vadd.f32 %v5303, %v5436
    %v5487 = vadd.f32 %v5304, %v5439
    %v5488 = vadd.f32 %v5305, %v5444
    %v5489 = vadd.f32 %v5306, %v5447
    %v5490 = vadd.f32 %v5307, %v5450
    %v5491 = vadd.f32 %v5308, %v5455
    %v5492 = vadd.f32 %v5309, %v5458
    %v5493 = vadd.f32 %v5310, %v5461
    %v5494 = vadd.f32 %v5311, %v5466
    %v5495 = vadd.f32 %v5312, %v5469
    %v5496 = vadd.f32 %v5313, %v5472
    %v5497 = vadd.f32 %v5314, %v5477
    %v5498 = vadd.f32 %v5315, %v5480
    %v5499 = vld [vmem:[#allocation2 + $0x120] sm:$0xff]
    %v5500 = vld [vmem:[#allocation2 + $0x128] sm:$0xff]
    %v5501 = vld [vmem:[#allocation2 + $0x130] sm:$0xff]
    %v5502 = vld [vmem:[#allocation2 + $0x138] sm:$0xff]
    %v5503 = vld [vmem:[#allocation2 + $0x140] sm:$0xff]
    %v5504 = vld [vmem:[#allocation2 + $0x148] sm:$0xff]
    %v5505 = vld [vmem:[#allocation2 + $0x150] sm:$0xff]
    %v5506 = vld [vmem:[#allocation2 + $0x158] sm:$0xff]
    %v5507 = vld [vmem:[#allocation2 + $0x160] sm:$0xff]
    %v5508 = vld [vmem:[#allocation2 + $0x168] sm:$0xff]
    %v5509 = vld [vmem:[#allocation2 + $0x170] sm:$0xff]
    %v5510 = vld [vmem:[#allocation2 + $0x178] sm:$0xff]
    %v5511 = vld [vmem:[#allocation2 + $0x180] sm:$0xff]
    %v5512 = vld [vmem:[#allocation2 + $0x188] sm:$0xff]
    %v5513 = vld [vmem:[#allocation2 + $0x190] sm:$0xff]
    %v5514 = vld [vmem:[#allocation2 + $0x198] sm:$0xff]
    %v5515 = vld [vmem:[#allocation2 + $0x1a0] sm:$0xff]
    %v5516 = vld [vmem:[#allocation2 + $0x1a8] sm:$0xff]
    %v5517 = vld [vmem:[#allocation2 + $0x1b0] sm:$0xff]
    %v5518 = vld [vmem:[#allocation2 + $0x1b8] sm:$0xff]
    %v5519 = vld [vmem:[#allocation2 + $0x1c0] sm:$0xff]
    %v5520 = vld [vmem:[#allocation2 + $0x1c8] sm:$0x7]
    %v5522 = vsel %vm33, %v5499, 0
    %v5525 = vsel %vm33, %v5500, 0
    %v5528 = vsel %vm33, %v5501, 0
    %v5531 = vsel %vm33, %v5502, 0
    %v5534 = vsel %vm33, %v5503, 0
    %v5537 = vsel %vm33, %v5504, 0
    %v5540 = vsel %vm33, %v5505, 0
    %v5543 = vsel %vm33, %v5506, 0
    %v5546 = vsel %vm33, %v5507, 0
    %v5549 = vsel %vm33, %v5508, 0
    %v5552 = vsel %vm33, %v5509, 0
    %v5555 = vsel %vm33, %v5510, 0
    %v5558 = vsel %vm33, %v5511, 0
    %v5561 = vsel %vm33, %v5512, 0
    %v5564 = vsel %vm33, %v5513, 0
    %v5567 = vsel %vm33, %v5514, 0
    %v5570 = vsel %vm33, %v5515, 0
    %v5573 = vsel %vm33, %v5516, 0
    %v5576 = vsel %vm33, %v5517, 0
    %v5579 = vsel %vm33, %v5518, 0
    %v5582 = vsel %vm33, %v5519, 0
    %v5585 = vsel %vm33, %v5520, 0
    %5587 = vmatpush.msra.mxu0 0.0
    %5588 = vmatpush.msra.mxu0 0.0
    %5589 = vmatpush.msra.mxu0 0.0
    %5590 = vmatpush.msra.mxu0 0.0
    %5591 = vmatpush.msra.mxu0 0.0
    %5592 = vmatpush.msra.mxu0 0.0
    %5593 = vmatpush.msra.mxu0 0.0
    %5594 = vmatpush.msra.mxu0 0.0
    %5595 = vmatpush.msra.mxu0 0.0
    %5596 = vmatpush.msra.mxu0 0.0
    %5597 = vmatpush.msra.mxu0 0.0
    %5598 = vmatpush.msra.mxu0 0.0
    %5599 = vmatpush.msra.mxu0 0.0
    %5600 = vmatpush.msra.mxu0 0.0
    %5601 = vmatpush.msra.mxu0 %v2495
    %5602 = vmatpush.msra.mxu0 %v2494
    %5603 = vmatmul.f32.gmra.mxu0 %v5522
    %v5604 = vpop.f32.mrf.mxu0
    %v5605 = vadd.f32 0.0, %v5604
    %5606 = vmatmul.f32.gmra.mxu0 %v5525
    %v5607 = vpop.f32.mrf.mxu0
    %v5608 = vadd.f32 0.0, %v5607
    %5609 = vmatmul.f32.gmra.mxu0 %v5528
    %v5610 = vpop.f32.mrf.mxu0
    %v5611 = vadd.f32 0.0, %v5610
    %5612 = vmatmul.f32.gmra.mxu0 %v5531
    %v5613 = vpop.f32.mrf.mxu0
    %5614 = vmatmul.f32.gmra.mxu0 %v5534
    %v5615 = vpop.f32.mrf.mxu0
    %v5616 = vadd.f32 0.0, %v5615
    %5617 = vmatmul.f32.gmra.mxu0 %v5537
    %v5618 = vpop.f32.mrf.mxu0
    %v5619 = vadd.f32 0.0, %v5618
    %5620 = vmatmul.f32.gmra.mxu0 %v5540
    %v5621 = vpop.f32.mrf.mxu0
    %v5622 = vadd.f32 0.0, %v5621
    %5623 = vmatmul.f32.gmra.mxu0 %v5543
    %v5624 = vpop.f32.mrf.mxu0
    %5625 = vmatmul.f32.gmra.mxu0 %v5546
    %v5626 = vpop.f32.mrf.mxu0
    %v5627 = vadd.f32 0.0, %v5626
    %5628 = vmatmul.f32.gmra.mxu0 %v5549
    %v5629 = vpop.f32.mrf.mxu0
    %v5630 = vadd.f32 0.0, %v5629
    %5631 = vmatmul.f32.gmra.mxu0 %v5552
    %v5632 = vpop.f32.mrf.mxu0
    %v5633 = vadd.f32 0.0, %v5632
    %5634 = vmatmul.f32.gmra.mxu0 %v5555
    %v5635 = vpop.f32.mrf.mxu0
    %5636 = vmatmul.f32.gmra.mxu0 %v5558
    %v5637 = vpop.f32.mrf.mxu0
    %v5638 = vadd.f32 0.0, %v5637
    %5639 = vmatmul.f32.gmra.mxu0 %v5561
    %v5640 = vpop.f32.mrf.mxu0
    %v5641 = vadd.f32 0.0, %v5640
    %5642 = vmatmul.f32.gmra.mxu0 %v5564
    %v5643 = vpop.f32.mrf.mxu0
    %v5644 = vadd.f32 0.0, %v5643
    %5645 = vmatmul.f32.gmra.mxu0 %v5567
    %v5646 = vpop.f32.mrf.mxu0
    %5647 = vmatmul.f32.gmra.mxu0 %v5570
    %v5648 = vpop.f32.mrf.mxu0
    %v5649 = vadd.f32 0.0, %v5648
    %5650 = vmatmul.f32.gmra.mxu0 %v5573
    %v5651 = vpop.f32.mrf.mxu0
    %v5652 = vadd.f32 0.0, %v5651
    %5653 = vmatmul.f32.gmra.mxu0 %v5576
    %v5654 = vpop.f32.mrf.mxu0
    %v5655 = vadd.f32 0.0, %v5654
    %5656 = vmatmul.f32.gmra.mxu0 %v5579
    %v5657 = vpop.f32.mrf.mxu0
    %5658 = vmatmul.f32.gmra.mxu0 %v5582
    %v5659 = vpop.f32.mrf.mxu0
    %v5660 = vadd.f32 0.0, %v5659
    %5661 = vmatmul.f32.gmra.mxu0 %v5585
    %v5662 = vpop.f32.mrf.mxu0
    %v5663 = vadd.f32 0.0, %v5662
    %5664 = vdwg.mxu0
    %v5665 = vadd.f32 %v5482, %v5605
    %v5666 = vadd.f32 %v5483, %v5608
    %v5667 = vadd.f32 %v5484, %v5611
    %v5668 = vadd.f32 %v5485, %v5616
    %v5669 = vadd.f32 %v5486, %v5619
    %v5670 = vadd.f32 %v5487, %v5622
    %v5671 = vadd.f32 %v5488, %v5627
    %v5672 = vadd.f32 %v5489, %v5630
    %v5673 = vadd.f32 %v5490, %v5633
    %v5674 = vadd.f32 %v5491, %v5638
    %v5675 = vadd.f32 %v5492, %v5641
    %v5676 = vadd.f32 %v5493, %v5644
    %v5677 = vadd.f32 %v5494, %v5649
    %v5678 = vadd.f32 %v5495, %v5652
    %v5679 = vadd.f32 %v5496, %v5655
    %v5680 = vadd.f32 %v5497, %v5660
    %v5681 = vadd.f32 %v5498, %v5663
    %v5682 = vld [vmem:[#allocation2 + $0x121] sm:$0xff]
    %v5683 = vld [vmem:[#allocation2 + $0x129] sm:$0xff]
    %v5684 = vld [vmem:[#allocation2 + $0x131] sm:$0xff]
    %v5685 = vld [vmem:[#allocation2 + $0x139] sm:$0xff]
    %v5686 = vld [vmem:[#allocation2 + $0x141] sm:$0xff]
    %v5687 = vld [vmem:[#allocation2 + $0x149] sm:$0xff]
    %v5688 = vld [vmem:[#allocation2 + $0x151] sm:$0xff]
    %v5689 = vld [vmem:[#allocation2 + $0x159] sm:$0xff]
    %v5690 = vld [vmem:[#allocation2 + $0x161] sm:$0xff]
    %v5691 = vld [vmem:[#allocation2 + $0x169] sm:$0xff]
    %v5692 = vld [vmem:[#allocation2 + $0x171] sm:$0xff]
    %v5693 = vld [vmem:[#allocation2 + $0x179] sm:$0xff]
    %v5694 = vld [vmem:[#allocation2 + $0x181] sm:$0xff]
    %v5695 = vld [vmem:[#allocation2 + $0x189] sm:$0xff]
    %v5696 = vld [vmem:[#allocation2 + $0x191] sm:$0xff]
    %v5697 = vld [vmem:[#allocation2 + $0x199] sm:$0xff]
    %v5698 = vld [vmem:[#allocation2 + $0x1a1] sm:$0xff]
    %v5699 = vld [vmem:[#allocation2 + $0x1a9] sm:$0xff]
    %v5700 = vld [vmem:[#allocation2 + $0x1b1] sm:$0xff]
    %v5701 = vld [vmem:[#allocation2 + $0x1b9] sm:$0xff]
    %v5702 = vld [vmem:[#allocation2 + $0x1c1] sm:$0xff]
    %v5703 = vld [vmem:[#allocation2 + $0x1c9] sm:$0x7]
    %v5705 = vsel %vm33, %v5682, 0
    %v5708 = vsel %vm33, %v5683, 0
    %v5711 = vsel %vm33, %v5684, 0
    %v5714 = vsel %vm33, %v5685, 0
    %v5717 = vsel %vm33, %v5686, 0
    %v5720 = vsel %vm33, %v5687, 0
    %v5723 = vsel %vm33, %v5688, 0
    %v5726 = vsel %vm33, %v5689, 0
    %v5729 = vsel %vm33, %v5690, 0
    %v5732 = vsel %vm33, %v5691, 0
    %v5735 = vsel %vm33, %v5692, 0
    %v5738 = vsel %vm33, %v5693, 0
    %v5741 = vsel %vm33, %v5694, 0
    %v5744 = vsel %vm33, %v5695, 0
    %v5747 = vsel %vm33, %v5696, 0
    %v5750 = vsel %vm33, %v5697, 0
    %v5753 = vsel %vm33, %v5698, 0
    %v5756 = vsel %vm33, %v5699, 0
    %v5759 = vsel %vm33, %v5700, 0
    %v5762 = vsel %vm33, %v5701, 0
    %v5765 = vsel %vm33, %v5702, 0
    %v5768 = vsel %vm33, %v5703, 0
    %5770 = vmatpush.msra.mxu0 0.0
    %5771 = vmatpush.msra.mxu0 0.0
    %5772 = vmatpush.msra.mxu0 0.0
    %5773 = vmatpush.msra.mxu0 0.0
    %5774 = vmatpush.msra.mxu0 0.0
    %5775 = vmatpush.msra.mxu0 0.0
    %5776 = vmatpush.msra.mxu0 0.0
    %5777 = vmatpush.msra.mxu0 0.0
    %5778 = vmatpush.msra.mxu0 0.0
    %5779 = vmatpush.msra.mxu0 0.0
    %5780 = vmatpush.msra.mxu0 0.0
    %5781 = vmatpush.msra.mxu0 0.0
    %5782 = vmatpush.msra.mxu0 0.0
    %5783 = vmatpush.msra.mxu0 0.0
    %5784 = vmatpush.msra.mxu0 %v2680
    %5785 = vmatpush.msra.mxu0 %v2679
    %5786 = vmatmul.f32.gmra.mxu0 %v5705
    %v5787 = vpop.f32.mrf.mxu0
    %v5788 = vadd.f32 0.0, %v5787
    %5789 = vmatmul.f32.gmra.mxu0 %v5708
    %v5790 = vpop.f32.mrf.mxu0
    %v5791 = vadd.f32 0.0, %v5790
    %5792 = vmatmul.f32.gmra.mxu0 %v5711
    %v5793 = vpop.f32.mrf.mxu0
    %v5794 = vadd.f32 0.0, %v5793
    %5795 = vmatmul.f32.gmra.mxu0 %v5714
    %v5796 = vpop.f32.mrf.mxu0
    %5797 = vmatmul.f32.gmra.mxu0 %v5717
    %v5798 = vpop.f32.mrf.mxu0
    %v5799 = vadd.f32 0.0, %v5798
    %5800 = vmatmul.f32.gmra.mxu0 %v5720
    %v5801 = vpop.f32.mrf.mxu0
    %v5802 = vadd.f32 0.0, %v5801
    %5803 = vmatmul.f32.gmra.mxu0 %v5723
    %v5804 = vpop.f32.mrf.mxu0
    %v5805 = vadd.f32 0.0, %v5804
    %5806 = vmatmul.f32.gmra.mxu0 %v5726
    %v5807 = vpop.f32.mrf.mxu0
    %5808 = vmatmul.f32.gmra.mxu0 %v5729
    %v5809 = vpop.f32.mrf.mxu0
    %v5810 = vadd.f32 0.0, %v5809
    %5811 = vmatmul.f32.gmra.mxu0 %v5732
    %v5812 = vpop.f32.mrf.mxu0
    %v5813 = vadd.f32 0.0, %v5812
    %5814 = vmatmul.f32.gmra.mxu0 %v5735
    %v5815 = vpop.f32.mrf.mxu0
    %v5816 = vadd.f32 0.0, %v5815
    %5817 = vmatmul.f32.gmra.mxu0 %v5738
    %v5818 = vpop.f32.mrf.mxu0
    %5819 = vmatmul.f32.gmra.mxu0 %v5741
    %v5820 = vpop.f32.mrf.mxu0
    %v5821 = vadd.f32 0.0, %v5820
    %5822 = vmatmul.f32.gmra.mxu0 %v5744
    %v5823 = vpop.f32.mrf.mxu0
    %v5824 = vadd.f32 0.0, %v5823
    %5825 = vmatmul.f32.gmra.mxu0 %v5747
    %v5826 = vpop.f32.mrf.mxu0
    %v5827 = vadd.f32 0.0, %v5826
    %5828 = vmatmul.f32.gmra.mxu0 %v5750
    %v5829 = vpop.f32.mrf.mxu0
    %5830 = vmatmul.f32.gmra.mxu0 %v5753
    %v5831 = vpop.f32.mrf.mxu0
    %v5832 = vadd.f32 0.0, %v5831
    %5833 = vmatmul.f32.gmra.mxu0 %v5756
    %v5834 = vpop.f32.mrf.mxu0
    %v5835 = vadd.f32 0.0, %v5834
    %5836 = vmatmul.f32.gmra.mxu0 %v5759
    %v5837 = vpop.f32.mrf.mxu0
    %v5838 = vadd.f32 0.0, %v5837
    %5839 = vmatmul.f32.gmra.mxu0 %v5762
    %v5840 = vpop.f32.mrf.mxu0
    %5841 = vmatmul.f32.gmra.mxu0 %v5765
    %v5842 = vpop.f32.mrf.mxu0
    %v5843 = vadd.f32 0.0, %v5842
    %5844 = vmatmul.f32.gmra.mxu0 %v5768
    %v5845 = vpop.f32.mrf.mxu0
    %v5846 = vadd.f32 0.0, %v5845
    %5847 = vdwg.mxu0
    %v5848 = vadd.f32 %v5665, %v5788
    %v5849 = vadd.f32 %v5666, %v5791
    %v5850 = vadd.f32 %v5667, %v5794
    %v5851 = vadd.f32 %v5668, %v5799
    %v5852 = vadd.f32 %v5669, %v5802
    %v5853 = vadd.f32 %v5670, %v5805
    %v5854 = vadd.f32 %v5671, %v5810
    %v5855 = vadd.f32 %v5672, %v5813
    %v5856 = vadd.f32 %v5673, %v5816
    %v5857 = vadd.f32 %v5674, %v5821
    %v5858 = vadd.f32 %v5675, %v5824
    %v5859 = vadd.f32 %v5676, %v5827
    %v5860 = vadd.f32 %v5677, %v5832
    %v5861 = vadd.f32 %v5678, %v5835
    %v5862 = vadd.f32 %v5679, %v5838
    %v5863 = vadd.f32 %v5680, %v5843
    %v5864 = vadd.f32 %v5681, %v5846
    %v5865 = vld [vmem:[#allocation2 + $0x122] sm:$0xff]
    %v5866 = vld [vmem:[#allocation2 + $0x12a] sm:$0xff]
    %v5867 = vld [vmem:[#allocation2 + $0x132] sm:$0xff]
    %v5868 = vld [vmem:[#allocation2 + $0x13a] sm:$0xff]
    %v5869 = vld [vmem:[#allocation2 + $0x142] sm:$0xff]
    %v5870 = vld [vmem:[#allocation2 + $0x14a] sm:$0xff]
    %v5871 = vld [vmem:[#allocation2 + $0x152] sm:$0xff]
    %v5872 = vld [vmem:[#allocation2 + $0x15a] sm:$0xff]
    %v5873 = vld [vmem:[#allocation2 + $0x162] sm:$0xff]
    %v5874 = vld [vmem:[#allocation2 + $0x16a] sm:$0xff]
    %v5875 = vld [vmem:[#allocation2 + $0x172] sm:$0xff]
    %v5876 = vld [vmem:[#allocation2 + $0x17a] sm:$0xff]
    %v5877 = vld [vmem:[#allocation2 + $0x182] sm:$0xff]
    %v5878 = vld [vmem:[#allocation2 + $0x18a] sm:$0xff]
    %v5879 = vld [vmem:[#allocation2 + $0x192] sm:$0xff]
    %v5880 = vld [vmem:[#allocation2 + $0x19a] sm:$0xff]
    %v5881 = vld [vmem:[#allocation2 + $0x1a2] sm:$0xff]
    %v5882 = vld [vmem:[#allocation2 + $0x1aa] sm:$0xff]
    %v5883 = vld [vmem:[#allocation2 + $0x1b2] sm:$0xff]
    %v5884 = vld [vmem:[#allocation2 + $0x1ba] sm:$0xff]
    %v5885 = vld [vmem:[#allocation2 + $0x1c2] sm:$0xff]
    %v5886 = vld [vmem:[#allocation2 + $0x1ca] sm:$0x7]
    %v5888 = vsel %vm33, %v5865, 0
    %v5891 = vsel %vm33, %v5866, 0
    %v5894 = vsel %vm33, %v5867, 0
    %v5897 = vsel %vm33, %v5868, 0
    %v5900 = vsel %vm33, %v5869, 0
    %v5903 = vsel %vm33, %v5870, 0
    %v5906 = vsel %vm33, %v5871, 0
    %v5909 = vsel %vm33, %v5872, 0
    %v5912 = vsel %vm33, %v5873, 0
    %v5915 = vsel %vm33, %v5874, 0
    %v5918 = vsel %vm33, %v5875, 0
    %v5921 = vsel %vm33, %v5876, 0
    %v5924 = vsel %vm33, %v5877, 0
    %v5927 = vsel %vm33, %v5878, 0
    %v5930 = vsel %vm33, %v5879, 0
    %v5933 = vsel %vm33, %v5880, 0
    %v5936 = vsel %vm33, %v5881, 0
    %v5939 = vsel %vm33, %v5882, 0
    %v5942 = vsel %vm33, %v5883, 0
    %v5945 = vsel %vm33, %v5884, 0
    %v5948 = vsel %vm33, %v5885, 0
    %v5951 = vsel %vm33, %v5886, 0
    %5953 = vmatpush.msra.mxu0 0.0
    %5954 = vmatpush.msra.mxu0 0.0
    %5955 = vmatpush.msra.mxu0 0.0
    %5956 = vmatpush.msra.mxu0 0.0
    %5957 = vmatpush.msra.mxu0 0.0
    %5958 = vmatpush.msra.mxu0 0.0
    %5959 = vmatpush.msra.mxu0 0.0
    %5960 = vmatpush.msra.mxu0 0.0
    %5961 = vmatpush.msra.mxu0 0.0
    %5962 = vmatpush.msra.mxu0 0.0
    %5963 = vmatpush.msra.mxu0 0.0
    %5964 = vmatpush.msra.mxu0 0.0
    %5965 = vmatpush.msra.mxu0 0.0
    %5966 = vmatpush.msra.mxu0 0.0
    %5967 = vmatpush.msra.mxu0 %v2865
    %5968 = vmatpush.msra.mxu0 %v2864
    %5969 = vmatmul.f32.gmra.mxu0 %v5888
    %v5970 = vpop.f32.mrf.mxu0
    %v5971 = vadd.f32 0.0, %v5970
    %5972 = vmatmul.f32.gmra.mxu0 %v5891
    %v5973 = vpop.f32.mrf.mxu0
    %v5974 = vadd.f32 0.0, %v5973
    %5975 = vmatmul.f32.gmra.mxu0 %v5894
    %v5976 = vpop.f32.mrf.mxu0
    %v5977 = vadd.f32 0.0, %v5976
    %5978 = vmatmul.f32.gmra.mxu0 %v5897
    %v5979 = vpop.f32.mrf.mxu0
    %5980 = vmatmul.f32.gmra.mxu0 %v5900
    %v5981 = vpop.f32.mrf.mxu0
    %v5982 = vadd.f32 0.0, %v5981
    %5983 = vmatmul.f32.gmra.mxu0 %v5903
    %v5984 = vpop.f32.mrf.mxu0
    %v5985 = vadd.f32 0.0, %v5984
    %5986 = vmatmul.f32.gmra.mxu0 %v5906
    %v5987 = vpop.f32.mrf.mxu0
    %v5988 = vadd.f32 0.0, %v5987
    %5989 = vmatmul.f32.gmra.mxu0 %v5909
    %v5990 = vpop.f32.mrf.mxu0
    %5991 = vmatmul.f32.gmra.mxu0 %v5912
    %v5992 = vpop.f32.mrf.mxu0
    %v5993 = vadd.f32 0.0, %v5992
    %5994 = vmatmul.f32.gmra.mxu0 %v5915
    %v5995 = vpop.f32.mrf.mxu0
    %v5996 = vadd.f32 0.0, %v5995
    %5997 = vmatmul.f32.gmra.mxu0 %v5918
    %v5998 = vpop.f32.mrf.mxu0
    %v5999 = vadd.f32 0.0, %v5998
    %6000 = vmatmul.f32.gmra.mxu0 %v5921
    %v6001 = vpop.f32.mrf.mxu0
    %6002 = vmatmul.f32.gmra.mxu0 %v5924
    %v6003 = vpop.f32.mrf.mxu0
    %v6004 = vadd.f32 0.0, %v6003
    %6005 = vmatmul.f32.gmra.mxu0 %v5927
    %v6006 = vpop.f32.mrf.mxu0
    %v6007 = vadd.f32 0.0, %v6006
    %6008 = vmatmul.f32.gmra.mxu0 %v5930
    %v6009 = vpop.f32.mrf.mxu0
    %v6010 = vadd.f32 0.0, %v6009
    %6011 = vmatmul.f32.gmra.mxu0 %v5933
    %v6012 = vpop.f32.mrf.mxu0
    %6013 = vmatmul.f32.gmra.mxu0 %v5936
    %v6014 = vpop.f32.mrf.mxu0
    %v6015 = vadd.f32 0.0, %v6014
    %6016 = vmatmul.f32.gmra.mxu0 %v5939
    %v6017 = vpop.f32.mrf.mxu0
    %v6018 = vadd.f32 0.0, %v6017
    %6019 = vmatmul.f32.gmra.mxu0 %v5942
    %v6020 = vpop.f32.mrf.mxu0
    %v6021 = vadd.f32 0.0, %v6020
    %6022 = vmatmul.f32.gmra.mxu0 %v5945
    %v6023 = vpop.f32.mrf.mxu0
    %6024 = vmatmul.f32.gmra.mxu0 %v5948
    %v6025 = vpop.f32.mrf.mxu0
    %v6026 = vadd.f32 0.0, %v6025
    %6027 = vmatmul.f32.gmra.mxu0 %v5951
    %v6028 = vpop.f32.mrf.mxu0
    %v6029 = vadd.f32 0.0, %v6028
    %6030 = vdwg.mxu0
    %v6031 = vadd.f32 %v5848, %v5971
    %v6032 = vadd.f32 %v5849, %v5974
    %v6033 = vadd.f32 %v5850, %v5977
    %v6034 = vadd.f32 %v5851, %v5982
    %v6035 = vadd.f32 %v5852, %v5985
    %v6036 = vadd.f32 %v5853, %v5988
    %v6037 = vadd.f32 %v5854, %v5993
    %v6038 = vadd.f32 %v5855, %v5996
    %v6039 = vadd.f32 %v5856, %v5999
    %v6040 = vadd.f32 %v5857, %v6004
    %v6041 = vadd.f32 %v5858, %v6007
    %v6042 = vadd.f32 %v5859, %v6010
    %v6043 = vadd.f32 %v5860, %v6015
    %v6044 = vadd.f32 %v5861, %v6018
    %v6045 = vadd.f32 %v5862, %v6021
    %v6046 = vadd.f32 %v5863, %v6026
    %v6047 = vadd.f32 %v5864, %v6029
    %v6048 = vld [vmem:[#allocation2 + $0x123] sm:$0xff]
    %v6049 = vld [vmem:[#allocation2 + $0x12b] sm:$0xff]
    %v6050 = vld [vmem:[#allocation2 + $0x133] sm:$0xff]
    %v6051 = vld [vmem:[#allocation2 + $0x13b] sm:$0xff]
    %v6052 = vld [vmem:[#allocation2 + $0x143] sm:$0xff]
    %v6053 = vld [vmem:[#allocation2 + $0x14b] sm:$0xff]
    %v6054 = vld [vmem:[#allocation2 + $0x153] sm:$0xff]
    %v6055 = vld [vmem:[#allocation2 + $0x15b] sm:$0xff]
    %v6056 = vld [vmem:[#allocation2 + $0x163] sm:$0xff]
    %v6057 = vld [vmem:[#allocation2 + $0x16b] sm:$0xff]
    %v6058 = vld [vmem:[#allocation2 + $0x173] sm:$0xff]
    %v6059 = vld [vmem:[#allocation2 + $0x17b] sm:$0xff]
    %v6060 = vld [vmem:[#allocation2 + $0x183] sm:$0xff]
    %v6061 = vld [vmem:[#allocation2 + $0x18b] sm:$0xff]
    %v6062 = vld [vmem:[#allocation2 + $0x193] sm:$0xff]
    %v6063 = vld [vmem:[#allocation2 + $0x19b] sm:$0xff]
    %v6064 = vld [vmem:[#allocation2 + $0x1a3] sm:$0xff]
    %v6065 = vld [vmem:[#allocation2 + $0x1ab] sm:$0xff]
    %v6066 = vld [vmem:[#allocation2 + $0x1b3] sm:$0xff]
    %v6067 = vld [vmem:[#allocation2 + $0x1bb] sm:$0xff]
    %v6068 = vld [vmem:[#allocation2 + $0x1c3] sm:$0xff]
    %v6069 = vld [vmem:[#allocation2 + $0x1cb] sm:$0x7]
    %v6071 = vsel %vm33, %v6048, 0
    %v6074 = vsel %vm33, %v6049, 0
    %v6077 = vsel %vm33, %v6050, 0
    %v6080 = vsel %vm33, %v6051, 0
    %v6083 = vsel %vm33, %v6052, 0
    %v6086 = vsel %vm33, %v6053, 0
    %v6089 = vsel %vm33, %v6054, 0
    %v6092 = vsel %vm33, %v6055, 0
    %v6095 = vsel %vm33, %v6056, 0
    %v6098 = vsel %vm33, %v6057, 0
    %v6101 = vsel %vm33, %v6058, 0
    %v6104 = vsel %vm33, %v6059, 0
    %v6107 = vsel %vm33, %v6060, 0
    %v6110 = vsel %vm33, %v6061, 0
    %v6113 = vsel %vm33, %v6062, 0
    %v6116 = vsel %vm33, %v6063, 0
    %v6119 = vsel %vm33, %v6064, 0
    %v6122 = vsel %vm33, %v6065, 0
    %v6125 = vsel %vm33, %v6066, 0
    %v6128 = vsel %vm33, %v6067, 0
    %v6131 = vsel %vm33, %v6068, 0
    %v6134 = vsel %vm33, %v6069, 0
    %6136 = vmatpush.msra.mxu0 0.0
    %6137 = vmatpush.msra.mxu0 0.0
    %6138 = vmatpush.msra.mxu0 0.0
    %6139 = vmatpush.msra.mxu0 0.0
    %6140 = vmatpush.msra.mxu0 0.0
    %6141 = vmatpush.msra.mxu0 0.0
    %6142 = vmatpush.msra.mxu0 0.0
    %6143 = vmatpush.msra.mxu0 0.0
    %6144 = vmatpush.msra.mxu0 0.0
    %6145 = vmatpush.msra.mxu0 0.0
    %6146 = vmatpush.msra.mxu0 0.0
    %6147 = vmatpush.msra.mxu0 0.0
    %6148 = vmatpush.msra.mxu0 0.0
    %6149 = vmatpush.msra.mxu0 0.0
    %6150 = vmatpush.msra.mxu0 %v3050
    %6151 = vmatpush.msra.mxu0 %v3049
    %6152 = vmatmul.f32.gmra.mxu0 %v6071
    %v6153 = vpop.f32.mrf.mxu0
    %v6154 = vadd.f32 0.0, %v6153
    %6155 = vmatmul.f32.gmra.mxu0 %v6074
    %v6156 = vpop.f32.mrf.mxu0
    %v6157 = vadd.f32 0.0, %v6156
    %6158 = vmatmul.f32.gmra.mxu0 %v6077
    %v6159 = vpop.f32.mrf.mxu0
    %v6160 = vadd.f32 0.0, %v6159
    %6161 = vmatmul.f32.gmra.mxu0 %v6080
    %v6162 = vpop.f32.mrf.mxu0
    %6163 = vmatmul.f32.gmra.mxu0 %v6083
    %v6164 = vpop.f32.mrf.mxu0
    %v6165 = vadd.f32 0.0, %v6164
    %6166 = vmatmul.f32.gmra.mxu0 %v6086
    %v6167 = vpop.f32.mrf.mxu0
    %v6168 = vadd.f32 0.0, %v6167
    %6169 = vmatmul.f32.gmra.mxu0 %v6089
    %v6170 = vpop.f32.mrf.mxu0
    %v6171 = vadd.f32 0.0, %v6170
    %6172 = vmatmul.f32.gmra.mxu0 %v6092
    %v6173 = vpop.f32.mrf.mxu0
    %6174 = vmatmul.f32.gmra.mxu0 %v6095
    %v6175 = vpop.f32.mrf.mxu0
    %v6176 = vadd.f32 0.0, %v6175
    %6177 = vmatmul.f32.gmra.mxu0 %v6098
    %v6178 = vpop.f32.mrf.mxu0
    %v6179 = vadd.f32 0.0, %v6178
    %6180 = vmatmul.f32.gmra.mxu0 %v6101
    %v6181 = vpop.f32.mrf.mxu0
    %v6182 = vadd.f32 0.0, %v6181
    %6183 = vmatmul.f32.gmra.mxu0 %v6104
    %v6184 = vpop.f32.mrf.mxu0
    %6185 = vmatmul.f32.gmra.mxu0 %v6107
    %v6186 = vpop.f32.mrf.mxu0
    %v6187 = vadd.f32 0.0, %v6186
    %6188 = vmatmul.f32.gmra.mxu0 %v6110
    %v6189 = vpop.f32.mrf.mxu0
    %v6190 = vadd.f32 0.0, %v6189
    %6191 = vmatmul.f32.gmra.mxu0 %v6113
    %v6192 = vpop.f32.mrf.mxu0
    %v6193 = vadd.f32 0.0, %v6192
    %6194 = vmatmul.f32.gmra.mxu0 %v6116
    %v6195 = vpop.f32.mrf.mxu0
    %6196 = vmatmul.f32.gmra.mxu0 %v6119
    %v6197 = vpop.f32.mrf.mxu0
    %v6198 = vadd.f32 0.0, %v6197
    %6199 = vmatmul.f32.gmra.mxu0 %v6122
    %v6200 = vpop.f32.mrf.mxu0
    %v6201 = vadd.f32 0.0, %v6200
    %6202 = vmatmul.f32.gmra.mxu0 %v6125
    %v6203 = vpop.f32.mrf.mxu0
    %v6204 = vadd.f32 0.0, %v6203
    %6205 = vmatmul.f32.gmra.mxu0 %v6128
    %v6206 = vpop.f32.mrf.mxu0
    %6207 = vmatmul.f32.gmra.mxu0 %v6131
    %v6208 = vpop.f32.mrf.mxu0
    %v6209 = vadd.f32 0.0, %v6208
    %6210 = vmatmul.f32.gmra.mxu0 %v6134
    %v6211 = vpop.f32.mrf.mxu0
    %v6212 = vadd.f32 0.0, %v6211
    %6213 = vdwg.mxu0
    %v6214 = vadd.f32 %v6031, %v6154
    %v6215 = vadd.f32 %v6032, %v6157
    %v6216 = vadd.f32 %v6033, %v6160
    %v6217 = vadd.f32 %v6034, %v6165
    %v6218 = vadd.f32 %v6035, %v6168
    %v6219 = vadd.f32 %v6036, %v6171
    %v6220 = vadd.f32 %v6037, %v6176
    %v6221 = vadd.f32 %v6038, %v6179
    %v6222 = vadd.f32 %v6039, %v6182
    %v6223 = vadd.f32 %v6040, %v6187
    %v6224 = vadd.f32 %v6041, %v6190
    %v6225 = vadd.f32 %v6042, %v6193
    %v6226 = vadd.f32 %v6043, %v6198
    %v6227 = vadd.f32 %v6044, %v6201
    %v6228 = vadd.f32 %v6045, %v6204
    %v6229 = vadd.f32 %v6046, %v6209
    %v6230 = vadd.f32 %v6047, %v6212
    %v6231 = vld [vmem:[#allocation2 + $0x130] sm:$0xff]
    %v6232 = vld [vmem:[#allocation2 + $0x138] sm:$0xff]
    %v6233 = vld [vmem:[#allocation2 + $0x140] sm:$0xff]
    %v6234 = vld [vmem:[#allocation2 + $0x148] sm:$0xff]
    %v6235 = vld [vmem:[#allocation2 + $0x150] sm:$0xff]
    %v6236 = vld [vmem:[#allocation2 + $0x158] sm:$0xff]
    %v6237 = vld [vmem:[#allocation2 + $0x160] sm:$0xff]
    %v6238 = vld [vmem:[#allocation2 + $0x168] sm:$0xff]
    %v6239 = vld [vmem:[#allocation2 + $0x170] sm:$0xff]
    %v6240 = vld [vmem:[#allocation2 + $0x178] sm:$0xff]
    %v6241 = vld [vmem:[#allocation2 + $0x180] sm:$0xff]
    %v6242 = vld [vmem:[#allocation2 + $0x188] sm:$0xff]
    %v6243 = vld [vmem:[#allocation2 + $0x190] sm:$0xff]
    %v6244 = vld [vmem:[#allocation2 + $0x198] sm:$0xff]
    %v6245 = vld [vmem:[#allocation2 + $0x1a0] sm:$0xff]
    %v6246 = vld [vmem:[#allocation2 + $0x1a8] sm:$0xff]
    %v6247 = vld [vmem:[#allocation2 + $0x1b0] sm:$0xff]
    %v6248 = vld [vmem:[#allocation2 + $0x1b8] sm:$0xff]
    %v6249 = vld [vmem:[#allocation2 + $0x1c0] sm:$0xff]
    %v6250 = vld [vmem:[#allocation2 + $0x1c8] sm:$0xff]
    %v6251 = vld [vmem:[#allocation2 + $0x1d0] sm:$0xff]
    %v6252 = vld [vmem:[#allocation2 + $0x1d8] sm:$0x7]
    %v6254 = vsel %vm33, %v6231, 0
    %v6257 = vsel %vm33, %v6232, 0
    %v6260 = vsel %vm33, %v6233, 0
    %v6263 = vsel %vm33, %v6234, 0
    %v6266 = vsel %vm33, %v6235, 0
    %v6269 = vsel %vm33, %v6236, 0
    %v6272 = vsel %vm33, %v6237, 0
    %v6275 = vsel %vm33, %v6238, 0
    %v6278 = vsel %vm33, %v6239, 0
    %v6281 = vsel %vm33, %v6240, 0
    %v6284 = vsel %vm33, %v6241, 0
    %v6287 = vsel %vm33, %v6242, 0
    %v6290 = vsel %vm33, %v6243, 0
    %v6293 = vsel %vm33, %v6244, 0
    %v6296 = vsel %vm33, %v6245, 0
    %v6299 = vsel %vm33, %v6246, 0
    %v6302 = vsel %vm33, %v6247, 0
    %v6305 = vsel %vm33, %v6248, 0
    %v6308 = vsel %vm33, %v6249, 0
    %v6311 = vsel %vm33, %v6250, 0
    %v6314 = vsel %vm33, %v6251, 0
    %v6317 = vsel %vm33, %v6252, 0
    %6319 = vmatpush.msra.mxu0 0.0
    %6320 = vmatpush.msra.mxu0 0.0
    %6321 = vmatpush.msra.mxu0 0.0
    %6322 = vmatpush.msra.mxu0 0.0
    %6323 = vmatpush.msra.mxu0 0.0
    %6324 = vmatpush.msra.mxu0 0.0
    %6325 = vmatpush.msra.mxu0 0.0
    %6326 = vmatpush.msra.mxu0 0.0
    %6327 = vmatpush.msra.mxu0 0.0
    %6328 = vmatpush.msra.mxu0 0.0
    %6329 = vmatpush.msra.mxu0 0.0
    %6330 = vmatpush.msra.mxu0 0.0
    %6331 = vmatpush.msra.mxu0 0.0
    %6332 = vmatpush.msra.mxu0 0.0
    %6333 = vmatpush.msra.mxu0 %v3235
    %6334 = vmatpush.msra.mxu0 %v3234
    %6335 = vmatmul.f32.gmra.mxu0 %v6254
    %v6336 = vpop.f32.mrf.mxu0
    %v6337 = vadd.f32 0.0, %v6336
    %6338 = vmatmul.f32.gmra.mxu0 %v6257
    %v6339 = vpop.f32.mrf.mxu0
    %v6340 = vadd.f32 0.0, %v6339
    %6341 = vmatmul.f32.gmra.mxu0 %v6260
    %v6342 = vpop.f32.mrf.mxu0
    %v6343 = vadd.f32 0.0, %v6342
    %6344 = vmatmul.f32.gmra.mxu0 %v6263
    %v6345 = vpop.f32.mrf.mxu0
    %6346 = vmatmul.f32.gmra.mxu0 %v6266
    %v6347 = vpop.f32.mrf.mxu0
    %v6348 = vadd.f32 0.0, %v6347
    %6349 = vmatmul.f32.gmra.mxu0 %v6269
    %v6350 = vpop.f32.mrf.mxu0
    %v6351 = vadd.f32 0.0, %v6350
    %6352 = vmatmul.f32.gmra.mxu0 %v6272
    %v6353 = vpop.f32.mrf.mxu0
    %v6354 = vadd.f32 0.0, %v6353
    %6355 = vmatmul.f32.gmra.mxu0 %v6275
    %v6356 = vpop.f32.mrf.mxu0
    %6357 = vmatmul.f32.gmra.mxu0 %v6278
    %v6358 = vpop.f32.mrf.mxu0
    %v6359 = vadd.f32 0.0, %v6358
    %6360 = vmatmul.f32.gmra.mxu0 %v6281
    %v6361 = vpop.f32.mrf.mxu0
    %v6362 = vadd.f32 0.0, %v6361
    %6363 = vmatmul.f32.gmra.mxu0 %v6284
    %v6364 = vpop.f32.mrf.mxu0
    %v6365 = vadd.f32 0.0, %v6364
    %6366 = vmatmul.f32.gmra.mxu0 %v6287
    %v6367 = vpop.f32.mrf.mxu0
    %6368 = vmatmul.f32.gmra.mxu0 %v6290
    %v6369 = vpop.f32.mrf.mxu0
    %v6370 = vadd.f32 0.0, %v6369
    %6371 = vmatmul.f32.gmra.mxu0 %v6293
    %v6372 = vpop.f32.mrf.mxu0
    %v6373 = vadd.f32 0.0, %v6372
    %6374 = vmatmul.f32.gmra.mxu0 %v6296
    %v6375 = vpop.f32.mrf.mxu0
    %v6376 = vadd.f32 0.0, %v6375
    %6377 = vmatmul.f32.gmra.mxu0 %v6299
    %v6378 = vpop.f32.mrf.mxu0
    %6379 = vmatmul.f32.gmra.mxu0 %v6302
    %v6380 = vpop.f32.mrf.mxu0
    %v6381 = vadd.f32 0.0, %v6380
    %6382 = vmatmul.f32.gmra.mxu0 %v6305
    %v6383 = vpop.f32.mrf.mxu0
    %v6384 = vadd.f32 0.0, %v6383
    %6385 = vmatmul.f32.gmra.mxu0 %v6308
    %v6386 = vpop.f32.mrf.mxu0
    %v6387 = vadd.f32 0.0, %v6386
    %6388 = vmatmul.f32.gmra.mxu0 %v6311
    %v6389 = vpop.f32.mrf.mxu0
    %6390 = vmatmul.f32.gmra.mxu0 %v6314
    %v6391 = vpop.f32.mrf.mxu0
    %v6392 = vadd.f32 0.0, %v6391
    %6393 = vmatmul.f32.gmra.mxu0 %v6317
    %v6394 = vpop.f32.mrf.mxu0
    %v6395 = vadd.f32 0.0, %v6394
    %6396 = vdwg.mxu0
    %v6397 = vadd.f32 %v6214, %v6337
    %v6398 = vadd.f32 %v6215, %v6340
    %v6399 = vadd.f32 %v6216, %v6343
    %v6400 = vadd.f32 %v6217, %v6348
    %v6401 = vadd.f32 %v6218, %v6351
    %v6402 = vadd.f32 %v6219, %v6354
    %v6403 = vadd.f32 %v6220, %v6359
    %v6404 = vadd.f32 %v6221, %v6362
    %v6405 = vadd.f32 %v6222, %v6365
    %v6406 = vadd.f32 %v6223, %v6370
    %v6407 = vadd.f32 %v6224, %v6373
    %v6408 = vadd.f32 %v6225, %v6376
    %v6409 = vadd.f32 %v6226, %v6381
    %v6410 = vadd.f32 %v6227, %v6384
    %v6411 = vadd.f32 %v6228, %v6387
    %v6412 = vadd.f32 %v6229, %v6392
    %v6413 = vadd.f32 %v6230, %v6395
    %v6414 = vld [vmem:[#allocation2 + $0x131] sm:$0xff]
    %v6415 = vld [vmem:[#allocation2 + $0x139] sm:$0xff]
    %v6416 = vld [vmem:[#allocation2 + $0x141] sm:$0xff]
    %v6417 = vld [vmem:[#allocation2 + $0x149] sm:$0xff]
    %v6418 = vld [vmem:[#allocation2 + $0x151] sm:$0xff]
    %v6419 = vld [vmem:[#allocation2 + $0x159] sm:$0xff]
    %v6420 = vld [vmem:[#allocation2 + $0x161] sm:$0xff]
    %v6421 = vld [vmem:[#allocation2 + $0x169] sm:$0xff]
    %v6422 = vld [vmem:[#allocation2 + $0x171] sm:$0xff]
    %v6423 = vld [vmem:[#allocation2 + $0x179] sm:$0xff]
    %v6424 = vld [vmem:[#allocation2 + $0x181] sm:$0xff]
    %v6425 = vld [vmem:[#allocation2 + $0x189] sm:$0xff]
    %v6426 = vld [vmem:[#allocation2 + $0x191] sm:$0xff]
    %v6427 = vld [vmem:[#allocation2 + $0x199] sm:$0xff]
    %v6428 = vld [vmem:[#allocation2 + $0x1a1] sm:$0xff]
    %v6429 = vld [vmem:[#allocation2 + $0x1a9] sm:$0xff]
    %v6430 = vld [vmem:[#allocation2 + $0x1b1] sm:$0xff]
    %v6431 = vld [vmem:[#allocation2 + $0x1b9] sm:$0xff]
    %v6432 = vld [vmem:[#allocation2 + $0x1c1] sm:$0xff]
    %v6433 = vld [vmem:[#allocation2 + $0x1c9] sm:$0xff]
    %v6434 = vld [vmem:[#allocation2 + $0x1d1] sm:$0xff]
    %v6435 = vld [vmem:[#allocation2 + $0x1d9] sm:$0x7]
    %v6437 = vsel %vm33, %v6414, 0
    %v6440 = vsel %vm33, %v6415, 0
    %v6443 = vsel %vm33, %v6416, 0
    %v6446 = vsel %vm33, %v6417, 0
    %v6449 = vsel %vm33, %v6418, 0
    %v6452 = vsel %vm33, %v6419, 0
    %v6455 = vsel %vm33, %v6420, 0
    %v6458 = vsel %vm33, %v6421, 0
    %v6461 = vsel %vm33, %v6422, 0
    %v6464 = vsel %vm33, %v6423, 0
    %v6467 = vsel %vm33, %v6424, 0
    %v6470 = vsel %vm33, %v6425, 0
    %v6473 = vsel %vm33, %v6426, 0
    %v6476 = vsel %vm33, %v6427, 0
    %v6479 = vsel %vm33, %v6428, 0
    %v6482 = vsel %vm33, %v6429, 0
    %v6485 = vsel %vm33, %v6430, 0
    %v6488 = vsel %vm33, %v6431, 0
    %v6491 = vsel %vm33, %v6432, 0
    %v6494 = vsel %vm33, %v6433, 0
    %v6497 = vsel %vm33, %v6434, 0
    %v6500 = vsel %vm33, %v6435, 0
    %6502 = vmatpush.msra.mxu0 0.0
    %6503 = vmatpush.msra.mxu0 0.0
    %6504 = vmatpush.msra.mxu0 0.0
    %6505 = vmatpush.msra.mxu0 0.0
    %6506 = vmatpush.msra.mxu0 0.0
    %6507 = vmatpush.msra.mxu0 0.0
    %6508 = vmatpush.msra.mxu0 0.0
    %6509 = vmatpush.msra.mxu0 0.0
    %6510 = vmatpush.msra.mxu0 0.0
    %6511 = vmatpush.msra.mxu0 0.0
    %6512 = vmatpush.msra.mxu0 0.0
    %6513 = vmatpush.msra.mxu0 0.0
    %6514 = vmatpush.msra.mxu0 0.0
    %6515 = vmatpush.msra.mxu0 0.0
    %6516 = vmatpush.msra.mxu0 %v3420
    %6517 = vmatpush.msra.mxu0 %v3419
    %6518 = vmatmul.f32.gmra.mxu0 %v6437
    %v6519 = vpop.f32.mrf.mxu0
    %v6520 = vadd.f32 0.0, %v6519
    %6521 = vmatmul.f32.gmra.mxu0 %v6440
    %v6522 = vpop.f32.mrf.mxu0
    %v6523 = vadd.f32 0.0, %v6522
    %6524 = vmatmul.f32.gmra.mxu0 %v6443
    %v6525 = vpop.f32.mrf.mxu0
    %v6526 = vadd.f32 0.0, %v6525
    %6527 = vmatmul.f32.gmra.mxu0 %v6446
    %v6528 = vpop.f32.mrf.mxu0
    %6529 = vmatmul.f32.gmra.mxu0 %v6449
    %v6530 = vpop.f32.mrf.mxu0
    %v6531 = vadd.f32 0.0, %v6530
    %6532 = vmatmul.f32.gmra.mxu0 %v6452
    %v6533 = vpop.f32.mrf.mxu0
    %v6534 = vadd.f32 0.0, %v6533
    %6535 = vmatmul.f32.gmra.mxu0 %v6455
    %v6536 = vpop.f32.mrf.mxu0
    %v6537 = vadd.f32 0.0, %v6536
    %6538 = vmatmul.f32.gmra.mxu0 %v6458
    %v6539 = vpop.f32.mrf.mxu0
    %6540 = vmatmul.f32.gmra.mxu0 %v6461
    %v6541 = vpop.f32.mrf.mxu0
    %v6542 = vadd.f32 0.0, %v6541
    %6543 = vmatmul.f32.gmra.mxu0 %v6464
    %v6544 = vpop.f32.mrf.mxu0
    %v6545 = vadd.f32 0.0, %v6544
    %6546 = vmatmul.f32.gmra.mxu0 %v6467
    %v6547 = vpop.f32.mrf.mxu0
    %v6548 = vadd.f32 0.0, %v6547
    %6549 = vmatmul.f32.gmra.mxu0 %v6470
    %v6550 = vpop.f32.mrf.mxu0
    %6551 = vmatmul.f32.gmra.mxu0 %v6473
    %v6552 = vpop.f32.mrf.mxu0
    %v6553 = vadd.f32 0.0, %v6552
    %6554 = vmatmul.f32.gmra.mxu0 %v6476
    %v6555 = vpop.f32.mrf.mxu0
    %v6556 = vadd.f32 0.0, %v6555
    %6557 = vmatmul.f32.gmra.mxu0 %v6479
    %v6558 = vpop.f32.mrf.mxu0
    %v6559 = vadd.f32 0.0, %v6558
    %6560 = vmatmul.f32.gmra.mxu0 %v6482
    %v6561 = vpop.f32.mrf.mxu0
    %6562 = vmatmul.f32.gmra.mxu0 %v6485
    %v6563 = vpop.f32.mrf.mxu0
    %v6564 = vadd.f32 0.0, %v6563
    %6565 = vmatmul.f32.gmra.mxu0 %v6488
    %v6566 = vpop.f32.mrf.mxu0
    %v6567 = vadd.f32 0.0, %v6566
    %6568 = vmatmul.f32.gmra.mxu0 %v6491
    %v6569 = vpop.f32.mrf.mxu0
    %v6570 = vadd.f32 0.0, %v6569
    %6571 = vmatmul.f32.gmra.mxu0 %v6494
    %v6572 = vpop.f32.mrf.mxu0
    %6573 = vmatmul.f32.gmra.mxu0 %v6497
    %v6574 = vpop.f32.mrf.mxu0
    %v6575 = vadd.f32 0.0, %v6574
    %6576 = vmatmul.f32.gmra.mxu0 %v6500
    %v6577 = vpop.f32.mrf.mxu0
    %v6578 = vadd.f32 0.0, %v6577
    %6579 = vdwg.mxu0
    %v6580 = vadd.f32 %v6397, %v6520
    %v6581 = vadd.f32 %v6398, %v6523
    %v6582 = vadd.f32 %v6399, %v6526
    %v6583 = vadd.f32 %v6400, %v6531
    %v6584 = vadd.f32 %v6401, %v6534
    %v6585 = vadd.f32 %v6402, %v6537
    %v6586 = vadd.f32 %v6403, %v6542
    %v6587 = vadd.f32 %v6404, %v6545
    %v6588 = vadd.f32 %v6405, %v6548
    %v6589 = vadd.f32 %v6406, %v6553
    %v6590 = vadd.f32 %v6407, %v6556
    %v6591 = vadd.f32 %v6408, %v6559
    %v6592 = vadd.f32 %v6409, %v6564
    %v6593 = vadd.f32 %v6410, %v6567
    %v6594 = vadd.f32 %v6411, %v6570
    %v6595 = vadd.f32 %v6412, %v6575
    %v6596 = vadd.f32 %v6413, %v6578
    %v6597 = vld [vmem:[#allocation2 + $0x132] sm:$0xff]
    %v6598 = vld [vmem:[#allocation2 + $0x13a] sm:$0xff]
    %v6599 = vld [vmem:[#allocation2 + $0x142] sm:$0xff]
    %v6600 = vld [vmem:[#allocation2 + $0x14a] sm:$0xff]
    %v6601 = vld [vmem:[#allocation2 + $0x152] sm:$0xff]
    %v6602 = vld [vmem:[#allocation2 + $0x15a] sm:$0xff]
    %v6603 = vld [vmem:[#allocation2 + $0x162] sm:$0xff]
    %v6604 = vld [vmem:[#allocation2 + $0x16a] sm:$0xff]
    %v6605 = vld [vmem:[#allocation2 + $0x172] sm:$0xff]
    %v6606 = vld [vmem:[#allocation2 + $0x17a] sm:$0xff]
    %v6607 = vld [vmem:[#allocation2 + $0x182] sm:$0xff]
    %v6608 = vld [vmem:[#allocation2 + $0x18a] sm:$0xff]
    %v6609 = vld [vmem:[#allocation2 + $0x192] sm:$0xff]
    %v6610 = vld [vmem:[#allocation2 + $0x19a] sm:$0xff]
    %v6611 = vld [vmem:[#allocation2 + $0x1a2] sm:$0xff]
    %v6612 = vld [vmem:[#allocation2 + $0x1aa] sm:$0xff]
    %v6613 = vld [vmem:[#allocation2 + $0x1b2] sm:$0xff]
    %v6614 = vld [vmem:[#allocation2 + $0x1ba] sm:$0xff]
    %v6615 = vld [vmem:[#allocation2 + $0x1c2] sm:$0xff]
    %v6616 = vld [vmem:[#allocation2 + $0x1ca] sm:$0xff]
    %v6617 = vld [vmem:[#allocation2 + $0x1d2] sm:$0xff]
    %v6618 = vld [vmem:[#allocation2 + $0x1da] sm:$0x7]
    %v6620 = vsel %vm33, %v6597, 0
    %v6623 = vsel %vm33, %v6598, 0
    %v6626 = vsel %vm33, %v6599, 0
    %v6629 = vsel %vm33, %v6600, 0
    %v6632 = vsel %vm33, %v6601, 0
    %v6635 = vsel %vm33, %v6602, 0
    %v6638 = vsel %vm33, %v6603, 0
    %v6641 = vsel %vm33, %v6604, 0
    %v6644 = vsel %vm33, %v6605, 0
    %v6647 = vsel %vm33, %v6606, 0
    %v6650 = vsel %vm33, %v6607, 0
    %v6653 = vsel %vm33, %v6608, 0
    %v6656 = vsel %vm33, %v6609, 0
    %v6659 = vsel %vm33, %v6610, 0
    %v6662 = vsel %vm33, %v6611, 0
    %v6665 = vsel %vm33, %v6612, 0
    %v6668 = vsel %vm33, %v6613, 0
    %v6671 = vsel %vm33, %v6614, 0
    %v6674 = vsel %vm33, %v6615, 0
    %v6677 = vsel %vm33, %v6616, 0
    %v6680 = vsel %vm33, %v6617, 0
    %v6683 = vsel %vm33, %v6618, 0
    %6685 = vmatpush.msra.mxu0 0.0
    %6686 = vmatpush.msra.mxu0 0.0
    %6687 = vmatpush.msra.mxu0 0.0
    %6688 = vmatpush.msra.mxu0 0.0
    %6689 = vmatpush.msra.mxu0 0.0
    %6690 = vmatpush.msra.mxu0 0.0
    %6691 = vmatpush.msra.mxu0 0.0
    %6692 = vmatpush.msra.mxu0 0.0
    %6693 = vmatpush.msra.mxu0 0.0
    %6694 = vmatpush.msra.mxu0 0.0
    %6695 = vmatpush.msra.mxu0 0.0
    %6696 = vmatpush.msra.mxu0 0.0
    %6697 = vmatpush.msra.mxu0 0.0
    %6698 = vmatpush.msra.mxu0 0.0
    %6699 = vmatpush.msra.mxu0 %v3605
    %6700 = vmatpush.msra.mxu0 %v3604
    %6701 = vmatmul.f32.gmra.mxu0 %v6620
    %v6702 = vpop.f32.mrf.mxu0
    %v6703 = vadd.f32 0.0, %v6702
    %6704 = vmatmul.f32.gmra.mxu0 %v6623
    %v6705 = vpop.f32.mrf.mxu0
    %v6706 = vadd.f32 0.0, %v6705
    %6707 = vmatmul.f32.gmra.mxu0 %v6626
    %v6708 = vpop.f32.mrf.mxu0
    %v6709 = vadd.f32 0.0, %v6708
    %6710 = vmatmul.f32.gmra.mxu0 %v6629
    %v6711 = vpop.f32.mrf.mxu0
    %6712 = vmatmul.f32.gmra.mxu0 %v6632
    %v6713 = vpop.f32.mrf.mxu0
    %v6714 = vadd.f32 0.0, %v6713
    %6715 = vmatmul.f32.gmra.mxu0 %v6635
    %v6716 = vpop.f32.mrf.mxu0
    %v6717 = vadd.f32 0.0, %v6716
    %6718 = vmatmul.f32.gmra.mxu0 %v6638
    %v6719 = vpop.f32.mrf.mxu0
    %v6720 = vadd.f32 0.0, %v6719
    %6721 = vmatmul.f32.gmra.mxu0 %v6641
    %v6722 = vpop.f32.mrf.mxu0
    %6723 = vmatmul.f32.gmra.mxu0 %v6644
    %v6724 = vpop.f32.mrf.mxu0
    %v6725 = vadd.f32 0.0, %v6724
    %6726 = vmatmul.f32.gmra.mxu0 %v6647
    %v6727 = vpop.f32.mrf.mxu0
    %v6728 = vadd.f32 0.0, %v6727
    %6729 = vmatmul.f32.gmra.mxu0 %v6650
    %v6730 = vpop.f32.mrf.mxu0
    %v6731 = vadd.f32 0.0, %v6730
    %6732 = vmatmul.f32.gmra.mxu0 %v6653
    %v6733 = vpop.f32.mrf.mxu0
    %6734 = vmatmul.f32.gmra.mxu0 %v6656
    %v6735 = vpop.f32.mrf.mxu0
    %v6736 = vadd.f32 0.0, %v6735
    %6737 = vmatmul.f32.gmra.mxu0 %v6659
    %v6738 = vpop.f32.mrf.mxu0
    %v6739 = vadd.f32 0.0, %v6738
    %6740 = vmatmul.f32.gmra.mxu0 %v6662
    %v6741 = vpop.f32.mrf.mxu0
    %v6742 = vadd.f32 0.0, %v6741
    %6743 = vmatmul.f32.gmra.mxu0 %v6665
    %v6744 = vpop.f32.mrf.mxu0
    %6745 = vmatmul.f32.gmra.mxu0 %v6668
    %v6746 = vpop.f32.mrf.mxu0
    %v6747 = vadd.f32 0.0, %v6746
    %6748 = vmatmul.f32.gmra.mxu0 %v6671
    %v6749 = vpop.f32.mrf.mxu0
    %v6750 = vadd.f32 0.0, %v6749
    %6751 = vmatmul.f32.gmra.mxu0 %v6674
    %v6752 = vpop.f32.mrf.mxu0
    %v6753 = vadd.f32 0.0, %v6752
    %6754 = vmatmul.f32.gmra.mxu0 %v6677
    %v6755 = vpop.f32.mrf.mxu0
    %6756 = vmatmul.f32.gmra.mxu0 %v6680
    %v6757 = vpop.f32.mrf.mxu0
    %v6758 = vadd.f32 0.0, %v6757
    %6759 = vmatmul.f32.gmra.mxu0 %v6683
    %v6760 = vpop.f32.mrf.mxu0
    %v6761 = vadd.f32 0.0, %v6760
    %6762 = vdwg.mxu0
    %v6763 = vadd.f32 %v6580, %v6703
    %v6764 = vadd.f32 %v6581, %v6706
    %v6765 = vadd.f32 %v6582, %v6709
    %v6766 = vadd.f32 %v6583, %v6714
    %v6767 = vadd.f32 %v6584, %v6717
    %v6768 = vadd.f32 %v6585, %v6720
    %v6769 = vadd.f32 %v6586, %v6725
    %v6770 = vadd.f32 %v6587, %v6728
    %v6771 = vadd.f32 %v6588, %v6731
    %v6772 = vadd.f32 %v6589, %v6736
    %v6773 = vadd.f32 %v6590, %v6739
    %v6774 = vadd.f32 %v6591, %v6742
    %v6775 = vadd.f32 %v6592, %v6747
    %v6776 = vadd.f32 %v6593, %v6750
    %v6777 = vadd.f32 %v6594, %v6753
    %v6778 = vadd.f32 %v6595, %v6758
    %v6779 = vadd.f32 %v6596, %v6761
    %v6780 = vld [vmem:[#allocation2 + $0x133] sm:$0xff]
    %v6781 = vld [vmem:[#allocation2 + $0x13b] sm:$0xff]
    %v6782 = vld [vmem:[#allocation2 + $0x143] sm:$0xff]
    %v6783 = vld [vmem:[#allocation2 + $0x14b] sm:$0xff]
    %v6784 = vld [vmem:[#allocation2 + $0x153] sm:$0xff]
    %v6785 = vld [vmem:[#allocation2 + $0x15b] sm:$0xff]
    %v6786 = vld [vmem:[#allocation2 + $0x163] sm:$0xff]
    %v6787 = vld [vmem:[#allocation2 + $0x16b] sm:$0xff]
    %v6788 = vld [vmem:[#allocation2 + $0x173] sm:$0xff]
    %v6789 = vld [vmem:[#allocation2 + $0x17b] sm:$0xff]
    %v6790 = vld [vmem:[#allocation2 + $0x183] sm:$0xff]
    %v6791 = vld [vmem:[#allocation2 + $0x18b] sm:$0xff]
    %v6792 = vld [vmem:[#allocation2 + $0x193] sm:$0xff]
    %v6793 = vld [vmem:[#allocation2 + $0x19b] sm:$0xff]
    %v6794 = vld [vmem:[#allocation2 + $0x1a3] sm:$0xff]
    %v6795 = vld [vmem:[#allocation2 + $0x1ab] sm:$0xff]
    %v6796 = vld [vmem:[#allocation2 + $0x1b3] sm:$0xff]
    %v6797 = vld [vmem:[#allocation2 + $0x1bb] sm:$0xff]
    %v6798 = vld [vmem:[#allocation2 + $0x1c3] sm:$0xff]
    %v6799 = vld [vmem:[#allocation2 + $0x1cb] sm:$0xff]
    %v6800 = vld [vmem:[#allocation2 + $0x1d3] sm:$0xff]
    %v6801 = vld [vmem:[#allocation2 + $0x1db] sm:$0x7]
    %v6803 = vsel %vm33, %v6780, 0
    %v6806 = vsel %vm33, %v6781, 0
    %v6809 = vsel %vm33, %v6782, 0
    %v6812 = vsel %vm33, %v6783, 0
    %v6815 = vsel %vm33, %v6784, 0
    %v6818 = vsel %vm33, %v6785, 0
    %v6821 = vsel %vm33, %v6786, 0
    %v6824 = vsel %vm33, %v6787, 0
    %v6827 = vsel %vm33, %v6788, 0
    %v6830 = vsel %vm33, %v6789, 0
    %v6833 = vsel %vm33, %v6790, 0
    %v6836 = vsel %vm33, %v6791, 0
    %v6839 = vsel %vm33, %v6792, 0
    %v6842 = vsel %vm33, %v6793, 0
    %v6845 = vsel %vm33, %v6794, 0
    %v6848 = vsel %vm33, %v6795, 0
    %v6851 = vsel %vm33, %v6796, 0
    %v6854 = vsel %vm33, %v6797, 0
    %v6857 = vsel %vm33, %v6798, 0
    %v6860 = vsel %vm33, %v6799, 0
    %v6863 = vsel %vm33, %v6800, 0
    %v6866 = vsel %vm33, %v6801, 0
    %6868 = vmatpush.msra.mxu0 0.0
    %6869 = vmatpush.msra.mxu0 0.0
    %6870 = vmatpush.msra.mxu0 0.0
    %6871 = vmatpush.msra.mxu0 0.0
    %6872 = vmatpush.msra.mxu0 0.0
    %6873 = vmatpush.msra.mxu0 0.0
    %6874 = vmatpush.msra.mxu0 0.0
    %6875 = vmatpush.msra.mxu0 0.0
    %6876 = vmatpush.msra.mxu0 0.0
    %6877 = vmatpush.msra.mxu0 0.0
    %6878 = vmatpush.msra.mxu0 0.0
    %6879 = vmatpush.msra.mxu0 0.0
    %6880 = vmatpush.msra.mxu0 0.0
    %6881 = vmatpush.msra.mxu0 0.0
    %6882 = vmatpush.msra.mxu0 %v3790
    %6883 = vmatpush.msra.mxu0 %v3789
    %6884 = vmatmul.f32.gmra.mxu0 %v6803
    %v6885 = vpop.f32.mrf.mxu0
    %v6886 = vadd.f32 0.0, %v6885
    %6887 = vmatmul.f32.gmra.mxu0 %v6806
    %v6888 = vpop.f32.mrf.mxu0
    %v6889 = vadd.f32 0.0, %v6888
    %6890 = vmatmul.f32.gmra.mxu0 %v6809
    %v6891 = vpop.f32.mrf.mxu0
    %v6892 = vadd.f32 0.0, %v6891
    %6893 = vmatmul.f32.gmra.mxu0 %v6812
    %v6894 = vpop.f32.mrf.mxu0
    %6895 = vmatmul.f32.gmra.mxu0 %v6815
    %v6896 = vpop.f32.mrf.mxu0
    %v6897 = vadd.f32 0.0, %v6896
    %6898 = vmatmul.f32.gmra.mxu0 %v6818
    %v6899 = vpop.f32.mrf.mxu0
    %v6900 = vadd.f32 0.0, %v6899
    %6901 = vmatmul.f32.gmra.mxu0 %v6821
    %v6902 = vpop.f32.mrf.mxu0
    %v6903 = vadd.f32 0.0, %v6902
    %6904 = vmatmul.f32.gmra.mxu0 %v6824
    %v6905 = vpop.f32.mrf.mxu0
    %6906 = vmatmul.f32.gmra.mxu0 %v6827
    %v6907 = vpop.f32.mrf.mxu0
    %v6908 = vadd.f32 0.0, %v6907
    %6909 = vmatmul.f32.gmra.mxu0 %v6830
    %v6910 = vpop.f32.mrf.mxu0
    %v6911 = vadd.f32 0.0, %v6910
    %6912 = vmatmul.f32.gmra.mxu0 %v6833
    %v6913 = vpop.f32.mrf.mxu0
    %v6914 = vadd.f32 0.0, %v6913
    %6915 = vmatmul.f32.gmra.mxu0 %v6836
    %v6916 = vpop.f32.mrf.mxu0
    %6917 = vmatmul.f32.gmra.mxu0 %v6839
    %v6918 = vpop.f32.mrf.mxu0
    %v6919 = vadd.f32 0.0, %v6918
    %6920 = vmatmul.f32.gmra.mxu0 %v6842
    %v6921 = vpop.f32.mrf.mxu0
    %v6922 = vadd.f32 0.0, %v6921
    %6923 = vmatmul.f32.gmra.mxu0 %v6845
    %v6924 = vpop.f32.mrf.mxu0
    %v6925 = vadd.f32 0.0, %v6924
    %6926 = vmatmul.f32.gmra.mxu0 %v6848
    %v6927 = vpop.f32.mrf.mxu0
    %6928 = vmatmul.f32.gmra.mxu0 %v6851
    %v6929 = vpop.f32.mrf.mxu0
    %v6930 = vadd.f32 0.0, %v6929
    %6931 = vmatmul.f32.gmra.mxu0 %v6854
    %v6932 = vpop.f32.mrf.mxu0
    %v6933 = vadd.f32 0.0, %v6932
    %6934 = vmatmul.f32.gmra.mxu0 %v6857
    %v6935 = vpop.f32.mrf.mxu0
    %v6936 = vadd.f32 0.0, %v6935
    %6937 = vmatmul.f32.gmra.mxu0 %v6860
    %v6938 = vpop.f32.mrf.mxu0
    %6939 = vmatmul.f32.gmra.mxu0 %v6863
    %v6940 = vpop.f32.mrf.mxu0
    %v6941 = vadd.f32 0.0, %v6940
    %6942 = vmatmul.f32.gmra.mxu0 %v6866
    %v6943 = vpop.f32.mrf.mxu0
    %v6944 = vadd.f32 0.0, %v6943
    %6945 = vdwg.mxu0
    %v6946 = vadd.f32 %v6763, %v6886
    %v6947 = vadd.f32 %v6764, %v6889
    %v6948 = vadd.f32 %v6765, %v6892
    %v6949 = vadd.f32 %v6766, %v6897
    %v6950 = vadd.f32 %v6767, %v6900
    %v6951 = vadd.f32 %v6768, %v6903
    %v6952 = vadd.f32 %v6769, %v6908
    %v6953 = vadd.f32 %v6770, %v6911
    %v6954 = vadd.f32 %v6771, %v6914
    %v6955 = vadd.f32 %v6772, %v6919
    %v6956 = vadd.f32 %v6773, %v6922
    %v6957 = vadd.f32 %v6774, %v6925
    %v6958 = vadd.f32 %v6775, %v6930
    %v6959 = vadd.f32 %v6776, %v6933
    %v6960 = vadd.f32 %v6777, %v6936
    %v6961 = vadd.f32 %v6778, %v6941
    %v6962 = vadd.f32 %v6779, %v6944
    %v6963 = vadd.f32 %v6946, %v3953
    %v6964 = vadd.f32 %v6947, %v3953
    %v6965 = vadd.f32 %v6948, %v3953
    %v6966 = vadd.f32 %v6949, %v3953
    %v6967 = vadd.f32 %v6950, %v3953
    %v6968 = vadd.f32 %v6951, %v3953
    %v6969 = vadd.f32 %v6952, %v3953
    %v6970 = vadd.f32 %v6953, %v3953
    %v6971 = vadd.f32 %v6954, %v3953
    %v6972 = vadd.f32 %v6955, %v3953
    %v6973 = vadd.f32 %v6956, %v3953
    %v6974 = vadd.f32 %v6957, %v3953
    %v6975 = vadd.f32 %v6958, %v3953
    %v6976 = vadd.f32 %v6959, %v3953
    %v6977 = vadd.f32 %v6960, %v3953
    %v6978 = vadd.f32 %v6961, %v3953
    %v6979 = vadd.f32 %v6962, %v3953
    %v6980 = vmax.f32 %v6963, 0.0
    %v6981 = vmax.f32 %v6964, 0.0
    %v6982 = vmax.f32 %v6965, 0.0
    %v6983 = vmax.f32 %v6966, 0.0
    %v6984 = vmax.f32 %v6967, 0.0
    %v6985 = vmax.f32 %v6968, 0.0
    %v6986 = vmax.f32 %v6969, 0.0
    %v6987 = vmax.f32 %v6970, 0.0
    %v6988 = vmax.f32 %v6971, 0.0
    %v6989 = vmax.f32 %v6972, 0.0
    %v6990 = vmax.f32 %v6973, 0.0
    %v6991 = vmax.f32 %v6974, 0.0
    %v6992 = vmax.f32 %v6975, 0.0
    %v6993 = vmax.f32 %v6976, 0.0
    %v6994 = vmax.f32 %v6977, 0.0
    %v6995 = vmax.f32 %v6978, 0.0
    %v6996 = vmax.f32 %v6979, 0.0
    %v7014 = vrot.slane %v6980, 2
    %v7015 = vrot.slane %v6981, 2
    %v7016 = vsel %vm4006, %v7014, %v7015
    %v7017 = vrot.slane %v6982, 2
    %v7018 = vsel %vm4006, %v7015, %v7017
    %v7019 = vrot.slane %v6983, 2
    %v7020 = vrot.slane %v6984, 2
    %v7021 = vsel %vm4006, %v7019, %v7020
    %v7022 = vrot.slane %v6985, 2
    %v7023 = vsel %vm4006, %v7020, %v7022
    %v7024 = vrot.slane %v6986, 2
    %v7025 = vrot.slane %v6987, 2
    %v7026 = vsel %vm4006, %v7024, %v7025
    %v7027 = vrot.slane %v6988, 2
    %v7028 = vsel %vm4006, %v7025, %v7027
    %v7029 = vrot.slane %v6989, 2
    %v7030 = vrot.slane %v6990, 2
    %v7031 = vsel %vm4006, %v7029, %v7030
    %v7032 = vrot.slane %v6991, 2
    %v7033 = vsel %vm4006, %v7030, %v7032
    %v7034 = vrot.slane %v6992, 2
    %v7035 = vrot.slane %v6993, 2
    %v7036 = vsel %vm4006, %v7034, %v7035
    %v7037 = vrot.slane %v6994, 2
    %v7038 = vsel %vm4006, %v7035, %v7037
    %v7039 = vrot.slane %v6995, 2
    %v7040 = vrot.slane %v6996, 2
    %v7041 = vsel %vm4006, %v7039, %v7040
    %v7054 = vmax.f32 %v6980, %v7016
    %v7055 = vmax.f32 %v6981, %v7018
    %v7056 = vmax.f32 %v6983, %v7021
    %v7057 = vmax.f32 %v6984, %v7023
    %v7058 = vmax.f32 %v6986, %v7026
    %v7059 = vmax.f32 %v6987, %v7028
    %v7060 = vmax.f32 %v6989, %v7031
    %v7061 = vmax.f32 %v6990, %v7033
    %v7062 = vmax.f32 %v6992, %v7036
    %v7063 = vmax.f32 %v6993, %v7038
    %v7064 = vmax.f32 %v6995, %v7041
    %v7065 = vmax.f32 %v6996, %v7040
    %v7066 = vmax.f32 %v7054, %v7056
    %v7067 = vmax.f32 %v7055, %v7057
    %v7068 = vmax.f32 %v7056, %v7058
    %v7069 = vmax.f32 %v7057, %v7059
    %v7070 = vmax.f32 %v7058, %v7060
    %v7071 = vmax.f32 %v7059, %v7061
    %v7072 = vmax.f32 %v7060, %v7062
    %v7073 = vmax.f32 %v7061, %v7063
    %v7074 = vmax.f32 %v7062, %v7064
    %v7075 = vmax.f32 %v7063, %v7065
    %v7077 = vrot.slane %v7066, 7
    %vm7079 = vcmask 1040384
    %v7080 = vsel %vm7079, %v4059, %v7077
    %v7081 = vld [vmem:[%s5] sm:$0xff]
    %v7082 = vld [vmem:[%s5 + $0x8] sm:$0xff]
    %v7083 = vld [vmem:[%s5 + $0x10] sm:$0xff]
    %v7084 = vld [vmem:[%s5 + $0x18] sm:$0xff]
    %v7086 = vrot.slane %v4059, 2
    %v7088 = vrot.slane %v7066, 1
    %v7090 = vsel %vm7079, %v7086, %v7088
    %v7091 = vld [vmem:[%s5 + $0x20] sm:$0xff]
    %v7092 = vld [vmem:[%s5 + $0x28] sm:$0xff]
    %v7093 = vld [vmem:[%s5 + $0x30] sm:$0xff]
    %v7094 = vld [vmem:[%s5 + $0x38] sm:$0xff]
    %vm7095 = vcmask 261120
    %v7097 = vsel %vm7095, %v7090, 0
    %7099 = vmatpush.msra.mxu0 0.0
    %7100 = vmatpush.msra.mxu0 0.0
    %7101 = vmatpush.msra.mxu0 0.0
    %7102 = vmatpush.msra.mxu0 0.0
    %7103 = vmatpush.msra.mxu0 0.0
    %7104 = vmatpush.msra.mxu0 0.0
    %7105 = vmatpush.msra.mxu0 0.0
    %7106 = vmatpush.msra.mxu0 0.0
    %7107 = vmatpush.msra.mxu0 0.0
    %7108 = vmatpush.msra.mxu0 0.0
    %7109 = vmatpush.msra.mxu0 0.0
    %7110 = vmatpush.msra.mxu0 0.0
    %7111 = vmatpush.msra.mxu0 %v7094
    %7112 = vmatpush.msra.mxu0 %v7093
    %7113 = vmatpush.msra.mxu0 %v7092
    %7114 = vmatpush.msra.mxu0 %v7091
    %7115 = vmatmul.f32.gmra.mxu0 %v7097
    %v7116 = vpop.f32.mrf.mxu0
    %v7117 = vadd.f32 0.0, %v7116
    %7118 = vdwg.mxu0
    %v7120 = vsel %vm7095, %v7080, 0
    %7122 = vmatpush.msra.mxu0 0.0
    %7123 = vmatpush.msra.mxu0 0.0
    %7124 = vmatpush.msra.mxu0 0.0
    %7125 = vmatpush.msra.mxu0 0.0
    %7126 = vmatpush.msra.mxu0 0.0
    %7127 = vmatpush.msra.mxu0 0.0
    %7128 = vmatpush.msra.mxu0 0.0
    %7129 = vmatpush.msra.mxu0 0.0
    %7130 = vmatpush.msra.mxu0 0.0
    %7131 = vmatpush.msra.mxu0 0.0
    %7132 = vmatpush.msra.mxu0 0.0
    %7133 = vmatpush.msra.mxu0 0.0
    %7134 = vmatpush.msra.mxu0 %v7084
    %7135 = vmatpush.msra.mxu0 %v7083
    %7136 = vmatpush.msra.mxu0 %v7082
    %7137 = vmatpush.msra.mxu0 %v7081
    %7138 = vmatmul.f32.gmra.mxu0 %v7120
    %v7139 = vpop.f32.mrf.mxu0
    %v7140 = vadd.f32 %v7117, %v7139
    %7141 = vdwg.mxu0
    %v7142 = vrot.slane %v4059, 4
    %v7144 = vrot.slane %v7066, 3
    %v7146 = vsel %vm7079, %v7142, %v7144
    %v7147 = vld [vmem:[%s5 + $0x40] sm:$0xff]
    %v7148 = vld [vmem:[%s5 + $0x48] sm:$0xff]
    %v7149 = vld [vmem:[%s5 + $0x50] sm:$0xff]
    %v7150 = vld [vmem:[%s5 + $0x58] sm:$0xff]
    %v7152 = vsel %vm7095, %v7146, 0
    %7154 = vmatpush.msra.mxu0 0.0
    %7155 = vmatpush.msra.mxu0 0.0
    %7156 = vmatpush.msra.mxu0 0.0
    %7157 = vmatpush.msra.mxu0 0.0
    %7158 = vmatpush.msra.mxu0 0.0
    %7159 = vmatpush.msra.mxu0 0.0
    %7160 = vmatpush.msra.mxu0 0.0
    %7161 = vmatpush.msra.mxu0 0.0
    %7162 = vmatpush.msra.mxu0 0.0
    %7163 = vmatpush.msra.mxu0 0.0
    %7164 = vmatpush.msra.mxu0 0.0
    %7165 = vmatpush.msra.mxu0 0.0
    %7166 = vmatpush.msra.mxu0 %v7150
    %7167 = vmatpush.msra.mxu0 %v7149
    %7168 = vmatpush.msra.mxu0 %v7148
    %7169 = vmatpush.msra.mxu0 %v7147
    %7170 = vmatmul.f32.gmra.mxu0 %v7152
    %v7171 = vpop.f32.mrf.mxu0
    %v7172 = vadd.f32 0.0, %v7171
    %7173 = vdwg.mxu0
    %v7174 = vadd.f32 %v7140, %v7172
    %v7175 = vrot.slane %v4059, 6
    %v7177 = vrot.slane %v7066, 5
    %v7179 = vsel %vm7079, %v7175, %v7177
    %v7180 = vld [vmem:[%s5 + $0x60] sm:$0xff]
    %v7181 = vld [vmem:[%s5 + $0x68] sm:$0xff]
    %v7182 = vld [vmem:[%s5 + $0x70] sm:$0xff]
    %v7183 = vld [vmem:[%s5 + $0x78] sm:$0xff]
    %v7185 = vsel %vm7095, %v7179, 0
    %7187 = vmatpush.msra.mxu0 0.0
    %7188 = vmatpush.msra.mxu0 0.0
    %7189 = vmatpush.msra.mxu0 0.0
    %7190 = vmatpush.msra.mxu0 0.0
    %7191 = vmatpush.msra.mxu0 0.0
    %7192 = vmatpush.msra.mxu0 0.0
    %7193 = vmatpush.msra.mxu0 0.0
    %7194 = vmatpush.msra.mxu0 0.0
    %7195 = vmatpush.msra.mxu0 0.0
    %7196 = vmatpush.msra.mxu0 0.0
    %7197 = vmatpush.msra.mxu0 0.0
    %7198 = vmatpush.msra.mxu0 0.0
    %7199 = vmatpush.msra.mxu0 %v7183
    %7200 = vmatpush.msra.mxu0 %v7182
    %7201 = vmatpush.msra.mxu0 %v7181
    %7202 = vmatpush.msra.mxu0 %v7180
    %7203 = vmatmul.f32.gmra.mxu0 %v7185
    %v7204 = vpop.f32.mrf.mxu0
    %v7205 = vadd.f32 0.0, %v7204
    %7206 = vdwg.mxu0
    %v7207 = vadd.f32 %v7174, %v7205
    %v7209 = vrot.slane %v7067, 7
    %v7211 = vsel %vm7079, %v4060, %v7209
    %v7212 = vld [vmem:[%s5 + $0x80] sm:$0xff]
    %v7213 = vld [vmem:[%s5 + $0x88] sm:$0xff]
    %v7214 = vld [vmem:[%s5 + $0x90] sm:$0xff]
    %v7215 = vld [vmem:[%s5 + $0x98] sm:$0xff]
    %v7217 = vsel %vm7095, %v7211, 0
    %7219 = vmatpush.msra.mxu0 0.0
    %7220 = vmatpush.msra.mxu0 0.0
    %7221 = vmatpush.msra.mxu0 0.0
    %7222 = vmatpush.msra.mxu0 0.0
    %7223 = vmatpush.msra.mxu0 0.0
    %7224 = vmatpush.msra.mxu0 0.0
    %7225 = vmatpush.msra.mxu0 0.0
    %7226 = vmatpush.msra.mxu0 0.0
    %7227 = vmatpush.msra.mxu0 0.0
    %7228 = vmatpush.msra.mxu0 0.0
    %7229 = vmatpush.msra.mxu0 0.0
    %7230 = vmatpush.msra.mxu0 0.0
    %7231 = vmatpush.msra.mxu0 %v7215
    %7232 = vmatpush.msra.mxu0 %v7214
    %7233 = vmatpush.msra.mxu0 %v7213
    %7234 = vmatpush.msra.mxu0 %v7212
    %7235 = vmatmul.f32.gmra.mxu0 %v7217
    %v7236 = vpop.f32.mrf.mxu0
    %v7237 = vadd.f32 0.0, %v7236
    %7238 = vdwg.mxu0
    %v7239 = vadd.f32 %v7207, %v7237
    %v7241 = vrot.slane %v7068, 7
    %v7243 = vsel %vm7079, %v4061, %v7241
    %v7244 = vld [vmem:[%s5 + $0xa0] sm:$0xff]
    %v7245 = vld [vmem:[%s5 + $0xa8] sm:$0xff]
    %v7246 = vld [vmem:[%s5 + $0xb0] sm:$0xff]
    %v7247 = vld [vmem:[%s5 + $0xb8] sm:$0xff]
    %v7249 = vsel %vm7095, %v7243, 0
    %7251 = vmatpush.msra.mxu0 0.0
    %7252 = vmatpush.msra.mxu0 0.0
    %7253 = vmatpush.msra.mxu0 0.0
    %7254 = vmatpush.msra.mxu0 0.0
    %7255 = vmatpush.msra.mxu0 0.0
    %7256 = vmatpush.msra.mxu0 0.0
    %7257 = vmatpush.msra.mxu0 0.0
    %7258 = vmatpush.msra.mxu0 0.0
    %7259 = vmatpush.msra.mxu0 0.0
    %7260 = vmatpush.msra.mxu0 0.0
    %7261 = vmatpush.msra.mxu0 0.0
    %7262 = vmatpush.msra.mxu0 0.0
    %7263 = vmatpush.msra.mxu0 %v7247
    %7264 = vmatpush.msra.mxu0 %v7246
    %7265 = vmatpush.msra.mxu0 %v7245
    %7266 = vmatpush.msra.mxu0 %v7244
    %7267 = vmatmul.f32.gmra.mxu0 %v7249
    %v7268 = vpop.f32.mrf.mxu0
    %v7269 = vadd.f32 0.0, %v7268
    %7270 = vdwg.mxu0
    %v7271 = vadd.f32 %v7239, %v7269
    %v7273 = vrot.slane %v4061, 2
    %v7275 = vrot.slane %v7068, 1
    %v7277 = vsel %vm7079, %v7273, %v7275
    %v7278 = vld [vmem:[%s5 + $0xc0] sm:$0xff]
    %v7279 = vld [vmem:[%s5 + $0xc8] sm:$0xff]
    %v7280 = vld [vmem:[%s5 + $0xd0] sm:$0xff]
    %v7281 = vld [vmem:[%s5 + $0xd8] sm:$0xff]
    %v7283 = vsel %vm7095, %v7277, 0
    %7285 = vmatpush.msra.mxu0 0.0
    %7286 = vmatpush.msra.mxu0 0.0
    %7287 = vmatpush.msra.mxu0 0.0
    %7288 = vmatpush.msra.mxu0 0.0
    %7289 = vmatpush.msra.mxu0 0.0
    %7290 = vmatpush.msra.mxu0 0.0
    %7291 = vmatpush.msra.mxu0 0.0
    %7292 = vmatpush.msra.mxu0 0.0
    %7293 = vmatpush.msra.mxu0 0.0
    %7294 = vmatpush.msra.mxu0 0.0
    %7295 = vmatpush.msra.mxu0 0.0
    %7296 = vmatpush.msra.mxu0 0.0
    %7297 = vmatpush.msra.mxu0 %v7281
    %7298 = vmatpush.msra.mxu0 %v7280
    %7299 = vmatpush.msra.mxu0 %v7279
    %7300 = vmatpush.msra.mxu0 %v7278
    %7301 = vmatmul.f32.gmra.mxu0 %v7283
    %v7302 = vpop.f32.mrf.mxu0
    %v7303 = vadd.f32 0.0, %v7302
    %7304 = vdwg.mxu0
    %v7305 = vadd.f32 %v7271, %v7303
    %v7306 = vrot.slane %v4061, 4
    %v7308 = vrot.slane %v7068, 3
    %v7310 = vsel %vm7079, %v7306, %v7308
    %v7311 = vld [vmem:[%s5 + $0xe0] sm:$0xff]
    %v7312 = vld [vmem:[%s5 + $0xe8] sm:$0xff]
    %v7313 = vld [vmem:[%s5 + $0xf0] sm:$0xff]
    %v7314 = vld [vmem:[%s5 + $0xf8] sm:$0xff]
    %v7316 = vsel %vm7095, %v7310, 0
    %7318 = vmatpush.msra.mxu0 0.0
    %7319 = vmatpush.msra.mxu0 0.0
    %7320 = vmatpush.msra.mxu0 0.0
    %7321 = vmatpush.msra.mxu0 0.0
    %7322 = vmatpush.msra.mxu0 0.0
    %7323 = vmatpush.msra.mxu0 0.0
    %7324 = vmatpush.msra.mxu0 0.0
    %7325 = vmatpush.msra.mxu0 0.0
    %7326 = vmatpush.msra.mxu0 0.0
    %7327 = vmatpush.msra.mxu0 0.0
    %7328 = vmatpush.msra.mxu0 0.0
    %7329 = vmatpush.msra.mxu0 0.0
    %7330 = vmatpush.msra.mxu0 %v7314
    %7331 = vmatpush.msra.mxu0 %v7313
    %7332 = vmatpush.msra.mxu0 %v7312
    %7333 = vmatpush.msra.mxu0 %v7311
    %7334 = vmatmul.f32.gmra.mxu0 %v7316
    %v7335 = vpop.f32.mrf.mxu0
    %v7336 = vadd.f32 0.0, %v7335
    %7337 = vdwg.mxu0
    %v7338 = vadd.f32 %v7305, %v7336
    %v7339 = vrot.slane %v4061, 6
    %v7341 = vrot.slane %v7068, 5
    %v7343 = vsel %vm7079, %v7339, %v7341
    %v7344 = vld [vmem:[%s5 + $0x100] sm:$0xff]
    %v7345 = vld [vmem:[%s5 + $0x108] sm:$0xff]
    %v7346 = vld [vmem:[%s5 + $0x110] sm:$0xff]
    %v7347 = vld [vmem:[%s5 + $0x118] sm:$0xff]
    %v7349 = vsel %vm7095, %v7343, 0
    %7351 = vmatpush.msra.mxu0 0.0
    %7352 = vmatpush.msra.mxu0 0.0
    %7353 = vmatpush.msra.mxu0 0.0
    %7354 = vmatpush.msra.mxu0 0.0
    %7355 = vmatpush.msra.mxu0 0.0
    %7356 = vmatpush.msra.mxu0 0.0
    %7357 = vmatpush.msra.mxu0 0.0
    %7358 = vmatpush.msra.mxu0 0.0
    %7359 = vmatpush.msra.mxu0 0.0
    %7360 = vmatpush.msra.mxu0 0.0
    %7361 = vmatpush.msra.mxu0 0.0
    %7362 = vmatpush.msra.mxu0 0.0
    %7363 = vmatpush.msra.mxu0 %v7347
    %7364 = vmatpush.msra.mxu0 %v7346
    %7365 = vmatpush.msra.mxu0 %v7345
    %7366 = vmatpush.msra.mxu0 %v7344
    %7367 = vmatmul.f32.gmra.mxu0 %v7349
    %v7368 = vpop.f32.mrf.mxu0
    %v7369 = vadd.f32 0.0, %v7368
    %7370 = vdwg.mxu0
    %v7371 = vadd.f32 %v7338, %v7369
    %v7373 = vrot.slane %v7069, 7
    %v7375 = vsel %vm7079, %v4062, %v7373
    %v7376 = vld [vmem:[%s5 + $0x120] sm:$0xff]
    %v7377 = vld [vmem:[%s5 + $0x128] sm:$0xff]
    %v7378 = vld [vmem:[%s5 + $0x130] sm:$0xff]
    %v7379 = vld [vmem:[%s5 + $0x138] sm:$0xff]
    %v7381 = vsel %vm7095, %v7375, 0
    %7383 = vmatpush.msra.mxu0 0.0
    %7384 = vmatpush.msra.mxu0 0.0
    %7385 = vmatpush.msra.mxu0 0.0
    %7386 = vmatpush.msra.mxu0 0.0
    %7387 = vmatpush.msra.mxu0 0.0
    %7388 = vmatpush.msra.mxu0 0.0
    %7389 = vmatpush.msra.mxu0 0.0
    %7390 = vmatpush.msra.mxu0 0.0
    %7391 = vmatpush.msra.mxu0 0.0
    %7392 = vmatpush.msra.mxu0 0.0
    %7393 = vmatpush.msra.mxu0 0.0
    %7394 = vmatpush.msra.mxu0 0.0
    %7395 = vmatpush.msra.mxu0 %v7379
    %7396 = vmatpush.msra.mxu0 %v7378
    %7397 = vmatpush.msra.mxu0 %v7377
    %7398 = vmatpush.msra.mxu0 %v7376
    %7399 = vmatmul.f32.gmra.mxu0 %v7381
    %v7400 = vpop.f32.mrf.mxu0
    %v7401 = vadd.f32 0.0, %v7400
    %7402 = vdwg.mxu0
    %v7403 = vadd.f32 %v7371, %v7401
    %v7405 = vrot.slane %v7070, 7
    %v7407 = vsel %vm7079, %v4063, %v7405
    %v7408 = vld [vmem:[%s5 + $0x140] sm:$0xff]
    %v7409 = vld [vmem:[%s5 + $0x148] sm:$0xff]
    %v7410 = vld [vmem:[%s5 + $0x150] sm:$0xff]
    %v7411 = vld [vmem:[%s5 + $0x158] sm:$0xff]
    %v7413 = vsel %vm7095, %v7407, 0
    %7415 = vmatpush.msra.mxu0 0.0
    %7416 = vmatpush.msra.mxu0 0.0
    %7417 = vmatpush.msra.mxu0 0.0
    %7418 = vmatpush.msra.mxu0 0.0
    %7419 = vmatpush.msra.mxu0 0.0
    %7420 = vmatpush.msra.mxu0 0.0
    %7421 = vmatpush.msra.mxu0 0.0
    %7422 = vmatpush.msra.mxu0 0.0
    %7423 = vmatpush.msra.mxu0 0.0
    %7424 = vmatpush.msra.mxu0 0.0
    %7425 = vmatpush.msra.mxu0 0.0
    %7426 = vmatpush.msra.mxu0 0.0
    %7427 = vmatpush.msra.mxu0 %v7411
    %7428 = vmatpush.msra.mxu0 %v7410
    %7429 = vmatpush.msra.mxu0 %v7409
    %7430 = vmatpush.msra.mxu0 %v7408
    %7431 = vmatmul.f32.gmra.mxu0 %v7413
    %v7432 = vpop.f32.mrf.mxu0
    %v7433 = vadd.f32 0.0, %v7432
    %7434 = vdwg.mxu0
    %v7435 = vadd.f32 %v7403, %v7433
    %v7437 = vrot.slane %v4063, 2
    %v7439 = vrot.slane %v7070, 1
    %v7441 = vsel %vm7079, %v7437, %v7439
    %v7442 = vld [vmem:[%s5 + $0x160] sm:$0xff]
    %v7443 = vld [vmem:[%s5 + $0x168] sm:$0xff]
    %v7444 = vld [vmem:[%s5 + $0x170] sm:$0xff]
    %v7445 = vld [vmem:[%s5 + $0x178] sm:$0xff]
    %v7447 = vsel %vm7095, %v7441, 0
    %7449 = vmatpush.msra.mxu0 0.0
    %7450 = vmatpush.msra.mxu0 0.0
    %7451 = vmatpush.msra.mxu0 0.0
    %7452 = vmatpush.msra.mxu0 0.0
    %7453 = vmatpush.msra.mxu0 0.0
    %7454 = vmatpush.msra.mxu0 0.0
    %7455 = vmatpush.msra.mxu0 0.0
    %7456 = vmatpush.msra.mxu0 0.0
    %7457 = vmatpush.msra.mxu0 0.0
    %7458 = vmatpush.msra.mxu0 0.0
    %7459 = vmatpush.msra.mxu0 0.0
    %7460 = vmatpush.msra.mxu0 0.0
    %7461 = vmatpush.msra.mxu0 %v7445
    %7462 = vmatpush.msra.mxu0 %v7444
    %7463 = vmatpush.msra.mxu0 %v7443
    %7464 = vmatpush.msra.mxu0 %v7442
    %7465 = vmatmul.f32.gmra.mxu0 %v7447
    %v7466 = vpop.f32.mrf.mxu0
    %v7467 = vadd.f32 0.0, %v7466
    %7468 = vdwg.mxu0
    %v7469 = vadd.f32 %v7435, %v7467
    %v7470 = vrot.slane %v4063, 4
    %v7472 = vrot.slane %v7070, 3
    %v7474 = vsel %vm7079, %v7470, %v7472
    %v7475 = vld [vmem:[%s5 + $0x180] sm:$0xff]
    %v7476 = vld [vmem:[%s5 + $0x188] sm:$0xff]
    %v7477 = vld [vmem:[%s5 + $0x190] sm:$0xff]
    %v7478 = vld [vmem:[%s5 + $0x198] sm:$0xff]
    %v7480 = vsel %vm7095, %v7474, 0
    %7482 = vmatpush.msra.mxu0 0.0
    %7483 = vmatpush.msra.mxu0 0.0
    %7484 = vmatpush.msra.mxu0 0.0
    %7485 = vmatpush.msra.mxu0 0.0
    %7486 = vmatpush.msra.mxu0 0.0
    %7487 = vmatpush.msra.mxu0 0.0
    %7488 = vmatpush.msra.mxu0 0.0
    %7489 = vmatpush.msra.mxu0 0.0
    %7490 = vmatpush.msra.mxu0 0.0
    %7491 = vmatpush.msra.mxu0 0.0
    %7492 = vmatpush.msra.mxu0 0.0
    %7493 = vmatpush.msra.mxu0 0.0
    %7494 = vmatpush.msra.mxu0 %v7478
    %7495 = vmatpush.msra.mxu0 %v7477
    %7496 = vmatpush.msra.mxu0 %v7476
    %7497 = vmatpush.msra.mxu0 %v7475
    %7498 = vmatmul.f32.gmra.mxu0 %v7480
    %v7499 = vpop.f32.mrf.mxu0
    %v7500 = vadd.f32 0.0, %v7499
    %7501 = vdwg.mxu0
    %v7502 = vadd.f32 %v7469, %v7500
    %v7503 = vrot.slane %v4063, 6
    %v7505 = vrot.slane %v7070, 5
    %v7507 = vsel %vm7079, %v7503, %v7505
    %v7508 = vld [vmem:[%s5 + $0x1a0] sm:$0xff]
    %v7509 = vld [vmem:[%s5 + $0x1a8] sm:$0xff]
    %v7510 = vld [vmem:[%s5 + $0x1b0] sm:$0xff]
    %v7511 = vld [vmem:[%s5 + $0x1b8] sm:$0xff]
    %v7513 = vsel %vm7095, %v7507, 0
    %7515 = vmatpush.msra.mxu0 0.0
    %7516 = vmatpush.msra.mxu0 0.0
    %7517 = vmatpush.msra.mxu0 0.0
    %7518 = vmatpush.msra.mxu0 0.0
    %7519 = vmatpush.msra.mxu0 0.0
    %7520 = vmatpush.msra.mxu0 0.0
    %7521 = vmatpush.msra.mxu0 0.0
    %7522 = vmatpush.msra.mxu0 0.0
    %7523 = vmatpush.msra.mxu0 0.0
    %7524 = vmatpush.msra.mxu0 0.0
    %7525 = vmatpush.msra.mxu0 0.0
    %7526 = vmatpush.msra.mxu0 0.0
    %7527 = vmatpush.msra.mxu0 %v7511
    %7528 = vmatpush.msra.mxu0 %v7510
    %7529 = vmatpush.msra.mxu0 %v7509
    %7530 = vmatpush.msra.mxu0 %v7508
    %7531 = vmatmul.f32.gmra.mxu0 %v7513
    %v7532 = vpop.f32.mrf.mxu0
    %v7533 = vadd.f32 0.0, %v7532
    %7534 = vdwg.mxu0
    %v7535 = vadd.f32 %v7502, %v7533
    %v7537 = vrot.slane %v7071, 7
    %v7539 = vsel %vm7079, %v4064, %v7537
    %v7540 = vld [vmem:[%s5 + $0x1c0] sm:$0xff]
    %v7541 = vld [vmem:[%s5 + $0x1c8] sm:$0xff]
    %v7542 = vld [vmem:[%s5 + $0x1d0] sm:$0xff]
    %v7543 = vld [vmem:[%s5 + $0x1d8] sm:$0xff]
    %v7545 = vsel %vm7095, %v7539, 0
    %7547 = vmatpush.msra.mxu0 0.0
    %7548 = vmatpush.msra.mxu0 0.0
    %7549 = vmatpush.msra.mxu0 0.0
    %7550 = vmatpush.msra.mxu0 0.0
    %7551 = vmatpush.msra.mxu0 0.0
    %7552 = vmatpush.msra.mxu0 0.0
    %7553 = vmatpush.msra.mxu0 0.0
    %7554 = vmatpush.msra.mxu0 0.0
    %7555 = vmatpush.msra.mxu0 0.0
    %7556 = vmatpush.msra.mxu0 0.0
    %7557 = vmatpush.msra.mxu0 0.0
    %7558 = vmatpush.msra.mxu0 0.0
    %7559 = vmatpush.msra.mxu0 %v7543
    %7560 = vmatpush.msra.mxu0 %v7542
    %7561 = vmatpush.msra.mxu0 %v7541
    %7562 = vmatpush.msra.mxu0 %v7540
    %7563 = vmatmul.f32.gmra.mxu0 %v7545
    %v7564 = vpop.f32.mrf.mxu0
    %v7565 = vadd.f32 0.0, %v7564
    %7566 = vdwg.mxu0
    %v7567 = vadd.f32 %v7535, %v7565
    %v7569 = vrot.slane %v7072, 7
    %v7571 = vsel %vm7079, %v4065, %v7569
    %v7572 = vld [vmem:[%s5 + $0x1e0] sm:$0xff]
    %v7573 = vld [vmem:[%s5 + $0x1e8] sm:$0xff]
    %v7574 = vld [vmem:[%s5 + $0x1f0] sm:$0xff]
    %v7575 = vld [vmem:[%s5 + $0x1f8] sm:$0xff]
    %v7577 = vsel %vm7095, %v7571, 0
    %7579 = vmatpush.msra.mxu0 0.0
    %7580 = vmatpush.msra.mxu0 0.0
    %7581 = vmatpush.msra.mxu0 0.0
    %7582 = vmatpush.msra.mxu0 0.0
    %7583 = vmatpush.msra.mxu0 0.0
    %7584 = vmatpush.msra.mxu0 0.0
    %7585 = vmatpush.msra.mxu0 0.0
    %7586 = vmatpush.msra.mxu0 0.0
    %7587 = vmatpush.msra.mxu0 0.0
    %7588 = vmatpush.msra.mxu0 0.0
    %7589 = vmatpush.msra.mxu0 0.0
    %7590 = vmatpush.msra.mxu0 0.0
    %7591 = vmatpush.msra.mxu0 %v7575
    %7592 = vmatpush.msra.mxu0 %v7574
    %7593 = vmatpush.msra.mxu0 %v7573
    %7594 = vmatpush.msra.mxu0 %v7572
    %7595 = vmatmul.f32.gmra.mxu0 %v7577
    %v7596 = vpop.f32.mrf.mxu0
    %v7597 = vadd.f32 0.0, %v7596
    %7598 = vdwg.mxu0
    %v7599 = vadd.f32 %v7567, %v7597
    %v7601 = vrot.slane %v4065, 2
    %v7603 = vrot.slane %v7072, 1
    %v7605 = vsel %vm7079, %v7601, %v7603
    %v7606 = vld [vmem:[%s5 + $0x200] sm:$0xff]
    %v7607 = vld [vmem:[%s5 + $0x208] sm:$0xff]
    %v7608 = vld [vmem:[%s5 + $0x210] sm:$0xff]
    %v7609 = vld [vmem:[%s5 + $0x218] sm:$0xff]
    %v7611 = vsel %vm7095, %v7605, 0
    %7613 = vmatpush.msra.mxu0 0.0
    %7614 = vmatpush.msra.mxu0 0.0
    %7615 = vmatpush.msra.mxu0 0.0
    %7616 = vmatpush.msra.mxu0 0.0
    %7617 = vmatpush.msra.mxu0 0.0
    %7618 = vmatpush.msra.mxu0 0.0
    %7619 = vmatpush.msra.mxu0 0.0
    %7620 = vmatpush.msra.mxu0 0.0
    %7621 = vmatpush.msra.mxu0 0.0
    %7622 = vmatpush.msra.mxu0 0.0
    %7623 = vmatpush.msra.mxu0 0.0
    %7624 = vmatpush.msra.mxu0 0.0
    %7625 = vmatpush.msra.mxu0 %v7609
    %7626 = vmatpush.msra.mxu0 %v7608
    %7627 = vmatpush.msra.mxu0 %v7607
    %7628 = vmatpush.msra.mxu0 %v7606
    %7629 = vmatmul.f32.gmra.mxu0 %v7611
    %v7630 = vpop.f32.mrf.mxu0
    %v7631 = vadd.f32 0.0, %v7630
    %7632 = vdwg.mxu0
    %v7633 = vadd.f32 %v7599, %v7631
    %v7634 = vrot.slane %v4065, 4
    %v7636 = vrot.slane %v7072, 3
    %v7638 = vsel %vm7079, %v7634, %v7636
    %v7639 = vld [vmem:[%s5 + $0x220] sm:$0xff]
    %v7640 = vld [vmem:[%s5 + $0x228] sm:$0xff]
    %v7641 = vld [vmem:[%s5 + $0x230] sm:$0xff]
    %v7642 = vld [vmem:[%s5 + $0x238] sm:$0xff]
    %v7644 = vsel %vm7095, %v7638, 0
    %7646 = vmatpush.msra.mxu0 0.0
    %7647 = vmatpush.msra.mxu0 0.0
    %7648 = vmatpush.msra.mxu0 0.0
    %7649 = vmatpush.msra.mxu0 0.0
    %7650 = vmatpush.msra.mxu0 0.0
    %7651 = vmatpush.msra.mxu0 0.0
    %7652 = vmatpush.msra.mxu0 0.0
    %7653 = vmatpush.msra.mxu0 0.0
    %7654 = vmatpush.msra.mxu0 0.0
    %7655 = vmatpush.msra.mxu0 0.0
    %7656 = vmatpush.msra.mxu0 0.0
    %7657 = vmatpush.msra.mxu0 0.0
    %7658 = vmatpush.msra.mxu0 %v7642
    %7659 = vmatpush.msra.mxu0 %v7641
    %7660 = vmatpush.msra.mxu0 %v7640
    %7661 = vmatpush.msra.mxu0 %v7639
    %7662 = vmatmul.f32.gmra.mxu0 %v7644
    %v7663 = vpop.f32.mrf.mxu0
    %v7664 = vadd.f32 0.0, %v7663
    %7665 = vdwg.mxu0
    %v7666 = vadd.f32 %v7633, %v7664
    %v7667 = vrot.slane %v4065, 6
    %v7669 = vrot.slane %v7072, 5
    %v7671 = vsel %vm7079, %v7667, %v7669
    %v7672 = vld [vmem:[%s5 + $0x240] sm:$0xff]
    %v7673 = vld [vmem:[%s5 + $0x248] sm:$0xff]
    %v7674 = vld [vmem:[%s5 + $0x250] sm:$0xff]
    %v7675 = vld [vmem:[%s5 + $0x258] sm:$0xff]
    %v7677 = vsel %vm7095, %v7671, 0
    %7679 = vmatpush.msra.mxu0 0.0
    %7680 = vmatpush.msra.mxu0 0.0
    %7681 = vmatpush.msra.mxu0 0.0
    %7682 = vmatpush.msra.mxu0 0.0
    %7683 = vmatpush.msra.mxu0 0.0
    %7684 = vmatpush.msra.mxu0 0.0
    %7685 = vmatpush.msra.mxu0 0.0
    %7686 = vmatpush.msra.mxu0 0.0
    %7687 = vmatpush.msra.mxu0 0.0
    %7688 = vmatpush.msra.mxu0 0.0
    %7689 = vmatpush.msra.mxu0 0.0
    %7690 = vmatpush.msra.mxu0 0.0
    %7691 = vmatpush.msra.mxu0 %v7675
    %7692 = vmatpush.msra.mxu0 %v7674
    %7693 = vmatpush.msra.mxu0 %v7673
    %7694 = vmatpush.msra.mxu0 %v7672
    %7695 = vmatmul.f32.gmra.mxu0 %v7677
    %v7696 = vpop.f32.mrf.mxu0
    %v7697 = vadd.f32 0.0, %v7696
    %7698 = vdwg.mxu0
    %v7699 = vadd.f32 %v7666, %v7697
    %v7701 = vrot.slane %v7073, 7
    %v7703 = vsel %vm7079, %v4066, %v7701
    %v7704 = vld [vmem:[%s5 + $0x260] sm:$0xff]
    %v7705 = vld [vmem:[%s5 + $0x268] sm:$0xff]
    %v7706 = vld [vmem:[%s5 + $0x270] sm:$0xff]
    %v7707 = vld [vmem:[%s5 + $0x278] sm:$0xff]
    %v7709 = vsel %vm7095, %v7703, 0
    %7711 = vmatpush.msra.mxu0 0.0
    %7712 = vmatpush.msra.mxu0 0.0
    %7713 = vmatpush.msra.mxu0 0.0
    %7714 = vmatpush.msra.mxu0 0.0
    %7715 = vmatpush.msra.mxu0 0.0
    %7716 = vmatpush.msra.mxu0 0.0
    %7717 = vmatpush.msra.mxu0 0.0
    %7718 = vmatpush.msra.mxu0 0.0
    %7719 = vmatpush.msra.mxu0 0.0
    %7720 = vmatpush.msra.mxu0 0.0
    %7721 = vmatpush.msra.mxu0 0.0
    %7722 = vmatpush.msra.mxu0 0.0
    %7723 = vmatpush.msra.mxu0 %v7707
    %7724 = vmatpush.msra.mxu0 %v7706
    %7725 = vmatpush.msra.mxu0 %v7705
    %7726 = vmatpush.msra.mxu0 %v7704
    %7727 = vmatmul.f32.gmra.mxu0 %v7709
    %v7728 = vpop.f32.mrf.mxu0
    %v7729 = vadd.f32 0.0, %v7728
    %7730 = vdwg.mxu0
    %v7731 = vadd.f32 %v7699, %v7729
    %v7733 = vrot.slane %v7074, 7
    %v7735 = vsel %vm7079, %v4067, %v7733
    %v7736 = vld [vmem:[%s5 + $0x280] sm:$0xff]
    %v7737 = vld [vmem:[%s5 + $0x288] sm:$0xff]
    %v7738 = vld [vmem:[%s5 + $0x290] sm:$0xff]
    %v7739 = vld [vmem:[%s5 + $0x298] sm:$0xff]
    %v7741 = vsel %vm7095, %v7735, 0
    %7743 = vmatpush.msra.mxu0 0.0
    %7744 = vmatpush.msra.mxu0 0.0
    %7745 = vmatpush.msra.mxu0 0.0
    %7746 = vmatpush.msra.mxu0 0.0
    %7747 = vmatpush.msra.mxu0 0.0
    %7748 = vmatpush.msra.mxu0 0.0
    %7749 = vmatpush.msra.mxu0 0.0
    %7750 = vmatpush.msra.mxu0 0.0
    %7751 = vmatpush.msra.mxu0 0.0
    %7752 = vmatpush.msra.mxu0 0.0
    %7753 = vmatpush.msra.mxu0 0.0
    %7754 = vmatpush.msra.mxu0 0.0
    %7755 = vmatpush.msra.mxu0 %v7739
    %7756 = vmatpush.msra.mxu0 %v7738
    %7757 = vmatpush.msra.mxu0 %v7737
    %7758 = vmatpush.msra.mxu0 %v7736
    %7759 = vmatmul.f32.gmra.mxu0 %v7741
    %v7760 = vpop.f32.mrf.mxu0
    %v7761 = vadd.f32 0.0, %v7760
    %7762 = vdwg.mxu0
    %v7763 = vadd.f32 %v7731, %v7761
    %v7765 = vrot.slane %v4067, 2
    %v7767 = vrot.slane %v7074, 1
    %v7769 = vsel %vm7079, %v7765, %v7767
    %v7770 = vld [vmem:[%s5 + $0x2a0] sm:$0xff]
    %v7771 = vld [vmem:[%s5 + $0x2a8] sm:$0xff]
    %v7772 = vld [vmem:[%s5 + $0x2b0] sm:$0xff]
    %v7773 = vld [vmem:[%s5 + $0x2b8] sm:$0xff]
    %v7775 = vsel %vm7095, %v7769, 0
    %7777 = vmatpush.msra.mxu0 0.0
    %7778 = vmatpush.msra.mxu0 0.0
    %7779 = vmatpush.msra.mxu0 0.0
    %7780 = vmatpush.msra.mxu0 0.0
    %7781 = vmatpush.msra.mxu0 0.0
    %7782 = vmatpush.msra.mxu0 0.0
    %7783 = vmatpush.msra.mxu0 0.0
    %7784 = vmatpush.msra.mxu0 0.0
    %7785 = vmatpush.msra.mxu0 0.0
    %7786 = vmatpush.msra.mxu0 0.0
    %7787 = vmatpush.msra.mxu0 0.0
    %7788 = vmatpush.msra.mxu0 0.0
    %7789 = vmatpush.msra.mxu0 %v7773
    %7790 = vmatpush.msra.mxu0 %v7772
    %7791 = vmatpush.msra.mxu0 %v7771
    %7792 = vmatpush.msra.mxu0 %v7770
    %7793 = vmatmul.f32.gmra.mxu0 %v7775
    %v7794 = vpop.f32.mrf.mxu0
    %v7795 = vadd.f32 0.0, %v7794
    %7796 = vdwg.mxu0
    %v7797 = vadd.f32 %v7763, %v7795
    %v7798 = vrot.slane %v4067, 4
    %v7800 = vrot.slane %v7074, 3
    %v7802 = vsel %vm7079, %v7798, %v7800
    %v7803 = vld [vmem:[%s5 + $0x2c0] sm:$0xff]
    %v7804 = vld [vmem:[%s5 + $0x2c8] sm:$0xff]
    %v7805 = vld [vmem:[%s5 + $0x2d0] sm:$0xff]
    %v7806 = vld [vmem:[%s5 + $0x2d8] sm:$0xff]
    %v7808 = vsel %vm7095, %v7802, 0
    %7810 = vmatpush.msra.mxu0 0.0
    %7811 = vmatpush.msra.mxu0 0.0
    %7812 = vmatpush.msra.mxu0 0.0
    %7813 = vmatpush.msra.mxu0 0.0
    %7814 = vmatpush.msra.mxu0 0.0
    %7815 = vmatpush.msra.mxu0 0.0
    %7816 = vmatpush.msra.mxu0 0.0
    %7817 = vmatpush.msra.mxu0 0.0
    %7818 = vmatpush.msra.mxu0 0.0
    %7819 = vmatpush.msra.mxu0 0.0
    %7820 = vmatpush.msra.mxu0 0.0
    %7821 = vmatpush.msra.mxu0 0.0
    %7822 = vmatpush.msra.mxu0 %v7806
    %7823 = vmatpush.msra.mxu0 %v7805
    %7824 = vmatpush.msra.mxu0 %v7804
    %7825 = vmatpush.msra.mxu0 %v7803
    %7826 = vmatmul.f32.gmra.mxu0 %v7808
    %v7827 = vpop.f32.mrf.mxu0
    %v7828 = vadd.f32 0.0, %v7827
    %7829 = vdwg.mxu0
    %v7830 = vadd.f32 %v7797, %v7828
    %v7831 = vrot.slane %v4067, 6
    %v7833 = vrot.slane %v7074, 5
    %v7835 = vsel %vm7079, %v7831, %v7833
    %v7836 = vld [vmem:[%s5 + $0x2e0] sm:$0xff]
    %v7837 = vld [vmem:[%s5 + $0x2e8] sm:$0xff]
    %v7838 = vld [vmem:[%s5 + $0x2f0] sm:$0xff]
    %v7839 = vld [vmem:[%s5 + $0x2f8] sm:$0xff]
    %v7841 = vsel %vm7095, %v7835, 0
    %7843 = vmatpush.msra.mxu0 0.0
    %7844 = vmatpush.msra.mxu0 0.0
    %7845 = vmatpush.msra.mxu0 0.0
    %7846 = vmatpush.msra.mxu0 0.0
    %7847 = vmatpush.msra.mxu0 0.0
    %7848 = vmatpush.msra.mxu0 0.0
    %7849 = vmatpush.msra.mxu0 0.0
    %7850 = vmatpush.msra.mxu0 0.0
    %7851 = vmatpush.msra.mxu0 0.0
    %7852 = vmatpush.msra.mxu0 0.0
    %7853 = vmatpush.msra.mxu0 0.0
    %7854 = vmatpush.msra.mxu0 0.0
    %7855 = vmatpush.msra.mxu0 %v7839
    %7856 = vmatpush.msra.mxu0 %v7838
    %7857 = vmatpush.msra.mxu0 %v7837
    %7858 = vmatpush.msra.mxu0 %v7836
    %7859 = vmatmul.f32.gmra.mxu0 %v7841
    %v7860 = vpop.f32.mrf.mxu0
    %v7861 = vadd.f32 0.0, %v7860
    %7862 = vdwg.mxu0
    %v7863 = vadd.f32 %v7830, %v7861
    %v7865 = vrot.slane %v7075, 7
    %v7867 = vsel %vm7079, %v4068, %v7865
    %v7868 = vld [vmem:[%s5 + $0x300] sm:$0xff]
    %v7869 = vld [vmem:[%s5 + $0x308] sm:$0xff]
    %v7870 = vld [vmem:[%s5 + $0x310] sm:$0xff]
    %v7871 = vld [vmem:[%s5 + $0x318] sm:$0xff]
    %v7873 = vsel %vm7095, %v7867, 0
    %7875 = vmatpush.msra.mxu0 0.0
    %7876 = vmatpush.msra.mxu0 0.0
    %7877 = vmatpush.msra.mxu0 0.0
    %7878 = vmatpush.msra.mxu0 0.0
    %7879 = vmatpush.msra.mxu0 0.0
    %7880 = vmatpush.msra.mxu0 0.0
    %7881 = vmatpush.msra.mxu0 0.0
    %7882 = vmatpush.msra.mxu0 0.0
    %7883 = vmatpush.msra.mxu0 0.0
    %7884 = vmatpush.msra.mxu0 0.0
    %7885 = vmatpush.msra.mxu0 0.0
    %7886 = vmatpush.msra.mxu0 0.0
    %7887 = vmatpush.msra.mxu0 %v7871
    %7888 = vmatpush.msra.mxu0 %v7870
    %7889 = vmatpush.msra.mxu0 %v7869
    %7890 = vmatpush.msra.mxu0 %v7868
    %7891 = vmatmul.f32.gmra.mxu0 %v7873
    %v7892 = vpop.f32.mrf.mxu0
    %v7893 = vadd.f32 0.0, %v7892
    %7894 = vdwg.mxu0
    %v7895 = vadd.f32 %v7863, %v7893
    %v7896 = vld [vmem:[%s6] sm:$0x1]
    %v7898 = vperm.slane %v7896, 0
    %v7900 = vadd.f32 %v7895, %v7898
    %v7901 = vmax.f32 %v7900, 0.0
    %v7902 = vld [vmem:[%s7] sm:$0xff]
    %v7903 = vld [vmem:[%s7 + $0x8] sm:$0xff]
    %v7904 = vld [vmem:[%s7 + $0x10] sm:$0xff]
    %v7905 = vld [vmem:[%s7 + $0x18] sm:$0xff]
    %v7906 = vld [vmem:[%s8] sm:$0x1]
    %v7908 = vperm.slane %v7906, 0
    %v7911 = vsel %vm7095, %v7901, 0
    %7913 = vmatpush.msra.mxu0 0.0
    %7914 = vmatpush.msra.mxu0 0.0
    %7915 = vmatpush.msra.mxu0 0.0
    %7916 = vmatpush.msra.mxu0 0.0
    %7917 = vmatpush.msra.mxu0 0.0
    %7918 = vmatpush.msra.mxu0 0.0
    %7919 = vmatpush.msra.mxu0 0.0
    %7920 = vmatpush.msra.mxu0 0.0
    %7921 = vmatpush.msra.mxu0 0.0
    %7922 = vmatpush.msra.mxu0 0.0
    %7923 = vmatpush.msra.mxu0 0.0
    %7924 = vmatpush.msra.mxu0 0.0
    %7925 = vmatpush.msra.mxu0 %v7905
    %7926 = vmatpush.msra.mxu0 %v7904
    %7927 = vmatpush.msra.mxu0 %v7903
    %7928 = vmatpush.msra.mxu0 %v7902
    %7929 = vmatmul.f32.gmra.mxu0 %v7911
    %v7930 = vpop.f32.mrf.mxu0
    %v7931 = vadd.f32 %v7908, %v7930
    %7932 = vdwg.mxu0
    %vm7933 = vcmask 74752
    %v7934 = vsel %vm7933, %v7931, -inf
    %7935 = vmax.xlane.f32.xlu0 %v7934
    %v7936 = vpop.xlane.xlu0 %7935
    %v7937 = vsub.f32 %v7931, %v7936
    %v7938 = vmul.f32 %v7937, 1.442695
    %v7939 = vpow.pop %v7938
    %v7940 = vsel %vm7933, %v7939, 0.0
    %7941 = vadd.xlane.f32.xlu0 %v7940
    %v7942 = vpop.xlane.xlu0 %7941
    %v7943 = vlog2.pop %v7942
    %v7944 = vmul.f32 %v7943, 0.6931472
    %v7945 = vsub.f32 %v7937, %v7944
    %7946 = vst.msk [vmem:[#allocation3] sm:$0x3] %vm7933, %v7945
    // Predicated region
    $region38: #{net_tf_forward.1} parent=1 // pred_check
      _
    $region39: #{net_tf_forward.1} parent=1 // pred_check_branch
      %7948 = sbr.rel (0) target = $region41
    $region40: #{net_tf_forward.1} parent=1 // pred_region
      %7950 = vsyncadd [#allocation4], 0
      %s7952 = sshll.u32 [#allocation3], 4
      %s7953 = int_to_ptr.vmem [resolvable:$true] %s7952
      %s7954 = sshll.u32 %s9, 4
      %s7955 = int_to_ptr.hbm [resolvable:$true] %s7954
      %7957 = dma.vmem_to_hbm [thread:$0]  %s7953, 32, %s7955, [#allocation4]
    $region41: #{net_tf_forward.1} parent=1 // pred_fallthru
      _
    // Predicated region
    $region42: #{net_tf_forward.1} parent=1 // pred_check
      _
    $region43: #{net_tf_forward.1} parent=1 // pred_check_branch
      %7959 = sbr.rel (0) target = $region45
    $region44: #{net_tf_forward.1} parent=1 // pred_region
      %7961 = dma.done [#allocation4], 32
    $region45: #{net_tf_forward.1} parent=1 // pred_fallthru
      _
    %7962 = vsyncpa [#allocation4], 1

</llo_original>
